<compile_context>
chip_gen: v6e
topology: v6e:2x2x1
jax: 0.10.0
libtpu: 0.0.40
codegen_flags: <defaults>
</compile_context>

<pallas_src>
import functools

import jax
import jax.numpy as jnp
import numpy as np
from jax import lax
from jax.experimental import pallas as pl
from jax.experimental.pallas import tpu as pltpu

EPS = 1e-5      # nn.InstanceNorm2d default eps
SLOPE = 0.2     # LeakyReLU negative slope
_TARGET_TILE = 512


def _round_up(x, m):
    return (x + m - 1) // m * m


def _cdiv(a, b):
    return -(-a // b)


def _leaky(y):
    return jnp.where(y >= 0, y, SLOPE * y)


def _pick_tiling(total, target=_TARGET_TILE):
    """Split `total` rows into n tiles of equal (8-aligned) size with minimal pad."""
    n_tiles = max(1, _cdiv(total, target))
    tile = _round_up(_cdiv(total, n_tiles), 8)
    return n_tiles, tile, n_tiles * tile


# ---------------------------------------------------------------------------
# Kernels
# ---------------------------------------------------------------------------
def _mm_bias_act_kernel(x_ref, w_ref, b_ref, o_ref, *, apply_act):
    """(rows of patches) @ W + b (+ LeakyReLU).  Batch folded into rows."""
    y = jnp.dot(x_ref[...], w_ref[...], preferred_element_type=jnp.float32)
    y = y + b_ref[...]
    if apply_act:
        y = _leaky(y)
    o_ref[...] = y.astype(o_ref.dtype)


def _mm_bias_stats_kernel(x_ref, w_ref, b_ref, y_ref, stats_ref, *,
                          tp, p_valid, mask_rows):
    """Conv-as-matmul for one (sample, spatial tile) plus one-pass InstanceNorm
    statistics: per-channel sum (row 0) and sum-of-squares (row 1) accumulated
    across the spatial grid axis in a VMEM-resident output block."""
    p = pl.program_id(1)

    @pl.when(p == 0)
    def _init():
        stats_ref[...] = jnp.zeros_like(stats_ref)

    y = jnp.dot(x_ref[...], w_ref[...], preferred_element_type=jnp.float32)
    y = y + b_ref[...]                                    # (TP, Cout) f32
    y_ref[...] = y.astype(y_ref.dtype)

    if mask_rows:
        # Mask spatial padding rows so they do not pollute the statistics.
        rows = p * tp + lax.broadcasted_iota(jnp.int32, (tp, 1), 0)
        ym = jnp.where(rows < p_valid, y, 0.0)
    else:
        ym = y
    stats_ref[0:1, :] = stats_ref[0:1, :] + jnp.sum(ym, axis=0, keepdims=True)
    stats_ref[1:2, :] = stats_ref[1:2, :] + jnp.sum(ym * ym, axis=0, keepdims=True)


def _instnorm_act_kernel(y_ref, stats_ref, o_ref, *, inv_p):
    """(y - mean) * rsqrt(var + eps) followed by LeakyReLU(0.2)."""
    mean = stats_ref[0:1, :] * inv_p
    ex2 = stats_ref[1:2, :] * inv_p
    var = jnp.maximum(ex2 - mean * mean, 0.0)             # biased variance
    inv_std = lax.rsqrt(var + EPS)
    y = y_ref[...].astype(jnp.float32)
    o_ref[...] = _leaky((y - mean) * inv_std).astype(o_ref.dtype)


# ---------------------------------------------------------------------------
# Wrapper (glue)
# ---------------------------------------------------------------------------
def _im2col(x_nhwc, stride):
    N, H, W, Cin = x_nhwc.shape
    Ho = (H + 2 - 3) // stride + 1
    Wo = (W + 2 - 3) // stride + 1
    xp = jnp.pad(x_nhwc, ((0, 0), (1, 1), (1, 1), (0, 0)))
    cols = []
    for kh in range(3):
        for kw in range(3):
            cols.append(xp[:, kh:kh + stride * (Ho - 1) + 1:stride,
                            kw:kw + stride * (Wo - 1) + 1:stride, :])
    # (kh, kw, cin) ordering matches w_hwio.reshape(9*Cin, Cout)
    patches = jnp.concatenate(cols, axis=-1).reshape(N, Ho * Wo, 9 * Cin)
    return patches, Ho, Wo


def conv_block(x_nhwc, w_hwio, b, *, stride, normalize, apply_act, out_dtype):
    """3x3 conv (pad=1) + optional InstanceNorm + optional LeakyReLU."""
    N = x_nhwc.shape[0]
    Cout = w_hwio.shape[-1]

    # bf16 everywhere on the im2col path (halves HBM traffic of the 9x patches).
    x_nhwc = x_nhwc.astype(jnp.bfloat16)
    patches, Ho, Wo = _im2col(x_nhwc, stride)
    P = Ho * Wo
    K = patches.shape[-1]

    K_pad = _round_up(K, 128)                      # lane-align contraction dim
    # Lane-dense stores for the Cout=1 final layer; do NOT pad Cout=64 (would
    # double the biggest activation's HBM traffic for no gain).
    Cout_p = Cout if Cout >= 64 else _round_up(Cout, 128)

    if K_pad != K:
        patches = jnp.pad(patches, ((0, 0), (0, 0), (0, K_pad - K)))
    wmat = w_hwio.reshape(K, Cout).astype(jnp.bfloat16)
    wmat = jnp.pad(wmat, ((0, K_pad - K), (0, Cout_p - Cout)))
    bias = jnp.pad(b.astype(jnp.float32), (0, Cout_p - Cout)).reshape(1, Cout_p)

    if not normalize:
        # Fold batch into the matmul M dimension and tile M.
        M = N * P
        n_mt, TM, M_pad = _pick_tiling(M)
        x2 = patches.reshape(M, K_pad)
        if M_pad != M:
            x2 = jnp.pad(x2, ((0, M_pad - M), (0, 0)))

        out = pl.pallas_call(
            functools.partial(_mm_bias_act_kernel, apply_act=apply_act),
            out_shape=jax.ShapeDtypeStruct((M_pad, Cout_p), out_dtype),
            grid=(n_mt,),
            in_specs=[
                pl.BlockSpec((TM, K_pad), lambda m: (m, 0)),
                pl.BlockSpec((K_pad, Cout_p), lambda m: (0, 0)),
                pl.BlockSpec((1, Cout_p), lambda m: (0, 0)),
            ],
            out_specs=pl.BlockSpec((TM, Cout_p), lambda m: (m, 0)),
            compiler_params=pltpu.CompilerParams(
                dimension_semantics=("parallel",)),
            cost_estimate=pl.CostEstimate(
                flops=2 * M_pad * K_pad * Cout_p,
                transcendentals=0,
                bytes_accessed=(M_pad * K_pad + K_pad * Cout_p) * 2
                + M_pad * Cout_p * jnp.dtype(out_dtype).itemsize),
        )(x2, wmat, bias)
        return out[:M, :Cout].reshape(N, Ho, Wo, Cout)

    # ---- InstanceNorm path: conv+stats kernel, then normalize+act kernel ----
    n_pt, TP, P_pad = _pick_tiling(P)              # spatial tiles, VMEM-bounded
    if P_pad != P:
        patches = jnp.pad(patches, ((0, 0), (0, P_pad - P), (0, 0)))

    y, stats = pl.pallas_call(
        functools.partial(_mm_bias_stats_kernel, tp=TP, p_valid=P,
                          mask_rows=(P_pad != P)),
        out_shape=(jax.ShapeDtypeStruct((N, P_pad, Cout_p), jnp.bfloat16),
                   jax.ShapeDtypeStruct((N, 2, Cout_p), jnp.float32)),
        grid=(N, n_pt),
        in_specs=[
            pl.BlockSpec((None, TP, K_pad), lambda n, p: (n, p, 0)),
            pl.BlockSpec((K_pad, Cout_p), lambda n, p: (0, 0)),
            pl.BlockSpec((1, Cout_p), lambda n, p: (0, 0)),
        ],
        out_specs=(
            pl.BlockSpec((None, TP, Cout_p), lambda n, p: (n, p, 0)),
            pl.BlockSpec((None, 2, Cout_p), lambda n, p: (n, 0, 0)),
        ),
        compiler_params=pltpu.CompilerParams(
            dimension_semantics=("parallel", "arbitrary")),
        cost_estimate=pl.CostEstimate(
            flops=2 * N * P_pad * K_pad * Cout_p,
            transcendentals=0,
            bytes_accessed=N * P_pad * K_pad * 2 + K_pad * Cout_p * 2
            + N * P_pad * Cout_p * 2 + N * 2 * Cout_p * 4),
    )(patches, wmat, bias)

    out = pl.pallas_call(
        functools.partial(_instnorm_act_kernel, inv_p=1.0 / P),
        out_shape=jax.ShapeDtypeStruct((N, P_pad, Cout_p), out_dtype),
        grid=(N, n_pt),
        in_specs=[
            pl.BlockSpec((None, TP, Cout_p), lambda n, p: (n, p, 0)),
            pl.BlockSpec((None, 2, Cout_p), lambda n, p: (n, 0, 0)),
        ],
        out_specs=pl.BlockSpec((None, TP, Cout_p), lambda n, p: (n, p, 0)),
        compiler_params=pltpu.CompilerParams(
            dimension_semantics=("parallel", "parallel")),
        cost_estimate=pl.CostEstimate(
            flops=6 * N * P_pad * Cout_p,
            transcendentals=N * Cout_p,
            bytes_accessed=N * P_pad * Cout_p * 2 + N * 2 * Cout_p * 4
            + N * P_pad * Cout_p * jnp.dtype(out_dtype).itemsize),
    )(y, stats)
    return out[:, :P, :Cout].reshape(N, Ho, Wo, Cout)


# (stride, normalize, leaky_relu) per conv layer; final conv last.
_LAYER_CFG = [
    (2, False, True),   # 3   -> 64
    (2, True, True),    # 64  -> 128
    (2, True, True),    # 128 -> 256
    (1, True, True),    # 256 -> 512
    (1, False, False),  # 512 -> 1   (plain conv, no norm / activation)
]


def discriminator_forward(img_nchw, params):
    # Accept NCHW (PyTorch convention), compute in NHWC, return NCHW.
    x = jnp.transpose(img_nchw, (0, 2, 3, 1))
    n_layers = len(_LAYER_CFG)
    for li, ((w, b), (stride, normalize, act)) in enumerate(zip(params, _LAYER_CFG)):
        out_dtype = jnp.float32 if li == n_layers - 1 else jnp.bfloat16
        x = conv_block(x, w, b, stride=stride, normalize=normalize,
                       apply_act=act, out_dtype=out_dtype)
    return jnp.transpose(x, (0, 3, 1, 2))


def init_params(key, channels=3):
    """Deterministic synthetic conv parameters (Kaiming-uniform-like bounds)."""
    io = [(channels, 64), (64, 128), (128, 256), (256, 512), (512, 1)]
    params = []
    for cin, cout in io:
        key, k_w, k_b = jax.random.split(key, 3)
        bound = 1.0 / np.sqrt(9 * cin)
        w = jax.random.uniform(k_w, (3, 3, cin, cout), jnp.float32,
                               minval=-bound, maxval=bound)
        b = jax.random.uniform(k_b, (cout,), jnp.float32,
                               minval=-bound, maxval=bound)
        params.append((w, b))
    return params


def reference_forward(img_nchw, params):
    """Pure-JAX reference (lax.conv) mirroring the PyTorch forward."""
    x = img_nchw
    for (w, b), (stride, normalize, act) in zip(params, _LAYER_CFG):
        y = lax.conv_general_dilated(
            x, w, (stride, stride), ((1, 1), (1, 1)),
            dimension_numbers=("NCHW", "HWIO", "NCHW"))
        y = y + b[None, :, None, None]
        if normalize:
            mean = jnp.mean(y, axis=(2, 3), keepdims=True)
            var = jnp.var(y, axis=(2, 3), keepdims=True)
            y = (y - mean) / jnp.sqrt(var + EPS)
        if act:
            y = jnp.where(y >= 0, y, SLOPE * y)
        x = y
    return x


if __name__ == "__main__":
    key = jax.random.PRNGKey(0)
    pkey, xkey, xkey2 = jax.random.split(key, 3)

    channels = 3
    params = init_params(pkey, channels)
    fwd = jax.jit(discriminator_forward)

    # Small functional check (matches the module's default usage).
    img = jax.random.normal(xkey, (2, channels, 16, 16), jnp.float32)
    out = jax.block_until_ready(fwd(img, params))
    assert out.shape == (2, 1, 2, 2), out.shape
    ref = reference_forward(img, params)
    np.testing.assert_allclose(np.asarray(out), np.asarray(ref),
                               rtol=5e-2, atol=5e-2)

    # Larger spatial check exercising the multi-tile InstanceNorm reduction.
    img2 = jax.random.normal(xkey2, (1, channels, 96, 96), jnp.float32)
    out2 = jax.block_until_ready(fwd(img2, params))
    assert out2.shape == (1, 1, 12, 12), out2.shape
    ref2 = reference_forward(img2, params)
    np.testing.assert_allclose(np.asarray(out2), np.asarray(ref2),
                               rtol=5e-2, atol=5e-2)

    print("KERNEL_OK")
</pallas_src>

<mosaic_0001>
module attributes {stable_mosaic.version = 11 : i64} {
  func.func @_mm_bias_act_kernel(%arg0: i32, %arg1: memref<128x128xbf16, #tpu.memory_space<vmem>>, %arg2: memref<128x64xbf16, #tpu.memory_space<vmem>>, %arg3: memref<1x64xf32, #tpu.memory_space<vmem>>, %arg4: memref<128x64xbf16, #tpu.memory_space<vmem>>) attributes {dimension_semantics = [#tpu.dimension_semantics<parallel>], iteration_bounds = array<i64: 1>, scalar_prefetch = 0 : i64, scratch_operands = 0 : i64, tpu.core_type = #tpu.core_type<tc>, window_params = [{transform_indices = @transform_0, window_bounds = array<i64: 128, 128>}, {pipeline_mode = #tpu.pipeline_mode<synchronous>, transform_indices = @transform_1, window_bounds = array<i64: 128, 64>}, {pipeline_mode = #tpu.pipeline_mode<synchronous>, transform_indices = @transform_2, window_bounds = array<i64: 1, 64>}, {transform_indices = @transform_3, window_bounds = array<i64: 128, 64>}]} {
    %c0 = arith.constant 0 : index
    %c0_0 = arith.constant 0 : index
    %0 = vector.load %arg1[%c0, %c0_0] : memref<128x128xbf16, #tpu.memory_space<vmem>>, vector<128x128xbf16>
    %c0_1 = arith.constant 0 : index
    %c0_2 = arith.constant 0 : index
    %1 = vector.load %arg2[%c0_1, %c0_2] : memref<128x64xbf16, #tpu.memory_space<vmem>>, vector<128x64xbf16>
    %cst = arith.constant dense<0.000000e+00> : vector<128x64xf32>
    %2 = tpu.matmul %0, %1, %cst {dimension_numbers = #tpu.dot_dimension_numbers<[1], [0], [0], [1], [0, 0, 1, 1], [], []>} : vector<128x128xbf16>, vector<128x64xbf16>, vector<128x64xf32> -> vector<128x64xf32>
    %c0_3 = arith.constant 0 : index
    %c0_4 = arith.constant 0 : index
    %3 = vector.load %arg3[%c0_3, %c0_4] : memref<1x64xf32, #tpu.memory_space<vmem>>, vector<1x64xf32>
    %4 = vector.broadcast %3 : vector<1x64xf32> to vector<128x64xf32>
    %5 = arith.addf %2, %4 : vector<128x64xf32>
    %cst_5 = arith.constant 0.000000e+00 : f32
    %6 = vector.broadcast %cst_5 : f32 to vector<128x64xf32>
    %7 = arith.cmpf oge, %5, %6 : vector<128x64xf32>
    %cst_6 = arith.constant 2.000000e-01 : f32
    %8 = vector.broadcast %cst_6 : f32 to vector<128x64xf32>
    %9 = arith.mulf %8, %5 : vector<128x64xf32>
    %10 = arith.select %7, %5, %9 : vector<128x64xi1>, vector<128x64xf32>
    %11 = arith.truncf %10 : vector<128x64xf32> to vector<128x64xbf16>
    %c0_7 = arith.constant 0 : index
    %c0_8 = arith.constant 0 : index
    %12 = vector.load %arg4[%c0_7, %c0_8] : memref<128x64xbf16, #tpu.memory_space<vmem>>, vector<128x64xbf16>
    tpu.vector_store %arg4[%c0_7, %c0_8], %11 {strides = array<i32>} : memref<128x64xbf16, #tpu.memory_space<vmem>>, vector<128x64xbf16>,
    return
  }
  func.func @transform_0(%arg0: i32) -> (i32, i32) {
    %c0_i32 = arith.constant 0 : i32
    %c0_i32_0 = arith.constant 0 : i32
    return %arg0, %c0_i32 : i32, i32
  }
  func.func @transform_1(%arg0: i32) -> (i32, i32) {
    %c0_i32 = arith.constant 0 : i32
    %c0_i32_0 = arith.constant 0 : i32
    %c0_i32_1 = arith.constant 0 : i32
    return %c0_i32, %c0_i32_0 : i32, i32
  }
  func.func @transform_2(%arg0: i32) -> (i32, i32) {
    %c0_i32 = arith.constant 0 : i32
    %c0_i32_0 = arith.constant 0 : i32
    %c0_i32_1 = arith.constant 0 : i32
    return %c0_i32, %c0_i32_0 : i32, i32
  }
  func.func @transform_3(%arg0: i32) -> (i32, i32) {
    %c0_i32 = arith.constant 0 : i32
    %c0_i32_0 = arith.constant 0 : i32
    return %arg0, %c0_i32 : i32, i32
  }
}

module attributes {stable_mosaic.version = 11 : i64} {
  func.func @_instnorm_act_kernel(%arg0: i32, %arg1: i32, %arg2: memref<1x16x128xbf16, #tpu.memory_space<vmem>>, %arg3: memref<1x2x128xf32, #tpu.memory_space<vmem>>, %arg4: memref<1x16x128xbf16, #tpu.memory_space<vmem>>) attributes {dimension_semantics = [#tpu.dimension_semantics<parallel>, #tpu.dimension_semantics<parallel>], iteration_bounds = array<i64: 2, 1>, scalar_prefetch = 0 : i64, scratch_operands = 0 : i64, tpu.core_type = #tpu.core_type<tc>, window_params = [{transform_indices = @transform_0, window_bounds = array<i64: 1, 16, 128>}, {transform_indices = @transform_1, window_bounds = array<i64: 1, 2, 128>}, {transform_indices = @transform_2, window_bounds = array<i64: 1, 16, 128>}]} {
    %c0 = arith.constant 0 : index
    %c0_0 = arith.constant 0 : index
    %c0_1 = arith.constant 0 : index
    %0 = vector.load %arg3[%c0, %c0_0, %c0_1] : memref<1x2x128xf32, #tpu.memory_space<vmem>>, vector<1x1x128xf32>
    %1 = vector.shape_cast %0 : vector<1x1x128xf32> to vector<1x128xf32>
    %cst = arith.constant 6.250000e-02 : f32
    %2 = vector.broadcast %cst : f32 to vector<1x128xf32>
    %3 = arith.mulf %1, %2 : vector<1x128xf32>
    %c0_2 = arith.constant 0 : index
    %c1 = arith.constant 1 : index
    %c0_3 = arith.constant 0 : index
    %4 = vector.load %arg3[%c0_2, %c1, %c0_3] : memref<1x2x128xf32, #tpu.memory_space<vmem>>, vector<1x1x128xf32>
    %5 = vector.shape_cast %4 : vector<1x1x128xf32> to vector<1x128xf32>
    %cst_4 = arith.constant 6.250000e-02 : f32
    %6 = vector.broadcast %cst_4 : f32 to vector<1x128xf32>
    %7 = arith.mulf %5, %6 : vector<1x128xf32>
    %8 = arith.mulf %3, %3 : vector<1x128xf32>
    %9 = arith.subf %7, %8 : vector<1x128xf32>
    %cst_5 = arith.constant 0.000000e+00 : f32
    %10 = vector.broadcast %cst_5 : f32 to vector<1x128xf32>
    %11 = arith.maximumf %9, %10 : vector<1x128xf32>
    %cst_6 = arith.constant 9.99999974E-6 : f32
    %12 = vector.broadcast %cst_6 : f32 to vector<1x128xf32>
    %13 = arith.addf %11, %12 : vector<1x128xf32>
    %14 = math.rsqrt %13 : vector<1x128xf32>
    %c0_7 = arith.constant 0 : index
    %c0_8 = arith.constant 0 : index
    %c0_9 = arith.constant 0 : index
    %15 = vector.load %arg2[%c0_7, %c0_8, %c0_9] : memref<1x16x128xbf16, #tpu.memory_space<vmem>>, vector<1x16x128xbf16>
    %16 = vector.shape_cast %15 : vector<1x16x128xbf16> to vector<16x128xbf16>
    %17 = arith.extf %16 : vector<16x128xbf16> to vector<16x128xf32>
    %18 = vector.broadcast %3 : vector<1x128xf32> to vector<16x128xf32>
    %19 = arith.subf %17, %18 : vector<16x128xf32>
    %20 = vector.broadcast %14 : vector<1x128xf32> to vector<16x128xf32>
    %21 = arith.mulf %19, %20 : vector<16x128xf32>
    %cst_10 = arith.constant 0.000000e+00 : f32
    %22 = vector.broadcast %cst_10 : f32 to vector<16x128xf32>
    %23 = arith.cmpf oge, %21, %22 : vector<16x128xf32>
    %cst_11 = arith.constant 2.000000e-01 : f32
    %24 = vector.broadcast %cst_11 : f32 to vector<16x128xf32>
    %25 = arith.mulf %24, %21 : vector<16x128xf32>
    %26 = arith.select %23, %21, %25 : vector<16x128xi1>, vector<16x128xf32>
    %27 = arith.truncf %26 : vector<16x128xf32> to vector<16x128xbf16>
    %c0_12 = arith.constant 0 : index
    %c0_13 = arith.constant 0 : index
    %c0_14 = arith.constant 0 : index
    %28 = vector.load %arg4[%c0_12, %c0_13, %c0_14] : memref<1x16x128xbf16, #tpu.memory_space<vmem>>, vector<1x16x128xbf16>
    %29 = vector.shape_cast %28 : vector<1x16x128xbf16> to vector<16x128xbf16>
    %30 = vector.shape_cast %27 : vector<16x128xbf16> to vector<1x16x128xbf16>
    tpu.vector_store %arg4[%c0_12, %c0_13, %c0_14], %30 {strides = array<i32>} : memref<1x16x128xbf16, #tpu.memory_space<vmem>>, vector<1x16x128xbf16>,
    return
  }
  func.func @transform_0(%arg0: i32, %arg1: i32) -> (i32, i32, i32) {
    %c0_i32 = arith.constant 0 : i32
    %c0_i32_0 = arith.constant 0 : i32
    return %arg0, %arg1, %c0_i32 : i32, i32, i32
  }
  func.func @transform_1(%arg0: i32, %arg1: i32) -> (i32, i32, i32) {
    %c0_i32 = arith.constant 0 : i32
    %c0_i32_0 = arith.constant 0 : i32
    %c0_i32_1 = arith.constant 0 : i32
    return %arg0, %c0_i32, %c0_i32_0 : i32, i32, i32
  }
  func.func @transform_2(%arg0: i32, %arg1: i32) -> (i32, i32, i32) {
    %c0_i32 = arith.constant 0 : i32
    %c0_i32_0 = arith.constant 0 : i32
    return %arg0, %arg1, %c0_i32 : i32, i32, i32
  }
}

module attributes {stable_mosaic.version = 11 : i64} {
  func.func @_mm_bias_stats_kernel(%arg0: i32, %arg1: i32, %arg2: memref<1x16x640xbf16, #tpu.memory_space<vmem>>, %arg3: memref<640x128xbf16, #tpu.memory_space<vmem>>, %arg4: memref<1x128xf32, #tpu.memory_space<vmem>>, %arg5: memref<1x16x128xbf16, #tpu.memory_space<vmem>>, %arg6: memref<1x2x128xf32, #tpu.memory_space<vmem>>) attributes {dimension_semantics = [#tpu.dimension_semantics<parallel>, #tpu.dimension_semantics<arbitrary>], iteration_bounds = array<i64: 2, 1>, scalar_prefetch = 0 : i64, scratch_operands = 0 : i64, tpu.core_type = #tpu.core_type<tc>, window_params = [{transform_indices = @transform_0, window_bounds = array<i64: 1, 16, 640>}, {pipeline_mode = #tpu.pipeline_mode<synchronous>, transform_indices = @transform_1, window_bounds = array<i64: 640, 128>}, {pipeline_mode = #tpu.pipeline_mode<synchronous>, transform_indices = @transform_2, window_bounds = array<i64: 1, 128>}, {transform_indices = @transform_3, window_bounds = array<i64: 1, 16, 128>}, {transform_indices = @transform_4, window_bounds = array<i64: 1, 2, 128>}]} {
    %c0_i32 = arith.constant 0 : i32
    %0 = arith.cmpi eq, %arg1, %c0_i32 : i32
    %1 = arith.extui %0 : i1 to i32
    %c0_i32_0 = arith.constant 0 : i32
    %2 = arith.cmpi ne, %1, %c0_i32_0 : i32
    scf.if %2 {
      %cst_23 = arith.constant 0.000000e+00 : f32
      %31 = vector.broadcast %cst_23 : f32 to vector<2x128xf32>
      %c0_24 = arith.constant 0 : index
      %c0_25 = arith.constant 0 : index
      %c0_26 = arith.constant 0 : index
      %32 = vector.load %arg6[%c0_24, %c0_25, %c0_26] : memref<1x2x128xf32, #tpu.memory_space<vmem>>, vector<1x2x128xf32>
      %33 = vector.shape_cast %32 : vector<1x2x128xf32> to vector<2x128xf32>
      %34 = vector.shape_cast %31 : vector<2x128xf32> to vector<1x2x128xf32>
      tpu.vector_store %arg6[%c0_24, %c0_25, %c0_26], %34 {strides = array<i32>} : memref<1x2x128xf32, #tpu.memory_space<vmem>>, vector<1x2x128xf32>,
    } else {
    }
    %c0 = arith.constant 0 : index
    %c0_1 = arith.constant 0 : index
    %c0_2 = arith.constant 0 : index
    %3 = vector.load %arg2[%c0, %c0_1, %c0_2] : memref<1x16x640xbf16, #tpu.memory_space<vmem>>, vector<1x16x640xbf16>
    %4 = vector.shape_cast %3 : vector<1x16x640xbf16> to vector<16x640xbf16>
    %c0_3 = arith.constant 0 : index
    %c0_4 = arith.constant 0 : index
    %5 = vector.load %arg3[%c0_3, %c0_4] : memref<640x128xbf16, #tpu.memory_space<vmem>>, vector<640x128xbf16>
    %cst = arith.constant dense<0.000000e+00> : vector<16x128xf32>
    %6 = tpu.matmul %4, %5, %cst {dimension_numbers = #tpu.dot_dimension_numbers<[1], [0], [0], [1], [0, 0, 1, 1], [], []>} : vector<16x640xbf16>, vector<640x128xbf16>, vector<16x128xf32> -> vector<16x128xf32>
    %c0_5 = arith.constant 0 : index
    %c0_6 = arith.constant 0 : index
    %7 = vector.load %arg4[%c0_5, %c0_6] : memref<1x128xf32, #tpu.memory_space<vmem>>, vector<1x128xf32>
    %8 = vector.broadcast %7 : vector<1x128xf32> to vector<16x128xf32>
    %9 = arith.addf %6, %8 : vector<16x128xf32>
    %10 = arith.truncf %9 : vector<16x128xf32> to vector<16x128xbf16>
    %c0_7 = arith.constant 0 : index
    %c0_8 = arith.constant 0 : index
    %c0_9 = arith.constant 0 : index
    %11 = vector.load %arg5[%c0_7, %c0_8, %c0_9] : memref<1x16x128xbf16, #tpu.memory_space<vmem>>, vector<1x16x128xbf16>
    %12 = vector.shape_cast %11 : vector<1x16x128xbf16> to vector<16x128xbf16>
    %13 = vector.shape_cast %10 : vector<16x128xbf16> to vector<1x16x128xbf16>
    tpu.vector_store %arg5[%c0_7, %c0_8, %c0_9], %13 {strides = array<i32>} : memref<1x16x128xbf16, #tpu.memory_space<vmem>>, vector<1x16x128xbf16>,
    %c0_10 = arith.constant 0 : index
    %c0_11 = arith.constant 0 : index
    %c0_12 = arith.constant 0 : index
    %14 = vector.load %arg6[%c0_10, %c0_11, %c0_12] : memref<1x2x128xf32, #tpu.memory_space<vmem>>, vector<1x1x128xf32>
    %15 = vector.shape_cast %14 : vector<1x1x128xf32> to vector<1x128xf32>
    %cst_13 = arith.constant dense<0.000000e+00> : vector<128xf32>
    %16 = vector.multi_reduction <add>, %9, %cst_13 [0] : vector<16x128xf32> to vector<128xf32>
    %17 = vector.shape_cast %16 : vector<128xf32> to vector<1x128xf32>
    %18 = arith.addf %15, %17 : vector<1x128xf32>
    %c0_14 = arith.constant 0 : index
    %c0_15 = arith.constant 0 : index
    %c0_16 = arith.constant 0 : index
    %19 = vector.load %arg6[%c0_14, %c0_15, %c0_16] : memref<1x2x128xf32, #tpu.memory_space<vmem>>, vector<1x1x128xf32>
    %20 = vector.shape_cast %19 : vector<1x1x128xf32> to vector<1x128xf32>
    %21 = vector.shape_cast %18 : vector<1x128xf32> to vector<1x1x128xf32>
    tpu.vector_store %arg6[%c0_14, %c0_15, %c0_16], %21 {strides = array<i32>} : memref<1x2x128xf32, #tpu.memory_space<vmem>>, vector<1x1x128xf32>,
    %c0_17 = arith.constant 0 : index
    %c1 = arith.constant 1 : index
    %c0_18 = arith.constant 0 : index
    %22 = vector.load %arg6[%c0_17, %c1, %c0_18] : memref<1x2x128xf32, #tpu.memory_space<vmem>>, vector<1x1x128xf32>
    %23 = vector.shape_cast %22 : vector<1x1x128xf32> to vector<1x128xf32>
    %24 = arith.mulf %9, %9 : vector<16x128xf32>
    %cst_19 = arith.constant dense<0.000000e+00> : vector<128xf32>
    %25 = vector.multi_reduction <add>, %24, %cst_19 [0] : vector<16x128xf32> to vector<128xf32>
    %26 = vector.shape_cast %25 : vector<128xf32> to vector<1x128xf32>
    %27 = arith.addf %23, %26 : vector<1x128xf32>
    %c0_20 = arith.constant 0 : index
    %c1_21 = arith.constant 1 : index
    %c0_22 = arith.constant 0 : index
    %28 = vector.load %arg6[%c0_20, %c1_21, %c0_22] : memref<1x2x128xf32, #tpu.memory_space<vmem>>, vector<1x1x128xf32>
    %29 = vector.shape_cast %28 : vector<1x1x128xf32> to vector<1x128xf32>
    %30 = vector.shape_cast %27 : vector<1x128xf32> to vector<1x1x128xf32>
    tpu.vector_store %arg6[%c0_20, %c1_21, %c0_22], %30 {strides = array<i32>} : memref<1x2x128xf32, #tpu.memory_space<vmem>>, vector<1x1x128xf32>,
    return
  }
  func.func @transform_0(%arg0: i32, %arg1: i32) -> (i32, i32, i32) {
    %c0_i32 = arith.constant 0 : i32
    %c0_i32_0 = arith.constant 0 : i32
    return %arg0, %arg1, %c0_i32 : i32, i32, i32
  }
  func.func @transform_1(%arg0: i32, %arg1: i32) -> (i32, i32) {
    %c0_i32 = arith.constant 0 : i32
    %c0_i32_0 = arith.constant 0 : i32
    %c0_i32_1 = arith.constant 0 : i32
    return %c0_i32, %c0_i32_0 : i32, i32
  }
  func.func @transform_2(%arg0: i32, %arg1: i32) -> (i32, i32) {
    %c0_i32 = arith.constant 0 : i32
    %c0_i32_0 = arith.constant 0 : i32
    %c0_i32_1 = arith.constant 0 : i32
    return %c0_i32, %c0_i32_0 : i32, i32
  }
  func.func @transform_3(%arg0: i32, %arg1: i32) -> (i32, i32, i32) {
    %c0_i32 = arith.constant 0 : i32
    %c0_i32_0 = arith.constant 0 : i32
    return %arg0, %arg1, %c0_i32 : i32, i32, i32
  }
  func.func @transform_4(%arg0: i32, %arg1: i32) -> (i32, i32, i32) {
    %c0_i32 = arith.constant 0 : i32
    %c0_i32_0 = arith.constant 0 : i32
    %c0_i32_1 = arith.constant 0 : i32
    return %arg0, %c0_i32, %c0_i32_0 : i32, i32, i32
  }
}

module attributes {stable_mosaic.version = 11 : i64} {
  func.func @_instnorm_act_kernel(%arg0: i32, %arg1: i32, %arg2: memref<1x8x256xbf16, #tpu.memory_space<vmem>>, %arg3: memref<1x2x256xf32, #tpu.memory_space<vmem>>, %arg4: memref<1x8x256xbf16, #tpu.memory_space<vmem>>) attributes {dimension_semantics = [#tpu.dimension_semantics<parallel>, #tpu.dimension_semantics<parallel>], iteration_bounds = array<i64: 2, 1>, scalar_prefetch = 0 : i64, scratch_operands = 0 : i64, tpu.core_type = #tpu.core_type<tc>, window_params = [{transform_indices = @transform_0, window_bounds = array<i64: 1, 8, 256>}, {transform_indices = @transform_1, window_bounds = array<i64: 1, 2, 256>}, {transform_indices = @transform_2, window_bounds = array<i64: 1, 8, 256>}]} {
    %c0 = arith.constant 0 : index
    %c0_0 = arith.constant 0 : index
    %c0_1 = arith.constant 0 : index
    %0 = vector.load %arg3[%c0, %c0_0, %c0_1] : memref<1x2x256xf32, #tpu.memory_space<vmem>>, vector<1x1x256xf32>
    %1 = vector.shape_cast %0 : vector<1x1x256xf32> to vector<1x256xf32>
    %cst = arith.constant 2.500000e-01 : f32
    %2 = vector.broadcast %cst : f32 to vector<1x256xf32>
    %3 = arith.mulf %1, %2 : vector<1x256xf32>
    %c0_2 = arith.constant 0 : index
    %c1 = arith.constant 1 : index
    %c0_3 = arith.constant 0 : index
    %4 = vector.load %arg3[%c0_2, %c1, %c0_3] : memref<1x2x256xf32, #tpu.memory_space<vmem>>, vector<1x1x256xf32>
    %5 = vector.shape_cast %4 : vector<1x1x256xf32> to vector<1x256xf32>
    %cst_4 = arith.constant 2.500000e-01 : f32
    %6 = vector.broadcast %cst_4 : f32 to vector<1x256xf32>
    %7 = arith.mulf %5, %6 : vector<1x256xf32>
    %8 = arith.mulf %3, %3 : vector<1x256xf32>
    %9 = arith.subf %7, %8 : vector<1x256xf32>
    %cst_5 = arith.constant 0.000000e+00 : f32
    %10 = vector.broadcast %cst_5 : f32 to vector<1x256xf32>
    %11 = arith.maximumf %9, %10 : vector<1x256xf32>
    %cst_6 = arith.constant 9.99999974E-6 : f32
    %12 = vector.broadcast %cst_6 : f32 to vector<1x256xf32>
    %13 = arith.addf %11, %12 : vector<1x256xf32>
    %14 = math.rsqrt %13 : vector<1x256xf32>
    %c0_7 = arith.constant 0 : index
    %c0_8 = arith.constant 0 : index
    %c0_9 = arith.constant 0 : index
    %15 = vector.load %arg2[%c0_7, %c0_8, %c0_9] : memref<1x8x256xbf16, #tpu.memory_space<vmem>>, vector<1x8x256xbf16>
    %16 = vector.shape_cast %15 : vector<1x8x256xbf16> to vector<8x256xbf16>
    %17 = arith.extf %16 : vector<8x256xbf16> to vector<8x256xf32>
    %18 = vector.broadcast %3 : vector<1x256xf32> to vector<8x256xf32>
    %19 = arith.subf %17, %18 : vector<8x256xf32>
    %20 = vector.broadcast %14 : vector<1x256xf32> to vector<8x256xf32>
    %21 = arith.mulf %19, %20 : vector<8x256xf32>
    %cst_10 = arith.constant 0.000000e+00 : f32
    %22 = vector.broadcast %cst_10 : f32 to vector<8x256xf32>
    %23 = arith.cmpf oge, %21, %22 : vector<8x256xf32>
    %cst_11 = arith.constant 2.000000e-01 : f32
    %24 = vector.broadcast %cst_11 : f32 to vector<8x256xf32>
    %25 = arith.mulf %24, %21 : vector<8x256xf32>
    %26 = arith.select %23, %21, %25 : vector<8x256xi1>, vector<8x256xf32>
    %27 = arith.truncf %26 : vector<8x256xf32> to vector<8x256xbf16>
    %c0_12 = arith.constant 0 : index
    %c0_13 = arith.constant 0 : index
    %c0_14 = arith.constant 0 : index
    %28 = vector.load %arg4[%c0_12, %c0_13, %c0_14] : memref<1x8x256xbf16, #tpu.memory_space<vmem>>, vector<1x8x256xbf16>
    %29 = vector.shape_cast %28 : vector<1x8x256xbf16> to vector<8x256xbf16>
    %30 = vector.shape_cast %27 : vector<8x256xbf16> to vector<1x8x256xbf16>
    tpu.vector_store %arg4[%c0_12, %c0_13, %c0_14], %30 {strides = array<i32>} : memref<1x8x256xbf16, #tpu.memory_space<vmem>>, vector<1x8x256xbf16>,
    return
  }
  func.func @transform_0(%arg0: i32, %arg1: i32) -> (i32, i32, i32) {
    %c0_i32 = arith.constant 0 : i32
    %c0_i32_0 = arith.constant 0 : i32
    return %arg0, %arg1, %c0_i32 : i32, i32, i32
  }
  func.func @transform_1(%arg0: i32, %arg1: i32) -> (i32, i32, i32) {
    %c0_i32 = arith.constant 0 : i32
    %c0_i32_0 = arith.constant 0 : i32
    %c0_i32_1 = arith.constant 0 : i32
    return %arg0, %c0_i32, %c0_i32_0 : i32, i32, i32
  }
  func.func @transform_2(%arg0: i32, %arg1: i32) -> (i32, i32, i32) {
    %c0_i32 = arith.constant 0 : i32
    %c0_i32_0 = arith.constant 0 : i32
    return %arg0, %arg1, %c0_i32 : i32, i32, i32
  }
}

module attributes {stable_mosaic.version = 11 : i64} {
  func.func @_mm_bias_stats_kernel(%arg0: i32, %arg1: i32, %arg2: memref<1x8x1152xbf16, #tpu.memory_space<vmem>>, %arg3: memref<1152x256xbf16, #tpu.memory_space<vmem>>, %arg4: memref<1x256xf32, #tpu.memory_space<vmem>>, %arg5: memref<1x8x256xbf16, #tpu.memory_space<vmem>>, %arg6: memref<1x2x256xf32, #tpu.memory_space<vmem>>) attributes {dimension_semantics = [#tpu.dimension_semantics<parallel>, #tpu.dimension_semantics<arbitrary>], iteration_bounds = array<i64: 2, 1>, scalar_prefetch = 0 : i64, scratch_operands = 0 : i64, tpu.core_type = #tpu.core_type<tc>, window_params = [{transform_indices = @transform_0, window_bounds = array<i64: 1, 8, 1152>}, {pipeline_mode = #tpu.pipeline_mode<synchronous>, transform_indices = @transform_1, window_bounds = array<i64: 1152, 256>}, {pipeline_mode = #tpu.pipeline_mode<synchronous>, transform_indices = @transform_2, window_bounds = array<i64: 1, 256>}, {transform_indices = @transform_3, window_bounds = array<i64: 1, 8, 256>}, {transform_indices = @transform_4, window_bounds = array<i64: 1, 2, 256>}]} {
    %c0_i32 = arith.constant 0 : i32
    %0 = arith.cmpi eq, %arg1, %c0_i32 : i32
    %1 = arith.extui %0 : i1 to i32
    %c0_i32_0 = arith.constant 0 : i32
    %2 = arith.cmpi ne, %1, %c0_i32_0 : i32
    scf.if %2 {
      %cst_24 = arith.constant 0.000000e+00 : f32
      %41 = vector.broadcast %cst_24 : f32 to vector<2x256xf32>
      %c0_25 = arith.constant 0 : index
      %c0_26 = arith.constant 0 : index
      %c0_27 = arith.constant 0 : index
      %42 = vector.load %arg6[%c0_25, %c0_26, %c0_27] : memref<1x2x256xf32, #tpu.memory_space<vmem>>, vector<1x2x256xf32>
      %43 = vector.shape_cast %42 : vector<1x2x256xf32> to vector<2x256xf32>
      %44 = vector.shape_cast %41 : vector<2x256xf32> to vector<1x2x256xf32>
      tpu.vector_store %arg6[%c0_25, %c0_26, %c0_27], %44 {strides = array<i32>} : memref<1x2x256xf32, #tpu.memory_space<vmem>>, vector<1x2x256xf32>,
    } else {
    }
    %c0 = arith.constant 0 : index
    %c0_1 = arith.constant 0 : index
    %c0_2 = arith.constant 0 : index
    %3 = vector.load %arg2[%c0, %c0_1, %c0_2] : memref<1x8x1152xbf16, #tpu.memory_space<vmem>>, vector<1x8x1152xbf16>
    %4 = vector.shape_cast %3 : vector<1x8x1152xbf16> to vector<8x1152xbf16>
    %c0_3 = arith.constant 0 : index
    %c0_4 = arith.constant 0 : index
    %5 = vector.load %arg3[%c0_3, %c0_4] : memref<1152x256xbf16, #tpu.memory_space<vmem>>, vector<1152x256xbf16>
    %cst = arith.constant dense<0.000000e+00> : vector<8x256xf32>
    %6 = tpu.matmul %4, %5, %cst {dimension_numbers = #tpu.dot_dimension_numbers<[1], [0], [0], [1], [0, 0, 1, 1], [], []>} : vector<8x1152xbf16>, vector<1152x256xbf16>, vector<8x256xf32> -> vector<8x256xf32>
    %c0_5 = arith.constant 0 : index
    %c0_6 = arith.constant 0 : index
    %7 = vector.load %arg4[%c0_5, %c0_6] : memref<1x256xf32, #tpu.memory_space<vmem>>, vector<1x256xf32>
    %8 = vector.broadcast %7 : vector<1x256xf32> to vector<8x256xf32>
    %9 = arith.addf %6, %8 : vector<8x256xf32>
    %10 = arith.truncf %9 : vector<8x256xf32> to vector<8x256xbf16>
    %c0_7 = arith.constant 0 : index
    %c0_8 = arith.constant 0 : index
    %c0_9 = arith.constant 0 : index
    %11 = vector.load %arg5[%c0_7, %c0_8, %c0_9] : memref<1x8x256xbf16, #tpu.memory_space<vmem>>, vector<1x8x256xbf16>
    %12 = vector.shape_cast %11 : vector<1x8x256xbf16> to vector<8x256xbf16>
    %13 = vector.shape_cast %10 : vector<8x256xbf16> to vector<1x8x256xbf16>
    tpu.vector_store %arg5[%c0_7, %c0_8, %c0_9], %13 {strides = array<i32>} : memref<1x8x256xbf16, #tpu.memory_space<vmem>>, vector<1x8x256xbf16>,
    %c8_i32 = arith.constant 8 : i32
    %14 = arith.muli %arg1, %c8_i32 : i32
    %15 = tpu.iota {dimensions = array<i32: 0>} : vector<8x1xi32>
    %16 = vector.broadcast %14 : i32 to vector<8x1xi32>
    %17 = arith.addi %16, %15 : vector<8x1xi32>
    %c4_i32 = arith.constant 4 : i32
    %18 = vector.broadcast %c4_i32 : i32 to vector<8x1xi32>
    %19 = arith.cmpi slt, %17, %18 : vector<8x1xi32>
    %cst_10 = arith.constant 0.000000e+00 : f32
    %20 = vector.shape_cast %19 : vector<8x1xi1> to vector<8x1xi1>
    %21 = vector.broadcast %20 : vector<8x1xi1> to vector<8x256xi1>
    %22 = vector.broadcast %cst_10 : f32 to vector<8x256xf32>
    %23 = arith.select %21, %9, %22 : vector<8x256xi1>, vector<8x256xf32>
    %c0_11 = arith.constant 0 : index
    %c0_12 = arith.constant 0 : index
    %c0_13 = arith.constant 0 : index
    %24 = vector.load %arg6[%c0_11, %c0_12, %c0_13] : memref<1x2x256xf32, #tpu.memory_space<vmem>>, vector<1x1x256xf32>
    %25 = vector.shape_cast %24 : vector<1x1x256xf32> to vector<1x256xf32>
    %cst_14 = arith.constant dense<0.000000e+00> : vector<256xf32>
    %26 = vector.multi_reduction <add>, %23, %cst_14 [0] : vector<8x256xf32> to vector<256xf32>
    %27 = vector.shape_cast %26 : vector<256xf32> to vector<1x256xf32>
    %28 = arith.addf %25, %27 : vector<1x256xf32>
    %c0_15 = arith.constant 0 : index
    %c0_16 = arith.constant 0 : index
    %c0_17 = arith.constant 0 : index
    %29 = vector.load %arg6[%c0_15, %c0_16, %c0_17] : memref<1x2x256xf32, #tpu.memory_space<vmem>>, vector<1x1x256xf32>
    %30 = vector.shape_cast %29 : vector<1x1x256xf32> to vector<1x256xf32>
    %31 = vector.shape_cast %28 : vector<1x256xf32> to vector<1x1x256xf32>
    tpu.vector_store %arg6[%c0_15, %c0_16, %c0_17], %31 {strides = array<i32>} : memref<1x2x256xf32, #tpu.memory_space<vmem>>, vector<1x1x256xf32>,
    %c0_18 = arith.constant 0 : index
    %c1 = arith.constant 1 : index
    %c0_19 = arith.constant 0 : index
    %32 = vector.load %arg6[%c0_18, %c1, %c0_19] : memref<1x2x256xf32, #tpu.memory_space<vmem>>, vector<1x1x256xf32>
    %33 = vector.shape_cast %32 : vector<1x1x256xf32> to vector<1x256xf32>
    %34 = arith.mulf %23, %23 : vector<8x256xf32>
    %cst_20 = arith.constant dense<0.000000e+00> : vector<256xf32>
    %35 = vector.multi_reduction <add>, %34, %cst_20 [0] : vector<8x256xf32> to vector<256xf32>
    %36 = vector.shape_cast %35 : vector<256xf32> to vector<1x256xf32>
    %37 = arith.addf %33, %36 : vector<1x256xf32>
    %c0_21 = arith.constant 0 : index
    %c1_22 = arith.constant 1 : index
    %c0_23 = arith.constant 0 : index
    %38 = vector.load %arg6[%c0_21, %c1_22, %c0_23] : memref<1x2x256xf32, #tpu.memory_space<vmem>>, vector<1x1x256xf32>
    %39 = vector.shape_cast %38 : vector<1x1x256xf32> to vector<1x256xf32>
    %40 = vector.shape_cast %37 : vector<1x256xf32> to vector<1x1x256xf32>
    tpu.vector_store %arg6[%c0_21, %c1_22, %c0_23], %40 {strides = array<i32>} : memref<1x2x256xf32, #tpu.memory_space<vmem>>, vector<1x1x256xf32>,
    return
  }
  func.func @transform_0(%arg0: i32, %arg1: i32) -> (i32, i32, i32) {
    %c0_i32 = arith.constant 0 : i32
    %c0_i32_0 = arith.constant 0 : i32
    return %arg0, %arg1, %c0_i32 : i32, i32, i32
  }
  func.func @transform_1(%arg0: i32, %arg1: i32) -> (i32, i32) {
    %c0_i32 = arith.constant 0 : i32
    %c0_i32_0 = arith.constant 0 : i32
    %c0_i32_1 = arith.constant 0 : i32
    return %c0_i32, %c0_i32_0 : i32, i32
  }
  func.func @transform_2(%arg0: i32, %arg1: i32) -> (i32, i32) {
    %c0_i32 = arith.constant 0 : i32
    %c0_i32_0 = arith.constant 0 : i32
    %c0_i32_1 = arith.constant 0 : i32
    return %c0_i32, %c0_i32_0 : i32, i32
  }
  func.func @transform_3(%arg0: i32, %arg1: i32) -> (i32, i32, i32) {
    %c0_i32 = arith.constant 0 : i32
    %c0_i32_0 = arith.constant 0 : i32
    return %arg0, %arg1, %c0_i32 : i32, i32, i32
  }
  func.func @transform_4(%arg0: i32, %arg1: i32) -> (i32, i32, i32) {
    %c0_i32 = arith.constant 0 : i32
    %c0_i32_0 = arith.constant 0 : i32
    %c0_i32_1 = arith.constant 0 : i32
    return %arg0, %c0_i32, %c0_i32_0 : i32, i32, i32
  }
}

module attributes {stable_mosaic.version = 11 : i64} {
  func.func @_mm_bias_stats_kernel(%arg0: i32, %arg1: i32, %arg2: memref<1x8x2304xbf16, #tpu.memory_space<vmem>>, %arg3: memref<2304x512xbf16, #tpu.memory_space<vmem>>, %arg4: memref<1x512xf32, #tpu.memory_space<vmem>>, %arg5: memref<1x8x512xbf16, #tpu.memory_space<vmem>>, %arg6: memref<1x2x512xf32, #tpu.memory_space<vmem>>) attributes {dimension_semantics = [#tpu.dimension_semantics<parallel>, #tpu.dimension_semantics<arbitrary>], iteration_bounds = array<i64: 2, 1>, scalar_prefetch = 0 : i64, scratch_operands = 0 : i64, tpu.core_type = #tpu.core_type<tc>, window_params = [{transform_indices = @transform_0, window_bounds = array<i64: 1, 8, 2304>}, {pipeline_mode = #tpu.pipeline_mode<synchronous>, transform_indices = @transform_1, window_bounds = array<i64: 2304, 512>}, {pipeline_mode = #tpu.pipeline_mode<synchronous>, transform_indices = @transform_2, window_bounds = array<i64: 1, 512>}, {transform_indices = @transform_3, window_bounds = array<i64: 1, 8, 512>}, {transform_indices = @transform_4, window_bounds = array<i64: 1, 2, 512>}]} {
    %c0_i32 = arith.constant 0 : i32
    %0 = arith.cmpi eq, %arg1, %c0_i32 : i32
    %1 = arith.extui %0 : i1 to i32
    %c0_i32_0 = arith.constant 0 : i32
    %2 = arith.cmpi ne, %1, %c0_i32_0 : i32
    scf.if %2 {
      %cst_24 = arith.constant 0.000000e+00 : f32
      %41 = vector.broadcast %cst_24 : f32 to vector<2x512xf32>
      %c0_25 = arith.constant 0 : index
      %c0_26 = arith.constant 0 : index
      %c0_27 = arith.constant 0 : index
      %42 = vector.load %arg6[%c0_25, %c0_26, %c0_27] : memref<1x2x512xf32, #tpu.memory_space<vmem>>, vector<1x2x512xf32>
      %43 = vector.shape_cast %42 : vector<1x2x512xf32> to vector<2x512xf32>
      %44 = vector.shape_cast %41 : vector<2x512xf32> to vector<1x2x512xf32>
      tpu.vector_store %arg6[%c0_25, %c0_26, %c0_27], %44 {strides = array<i32>} : memref<1x2x512xf32, #tpu.memory_space<vmem>>, vector<1x2x512xf32>,
    } else {
    }
    %c0 = arith.constant 0 : index
    %c0_1 = arith.constant 0 : index
    %c0_2 = arith.constant 0 : index
    %3 = vector.load %arg2[%c0, %c0_1, %c0_2] : memref<1x8x2304xbf16, #tpu.memory_space<vmem>>, vector<1x8x2304xbf16>
    %4 = vector.shape_cast %3 : vector<1x8x2304xbf16> to vector<8x2304xbf16>
    %c0_3 = arith.constant 0 : index
    %c0_4 = arith.constant 0 : index
    %5 = vector.load %arg3[%c0_3, %c0_4] : memref<2304x512xbf16, #tpu.memory_space<vmem>>, vector<2304x512xbf16>
    %cst = arith.constant dense<0.000000e+00> : vector<8x512xf32>
    %6 = tpu.matmul %4, %5, %cst {dimension_numbers = #tpu.dot_dimension_numbers<[1], [0], [0], [1], [0, 0, 1, 1], [], []>} : vector<8x2304xbf16>, vector<2304x512xbf16>, vector<8x512xf32> -> vector<8x512xf32>
    %c0_5 = arith.constant 0 : index
    %c0_6 = arith.constant 0 : index
    %7 = vector.load %arg4[%c0_5, %c0_6] : memref<1x512xf32, #tpu.memory_space<vmem>>, vector<1x512xf32>
    %8 = vector.broadcast %7 : vector<1x512xf32> to vector<8x512xf32>
    %9 = arith.addf %6, %8 : vector<8x512xf32>
    %10 = arith.truncf %9 : vector<8x512xf32> to vector<8x512xbf16>
    %c0_7 = arith.constant 0 : index
    %c0_8 = arith.constant 0 : index
    %c0_9 = arith.constant 0 : index
    %11 = vector.load %arg5[%c0_7, %c0_8, %c0_9] : memref<1x8x512xbf16, #tpu.memory_space<vmem>>, vector<1x8x512xbf16>
    %12 = vector.shape_cast %11 : vector<1x8x512xbf16> to vector<8x512xbf16>
    %13 = vector.shape_cast %10 : vector<8x512xbf16> to vector<1x8x512xbf16>
    tpu.vector_store %arg5[%c0_7, %c0_8, %c0_9], %13 {strides = array<i32>} : memref<1x8x512xbf16, #tpu.memory_space<vmem>>, vector<1x8x512xbf16>,
    %c8_i32 = arith.constant 8 : i32
    %14 = arith.muli %arg1, %c8_i32 : i32
    %15 = tpu.iota {dimensions = array<i32: 0>} : vector<8x1xi32>
    %16 = vector.broadcast %14 : i32 to vector<8x1xi32>
    %17 = arith.addi %16, %15 : vector<8x1xi32>
    %c4_i32 = arith.constant 4 : i32
    %18 = vector.broadcast %c4_i32 : i32 to vector<8x1xi32>
    %19 = arith.cmpi slt, %17, %18 : vector<8x1xi32>
    %cst_10 = arith.constant 0.000000e+00 : f32
    %20 = vector.shape_cast %19 : vector<8x1xi1> to vector<8x1xi1>
    %21 = vector.broadcast %20 : vector<8x1xi1> to vector<8x512xi1>
    %22 = vector.broadcast %cst_10 : f32 to vector<8x512xf32>
    %23 = arith.select %21, %9, %22 : vector<8x512xi1>, vector<8x512xf32>
    %c0_11 = arith.constant 0 : index
    %c0_12 = arith.constant 0 : index
    %c0_13 = arith.constant 0 : index
    %24 = vector.load %arg6[%c0_11, %c0_12, %c0_13] : memref<1x2x512xf32, #tpu.memory_space<vmem>>, vector<1x1x512xf32>
    %25 = vector.shape_cast %24 : vector<1x1x512xf32> to vector<1x512xf32>
    %cst_14 = arith.constant dense<0.000000e+00> : vector<512xf32>
    %26 = vector.multi_reduction <add>, %23, %cst_14 [0] : vector<8x512xf32> to vector<512xf32>
    %27 = vector.shape_cast %26 : vector<512xf32> to vector<1x512xf32>
    %28 = arith.addf %25, %27 : vector<1x512xf32>
    %c0_15 = arith.constant 0 : index
    %c0_16 = arith.constant 0 : index
    %c0_17 = arith.constant 0 : index
    %29 = vector.load %arg6[%c0_15, %c0_16, %c0_17] : memref<1x2x512xf32, #tpu.memory_space<vmem>>, vector<1x1x512xf32>
    %30 = vector.shape_cast %29 : vector<1x1x512xf32> to vector<1x512xf32>
    %31 = vector.shape_cast %28 : vector<1x512xf32> to vector<1x1x512xf32>
    tpu.vector_store %arg6[%c0_15, %c0_16, %c0_17], %31 {strides = array<i32>} : memref<1x2x512xf32, #tpu.memory_space<vmem>>, vector<1x1x512xf32>,
    %c0_18 = arith.constant 0 : index
    %c1 = arith.constant 1 : index
    %c0_19 = arith.constant 0 : index
    %32 = vector.load %arg6[%c0_18, %c1, %c0_19] : memref<1x2x512xf32, #tpu.memory_space<vmem>>, vector<1x1x512xf32>
    %33 = vector.shape_cast %32 : vector<1x1x512xf32> to vector<1x512xf32>
    %34 = arith.mulf %23, %23 : vector<8x512xf32>
    %cst_20 = arith.constant dense<0.000000e+00> : vector<512xf32>
    %35 = vector.multi_reduction <add>, %34, %cst_20 [0] : vector<8x512xf32> to vector<512xf32>
    %36 = vector.shape_cast %35 : vector<512xf32> to vector<1x512xf32>
    %37 = arith.addf %33, %36 : vector<1x512xf32>
    %c0_21 = arith.constant 0 : index
    %c1_22 = arith.constant 1 : index
    %c0_23 = arith.constant 0 : index
    %38 = vector.load %arg6[%c0_21, %c1_22, %c0_23] : memref<1x2x512xf32, #tpu.memory_space<vmem>>, vector<1x1x512xf32>
    %39 = vector.shape_cast %38 : vector<1x1x512xf32> to vector<1x512xf32>
    %40 = vector.shape_cast %37 : vector<1x512xf32> to vector<1x1x512xf32>
    tpu.vector_store %arg6[%c0_21, %c1_22, %c0_23], %40 {strides = array<i32>} : memref<1x2x512xf32, #tpu.memory_space<vmem>>, vector<1x1x512xf32>,
    return
  }
  func.func @transform_0(%arg0: i32, %arg1: i32) -> (i32, i32, i32) {
    %c0_i32 = arith.constant 0 : i32
    %c0_i32_0 = arith.constant 0 : i32
    return %arg0, %arg1, %c0_i32 : i32, i32, i32
  }
  func.func @transform_1(%arg0: i32, %arg1: i32) -> (i32, i32) {
    %c0_i32 = arith.constant 0 : i32
    %c0_i32_0 = arith.constant 0 : i32
    %c0_i32_1 = arith.constant 0 : i32
    return %c0_i32, %c0_i32_0 : i32, i32
  }
  func.func @transform_2(%arg0: i32, %arg1: i32) -> (i32, i32) {
    %c0_i32 = arith.constant 0 : i32
    %c0_i32_0 = arith.constant 0 : i32
    %c0_i32_1 = arith.constant 0 : i32
    return %c0_i32, %c0_i32_0 : i32, i32
  }
  func.func @transform_3(%arg0: i32, %arg1: i32) -> (i32, i32, i32) {
    %c0_i32 = arith.constant 0 : i32
    %c0_i32_0 = arith.constant 0 : i32
    return %arg0, %arg1, %c0_i32 : i32, i32, i32
  }
  func.func @transform_4(%arg0: i32, %arg1: i32) -> (i32, i32, i32) {
    %c0_i32 = arith.constant 0 : i32
    %c0_i32_0 = arith.constant 0 : i32
    %c0_i32_1 = arith.constant 0 : i32
    return %arg0, %c0_i32, %c0_i32_0 : i32, i32, i32
  }
}

module attributes {stable_mosaic.version = 11 : i64} {
  func.func @_instnorm_act_kernel(%arg0: i32, %arg1: i32, %arg2: memref<1x8x512xbf16, #tpu.memory_space<vmem>>, %arg3: memref<1x2x512xf32, #tpu.memory_space<vmem>>, %arg4: memref<1x8x512xbf16, #tpu.memory_space<vmem>>) attributes {dimension_semantics = [#tpu.dimension_semantics<parallel>, #tpu.dimension_semantics<parallel>], iteration_bounds = array<i64: 2, 1>, scalar_prefetch = 0 : i64, scratch_operands = 0 : i64, tpu.core_type = #tpu.core_type<tc>, window_params = [{transform_indices = @transform_0, window_bounds = array<i64: 1, 8, 512>}, {transform_indices = @transform_1, window_bounds = array<i64: 1, 2, 512>}, {transform_indices = @transform_2, window_bounds = array<i64: 1, 8, 512>}]} {
    %c0 = arith.constant 0 : index
    %c0_0 = arith.constant 0 : index
    %c0_1 = arith.constant 0 : index
    %0 = vector.load %arg3[%c0, %c0_0, %c0_1] : memref<1x2x512xf32, #tpu.memory_space<vmem>>, vector<1x1x512xf32>
    %1 = vector.shape_cast %0 : vector<1x1x512xf32> to vector<1x512xf32>
    %cst = arith.constant 2.500000e-01 : f32
    %2 = vector.broadcast %cst : f32 to vector<1x512xf32>
    %3 = arith.mulf %1, %2 : vector<1x512xf32>
    %c0_2 = arith.constant 0 : index
    %c1 = arith.constant 1 : index
    %c0_3 = arith.constant 0 : index
    %4 = vector.load %arg3[%c0_2, %c1, %c0_3] : memref<1x2x512xf32, #tpu.memory_space<vmem>>, vector<1x1x512xf32>
    %5 = vector.shape_cast %4 : vector<1x1x512xf32> to vector<1x512xf32>
    %cst_4 = arith.constant 2.500000e-01 : f32
    %6 = vector.broadcast %cst_4 : f32 to vector<1x512xf32>
    %7 = arith.mulf %5, %6 : vector<1x512xf32>
    %8 = arith.mulf %3, %3 : vector<1x512xf32>
    %9 = arith.subf %7, %8 : vector<1x512xf32>
    %cst_5 = arith.constant 0.000000e+00 : f32
    %10 = vector.broadcast %cst_5 : f32 to vector<1x512xf32>
    %11 = arith.maximumf %9, %10 : vector<1x512xf32>
    %cst_6 = arith.constant 9.99999974E-6 : f32
    %12 = vector.broadcast %cst_6 : f32 to vector<1x512xf32>
    %13 = arith.addf %11, %12 : vector<1x512xf32>
    %14 = math.rsqrt %13 : vector<1x512xf32>
    %c0_7 = arith.constant 0 : index
    %c0_8 = arith.constant 0 : index
    %c0_9 = arith.constant 0 : index
    %15 = vector.load %arg2[%c0_7, %c0_8, %c0_9] : memref<1x8x512xbf16, #tpu.memory_space<vmem>>, vector<1x8x512xbf16>
    %16 = vector.shape_cast %15 : vector<1x8x512xbf16> to vector<8x512xbf16>
    %17 = arith.extf %16 : vector<8x512xbf16> to vector<8x512xf32>
    %18 = vector.broadcast %3 : vector<1x512xf32> to vector<8x512xf32>
    %19 = arith.subf %17, %18 : vector<8x512xf32>
    %20 = vector.broadcast %14 : vector<1x512xf32> to vector<8x512xf32>
    %21 = arith.mulf %19, %20 : vector<8x512xf32>
    %cst_10 = arith.constant 0.000000e+00 : f32
    %22 = vector.broadcast %cst_10 : f32 to vector<8x512xf32>
    %23 = arith.cmpf oge, %21, %22 : vector<8x512xf32>
    %cst_11 = arith.constant 2.000000e-01 : f32
    %24 = vector.broadcast %cst_11 : f32 to vector<8x512xf32>
    %25 = arith.mulf %24, %21 : vector<8x512xf32>
    %26 = arith.select %23, %21, %25 : vector<8x512xi1>, vector<8x512xf32>
    %27 = arith.truncf %26 : vector<8x512xf32> to vector<8x512xbf16>
    %c0_12 = arith.constant 0 : index
    %c0_13 = arith.constant 0 : index
    %c0_14 = arith.constant 0 : index
    %28 = vector.load %arg4[%c0_12, %c0_13, %c0_14] : memref<1x8x512xbf16, #tpu.memory_space<vmem>>, vector<1x8x512xbf16>
    %29 = vector.shape_cast %28 : vector<1x8x512xbf16> to vector<8x512xbf16>
    %30 = vector.shape_cast %27 : vector<8x512xbf16> to vector<1x8x512xbf16>
    tpu.vector_store %arg4[%c0_12, %c0_13, %c0_14], %30 {strides = array<i32>} : memref<1x8x512xbf16, #tpu.memory_space<vmem>>, vector<1x8x512xbf16>,
    return
  }
  func.func @transform_0(%arg0: i32, %arg1: i32) -> (i32, i32, i32) {
    %c0_i32 = arith.constant 0 : i32
    %c0_i32_0 = arith.constant 0 : i32
    return %arg0, %arg1, %c0_i32 : i32, i32, i32
  }
  func.func @transform_1(%arg0: i32, %arg1: i32) -> (i32, i32, i32) {
    %c0_i32 = arith.constant 0 : i32
    %c0_i32_0 = arith.constant 0 : i32
    %c0_i32_1 = arith.constant 0 : i32
    return %arg0, %c0_i32, %c0_i32_0 : i32, i32, i32
  }
  func.func @transform_2(%arg0: i32, %arg1: i32) -> (i32, i32, i32) {
    %c0_i32 = arith.constant 0 : i32
    %c0_i32_0 = arith.constant 0 : i32
    return %arg0, %arg1, %c0_i32 : i32, i32, i32
  }
}

module attributes {stable_mosaic.version = 11 : i64} {
  func.func @_mm_bias_act_kernel(%arg0: i32, %arg1: memref<8x4608xbf16, #tpu.memory_space<vmem>>, %arg2: memref<4608x128xbf16, #tpu.memory_space<vmem>>, %arg3: memref<1x128xf32, #tpu.memory_space<vmem>>, %arg4: memref<8x128xf32, #tpu.memory_space<vmem>>) attributes {dimension_semantics = [#tpu.dimension_semantics<parallel>], iteration_bounds = array<i64: 1>, scalar_prefetch = 0 : i64, scratch_operands = 0 : i64, tpu.core_type = #tpu.core_type<tc>, window_params = [{transform_indices = @transform_0, window_bounds = array<i64: 8, 4608>}, {pipeline_mode = #tpu.pipeline_mode<synchronous>, transform_indices = @transform_1, window_bounds = array<i64: 4608, 128>}, {pipeline_mode = #tpu.pipeline_mode<synchronous>, transform_indices = @transform_2, window_bounds = array<i64: 1, 128>}, {transform_indices = @transform_3, window_bounds = array<i64: 8, 128>}]} {
    %c0 = arith.constant 0 : index
    %c0_0 = arith.constant 0 : index
    %0 = vector.load %arg1[%c0, %c0_0] : memref<8x4608xbf16, #tpu.memory_space<vmem>>, vector<8x4608xbf16>
    %c0_1 = arith.constant 0 : index
    %c0_2 = arith.constant 0 : index
    %1 = vector.load %arg2[%c0_1, %c0_2] : memref<4608x128xbf16, #tpu.memory_space<vmem>>, vector<4608x128xbf16>
    %cst = arith.constant dense<0.000000e+00> : vector<8x128xf32>
    %2 = tpu.matmul %0, %1, %cst {dimension_numbers = #tpu.dot_dimension_numbers<[1], [0], [0], [1], [0, 0, 1, 1], [], []>} : vector<8x4608xbf16>, vector<4608x128xbf16>, vector<8x128xf32> -> vector<8x128xf32>
    %c0_3 = arith.constant 0 : index
    %c0_4 = arith.constant 0 : index
    %3 = vector.load %arg3[%c0_3, %c0_4] : memref<1x128xf32, #tpu.memory_space<vmem>>, vector<1x128xf32>
    %4 = vector.broadcast %3 : vector<1x128xf32> to vector<8x128xf32>
    %5 = arith.addf %2, %4 : vector<8x128xf32>
    %c0_5 = arith.constant 0 : index
    %c0_6 = arith.constant 0 : index
    %6 = vector.load %arg4[%c0_5, %c0_6] : memref<8x128xf32, #tpu.memory_space<vmem>>, vector<8x128xf32>
    tpu.vector_store %arg4[%c0_5, %c0_6], %5 {strides = array<i32>} : memref<8x128xf32, #tpu.memory_space<vmem>>, vector<8x128xf32>,
    return
  }
  func.func @transform_0(%arg0: i32) -> (i32, i32) {
    %c0_i32 = arith.constant 0 : i32
    %c0_i32_0 = arith.constant 0 : i32
    return %arg0, %c0_i32 : i32, i32
  }
  func.func @transform_1(%arg0: i32) -> (i32, i32) {
    %c0_i32 = arith.constant 0 : i32
    %c0_i32_0 = arith.constant 0 : i32
    %c0_i32_1 = arith.constant 0 : i32
    return %c0_i32, %c0_i32_0 : i32, i32
  }
  func.func @transform_2(%arg0: i32) -> (i32, i32) {
    %c0_i32 = arith.constant 0 : i32
    %c0_i32_0 = arith.constant 0 : i32
    %c0_i32_1 = arith.constant 0 : i32
    return %c0_i32, %c0_i32_0 : i32, i32
  }
  func.func @transform_3(%arg0: i32) -> (i32, i32) {
    %c0_i32 = arith.constant 0 : i32
    %c0_i32_0 = arith.constant 0 : i32
    return %arg0, %c0_i32 : i32, i32
  }
}

</mosaic_0001>

<llo_original>
// kernel: discriminator_forward.8
$region0: #{discriminator_forward.8}
  #allocation0 [shape = 'u32[]', space=smem, size = 0x4, offset = 0x4, fixed_abs, tag = 'smem constant byte address 0x4 - core index']
  #allocation1 [shape = 'u32[144,128]{1,0:T(1,128)}', space=vmem, size = 0x12000, scoped, tag = 'internal scratch']
  %s0 = inlined_call_operand.vmem [shape: bf16[128,128], index: 0, kind: input, shape index: {}]
  %s1 = inlined_call_operand.vmem [shape: bf16[128,64], index: 1, kind: input, shape index: {}]
  %s2 = inlined_call_operand.vmem [shape: f32[1,64], index: 2, kind: input, shape index: {}]
  %s3 = inlined_call_operand.vmem [shape: bf16[128,64], index: 3, kind: output, shape index: {}]
  %s4 = sld [smem:[#allocation0]]
  $region22: #{discriminator_forward.8} parent=0
    _
  %s6 = ssub.s32 1, %s4
  %s7 = scalar_select 0, %s6, %s4
  // Predicated region
  $region2: #{discriminator_forward.8} parent=0 // pred_check
    _
  $region3: #{discriminator_forward.8} parent=0 // pred_check_branch
    %9 = sbr.rel (0) target = $region5
  $region4: #{discriminator_forward.8} parent=0 // pred_region
    _
  $region5: #{discriminator_forward.8} parent=0 // pred_fallthru
    _
  // Predicated region
  $region6: #{discriminator_forward.8} parent=0 // pred_check
    _
  $region7: #{discriminator_forward.8} parent=0 // pred_check_branch
    %11 = sbr.rel (0) target = $region9
  $region8: #{discriminator_forward.8} parent=0 // pred_region
    _
  $region9: #{discriminator_forward.8} parent=0 // pred_fallthru
    _
  // Predicated region
  $region10: #{discriminator_forward.8} parent=0 // pred_check
    _
  $region11: #{discriminator_forward.8} parent=0 // pred_check_branch
    %13 = sbr.rel (0) target = $region13
  $region12: #{discriminator_forward.8} parent=0 // pred_region
    _
  $region13: #{discriminator_forward.8} parent=0 // pred_fallthru
    _
  %v15 = vld [vmem:[%s0] sm:$0xf]
  %v16 = vld [vmem:[%s0 + $0x4] sm:$0xf]
  %v17 = vld [vmem:[%s0 + $0x8] sm:$0xf]
  %v18 = vld [vmem:[%s0 + $0xc] sm:$0xf]
  %v19 = vld [vmem:[%s0 + $0x10] sm:$0xf]
  %v20 = vld [vmem:[%s0 + $0x14] sm:$0xf]
  %v21 = vld [vmem:[%s0 + $0x18] sm:$0xf]
  %v22 = vld [vmem:[%s0 + $0x1c] sm:$0xf]
  %v23 = vld [vmem:[%s0 + $0x20] sm:$0xf]
  %v24 = vld [vmem:[%s0 + $0x24] sm:$0xf]
  %v25 = vld [vmem:[%s0 + $0x28] sm:$0xf]
  %v26 = vld [vmem:[%s0 + $0x2c] sm:$0xf]
  %v27 = vld [vmem:[%s0 + $0x30] sm:$0xf]
  %v28 = vld [vmem:[%s0 + $0x34] sm:$0xf]
  %v29 = vld [vmem:[%s0 + $0x38] sm:$0xf]
  %v30 = vld [vmem:[%s0 + $0x3c] sm:$0xf]
  %v31 = vld [vmem:[%s1] sm:$0xf]
  %v32 = vld [vmem:[%s1 + $0x4] sm:$0xf]
  %v33 = vld [vmem:[%s1 + $0x8] sm:$0xf]
  %v34 = vld [vmem:[%s1 + $0xc] sm:$0xf]
  %v35 = vld [vmem:[%s1 + $0x10] sm:$0xf]
  %v36 = vld [vmem:[%s1 + $0x14] sm:$0xf]
  %v37 = vld [vmem:[%s1 + $0x18] sm:$0xf]
  %v38 = vld [vmem:[%s1 + $0x1c] sm:$0xf]
  %v39 = vld [vmem:[%s1 + $0x20] sm:$0xf]
  %v40 = vld [vmem:[%s1 + $0x24] sm:$0xf]
  %v41 = vld [vmem:[%s1 + $0x28] sm:$0xf]
  %v42 = vld [vmem:[%s1 + $0x2c] sm:$0xf]
  %v43 = vld [vmem:[%s1 + $0x30] sm:$0xf]
  %v44 = vld [vmem:[%s1 + $0x34] sm:$0xf]
  %v45 = vld [vmem:[%s1 + $0x38] sm:$0xf]
  %v46 = vld [vmem:[%s1 + $0x3c] sm:$0xf]
  %v47 = vld [vmem:[%s2] sm:$0x1]
  %v49 = vlaneseq
  %v50 = vshrl.u32 %v49, 7
  %v51 = vsub.s32 0, %v50
  %v52 = vrot.slane %v47, %v51
  %v70 = vunpack.c.l.b16 %v15
  %v71 = vunpack.c.l.b16 %v16
  %v72 = vunpack.c.l.b16 %v17
  %v73 = vunpack.c.l.b16 %v18
  %v74 = vunpack.c.l.b16 %v19
  %v75 = vunpack.c.l.b16 %v20
  %v76 = vunpack.c.l.b16 %v21
  %v77 = vunpack.c.l.b16 %v22
  %v78 = vunpack.c.l.b16 %v23
  %v79 = vunpack.c.l.b16 %v24
  %v80 = vunpack.c.l.b16 %v25
  %v81 = vunpack.c.l.b16 %v26
  %v82 = vunpack.c.l.b16 %v27
  %v83 = vunpack.c.l.b16 %v28
  %v84 = vunpack.c.l.b16 %v29
  %v85 = vunpack.c.l.b16 %v30
  %v86 = vpack.c.b16 %v71, %v70
  %v87 = vpack.c.b16 %v73, %v72
  %v88 = vpack.c.b16 %v75, %v74
  %v89 = vpack.c.b16 %v77, %v76
  %v90 = vpack.c.b16 %v79, %v78
  %v91 = vpack.c.b16 %v81, %v80
  %v92 = vpack.c.b16 %v83, %v82
  %v93 = vpack.c.b16 %v85, %v84
  %v118 = vunpack.c.l.b16 %v31
  %v119 = vunpack.c.l.b16 %v32
  %v120 = vunpack.c.l.b16 %v33
  %v121 = vunpack.c.l.b16 %v34
  %v122 = vunpack.c.l.b16 %v35
  %v123 = vunpack.c.l.b16 %v36
  %v124 = vunpack.c.l.b16 %v37
  %v125 = vunpack.c.l.b16 %v38
  %v126 = vunpack.c.l.b16 %v39
  %v127 = vunpack.c.l.b16 %v40
  %v128 = vunpack.c.l.b16 %v41
  %v129 = vunpack.c.l.b16 %v42
  %v130 = vunpack.c.l.b16 %v43
  %v131 = vunpack.c.l.b16 %v44
  %v132 = vunpack.c.l.b16 %v45
  %v133 = vunpack.c.l.b16 %v46
  %v134 = vpack.c.b16 %v119, %v118
  %v135 = vpack.c.b16 %v121, %v120
  %v136 = vpack.c.b16 %v123, %v122
  %v137 = vpack.c.b16 %v125, %v124
  %v138 = vpack.c.b16 %v127, %v126
  %v139 = vpack.c.b16 %v129, %v128
  %v140 = vpack.c.b16 %v131, %v130
  %v141 = vpack.c.b16 %v133, %v132
  %150 = vmatprep.subr.bf16.mxu0 0
  %151 = vmatpush1.bf16.msra.mxu0 %v141
  %152 = vmatprep.subr.bf16.mxu0 0
  %153 = vmatpush1.bf16.msra.mxu0 %v140
  %154 = vmatprep.subr.bf16.mxu0 0
  %155 = vmatpush1.bf16.msra.mxu0 %v139
  %156 = vmatprep.subr.bf16.mxu0 0
  %157 = vmatpush1.bf16.msra.mxu0 %v138
  %158 = vmatprep.subr.bf16.mxu0 0
  %159 = vmatpush1.bf16.msra.mxu0 %v137
  %160 = vmatprep.subr.bf16.mxu0 0
  %161 = vmatpush1.bf16.msra.mxu0 %v136
  %162 = vmatprep.subr.bf16.mxu0 0
  %163 = vmatpush1.bf16.msra.mxu0 %v135
  %164 = vmatprep.subr.bf16.mxu0 0
  %165 = vmatpush1.bf16.msra.mxu0 %v134
  %166 = vmatprep.subr.bf16.mxu0 0
  %167 = vmatpush2.bf16.msra.mxu0 0
  %168 = vmatprep.subr.bf16.mxu0 0
  %169 = vmatpush2.bf16.msra.mxu0 0
  %170 = vmatprep.subr.bf16.mxu0 0
  %171 = vmatpush2.bf16.msra.mxu0 0
  %172 = vmatprep.subr.bf16.mxu0 0
  %173 = vmatpush2.bf16.msra.mxu0 0
  %174 = vmatprep.subr.bf16.mxu0 0
  %175 = vmatpush2.bf16.msra.mxu0 0
  %176 = vmatprep.subr.bf16.mxu0 0
  %177 = vmatpush2.bf16.msra.mxu0 0
  %178 = vmatprep.subr.bf16.mxu0 0
  %179 = vmatpush2.bf16.msra.mxu0 0
  %180 = vmatprep.subr.bf16.mxu0 0
  %181 = vmatpush2.bf16.msra.mxu0 0
  %182 = vmatprep.mubr.bf16.mxu0 0
  %183 = vmatmul.mubr.bf16.gmra.mxu0 %v86
  %v184 = vpop.f32.mrf.mxu0
  %v185 = vadd.f32 %v52, %v184
  %v186 = vpop.f32.mrf.mxu0
  %v187 = vpop.f32.mrf.mxu0
  %v188 = vadd.f32 %v52, %v187
  %v189 = vpop.f32.mrf.mxu0
  %190 = vmatprep.mubr.bf16.mxu0 0
  %191 = vmatmul.mubr.bf16.gmra.mxu0 %v87
  %v192 = vpop.f32.mrf.mxu0
  %v193 = vadd.f32 %v52, %v192
  %v194 = vpop.f32.mrf.mxu0
  %v195 = vpop.f32.mrf.mxu0
  %v196 = vadd.f32 %v52, %v195
  %v197 = vpop.f32.mrf.mxu0
  %198 = vmatprep.mubr.bf16.mxu0 0
  %199 = vmatmul.mubr.bf16.gmra.mxu0 %v88
  %v200 = vpop.f32.mrf.mxu0
  %v201 = vadd.f32 %v52, %v200
  %v202 = vpop.f32.mrf.mxu0
  %v203 = vpop.f32.mrf.mxu0
  %v204 = vadd.f32 %v52, %v203
  %v205 = vpop.f32.mrf.mxu0
  %206 = vmatprep.mubr.bf16.mxu0 0
  %207 = vmatmul.mubr.bf16.gmra.mxu0 %v89
  %v208 = vpop.f32.mrf.mxu0
  %v209 = vadd.f32 %v52, %v208
  %v210 = vpop.f32.mrf.mxu0
  %v211 = vpop.f32.mrf.mxu0
  %v212 = vadd.f32 %v52, %v211
  %v213 = vpop.f32.mrf.mxu0
  %214 = vmatprep.mubr.bf16.mxu0 0
  %215 = vmatmul.mubr.bf16.gmra.mxu0 %v90
  %v216 = vpop.f32.mrf.mxu0
  %v217 = vadd.f32 %v52, %v216
  %v218 = vpop.f32.mrf.mxu0
  %v219 = vpop.f32.mrf.mxu0
  %v220 = vadd.f32 %v52, %v219
  %v221 = vpop.f32.mrf.mxu0
  %222 = vmatprep.mubr.bf16.mxu0 0
  %223 = vmatmul.mubr.bf16.gmra.mxu0 %v91
  %v224 = vpop.f32.mrf.mxu0
  %v225 = vadd.f32 %v52, %v224
  %v226 = vpop.f32.mrf.mxu0
  %v227 = vpop.f32.mrf.mxu0
  %v228 = vadd.f32 %v52, %v227
  %v229 = vpop.f32.mrf.mxu0
  %230 = vmatprep.mubr.bf16.mxu0 0
  %231 = vmatmul.mubr.bf16.gmra.mxu0 %v92
  %v232 = vpop.f32.mrf.mxu0
  %v233 = vadd.f32 %v52, %v232
  %v234 = vpop.f32.mrf.mxu0
  %v235 = vpop.f32.mrf.mxu0
  %v236 = vadd.f32 %v52, %v235
  %v237 = vpop.f32.mrf.mxu0
  %238 = vmatprep.mubr.bf16.mxu0 0
  %239 = vmatmul.mubr.bf16.gmra.mxu0 %v93
  %v240 = vpop.f32.mrf.mxu0
  %v241 = vadd.f32 %v52, %v240
  %v242 = vpop.f32.mrf.mxu0
  %v243 = vpop.f32.mrf.mxu0
  %v244 = vadd.f32 %v52, %v243
  %v245 = vpop.f32.mrf.mxu0
  %246 = vdwg.mxu0
  %vm247 = vcmp.ge.f32.partialorder %v185, 0.0
  %vm248 = vcmp.ge.f32.partialorder %v188, 0.0
  %vm249 = vcmp.ge.f32.partialorder %v193, 0.0
  %vm250 = vcmp.ge.f32.partialorder %v196, 0.0
  %vm251 = vcmp.ge.f32.partialorder %v201, 0.0
  %vm252 = vcmp.ge.f32.partialorder %v204, 0.0
  %vm253 = vcmp.ge.f32.partialorder %v209, 0.0
  %vm254 = vcmp.ge.f32.partialorder %v212, 0.0
  %vm255 = vcmp.ge.f32.partialorder %v217, 0.0
  %vm256 = vcmp.ge.f32.partialorder %v220, 0.0
  %vm257 = vcmp.ge.f32.partialorder %v225, 0.0
  %vm258 = vcmp.ge.f32.partialorder %v228, 0.0
  %vm259 = vcmp.ge.f32.partialorder %v233, 0.0
  %vm260 = vcmp.ge.f32.partialorder %v236, 0.0
  %vm261 = vcmp.ge.f32.partialorder %v241, 0.0
  %vm262 = vcmp.ge.f32.partialorder %v244, 0.0
  %v263 = vmul.f32 %v185, 0.2
  %v264 = vmul.f32 %v188, 0.2
  %v265 = vmul.f32 %v193, 0.2
  %v266 = vmul.f32 %v196, 0.2
  %v267 = vmul.f32 %v201, 0.2
  %v268 = vmul.f32 %v204, 0.2
  %v269 = vmul.f32 %v209, 0.2
  %v270 = vmul.f32 %v212, 0.2
  %v271 = vmul.f32 %v217, 0.2
  %v272 = vmul.f32 %v220, 0.2
  %v273 = vmul.f32 %v225, 0.2
  %v274 = vmul.f32 %v228, 0.2
  %v275 = vmul.f32 %v233, 0.2
  %v276 = vmul.f32 %v236, 0.2
  %v277 = vmul.f32 %v241, 0.2
  %v278 = vmul.f32 %v244, 0.2
  %v279 = vsel %vm247, %v185, %v263
  %v280 = vsel %vm248, %v188, %v264
  %v281 = vsel %vm249, %v193, %v265
  %v282 = vsel %vm250, %v196, %v266
  %v283 = vsel %vm251, %v201, %v267
  %v284 = vsel %vm252, %v204, %v268
  %v285 = vsel %vm253, %v209, %v269
  %v286 = vsel %vm254, %v212, %v270
  %v287 = vsel %vm255, %v217, %v271
  %v288 = vsel %vm256, %v220, %v272
  %v289 = vsel %vm257, %v225, %v273
  %v290 = vsel %vm258, %v228, %v274
  %v291 = vsel %vm259, %v233, %v275
  %v292 = vsel %vm260, %v236, %v276
  %v293 = vsel %vm261, %v241, %v277
  %v294 = vsel %vm262, %v244, %v278
  %v295 = vpack.c.bf16 %v280, %v279
  %v296 = vpack.c.bf16 %v282, %v281
  %v297 = vpack.c.bf16 %v284, %v283
  %v298 = vpack.c.bf16 %v286, %v285
  %v299 = vpack.c.bf16 %v288, %v287
  %v300 = vpack.c.bf16 %v290, %v289
  %v301 = vpack.c.bf16 %v292, %v291
  %v302 = vpack.c.bf16 %v294, %v293
  %v311 = vunpack.c.l.b16 %v295
  %v312 = vunpack.c.h.b16 %v295
  %v313 = vunpack.c.l.b16 %v296
  %v314 = vunpack.c.h.b16 %v296
  %v315 = vunpack.c.l.b16 %v297
  %v316 = vunpack.c.h.b16 %v297
  %v317 = vunpack.c.l.b16 %v298
  %v318 = vunpack.c.h.b16 %v298
  %v319 = vunpack.c.l.b16 %v299
  %v320 = vunpack.c.h.b16 %v299
  %v321 = vunpack.c.l.b16 %v300
  %v322 = vunpack.c.h.b16 %v300
  %v323 = vunpack.c.l.b16 %v301
  %v324 = vunpack.c.h.b16 %v301
  %v325 = vunpack.c.l.b16 %v302
  %v326 = vunpack.c.h.b16 %v302
  %v327 = vpack.c.b16 %v311, %v311
  %v328 = vpack.c.b16 %v312, %v312
  %v329 = vpack.c.b16 %v313, %v313
  %v330 = vpack.c.b16 %v314, %v314
  %v331 = vpack.c.b16 %v315, %v315
  %v332 = vpack.c.b16 %v316, %v316
  %v333 = vpack.c.b16 %v317, %v317
  %v334 = vpack.c.b16 %v318, %v318
  %v335 = vpack.c.b16 %v319, %v319
  %v336 = vpack.c.b16 %v320, %v320
  %v337 = vpack.c.b16 %v321, %v321
  %v338 = vpack.c.b16 %v322, %v322
  %v339 = vpack.c.b16 %v323, %v323
  %v340 = vpack.c.b16 %v324, %v324
  %v341 = vpack.c.b16 %v325, %v325
  %v342 = vpack.c.b16 %v326, %v326
  %vm359 = vcmask 519168
  %360 = vst.msk [vmem:[%s3] sm:$0xf] %vm359, %v327
  %361 = vst.msk [vmem:[%s3 + $0x4] sm:$0xf] %vm359, %v328
  %362 = vst.msk [vmem:[%s3 + $0x8] sm:$0xf] %vm359, %v329
  %363 = vst.msk [vmem:[%s3 + $0xc] sm:$0xf] %vm359, %v330
  %364 = vst.msk [vmem:[%s3 + $0x10] sm:$0xf] %vm359, %v331
  %365 = vst.msk [vmem:[%s3 + $0x14] sm:$0xf] %vm359, %v332
  %366 = vst.msk [vmem:[%s3 + $0x18] sm:$0xf] %vm359, %v333
  %367 = vst.msk [vmem:[%s3 + $0x1c] sm:$0xf] %vm359, %v334
  %368 = vst.msk [vmem:[%s3 + $0x20] sm:$0xf] %vm359, %v335
  %369 = vst.msk [vmem:[%s3 + $0x24] sm:$0xf] %vm359, %v336
  %370 = vst.msk [vmem:[%s3 + $0x28] sm:$0xf] %vm359, %v337
  %371 = vst.msk [vmem:[%s3 + $0x2c] sm:$0xf] %vm359, %v338
  %372 = vst.msk [vmem:[%s3 + $0x30] sm:$0xf] %vm359, %v339
  %373 = vst.msk [vmem:[%s3 + $0x34] sm:$0xf] %vm359, %v340
  %374 = vst.msk [vmem:[%s3 + $0x38] sm:$0xf] %vm359, %v341
  %375 = vst.msk [vmem:[%s3 + $0x3c] sm:$0xf] %vm359, %v342
  // Predicated region
  $region14: #{discriminator_forward.8} parent=0 // pred_check
    _
  $region15: #{discriminator_forward.8} parent=0 // pred_check_branch
    %377 = sbr.rel (0) target = $region17
  $region16: #{discriminator_forward.8} parent=0 // pred_region
    _
  $region17: #{discriminator_forward.8} parent=0 // pred_fallthru
    _
  // Predicated region
  $region18: #{discriminator_forward.8} parent=0 // pred_check
    _
  $region19: #{discriminator_forward.8} parent=0 // pred_check_branch
    %379 = sbr.rel (0) target = $region21
  $region20: #{discriminator_forward.8} parent=0 // pred_region
    _
  $region21: #{discriminator_forward.8} parent=0 // pred_fallthru
    _

// kernel: discriminator_forward.10
$region0: #{discriminator_forward.10}
  #allocation0 [shape = 'u32[]', space=smem, size = 0x4, offset = 0x4, fixed_abs, tag = 'smem constant byte address 0x4 - core index']
  #allocation1 [shape = 'u32[144,128]{1,0:T(1,128)}', space=vmem, size = 0x12000, scoped, tag = 'internal scratch']
  %s0 = inlined_call_operand.vmem [shape: bf16[2,16,128], index: 0, kind: input, shape index: {}]
  %s1 = inlined_call_operand.vmem [shape: f32[2,2,128], index: 1, kind: input, shape index: {}]
  %s2 = inlined_call_operand.vmem [shape: bf16[2,16,128], index: 2, kind: output, shape index: {}]
  %s3 = sld [smem:[#allocation0]]
  $region41: #{discriminator_forward.10} parent=0
    _
  %s5 = ssub.s32 1, %s3
  %s6 = scalar_select 0, %s5, %s3
  loop: start=0, step=1, limit=4
  $region2: #{discriminator_forward.10} parent=0 // loop_pre_header
    _
  $region3: #{discriminator_forward.10} parent=0 // loop_header
    %s8 = sphi 0, %s12
    %p9 = scmp.ge.s32.totalorder %s8, 4
    %s15 = sphi 0, %s27
    %s16 = sphi 0, %s23
    %s17 = sphi 0, %s15
    %s18 = sphi 0, %s16
    %s19 = sphi 0, %s17
    %s20 = sphi 0, %s18
    %s32 = sphi 0, %s34
    %s35 = sphi 0, %s32
    %s36 = sphi 0, %s35
    %s52 = sphi 0, %s36
    %s58 = sphi 0, %s60
    %s61 = sphi 0, %s58
    %s62 = sphi 0, %s61
    %s78 = sphi 0, %s62
    %s86 = sphi 0, %s88
    %s89 = sphi 0, %s86
    %s90 = sphi 0, %s89
    %s106 = sphi 0, %s90
  $region4: #{discriminator_forward.10} parent=0 // loop_header_branch
    %11 = sbr.rel (%p9) target = $region8
  $region5: #{discriminator_forward.10} parent=0 // loop_body
    %s13 = ssub.s32 %s8, 1
    %s14 = ssub.s32 %s8, 2
    %s21 = sadd.s32 1, %s16
    %p22 = scmp.ge.s32.totalorder %s21, 1
    %s23 = scalar_select %p22, 0, %s21
    %s24 = sadd.s32 1, %s15
    %s25 = scalar_select %p22, %s24, %s15
    %p26 = scmp.ge.s32.totalorder %s25, 2
    %s27 = scalar_select %p26, 0, %s25
    %s28 = ssub.s32 %s15, %s27
    %s29 = ssub.s32 %s16, %s23
    %s30 = sor.u32 %s28, %s29
    %p31 = scmp.eq.s32.totalorder %s30, 0
    %s33 = sadd.s32 %s32, 1
    %s34 = scalar_select %p31, %s32, %s33
    %p37 = pneg %p31
    %p38 = scmp.eq.s32.totalorder %s8, 1
    %p39 = por %p37, %p38
    %p40 = scmp.ne.s32.totalorder %s32, %s35
    %p41 = scmp.eq.s32.totalorder %s8, 0
    %p42 = por %p40, %p41
    %p43 = scmp.ne.s32.totalorder %s32, %s35
    %p44 = scmp.eq.s32.totalorder %s13, 1
    %p45 = por %p43, %p44
    %p46 = scmp.ne.s32.totalorder %s35, %s36
    %p47 = scmp.eq.s32.totalorder %s13, 0
    %p48 = por %p46, %p47
    %p49 = scmp.ne.s32.totalorder %s35, %s36
    %p50 = scmp.eq.s32.totalorder %s14, 1
    %p51 = por %p49, %p50
    %p53 = scmp.ne.s32.totalorder %s36, %s52
    %p54 = scmp.eq.s32.totalorder %s14, 0
    %p55 = por %p53, %p54
    %s56 = ssub.s32 %s15, %s27
    %p57 = scmp.eq.s32.totalorder %s56, 0
    %s59 = sadd.s32 %s58, 1
    %s60 = scalar_select %p57, %s58, %s59
    %p63 = pneg %p57
    %p64 = scmp.eq.s32.totalorder %s8, 1
    %p65 = por %p63, %p64
    %p66 = scmp.ne.s32.totalorder %s58, %s61
    %p67 = scmp.eq.s32.totalorder %s8, 0
    %p68 = por %p66, %p67
    %p69 = scmp.ne.s32.totalorder %s58, %s61
    %p70 = scmp.eq.s32.totalorder %s13, 1
    %p71 = por %p69, %p70
    %p72 = scmp.ne.s32.totalorder %s61, %s62
    %p73 = scmp.eq.s32.totalorder %s13, 0
    %p74 = por %p72, %p73
    %p75 = scmp.ne.s32.totalorder %s61, %s62
    %p76 = scmp.eq.s32.totalorder %s14, 1
    %p77 = por %p75, %p76
    %p79 = scmp.ne.s32.totalorder %s62, %s78
    %p80 = scmp.eq.s32.totalorder %s14, 0
    %p81 = por %p79, %p80
    %s82 = ssub.s32 %s15, %s27
    %s83 = ssub.s32 %s16, %s23
    %s84 = sor.u32 %s82, %s83
    %p85 = scmp.eq.s32.totalorder %s84, 0
    %s87 = sadd.s32 %s86, 1
    %s88 = scalar_select %p85, %s86, %s87
    %p91 = pneg %p85
    %p92 = scmp.eq.s32.totalorder %s8, 1
    %p93 = por %p91, %p92
    %p94 = scmp.ne.s32.totalorder %s86, %s89
    %p95 = scmp.eq.s32.totalorder %s8, 0
    %p96 = por %p94, %p95
    %p97 = scmp.ne.s32.totalorder %s86, %s89
    %p98 = scmp.eq.s32.totalorder %s13, 1
    %p99 = por %p97, %p98
    %p100 = scmp.ne.s32.totalorder %s89, %s90
    %p101 = scmp.eq.s32.totalorder %s13, 0
    %p102 = por %p100, %p101
    %p103 = scmp.ne.s32.totalorder %s89, %s90
    %p104 = scmp.eq.s32.totalorder %s14, 1
    %p105 = por %p103, %p104
    %p107 = scmp.ne.s32.totalorder %s90, %s106
    %p108 = scmp.eq.s32.totalorder %s14, 0
    %p109 = por %p107, %p108
    %p110 = scmp.le.s32.totalorder 1, %s8
    %p111 = scmp.lt.s32.totalorder %s8, 3
    %p112 = pnand %p110, %p111
    %p113 = pneg %p112
    // Predicated region
    $region9: #{discriminator_forward.10} parent=5 // pred_check
      _
    $region10: #{discriminator_forward.10} parent=5 // pred_check_branch
      %115 = sbr.rel (%p112) target = $region12
    $region11: #{discriminator_forward.10} parent=5 // pred_region
      %s116 = ssub.s32 %s8, 1
    $region12: #{discriminator_forward.10} parent=5 // pred_fallthru
      _
    %p117 = scmp.lt.s32.totalorder %s8, 2
    // Predicated region
    $region13: #{discriminator_forward.10} parent=5 // pred_check
      %p118 = pneg %p117
    $region14: #{discriminator_forward.10} parent=5 // pred_check_branch
      %120 = sbr.rel (%p118) target = $region16
    $region15: #{discriminator_forward.10} parent=5 // pred_region
      // Predicated region
      $region17: #{discriminator_forward.10} parent=15 // pred_check
        %p121 = pneg %p42
      $region18: #{discriminator_forward.10} parent=15 // pred_check_branch
        %123 = sbr.rel (%p121) target = $region20
      $region19: #{discriminator_forward.10} parent=15 // pred_region
        %s124 = smul.u32 2, %s16
        %p125 = scmp.lt.s32.totalorder %s15, 1
        %s126 = scalar_select %p125, %s15, 1
        %p127 = scmp.lt.s32.totalorder %s124, 1
        %s128 = scalar_select %p127, %s124, 1
        %s129 = smul.addr %s126, 2
        %s130 = sadd.s32 %s128, %s129
        %s131 = smul.addr %s130, 4
        %s132 = scalar_lea.vmem %s0, %s131
        %s133 = smul.u32 2, %s16
      $region20: #{discriminator_forward.10} parent=15 // pred_fallthru
        _
      // Predicated region
      $region21: #{discriminator_forward.10} parent=15 // pred_check
        %p134 = pneg %p68
      $region22: #{discriminator_forward.10} parent=15 // pred_check_branch
        %136 = sbr.rel (%p134) target = $region24
      $region23: #{discriminator_forward.10} parent=15 // pred_region
        %p137 = scmp.lt.s32.totalorder %s15, 1
        %s138 = scalar_select %p137, %s15, 1
        %s139 = smul.addr %s138, 2
        %s140 = scalar_lea.vmem %s1, %s139
      $region24: #{discriminator_forward.10} parent=15 // pred_fallthru
        _
    $region16: #{discriminator_forward.10} parent=5 // pred_fallthru
      _
    %p141 = scmp.le.s32.totalorder 1, %s8
    %p142 = scmp.lt.s32.totalorder %s8, 3
    %p143 = pnand %p141, %p142
    %p144 = pneg %p143
    // Predicated region
    $region25: #{discriminator_forward.10} parent=5 // pred_check
      _
    $region26: #{discriminator_forward.10} parent=5 // pred_check_branch
      %146 = sbr.rel (%p143) target = $region28
    $region27: #{discriminator_forward.10} parent=5 // pred_region
      %s147 = ssub.s32 %s8, 1
      %s148 = smul.u32 2, %s18
      %p149 = scmp.lt.s32.totalorder %s17, 1
      %s150 = scalar_select %p149, %s17, 1
      %p151 = scmp.lt.s32.totalorder %s148, 1
      %s152 = scalar_select %p151, %s148, 1
      %s153 = smul.addr %s150, 2
      %s154 = sadd.s32 %s152, %s153
      %s155 = smul.addr %s154, 4
      %s156 = scalar_lea.vmem %s0, %s155
      %p157 = pneg %p48
      %p158 = pneg %p45
      %p159 = scmp.lt.s32.totalorder %s17, 1
      %s160 = scalar_select %p159, %s17, 1
      %s161 = smul.addr %s160, 2
      %s162 = scalar_lea.vmem %s1, %s161
      %p163 = pneg %p74
      %p164 = pneg %p71
      %p165 = pneg %p102
      %p166 = pneg %p99
      %s167 = smul.u32 2, %s18
      %p168 = scmp.lt.s32.totalorder %s17, 1
      %s169 = scalar_select %p168, %s17, 1
      %p170 = scmp.lt.s32.totalorder %s167, 1
      %s171 = scalar_select %p170, %s167, 1
      %s172 = smul.addr %s169, 2
      %s173 = sadd.s32 %s171, %s172
      %s174 = smul.addr %s173, 4
      %s175 = scalar_lea.vmem %s2, %s174
      %s176 = smul.u32 2, %s18
      %p177 = scmp.lt.s32.totalorder %s17, 1
      %s178 = scalar_select %p177, %s17, 1
      %p179 = scmp.lt.s32.totalorder %s176, 1
      %s180 = scalar_select %p179, %s176, 1
      %s181 = smul.addr %s178, 2
      %s182 = sadd.s32 %s180, %s181
      %s183 = smul.addr %s182, 4
      %s184 = scalar_lea.vmem %s0, %s183
      %s185 = smul.u32 2, %s18
      %p186 = scmp.lt.s32.totalorder %s17, 1
      %s187 = scalar_select %p186, %s17, 1
      %s188 = smul.addr %s187, 2
      %s189 = scalar_lea.vmem %s1, %s188
      %s190 = smul.u32 2, %s18
      %p191 = scmp.lt.s32.totalorder %s17, 1
      %s192 = scalar_select %p191, %s17, 1
      %p193 = scmp.lt.s32.totalorder %s190, 1
      %s194 = scalar_select %p193, %s190, 1
      %s195 = smul.addr %s192, 2
      %s196 = sadd.s32 %s194, %s195
      %s197 = smul.addr %s196, 4
      %s198 = scalar_lea.vmem %s2, %s197
      %s199 = smul.u32 2, %s18
      %v200 = vld [vmem:[%s189] sm:$0x1]
      %v201 = vmul.f32 %v200, 0.0625
      %v202 = vld [vmem:[%s189 + $0x1] sm:$0x1]
      %v203 = vmul.f32 %v202, 0.0625
      %v204 = vmul.f32 %v201, %v201
      %v205 = vsub.f32 %v203, %v204
      %v206 = vmax.f32 %v205, 0.0
      %v207 = vadd.f32 %v206, 1e-05
      %v208 = vrsqrt.pop %v207
      %v209 = vld [vmem:[%s184] sm:$0xf]
      %v210 = vld [vmem:[%s184 + $0x4] sm:$0xf]
      %v211 = vunpack.c.l.bf16 %v209
      %v212 = vunpack.c.l.bf16 %v210
      %v213 = vlaneseq
      %v214 = vshrl.u32 %v213, 7
      %v215 = vsub.s32 0, %v214
      %v216 = vrot.slane %v201, %v215
      %v217 = vsub.f32 %v211, %v216
      %v218 = vsub.f32 %v212, %v216
      %v219 = vlaneseq
      %v220 = vshrl.u32 %v219, 7
      %v221 = vsub.s32 0, %v220
      %v222 = vrot.slane %v208, %v221
      %v223 = vmul.f32 %v217, %v222
      %v224 = vmul.f32 %v218, %v222
      %vm225 = vcmp.ge.f32.partialorder %v223, 0.0
      %vm226 = vcmp.ge.f32.partialorder %v224, 0.0
      %v227 = vmul.f32 %v223, 0.2
      %v228 = vmul.f32 %v224, 0.2
      %v229 = vsel %vm225, %v223, %v227
      %v230 = vsel %vm226, %v224, %v228
      %v231 = vpack.c.bf16 %v230, %v229
      %v233 = vunpack.c.l.b16 %v231
      %v234 = vunpack.c.h.b16 %v231
      %v235 = vpack.c.b16 %v233, %v233
      %v236 = vpack.c.b16 %v234, %v234
      %239 = vst [vmem:[%s198] sm:$0xf] %v235
      %240 = vst [vmem:[%s198 + $0x4] sm:$0xf] %v236
      %s241 = smul.u32 2, %s18
      %p242 = scmp.lt.s32.totalorder %s17, 1
      %s243 = scalar_select %p242, %s17, 1
      %p244 = scmp.lt.s32.totalorder %s241, 1
      %s245 = scalar_select %p244, %s241, 1
      %s246 = smul.addr %s243, 2
      %s247 = sadd.s32 %s245, %s246
      %s248 = smul.addr %s247, 4
      %s249 = scalar_lea.vmem %s2, %s248
      // Predicated region
      $region29: #{discriminator_forward.10} parent=27 // pred_check
        %p250 = pneg %p99
      $region30: #{discriminator_forward.10} parent=27 // pred_check_branch
        %252 = sbr.rel (%p250) target = $region32
      $region31: #{discriminator_forward.10} parent=27 // pred_region
        %s253 = smul.u32 2, %s18
      $region32: #{discriminator_forward.10} parent=27 // pred_fallthru
        _
    $region28: #{discriminator_forward.10} parent=5 // pred_fallthru
      _
    %p254 = scmp.le.s32.totalorder 2, %s8
    // Predicated region
    $region33: #{discriminator_forward.10} parent=5 // pred_check
      %p255 = pneg %p254
    $region34: #{discriminator_forward.10} parent=5 // pred_check_branch
      %257 = sbr.rel (%p255) target = $region36
    $region35: #{discriminator_forward.10} parent=5 // pred_region
      %s258 = ssub.s32 %s8, 2
      // Predicated region
      $region37: #{discriminator_forward.10} parent=35 // pred_check
        %p259 = pneg %p105
      $region38: #{discriminator_forward.10} parent=35 // pred_check_branch
        %261 = sbr.rel (%p259) target = $region40
      $region39: #{discriminator_forward.10} parent=35 // pred_region
        %s262 = smul.u32 2, %s20
        %p263 = scmp.lt.s32.totalorder %s19, 1
        %s264 = scalar_select %p263, %s19, 1
        %p265 = scmp.lt.s32.totalorder %s262, 1
        %s266 = scalar_select %p265, %s262, 1
        %s267 = smul.addr %s264, 2
        %s268 = sadd.s32 %s266, %s267
        %s269 = smul.addr %s268, 4
        %s270 = scalar_lea.vmem %s2, %s269
      $region40: #{discriminator_forward.10} parent=35 // pred_fallthru
        _
    $region36: #{discriminator_forward.10} parent=5 // pred_fallthru
      _
  $region6: #{discriminator_forward.10} parent=0 // loop_footer
    %s12 = sadd.s32 1, %s8
  $region7: #{discriminator_forward.10} parent=0 // loop_footer_branch
    %7 = sbr.rel target = $region3
  $region8: #{discriminator_forward.10} parent=0 // loop_exit
    _

// kernel: discriminator_forward.9
$region0: #{discriminator_forward.9}
  #allocation0 [shape = 'u32[]', space=smem, size = 0x4, offset = 0x4, fixed_abs, tag = 'smem constant byte address 0x4 - core index']
  #allocation1 [shape = 'u32[144,128]{1,0:T(1,128)}', space=vmem, size = 0x12000, scoped, tag = 'internal scratch']
  %s0 = inlined_call_operand.vmem [shape: bf16[2,16,640], index: 0, kind: input, shape index: {}]
  %s1 = inlined_call_operand.vmem [shape: bf16[640,128], index: 1, kind: input, shape index: {}]
  %s2 = inlined_call_operand.vmem [shape: f32[1,128], index: 2, kind: input, shape index: {}]
  %s3 = inlined_call_operand.vmem [shape: bf16[2,16,128], index: 3, kind: output, shape index: {0}]
  %s4 = inlined_call_operand.vmem [shape: f32[2,2,128], index: 4, kind: output, shape index: {1}]
  %5 = xla_tuple %s3, %s4
  %s6 = sld [smem:[#allocation0]]
  $region57: #{discriminator_forward.9} parent=0
    _
  %s8 = ssub.s32 1, %s6
  %s9 = scalar_select 0, %s8, %s6
  loop: start=0, step=1, limit=4
  $region2: #{discriminator_forward.9} parent=0 // loop_pre_header
    _
  $region3: #{discriminator_forward.9} parent=0 // loop_header
    %s11 = sphi 0, %s15
    %p12 = scmp.ge.s32.totalorder %s11, 4
    %s18 = sphi 0, %s30
    %s19 = sphi 0, %s26
    %s20 = sphi 0, %s18
    %s21 = sphi 0, %s19
    %s22 = sphi 0, %s20
    %s23 = sphi 0, %s21
    %s35 = sphi 0, %s37
    %s38 = sphi 0, %s35
    %s39 = sphi 0, %s38
    %s55 = sphi 0, %s39
    %s59 = sphi 0, %s59
    %s61 = sphi 0, %s59
    %s62 = sphi 0, %s61
    %s76 = sphi 0, %s62
    %s80 = sphi 0, %s80
    %s82 = sphi 0, %s80
    %s83 = sphi 0, %s82
    %s97 = sphi 0, %s83
    %s105 = sphi 0, %s107
    %s108 = sphi 0, %s105
    %s109 = sphi 0, %s108
    %s125 = sphi 0, %s109
    %s131 = sphi 0, %s133
    %s134 = sphi 0, %s131
    %s135 = sphi 0, %s134
    %s151 = sphi 0, %s135
  $region4: #{discriminator_forward.9} parent=0 // loop_header_branch
    %14 = sbr.rel (%p12) target = $region8
  $region5: #{discriminator_forward.9} parent=0 // loop_body
    %s16 = ssub.s32 %s11, 1
    %s17 = ssub.s32 %s11, 2
    %s24 = sadd.s32 1, %s19
    %p25 = scmp.ge.s32.totalorder %s24, 1
    %s26 = scalar_select %p25, 0, %s24
    %s27 = sadd.s32 1, %s18
    %s28 = scalar_select %p25, %s27, %s18
    %p29 = scmp.ge.s32.totalorder %s28, 2
    %s30 = scalar_select %p29, 0, %s28
    %s31 = ssub.s32 %s18, %s30
    %s32 = ssub.s32 %s19, %s26
    %s33 = sor.u32 %s31, %s32
    %p34 = scmp.eq.s32.totalorder %s33, 0
    %s36 = sadd.s32 %s35, 1
    %s37 = scalar_select %p34, %s35, %s36
    %p40 = pneg %p34
    %p41 = scmp.eq.s32.totalorder %s11, 1
    %p42 = por %p40, %p41
    %p43 = scmp.ne.s32.totalorder %s35, %s38
    %p44 = scmp.eq.s32.totalorder %s11, 0
    %p45 = por %p43, %p44
    %p46 = scmp.ne.s32.totalorder %s35, %s38
    %p47 = scmp.eq.s32.totalorder %s16, 1
    %p48 = por %p46, %p47
    %p49 = scmp.ne.s32.totalorder %s38, %s39
    %p50 = scmp.eq.s32.totalorder %s16, 0
    %p51 = por %p49, %p50
    %p52 = scmp.ne.s32.totalorder %s38, %s39
    %p53 = scmp.eq.s32.totalorder %s17, 1
    %p54 = por %p52, %p53
    %p56 = scmp.ne.s32.totalorder %s39, %s55
    %p57 = scmp.eq.s32.totalorder %s17, 0
    %p58 = por %p56, %p57
    %s60 = sadd.s32 %s59, 1
    %p63 = scmp.eq.s32.totalorder %s11, 1
    %p64 = scmp.ne.s32.totalorder %s59, %s61
    %p65 = scmp.eq.s32.totalorder %s11, 0
    %p66 = por %p64, %p65
    %p67 = scmp.ne.s32.totalorder %s59, %s61
    %p68 = scmp.eq.s32.totalorder %s16, 1
    %p69 = por %p67, %p68
    %p70 = scmp.ne.s32.totalorder %s61, %s62
    %p71 = scmp.eq.s32.totalorder %s16, 0
    %p72 = por %p70, %p71
    %p73 = scmp.ne.s32.totalorder %s61, %s62
    %p74 = scmp.eq.s32.totalorder %s17, 1
    %p75 = por %p73, %p74
    %p77 = scmp.ne.s32.totalorder %s62, %s76
    %p78 = scmp.eq.s32.totalorder %s17, 0
    %p79 = por %p77, %p78
    %s81 = sadd.s32 %s80, 1
    %p84 = scmp.eq.s32.totalorder %s11, 1
    %p85 = scmp.ne.s32.totalorder %s80, %s82
    %p86 = scmp.eq.s32.totalorder %s11, 0
    %p87 = por %p85, %p86
    %p88 = scmp.ne.s32.totalorder %s80, %s82
    %p89 = scmp.eq.s32.totalorder %s16, 1
    %p90 = por %p88, %p89
    %p91 = scmp.ne.s32.totalorder %s82, %s83
    %p92 = scmp.eq.s32.totalorder %s16, 0
    %p93 = por %p91, %p92
    %p94 = scmp.ne.s32.totalorder %s82, %s83
    %p95 = scmp.eq.s32.totalorder %s17, 1
    %p96 = por %p94, %p95
    %p98 = scmp.ne.s32.totalorder %s83, %s97
    %p99 = scmp.eq.s32.totalorder %s17, 0
    %p100 = por %p98, %p99
    %s101 = ssub.s32 %s18, %s30
    %s102 = ssub.s32 %s19, %s26
    %s103 = sor.u32 %s101, %s102
    %p104 = scmp.eq.s32.totalorder %s103, 0
    %s106 = sadd.s32 %s105, 1
    %s107 = scalar_select %p104, %s105, %s106
    %p110 = pneg %p104
    %p111 = scmp.eq.s32.totalorder %s11, 1
    %p112 = por %p110, %p111
    %p113 = scmp.ne.s32.totalorder %s105, %s108
    %p114 = scmp.eq.s32.totalorder %s11, 0
    %p115 = por %p113, %p114
    %p116 = scmp.ne.s32.totalorder %s105, %s108
    %p117 = scmp.eq.s32.totalorder %s16, 1
    %p118 = por %p116, %p117
    %p119 = scmp.ne.s32.totalorder %s108, %s109
    %p120 = scmp.eq.s32.totalorder %s16, 0
    %p121 = por %p119, %p120
    %p122 = scmp.ne.s32.totalorder %s108, %s109
    %p123 = scmp.eq.s32.totalorder %s17, 1
    %p124 = por %p122, %p123
    %p126 = scmp.ne.s32.totalorder %s109, %s125
    %p127 = scmp.eq.s32.totalorder %s17, 0
    %p128 = por %p126, %p127
    %s129 = ssub.s32 %s18, %s30
    %p130 = scmp.eq.s32.totalorder %s129, 0
    %s132 = sadd.s32 %s131, 1
    %s133 = scalar_select %p130, %s131, %s132
    %p136 = pneg %p130
    %p137 = scmp.eq.s32.totalorder %s11, 1
    %p138 = por %p136, %p137
    %p139 = scmp.ne.s32.totalorder %s131, %s134
    %p140 = scmp.eq.s32.totalorder %s11, 0
    %p141 = por %p139, %p140
    %p142 = scmp.ne.s32.totalorder %s131, %s134
    %p143 = scmp.eq.s32.totalorder %s16, 1
    %p144 = por %p142, %p143
    %p145 = scmp.ne.s32.totalorder %s134, %s135
    %p146 = scmp.eq.s32.totalorder %s16, 0
    %p147 = por %p145, %p146
    %p148 = scmp.ne.s32.totalorder %s134, %s135
    %p149 = scmp.eq.s32.totalorder %s17, 1
    %p150 = por %p148, %p149
    %p152 = scmp.ne.s32.totalorder %s135, %s151
    %p153 = scmp.eq.s32.totalorder %s17, 0
    %p154 = por %p152, %p153
    %p155 = scmp.le.s32.totalorder 1, %s11
    %p156 = scmp.lt.s32.totalorder %s11, 3
    %p157 = pnand %p155, %p156
    %p158 = pneg %p157
    // Predicated region
    $region9: #{discriminator_forward.9} parent=5 // pred_check
      _
    $region10: #{discriminator_forward.9} parent=5 // pred_check_branch
      %160 = sbr.rel (%p157) target = $region12
    $region11: #{discriminator_forward.9} parent=5 // pred_region
      %s161 = ssub.s32 %s11, 1
      // Predicated region
      $region13: #{discriminator_forward.9} parent=11 // pred_check
        %p162 = pneg %p72
      $region14: #{discriminator_forward.9} parent=11 // pred_check_branch
        %164 = sbr.rel (%p162) target = $region16
      $region15: #{discriminator_forward.9} parent=11 // pred_region
        _
      $region16: #{discriminator_forward.9} parent=11 // pred_fallthru
        _
      // Predicated region
      $region17: #{discriminator_forward.9} parent=11 // pred_check
        %p165 = pneg %p93
      $region18: #{discriminator_forward.9} parent=11 // pred_check_branch
        %167 = sbr.rel (%p165) target = $region20
      $region19: #{discriminator_forward.9} parent=11 // pred_region
        _
      $region20: #{discriminator_forward.9} parent=11 // pred_fallthru
        _
    $region12: #{discriminator_forward.9} parent=5 // pred_fallthru
      _
    %p168 = scmp.lt.s32.totalorder %s11, 2
    // Predicated region
    $region21: #{discriminator_forward.9} parent=5 // pred_check
      %p169 = pneg %p168
    $region22: #{discriminator_forward.9} parent=5 // pred_check_branch
      %171 = sbr.rel (%p169) target = $region24
    $region23: #{discriminator_forward.9} parent=5 // pred_region
      // Predicated region
      $region25: #{discriminator_forward.9} parent=23 // pred_check
        %p172 = pneg %p45
      $region26: #{discriminator_forward.9} parent=23 // pred_check_branch
        %174 = sbr.rel (%p172) target = $region28
      $region27: #{discriminator_forward.9} parent=23 // pred_region
        %s175 = smul.u32 2, %s19
        %p176 = scmp.lt.s32.totalorder %s18, 1
        %s177 = scalar_select %p176, %s18, 1
        %p178 = scmp.lt.s32.totalorder %s175, 1
        %s179 = scalar_select %p178, %s175, 1
        %s180 = smul.addr %s179, 5
        %s181 = smul.addr %s177, 10
        %s182 = sadd.s32 %s180, %s181
        %s183 = smul.addr %s182, 4
        %s184 = scalar_lea.vmem %s0, %s183
        %s185 = smul.u32 2, %s19
      $region28: #{discriminator_forward.9} parent=23 // pred_fallthru
        _
    $region24: #{discriminator_forward.9} parent=5 // pred_fallthru
      _
    %p186 = scmp.le.s32.totalorder 1, %s11
    %p187 = scmp.lt.s32.totalorder %s11, 3
    %p188 = pnand %p186, %p187
    %p189 = pneg %p188
    // Predicated region
    $region29: #{discriminator_forward.9} parent=5 // pred_check
      _
    $region30: #{discriminator_forward.9} parent=5 // pred_check_branch
      %191 = sbr.rel (%p188) target = $region32
    $region31: #{discriminator_forward.9} parent=5 // pred_region
      %s192 = ssub.s32 %s11, 1
      %s193 = smul.u32 2, %s21
      %p194 = scmp.lt.s32.totalorder %s20, 1
      %s195 = scalar_select %p194, %s20, 1
      %p196 = scmp.lt.s32.totalorder %s193, 1
      %s197 = scalar_select %p196, %s193, 1
      %s198 = smul.addr %s197, 5
      %s199 = smul.addr %s195, 10
      %s200 = sadd.s32 %s198, %s199
      %s201 = smul.addr %s200, 4
      %s202 = scalar_lea.vmem %s0, %s201
      %p203 = pneg %p51
      %p204 = pneg %p48
      %p205 = pneg %p72
      %p206 = pneg %p69
      %p207 = pneg %p93
      %p208 = pneg %p90
      %p209 = pneg %p121
      %p210 = pneg %p118
      %s211 = smul.u32 2, %s21
      %p212 = scmp.lt.s32.totalorder %s20, 1
      %s213 = scalar_select %p212, %s20, 1
      %p214 = scmp.lt.s32.totalorder %s211, 1
      %s215 = scalar_select %p214, %s211, 1
      %s216 = smul.addr %s213, 2
      %s217 = sadd.s32 %s215, %s216
      %s218 = smul.addr %s217, 4
      %s219 = scalar_lea.vmem %s3, %s218
      %p220 = pneg %p147
      %p221 = pneg %p144
      %p222 = scmp.lt.s32.totalorder %s20, 1
      %s223 = scalar_select %p222, %s20, 1
      %s224 = smul.addr %s223, 2
      %s225 = scalar_lea.vmem %s4, %s224
      %s226 = smul.u32 2, %s21
      %p227 = scmp.lt.s32.totalorder %s20, 1
      %s228 = scalar_select %p227, %s20, 1
      %p229 = scmp.lt.s32.totalorder %s226, 1
      %s230 = scalar_select %p229, %s226, 1
      %s231 = smul.addr %s230, 5
      %s232 = smul.addr %s228, 10
      %s233 = sadd.s32 %s231, %s232
      %s234 = smul.addr %s233, 4
      %s235 = scalar_lea.vmem %s0, %s234
      %s236 = smul.u32 2, %s21
      %s237 = smul.u32 2, %s21
      %p238 = scmp.lt.s32.totalorder %s20, 1
      %s239 = scalar_select %p238, %s20, 1
      %p240 = scmp.lt.s32.totalorder %s237, 1
      %s241 = scalar_select %p240, %s237, 1
      %s242 = smul.addr %s239, 2
      %s243 = sadd.s32 %s241, %s242
      %s244 = smul.addr %s243, 4
      %s245 = scalar_lea.vmem %s3, %s244
      %s246 = smul.u32 2, %s21
      %p247 = scmp.lt.s32.totalorder %s20, 1
      %s248 = scalar_select %p247, %s20, 1
      %s249 = smul.addr %s248, 2
      %s250 = scalar_lea.vmem %s4, %s249
      %p252 = scmp.eq.s32.totalorder %s21, 0
      // Predicated region
      $region33: #{discriminator_forward.9} parent=31 // pred_check
        %p253 = pneg %p252
      $region34: #{discriminator_forward.9} parent=31 // pred_check_branch
        %255 = sbr.rel (%p253) target = $region36
      $region35: #{discriminator_forward.9} parent=31 // pred_region
        %256 = vst [vmem:[%s250] sm:$0x3] 0.0
      $region36: #{discriminator_forward.9} parent=31 // pred_fallthru
        _
      %v257 = vld [vmem:[%s235] sm:$0xff]
      %v258 = vld [vmem:[%s235 + $0x8] sm:$0xff]
      %v259 = vld [vmem:[%s235 + $0x10] sm:$0xf]
      %v260 = vld [vmem:[%s235 + $0x14] sm:$0xff]
      %v261 = vld [vmem:[%s235 + $0x1c] sm:$0xff]
      %v262 = vld [vmem:[%s235 + $0x24] sm:$0xf]
      %v263 = vld [vmem:[%s1] sm:$0xf]
      %v264 = vld [vmem:[%s1 + $0x4] sm:$0xf]
      %v265 = vld [vmem:[%s1 + $0x8] sm:$0xf]
      %v266 = vld [vmem:[%s1 + $0xc] sm:$0xf]
      %v267 = vld [vmem:[%s1 + $0x10] sm:$0xf]
      %v268 = vld [vmem:[%s1 + $0x14] sm:$0xf]
      %v269 = vld [vmem:[%s1 + $0x18] sm:$0xf]
      %v270 = vld [vmem:[%s1 + $0x1c] sm:$0xf]
      %v271 = vld [vmem:[%s1 + $0x20] sm:$0xf]
      %v272 = vld [vmem:[%s1 + $0x24] sm:$0xf]
      %v273 = vld [vmem:[%s1 + $0x28] sm:$0xf]
      %v274 = vld [vmem:[%s1 + $0x2c] sm:$0xf]
      %v275 = vld [vmem:[%s1 + $0x30] sm:$0xf]
      %v276 = vld [vmem:[%s1 + $0x34] sm:$0xf]
      %v277 = vld [vmem:[%s1 + $0x38] sm:$0xf]
      %v278 = vld [vmem:[%s1 + $0x3c] sm:$0xf]
      %v279 = vld [vmem:[%s1 + $0x40] sm:$0xf]
      %v280 = vld [vmem:[%s1 + $0x44] sm:$0xf]
      %v281 = vld [vmem:[%s1 + $0x48] sm:$0xf]
      %v282 = vld [vmem:[%s1 + $0x4c] sm:$0xf]
      %v283 = vld [vmem:[%s1 + $0x50] sm:$0xf]
      %v284 = vld [vmem:[%s1 + $0x54] sm:$0xf]
      %v285 = vld [vmem:[%s1 + $0x58] sm:$0xf]
      %v286 = vld [vmem:[%s1 + $0x5c] sm:$0xf]
      %v287 = vld [vmem:[%s1 + $0x60] sm:$0xf]
      %v288 = vld [vmem:[%s1 + $0x64] sm:$0xf]
      %v289 = vld [vmem:[%s1 + $0x68] sm:$0xf]
      %v290 = vld [vmem:[%s1 + $0x6c] sm:$0xf]
      %v291 = vld [vmem:[%s1 + $0x70] sm:$0xf]
      %v292 = vld [vmem:[%s1 + $0x74] sm:$0xf]
      %v293 = vld [vmem:[%s1 + $0x78] sm:$0xf]
      %v294 = vld [vmem:[%s1 + $0x7c] sm:$0xf]
      %v295 = vld [vmem:[%s1 + $0x80] sm:$0xf]
      %v296 = vld [vmem:[%s1 + $0x84] sm:$0xf]
      %v297 = vld [vmem:[%s1 + $0x88] sm:$0xf]
      %v298 = vld [vmem:[%s1 + $0x8c] sm:$0xf]
      %v299 = vld [vmem:[%s1 + $0x90] sm:$0xf]
      %v300 = vld [vmem:[%s1 + $0x94] sm:$0xf]
      %v301 = vld [vmem:[%s1 + $0x98] sm:$0xf]
      %v302 = vld [vmem:[%s1 + $0x9c] sm:$0xf]
      %v303 = vld [vmem:[%s1 + $0xa0] sm:$0xf]
      %v304 = vld [vmem:[%s1 + $0xa4] sm:$0xf]
      %v305 = vld [vmem:[%s1 + $0xa8] sm:$0xf]
      %v306 = vld [vmem:[%s1 + $0xac] sm:$0xf]
      %v307 = vld [vmem:[%s1 + $0xb0] sm:$0xf]
      %v308 = vld [vmem:[%s1 + $0xb4] sm:$0xf]
      %v309 = vld [vmem:[%s1 + $0xb8] sm:$0xf]
      %v310 = vld [vmem:[%s1 + $0xbc] sm:$0xf]
      %v311 = vld [vmem:[%s1 + $0xc0] sm:$0xf]
      %v312 = vld [vmem:[%s1 + $0xc4] sm:$0xf]
      %v313 = vld [vmem:[%s1 + $0xc8] sm:$0xf]
      %v314 = vld [vmem:[%s1 + $0xcc] sm:$0xf]
      %v315 = vld [vmem:[%s1 + $0xd0] sm:$0xf]
      %v316 = vld [vmem:[%s1 + $0xd4] sm:$0xf]
      %v317 = vld [vmem:[%s1 + $0xd8] sm:$0xf]
      %v318 = vld [vmem:[%s1 + $0xdc] sm:$0xf]
      %v319 = vld [vmem:[%s1 + $0xe0] sm:$0xf]
      %v320 = vld [vmem:[%s1 + $0xe4] sm:$0xf]
      %v321 = vld [vmem:[%s1 + $0xe8] sm:$0xf]
      %v322 = vld [vmem:[%s1 + $0xec] sm:$0xf]
      %v323 = vld [vmem:[%s1 + $0xf0] sm:$0xf]
      %v324 = vld [vmem:[%s1 + $0xf4] sm:$0xf]
      %v325 = vld [vmem:[%s1 + $0xf8] sm:$0xf]
      %v326 = vld [vmem:[%s1 + $0xfc] sm:$0xf]
      %v327 = vld [vmem:[%s1 + $0x100] sm:$0xf]
      %v328 = vld [vmem:[%s1 + $0x104] sm:$0xf]
      %v329 = vld [vmem:[%s1 + $0x108] sm:$0xf]
      %v330 = vld [vmem:[%s1 + $0x10c] sm:$0xf]
      %v331 = vld [vmem:[%s1 + $0x110] sm:$0xf]
      %v332 = vld [vmem:[%s1 + $0x114] sm:$0xf]
      %v333 = vld [vmem:[%s1 + $0x118] sm:$0xf]
      %v334 = vld [vmem:[%s1 + $0x11c] sm:$0xf]
      %v335 = vld [vmem:[%s1 + $0x120] sm:$0xf]
      %v336 = vld [vmem:[%s1 + $0x124] sm:$0xf]
      %v337 = vld [vmem:[%s1 + $0x128] sm:$0xf]
      %v338 = vld [vmem:[%s1 + $0x12c] sm:$0xf]
      %v339 = vld [vmem:[%s1 + $0x130] sm:$0xf]
      %v340 = vld [vmem:[%s1 + $0x134] sm:$0xf]
      %v341 = vld [vmem:[%s1 + $0x138] sm:$0xf]
      %v342 = vld [vmem:[%s1 + $0x13c] sm:$0xf]
      %v343 = vld [vmem:[%s2] sm:$0x1]
      %v345 = vlaneseq
      %v346 = vshrl.u32 %v345, 7
      %v347 = vsub.s32 0, %v346
      %v348 = vrot.slane %v343, %v347
      %v356 = vunpack.c.l.b16 %v257
      %v357 = vunpack.c.h.b16 %v257
      %v358 = vunpack.c.l.b16 %v258
      %v359 = vunpack.c.h.b16 %v258
      %v360 = vunpack.c.l.b16 %v259
      %v361 = vunpack.c.l.b16 %v260
      %v362 = vunpack.c.h.b16 %v260
      %v363 = vunpack.c.l.b16 %v261
      %v364 = vunpack.c.h.b16 %v261
      %v365 = vunpack.c.l.b16 %v262
      %v366 = vpack.c.b16 %v361, %v356
      %v367 = vpack.c.b16 %v362, %v357
      %v368 = vpack.c.b16 %v363, %v358
      %v369 = vpack.c.b16 %v364, %v359
      %v370 = vpack.c.b16 %v365, %v360
      %v456 = vunpack.c.l.b16 %v263
      %v457 = vunpack.c.l.b16 %v264
      %v458 = vunpack.c.l.b16 %v265
      %v459 = vunpack.c.l.b16 %v266
      %v460 = vunpack.c.l.b16 %v267
      %v461 = vunpack.c.l.b16 %v268
      %v462 = vunpack.c.l.b16 %v269
      %v463 = vunpack.c.l.b16 %v270
      %v464 = vunpack.c.l.b16 %v271
      %v465 = vunpack.c.l.b16 %v272
      %v466 = vunpack.c.l.b16 %v273
      %v467 = vunpack.c.l.b16 %v274
      %v468 = vunpack.c.l.b16 %v275
      %v469 = vunpack.c.l.b16 %v276
      %v470 = vunpack.c.l.b16 %v277
      %v471 = vunpack.c.l.b16 %v278
      %v472 = vunpack.c.l.b16 %v279
      %v473 = vunpack.c.l.b16 %v280
      %v474 = vunpack.c.l.b16 %v281
      %v475 = vunpack.c.l.b16 %v282
      %v476 = vunpack.c.l.b16 %v283
      %v477 = vunpack.c.l.b16 %v284
      %v478 = vunpack.c.l.b16 %v285
      %v479 = vunpack.c.l.b16 %v286
      %v480 = vunpack.c.l.b16 %v287
      %v481 = vunpack.c.l.b16 %v288
      %v482 = vunpack.c.l.b16 %v289
      %v483 = vunpack.c.l.b16 %v290
      %v484 = vunpack.c.l.b16 %v291
      %v485 = vunpack.c.l.b16 %v292
      %v486 = vunpack.c.l.b16 %v293
      %v487 = vunpack.c.l.b16 %v294
      %v488 = vunpack.c.l.b16 %v295
      %v489 = vunpack.c.l.b16 %v296
      %v490 = vunpack.c.l.b16 %v297
      %v491 = vunpack.c.l.b16 %v298
      %v492 = vunpack.c.l.b16 %v299
      %v493 = vunpack.c.l.b16 %v300
      %v494 = vunpack.c.l.b16 %v301
      %v495 = vunpack.c.l.b16 %v302
      %v496 = vunpack.c.l.b16 %v303
      %v497 = vunpack.c.l.b16 %v304
      %v498 = vunpack.c.l.b16 %v305
      %v499 = vunpack.c.l.b16 %v306
      %v500 = vunpack.c.l.b16 %v307
      %v501 = vunpack.c.l.b16 %v308
      %v502 = vunpack.c.l.b16 %v309
      %v503 = vunpack.c.l.b16 %v310
      %v504 = vunpack.c.l.b16 %v311
      %v505 = vunpack.c.l.b16 %v312
      %v506 = vunpack.c.l.b16 %v313
      %v507 = vunpack.c.l.b16 %v314
      %v508 = vunpack.c.l.b16 %v315
      %v509 = vunpack.c.l.b16 %v316
      %v510 = vunpack.c.l.b16 %v317
      %v511 = vunpack.c.l.b16 %v318
      %v512 = vunpack.c.l.b16 %v319
      %v513 = vunpack.c.l.b16 %v320
      %v514 = vunpack.c.l.b16 %v321
      %v515 = vunpack.c.l.b16 %v322
      %v516 = vunpack.c.l.b16 %v323
      %v517 = vunpack.c.l.b16 %v324
      %v518 = vunpack.c.l.b16 %v325
      %v519 = vunpack.c.l.b16 %v326
      %v520 = vunpack.c.l.b16 %v327
      %v521 = vunpack.c.l.b16 %v328
      %v522 = vunpack.c.l.b16 %v329
      %v523 = vunpack.c.l.b16 %v330
      %v524 = vunpack.c.l.b16 %v331
      %v525 = vunpack.c.l.b16 %v332
      %v526 = vunpack.c.l.b16 %v333
      %v527 = vunpack.c.l.b16 %v334
      %v528 = vunpack.c.l.b16 %v335
      %v529 = vunpack.c.l.b16 %v336
      %v530 = vunpack.c.l.b16 %v337
      %v531 = vunpack.c.l.b16 %v338
      %v532 = vunpack.c.l.b16 %v339
      %v533 = vunpack.c.l.b16 %v340
      %v534 = vunpack.c.l.b16 %v341
      %v535 = vunpack.c.l.b16 %v342
      %v536 = vpack.c.b16 %v457, %v456
      %v537 = vpack.c.b16 %v459, %v458
      %v538 = vpack.c.b16 %v461, %v460
      %v539 = vpack.c.b16 %v463, %v462
      %v540 = vpack.c.b16 %v465, %v464
      %v541 = vpack.c.b16 %v467, %v466
      %v542 = vpack.c.b16 %v469, %v468
      %v543 = vpack.c.b16 %v471, %v470
      %v544 = vpack.c.b16 %v473, %v472
      %v545 = vpack.c.b16 %v475, %v474
      %v546 = vpack.c.b16 %v477, %v476
      %v547 = vpack.c.b16 %v479, %v478
      %v548 = vpack.c.b16 %v481, %v480
      %v549 = vpack.c.b16 %v483, %v482
      %v550 = vpack.c.b16 %v485, %v484
      %v551 = vpack.c.b16 %v487, %v486
      %v552 = vpack.c.b16 %v489, %v488
      %v553 = vpack.c.b16 %v491, %v490
      %v554 = vpack.c.b16 %v493, %v492
      %v555 = vpack.c.b16 %v495, %v494
      %v556 = vpack.c.b16 %v497, %v496
      %v557 = vpack.c.b16 %v499, %v498
      %v558 = vpack.c.b16 %v501, %v500
      %v559 = vpack.c.b16 %v503, %v502
      %v560 = vpack.c.b16 %v505, %v504
      %v561 = vpack.c.b16 %v507, %v506
      %v562 = vpack.c.b16 %v509, %v508
      %v563 = vpack.c.b16 %v511, %v510
      %v564 = vpack.c.b16 %v513, %v512
      %v565 = vpack.c.b16 %v515, %v514
      %v566 = vpack.c.b16 %v517, %v516
      %v567 = vpack.c.b16 %v519, %v518
      %v568 = vpack.c.b16 %v521, %v520
      %v569 = vpack.c.b16 %v523, %v522
      %v570 = vpack.c.b16 %v525, %v524
      %v571 = vpack.c.b16 %v527, %v526
      %v572 = vpack.c.b16 %v529, %v528
      %v573 = vpack.c.b16 %v531, %v530
      %v574 = vpack.c.b16 %v533, %v532
      %v575 = vpack.c.b16 %v535, %v534
      %616 = vmatprep.subr.bf16.mxu0 0
      %617 = vmatpush1.bf16.msra.mxu0 %v543
      %618 = vmatprep.subr.bf16.mxu0 0
      %619 = vmatpush1.bf16.msra.mxu0 %v542
      %620 = vmatprep.subr.bf16.mxu0 0
      %621 = vmatpush1.bf16.msra.mxu0 %v541
      %622 = vmatprep.subr.bf16.mxu0 0
      %623 = vmatpush1.bf16.msra.mxu0 %v540
      %624 = vmatprep.subr.bf16.mxu0 0
      %625 = vmatpush1.bf16.msra.mxu0 %v539
      %626 = vmatprep.subr.bf16.mxu0 0
      %627 = vmatpush1.bf16.msra.mxu0 %v538
      %628 = vmatprep.subr.bf16.mxu0 0
      %629 = vmatpush1.bf16.msra.mxu0 %v537
      %630 = vmatprep.subr.bf16.mxu0 0
      %631 = vmatpush1.bf16.msra.mxu0 %v536
      %632 = vmatprep.subr.bf16.mxu0 0
      %633 = vmatpush2.bf16.msra.mxu0 %v551
      %634 = vmatprep.subr.bf16.mxu0 0
      %635 = vmatpush2.bf16.msra.mxu0 %v550
      %636 = vmatprep.subr.bf16.mxu0 0
      %637 = vmatpush2.bf16.msra.mxu0 %v549
      %638 = vmatprep.subr.bf16.mxu0 0
      %639 = vmatpush2.bf16.msra.mxu0 %v548
      %640 = vmatprep.subr.bf16.mxu0 0
      %641 = vmatpush2.bf16.msra.mxu0 %v547
      %642 = vmatprep.subr.bf16.mxu0 0
      %643 = vmatpush2.bf16.msra.mxu0 %v546
      %644 = vmatprep.subr.bf16.mxu0 0
      %645 = vmatpush2.bf16.msra.mxu0 %v545
      %646 = vmatprep.subr.bf16.mxu0 0
      %647 = vmatpush2.bf16.msra.mxu0 %v544
      %648 = vmatprep.mubr.bf16.mxu0 %v367
      %649 = vmatmul.mubr.bf16.gmra.mxu0 %v366
      %v650 = vpop.f32.mrf.mxu0
      %v651 = vadd.f32 %v348, %v650
      %v652 = vpop.f32.mrf.mxu0
      %v653 = vpop.f32.mrf.mxu0
      %v654 = vadd.f32 %v348, %v653
      %v655 = vpop.f32.mrf.mxu0
      %656 = vdwg.mxu0
      %657 = vmatprep.subr.bf16.mxu0 0
      %658 = vmatpush1.bf16.msra.mxu0 %v559
      %659 = vmatprep.subr.bf16.mxu0 0
      %660 = vmatpush1.bf16.msra.mxu0 %v558
      %661 = vmatprep.subr.bf16.mxu0 0
      %662 = vmatpush1.bf16.msra.mxu0 %v557
      %663 = vmatprep.subr.bf16.mxu0 0
      %664 = vmatpush1.bf16.msra.mxu0 %v556
      %665 = vmatprep.subr.bf16.mxu0 0
      %666 = vmatpush1.bf16.msra.mxu0 %v555
      %667 = vmatprep.subr.bf16.mxu0 0
      %668 = vmatpush1.bf16.msra.mxu0 %v554
      %669 = vmatprep.subr.bf16.mxu0 0
      %670 = vmatpush1.bf16.msra.mxu0 %v553
      %671 = vmatprep.subr.bf16.mxu0 0
      %672 = vmatpush1.bf16.msra.mxu0 %v552
      %673 = vmatprep.subr.bf16.mxu0 0
      %674 = vmatpush2.bf16.msra.mxu0 %v567
      %675 = vmatprep.subr.bf16.mxu0 0
      %676 = vmatpush2.bf16.msra.mxu0 %v566
      %677 = vmatprep.subr.bf16.mxu0 0
      %678 = vmatpush2.bf16.msra.mxu0 %v565
      %679 = vmatprep.subr.bf16.mxu0 0
      %680 = vmatpush2.bf16.msra.mxu0 %v564
      %681 = vmatprep.subr.bf16.mxu0 0
      %682 = vmatpush2.bf16.msra.mxu0 %v563
      %683 = vmatprep.subr.bf16.mxu0 0
      %684 = vmatpush2.bf16.msra.mxu0 %v562
      %685 = vmatprep.subr.bf16.mxu0 0
      %686 = vmatpush2.bf16.msra.mxu0 %v561
      %687 = vmatprep.subr.bf16.mxu0 0
      %688 = vmatpush2.bf16.msra.mxu0 %v560
      %689 = vmatprep.mubr.bf16.mxu0 %v369
      %690 = vmatmul.mubr.bf16.gmra.mxu0 %v368
      %v691 = vpop.f32.mrf.mxu0
      %v692 = vadd.f32 %v651, %v691
      %v693 = vpop.f32.mrf.mxu0
      %v694 = vpop.f32.mrf.mxu0
      %v695 = vadd.f32 %v654, %v694
      %v696 = vpop.f32.mrf.mxu0
      %697 = vdwg.mxu0
      %698 = vmatprep.subr.bf16.mxu0 0
      %699 = vmatpush1.bf16.msra.mxu0 %v575
      %700 = vmatprep.subr.bf16.mxu0 0
      %701 = vmatpush1.bf16.msra.mxu0 %v574
      %702 = vmatprep.subr.bf16.mxu0 0
      %703 = vmatpush1.bf16.msra.mxu0 %v573
      %704 = vmatprep.subr.bf16.mxu0 0
      %705 = vmatpush1.bf16.msra.mxu0 %v572
      %706 = vmatprep.subr.bf16.mxu0 0
      %707 = vmatpush1.bf16.msra.mxu0 %v571
      %708 = vmatprep.subr.bf16.mxu0 0
      %709 = vmatpush1.bf16.msra.mxu0 %v570
      %710 = vmatprep.subr.bf16.mxu0 0
      %711 = vmatpush1.bf16.msra.mxu0 %v569
      %712 = vmatprep.subr.bf16.mxu0 0
      %713 = vmatpush1.bf16.msra.mxu0 %v568
      %714 = vmatprep.subr.bf16.mxu0 0
      %715 = vmatpush2.bf16.msra.mxu0 0
      %716 = vmatprep.subr.bf16.mxu0 0
      %717 = vmatpush2.bf16.msra.mxu0 0
      %718 = vmatprep.subr.bf16.mxu0 0
      %719 = vmatpush2.bf16.msra.mxu0 0
      %720 = vmatprep.subr.bf16.mxu0 0
      %721 = vmatpush2.bf16.msra.mxu0 0
      %722 = vmatprep.subr.bf16.mxu0 0
      %723 = vmatpush2.bf16.msra.mxu0 0
      %724 = vmatprep.subr.bf16.mxu0 0
      %725 = vmatpush2.bf16.msra.mxu0 0
      %726 = vmatprep.subr.bf16.mxu0 0
      %727 = vmatpush2.bf16.msra.mxu0 0
      %728 = vmatprep.subr.bf16.mxu0 0
      %729 = vmatpush2.bf16.msra.mxu0 0
      %730 = vmatprep.mubr.bf16.mxu0 0
      %731 = vmatmul.mubr.bf16.gmra.mxu0 %v370
      %v732 = vpop.f32.mrf.mxu0
      %v733 = vadd.f32 %v692, %v732
      %v734 = vpop.f32.mrf.mxu0
      %v735 = vpop.f32.mrf.mxu0
      %v736 = vadd.f32 %v695, %v735
      %v737 = vpop.f32.mrf.mxu0
      %738 = vdwg.mxu0
      %v739 = vpack.c.bf16 %v736, %v733
      %v741 = vunpack.c.l.b16 %v739
      %v742 = vunpack.c.h.b16 %v739
      %v743 = vpack.c.b16 %v741, %v741
      %v744 = vpack.c.b16 %v742, %v742
      %747 = vst [vmem:[%s245] sm:$0xf] %v743
      %748 = vst [vmem:[%s245 + $0x4] sm:$0xf] %v744
      %v749 = vld [vmem:[%s250] sm:$0x1]
      %v750 = vadd.f32 %v733, %v736
      %v751 = vrot.slane %v750, 4
      %v752 = vadd.f32 %v750, %v751
      %v753 = vrot.slane %v752, 2
      %v754 = vadd.f32 %v752, %v753
      %v755 = vrot.slane %v754, 1
      %v756 = vadd.f32 %v754, %v755
      %v757 = vadd.f32 %v749, %v756
      %758 = vst [vmem:[%s250] sm:$0x1] %v757
      %v759 = vld [vmem:[%s250 + $0x1] sm:$0x1]
      %v760 = vmul.f32 %v733, %v733
      %v761 = vmul.f32 %v736, %v736
      %v762 = vadd.f32 %v760, %v761
      %v763 = vrot.slane %v762, 4
      %v764 = vadd.f32 %v762, %v763
      %v765 = vrot.slane %v764, 2
      %v766 = vadd.f32 %v764, %v765
      %v767 = vrot.slane %v766, 1
      %v768 = vadd.f32 %v766, %v767
      %v769 = vadd.f32 %v759, %v768
      %770 = vst [vmem:[%s250 + $0x1] sm:$0x1] %v769
      %s771 = smul.u32 2, %s21
      %p772 = scmp.lt.s32.totalorder %s20, 1
      %s773 = scalar_select %p772, %s20, 1
      %p774 = scmp.lt.s32.totalorder %s771, 1
      %s775 = scalar_select %p774, %s771, 1
      %s776 = smul.addr %s773, 2
      %s777 = sadd.s32 %s775, %s776
      %s778 = smul.addr %s777, 4
      %s779 = scalar_lea.vmem %s3, %s778
      %p780 = scmp.lt.s32.totalorder %s20, 1
      %s781 = scalar_select %p780, %s20, 1
      %s782 = smul.addr %s781, 2
      %s783 = scalar_lea.vmem %s4, %s782
      // Predicated region
      $region37: #{discriminator_forward.9} parent=31 // pred_check
        %p784 = pneg %p118
      $region38: #{discriminator_forward.9} parent=31 // pred_check_branch
        %786 = sbr.rel (%p784) target = $region40
      $region39: #{discriminator_forward.9} parent=31 // pred_region
        %s787 = smul.u32 2, %s21
      $region40: #{discriminator_forward.9} parent=31 // pred_fallthru
        _
      // Predicated region
      $region41: #{discriminator_forward.9} parent=31 // pred_check
        %p788 = pneg %p144
      $region42: #{discriminator_forward.9} parent=31 // pred_check_branch
        %790 = sbr.rel (%p788) target = $region44
      $region43: #{discriminator_forward.9} parent=31 // pred_region
        _
      $region44: #{discriminator_forward.9} parent=31 // pred_fallthru
        _
    $region32: #{discriminator_forward.9} parent=5 // pred_fallthru
      _
    %p791 = scmp.le.s32.totalorder 2, %s11
    // Predicated region
    $region45: #{discriminator_forward.9} parent=5 // pred_check
      %p792 = pneg %p791
    $region46: #{discriminator_forward.9} parent=5 // pred_check_branch
      %794 = sbr.rel (%p792) target = $region48
    $region47: #{discriminator_forward.9} parent=5 // pred_region
      %s795 = ssub.s32 %s11, 2
      // Predicated region
      $region49: #{discriminator_forward.9} parent=47 // pred_check
        %p796 = pneg %p124
      $region50: #{discriminator_forward.9} parent=47 // pred_check_branch
        %798 = sbr.rel (%p796) target = $region52
      $region51: #{discriminator_forward.9} parent=47 // pred_region
        %s799 = smul.u32 2, %s23
        %p800 = scmp.lt.s32.totalorder %s22, 1
        %s801 = scalar_select %p800, %s22, 1
        %p802 = scmp.lt.s32.totalorder %s799, 1
        %s803 = scalar_select %p802, %s799, 1
        %s804 = smul.addr %s801, 2
        %s805 = sadd.s32 %s803, %s804
        %s806 = smul.addr %s805, 4
        %s807 = scalar_lea.vmem %s3, %s806
      $region52: #{discriminator_forward.9} parent=47 // pred_fallthru
        _
      // Predicated region
      $region53: #{discriminator_forward.9} parent=47 // pred_check
        %p808 = pneg %p150
      $region54: #{discriminator_forward.9} parent=47 // pred_check_branch
        %810 = sbr.rel (%p808) target = $region56
      $region55: #{discriminator_forward.9} parent=47 // pred_region
        %p811 = scmp.lt.s32.totalorder %s22, 1
        %s812 = scalar_select %p811, %s22, 1
        %s813 = smul.addr %s812, 2
        %s814 = scalar_lea.vmem %s4, %s813
      $region56: #{discriminator_forward.9} parent=47 // pred_fallthru
        _
    $region48: #{discriminator_forward.9} parent=5 // pred_fallthru
      _
  $region6: #{discriminator_forward.9} parent=0 // loop_footer
    %s15 = sadd.s32 1, %s11
  $region7: #{discriminator_forward.9} parent=0 // loop_footer_branch
    %10 = sbr.rel target = $region3
  $region8: #{discriminator_forward.9} parent=0 // loop_exit
    _

// kernel: discriminator_forward.12
$region0: #{discriminator_forward.12}
  #allocation0 [shape = 'u32[]', space=smem, size = 0x4, offset = 0x4, fixed_abs, tag = 'smem constant byte address 0x4 - core index']
  #allocation1 [shape = 'u32[144,128]{1,0:T(1,128)}', space=vmem, size = 0x12000, scoped, tag = 'internal scratch']
  %s0 = inlined_call_operand.vmem [shape: bf16[2,8,256], index: 0, kind: input, shape index: {}]
  %s1 = inlined_call_operand.vmem [shape: f32[2,2,256], index: 1, kind: input, shape index: {}]
  %s2 = inlined_call_operand.vmem [shape: bf16[2,8,256], index: 2, kind: output, shape index: {}]
  %s3 = sld [smem:[#allocation0]]
  $region41: #{discriminator_forward.12} parent=0
    _
  %s5 = ssub.s32 1, %s3
  %s6 = scalar_select 0, %s5, %s3
  loop: start=0, step=1, limit=4
  $region2: #{discriminator_forward.12} parent=0 // loop_pre_header
    _
  $region3: #{discriminator_forward.12} parent=0 // loop_header
    %s8 = sphi 0, %s12
    %p9 = scmp.ge.s32.totalorder %s8, 4
    %s15 = sphi 0, %s27
    %s16 = sphi 0, %s23
    %s17 = sphi 0, %s15
    %s18 = sphi 0, %s16
    %s19 = sphi 0, %s17
    %s20 = sphi 0, %s18
    %s32 = sphi 0, %s34
    %s35 = sphi 0, %s32
    %s36 = sphi 0, %s35
    %s52 = sphi 0, %s36
    %s58 = sphi 0, %s60
    %s61 = sphi 0, %s58
    %s62 = sphi 0, %s61
    %s78 = sphi 0, %s62
    %s86 = sphi 0, %s88
    %s89 = sphi 0, %s86
    %s90 = sphi 0, %s89
    %s106 = sphi 0, %s90
  $region4: #{discriminator_forward.12} parent=0 // loop_header_branch
    %11 = sbr.rel (%p9) target = $region8
  $region5: #{discriminator_forward.12} parent=0 // loop_body
    %s13 = ssub.s32 %s8, 1
    %s14 = ssub.s32 %s8, 2
    %s21 = sadd.s32 1, %s16
    %p22 = scmp.ge.s32.totalorder %s21, 1
    %s23 = scalar_select %p22, 0, %s21
    %s24 = sadd.s32 1, %s15
    %s25 = scalar_select %p22, %s24, %s15
    %p26 = scmp.ge.s32.totalorder %s25, 2
    %s27 = scalar_select %p26, 0, %s25
    %s28 = ssub.s32 %s15, %s27
    %s29 = ssub.s32 %s16, %s23
    %s30 = sor.u32 %s28, %s29
    %p31 = scmp.eq.s32.totalorder %s30, 0
    %s33 = sadd.s32 %s32, 1
    %s34 = scalar_select %p31, %s32, %s33
    %p37 = pneg %p31
    %p38 = scmp.eq.s32.totalorder %s8, 1
    %p39 = por %p37, %p38
    %p40 = scmp.ne.s32.totalorder %s32, %s35
    %p41 = scmp.eq.s32.totalorder %s8, 0
    %p42 = por %p40, %p41
    %p43 = scmp.ne.s32.totalorder %s32, %s35
    %p44 = scmp.eq.s32.totalorder %s13, 1
    %p45 = por %p43, %p44
    %p46 = scmp.ne.s32.totalorder %s35, %s36
    %p47 = scmp.eq.s32.totalorder %s13, 0
    %p48 = por %p46, %p47
    %p49 = scmp.ne.s32.totalorder %s35, %s36
    %p50 = scmp.eq.s32.totalorder %s14, 1
    %p51 = por %p49, %p50
    %p53 = scmp.ne.s32.totalorder %s36, %s52
    %p54 = scmp.eq.s32.totalorder %s14, 0
    %p55 = por %p53, %p54
    %s56 = ssub.s32 %s15, %s27
    %p57 = scmp.eq.s32.totalorder %s56, 0
    %s59 = sadd.s32 %s58, 1
    %s60 = scalar_select %p57, %s58, %s59
    %p63 = pneg %p57
    %p64 = scmp.eq.s32.totalorder %s8, 1
    %p65 = por %p63, %p64
    %p66 = scmp.ne.s32.totalorder %s58, %s61
    %p67 = scmp.eq.s32.totalorder %s8, 0
    %p68 = por %p66, %p67
    %p69 = scmp.ne.s32.totalorder %s58, %s61
    %p70 = scmp.eq.s32.totalorder %s13, 1
    %p71 = por %p69, %p70
    %p72 = scmp.ne.s32.totalorder %s61, %s62
    %p73 = scmp.eq.s32.totalorder %s13, 0
    %p74 = por %p72, %p73
    %p75 = scmp.ne.s32.totalorder %s61, %s62
    %p76 = scmp.eq.s32.totalorder %s14, 1
    %p77 = por %p75, %p76
    %p79 = scmp.ne.s32.totalorder %s62, %s78
    %p80 = scmp.eq.s32.totalorder %s14, 0
    %p81 = por %p79, %p80
    %s82 = ssub.s32 %s15, %s27
    %s83 = ssub.s32 %s16, %s23
    %s84 = sor.u32 %s82, %s83
    %p85 = scmp.eq.s32.totalorder %s84, 0
    %s87 = sadd.s32 %s86, 1
    %s88 = scalar_select %p85, %s86, %s87
    %p91 = pneg %p85
    %p92 = scmp.eq.s32.totalorder %s8, 1
    %p93 = por %p91, %p92
    %p94 = scmp.ne.s32.totalorder %s86, %s89
    %p95 = scmp.eq.s32.totalorder %s8, 0
    %p96 = por %p94, %p95
    %p97 = scmp.ne.s32.totalorder %s86, %s89
    %p98 = scmp.eq.s32.totalorder %s13, 1
    %p99 = por %p97, %p98
    %p100 = scmp.ne.s32.totalorder %s89, %s90
    %p101 = scmp.eq.s32.totalorder %s13, 0
    %p102 = por %p100, %p101
    %p103 = scmp.ne.s32.totalorder %s89, %s90
    %p104 = scmp.eq.s32.totalorder %s14, 1
    %p105 = por %p103, %p104
    %p107 = scmp.ne.s32.totalorder %s90, %s106
    %p108 = scmp.eq.s32.totalorder %s14, 0
    %p109 = por %p107, %p108
    %p110 = scmp.le.s32.totalorder 1, %s8
    %p111 = scmp.lt.s32.totalorder %s8, 3
    %p112 = pnand %p110, %p111
    %p113 = pneg %p112
    // Predicated region
    $region9: #{discriminator_forward.12} parent=5 // pred_check
      _
    $region10: #{discriminator_forward.12} parent=5 // pred_check_branch
      %115 = sbr.rel (%p112) target = $region12
    $region11: #{discriminator_forward.12} parent=5 // pred_region
      %s116 = ssub.s32 %s8, 1
    $region12: #{discriminator_forward.12} parent=5 // pred_fallthru
      _
    %p117 = scmp.lt.s32.totalorder %s8, 2
    // Predicated region
    $region13: #{discriminator_forward.12} parent=5 // pred_check
      %p118 = pneg %p117
    $region14: #{discriminator_forward.12} parent=5 // pred_check_branch
      %120 = sbr.rel (%p118) target = $region16
    $region15: #{discriminator_forward.12} parent=5 // pred_region
      // Predicated region
      $region17: #{discriminator_forward.12} parent=15 // pred_check
        %p121 = pneg %p42
      $region18: #{discriminator_forward.12} parent=15 // pred_check_branch
        %123 = sbr.rel (%p121) target = $region20
      $region19: #{discriminator_forward.12} parent=15 // pred_region
        %p124 = scmp.lt.s32.totalorder %s15, 1
        %s125 = scalar_select %p124, %s15, 1
        %p126 = scmp.lt.s32.totalorder %s16, 0
        %s127 = scalar_select %p126, %s16, 0
        %s128 = smul.addr %s127, 2
        %s129 = smul.addr %s125, 2
        %s130 = sadd.s32 %s128, %s129
        %s131 = smul.addr %s130, 4
        %s132 = scalar_lea.vmem %s0, %s131
      $region20: #{discriminator_forward.12} parent=15 // pred_fallthru
        _
      // Predicated region
      $region21: #{discriminator_forward.12} parent=15 // pred_check
        %p133 = pneg %p68
      $region22: #{discriminator_forward.12} parent=15 // pred_check_branch
        %135 = sbr.rel (%p133) target = $region24
      $region23: #{discriminator_forward.12} parent=15 // pred_region
        %p136 = scmp.lt.s32.totalorder %s15, 1
        %s137 = scalar_select %p136, %s15, 1
        %s138 = smul.addr %s137, 2
        %s139 = smul.addr %s138, 2
        %s140 = scalar_lea.vmem %s1, %s139
      $region24: #{discriminator_forward.12} parent=15 // pred_fallthru
        _
    $region16: #{discriminator_forward.12} parent=5 // pred_fallthru
      _
    %p141 = scmp.le.s32.totalorder 1, %s8
    %p142 = scmp.lt.s32.totalorder %s8, 3
    %p143 = pnand %p141, %p142
    %p144 = pneg %p143
    // Predicated region
    $region25: #{discriminator_forward.12} parent=5 // pred_check
      _
    $region26: #{discriminator_forward.12} parent=5 // pred_check_branch
      %146 = sbr.rel (%p143) target = $region28
    $region27: #{discriminator_forward.12} parent=5 // pred_region
      %s147 = ssub.s32 %s8, 1
      %p148 = scmp.lt.s32.totalorder %s17, 1
      %s149 = scalar_select %p148, %s17, 1
      %p150 = scmp.lt.s32.totalorder %s18, 0
      %s151 = scalar_select %p150, %s18, 0
      %s152 = smul.addr %s151, 2
      %s153 = smul.addr %s149, 2
      %s154 = sadd.s32 %s152, %s153
      %s155 = smul.addr %s154, 4
      %s156 = scalar_lea.vmem %s0, %s155
      %p157 = pneg %p48
      %p158 = pneg %p45
      %p159 = scmp.lt.s32.totalorder %s17, 1
      %s160 = scalar_select %p159, %s17, 1
      %s161 = smul.addr %s160, 2
      %s162 = smul.addr %s161, 2
      %s163 = scalar_lea.vmem %s1, %s162
      %p164 = pneg %p74
      %p165 = pneg %p71
      %p166 = pneg %p102
      %p167 = pneg %p99
      %p168 = scmp.lt.s32.totalorder %s17, 1
      %s169 = scalar_select %p168, %s17, 1
      %p170 = scmp.lt.s32.totalorder %s18, 0
      %s171 = scalar_select %p170, %s18, 0
      %s172 = smul.addr %s171, 2
      %s173 = smul.addr %s169, 2
      %s174 = sadd.s32 %s172, %s173
      %s175 = smul.addr %s174, 4
      %s176 = scalar_lea.vmem %s2, %s175
      %p177 = scmp.lt.s32.totalorder %s17, 1
      %s178 = scalar_select %p177, %s17, 1
      %p179 = scmp.lt.s32.totalorder %s18, 0
      %s180 = scalar_select %p179, %s18, 0
      %s181 = smul.addr %s180, 2
      %s182 = smul.addr %s178, 2
      %s183 = sadd.s32 %s181, %s182
      %s184 = smul.addr %s183, 4
      %s185 = scalar_lea.vmem %s0, %s184
      %p186 = scmp.lt.s32.totalorder %s17, 1
      %s187 = scalar_select %p186, %s17, 1
      %s188 = smul.addr %s187, 2
      %s189 = smul.addr %s188, 2
      %s190 = scalar_lea.vmem %s1, %s189
      %p191 = scmp.lt.s32.totalorder %s17, 1
      %s192 = scalar_select %p191, %s17, 1
      %p193 = scmp.lt.s32.totalorder %s18, 0
      %s194 = scalar_select %p193, %s18, 0
      %s195 = smul.addr %s194, 2
      %s196 = smul.addr %s192, 2
      %s197 = sadd.s32 %s195, %s196
      %s198 = smul.addr %s197, 4
      %s199 = scalar_lea.vmem %s2, %s198
      %v200 = vld [vmem:[%s190] ss:$2 sm:$0x3]
      %v201 = vmul.f32 %v200, 0.25
      %s202 = scalar_lea.vmem %s190, 1
      %v203 = vld [vmem:[%s202] ss:$2 sm:$0x3]
      %v204 = vmul.f32 %v203, 0.25
      %v205 = vmul.f32 %v201, %v201
      %v206 = vsub.f32 %v204, %v205
      %v207 = vmax.f32 %v206, 0.0
      %v208 = vadd.f32 %v207, 1e-05
      %v209 = vrsqrt.pop %v208
      %v210 = vld [vmem:[%s185] sm:$0xff]
      %v211 = vunpack.c.l.bf16 %v210
      %v212 = vunpack.c.h.bf16 %v210
      %v214 = vlaneseq
      %v215 = vshrl.u32 %v214, 7
      %v216 = vsub.s32 0, %v215
      %v217 = vrot.slane %v201, %v216
      %v218 = vlaneseq
      %v219 = vshrl.u32 %v218, 7
      %v220 = vsub.s32 1, %v219
      %v221 = vrot.slane %v201, %v220
      %v224 = vsub.f32 %v211, %v217
      %v225 = vsub.f32 %v212, %v221
      %v227 = vlaneseq
      %v228 = vshrl.u32 %v227, 7
      %v229 = vsub.s32 0, %v228
      %v230 = vrot.slane %v209, %v229
      %v231 = vlaneseq
      %v232 = vshrl.u32 %v231, 7
      %v233 = vsub.s32 1, %v232
      %v234 = vrot.slane %v209, %v233
      %v237 = vmul.f32 %v224, %v230
      %v238 = vmul.f32 %v225, %v234
      %vm239 = vcmp.ge.f32.partialorder %v237, 0.0
      %vm240 = vcmp.ge.f32.partialorder %v238, 0.0
      %v241 = vmul.f32 %v237, 0.2
      %v242 = vmul.f32 %v238, 0.2
      %v243 = vsel %vm239, %v237, %v241
      %v244 = vsel %vm240, %v238, %v242
      %v245 = vpack.c.bf16 %v243, %v243
      %v246 = vpack.c.bf16 %v244, %v244
      %v249 = vunpack.c.l.b16 %v245
      %v250 = vunpack.c.l.b16 %v246
      %v251 = vpack.c.b16 %v250, %v249
      %253 = vst [vmem:[%s199] sm:$0xff] %v251
      %p254 = scmp.lt.s32.totalorder %s17, 1
      %s255 = scalar_select %p254, %s17, 1
      %p256 = scmp.lt.s32.totalorder %s18, 0
      %s257 = scalar_select %p256, %s18, 0
      %s258 = smul.addr %s257, 2
      %s259 = smul.addr %s255, 2
      %s260 = sadd.s32 %s258, %s259
      %s261 = smul.addr %s260, 4
      %s262 = scalar_lea.vmem %s2, %s261
      // Predicated region
      $region29: #{discriminator_forward.12} parent=27 // pred_check
        %p263 = pneg %p99
      $region30: #{discriminator_forward.12} parent=27 // pred_check_branch
        %265 = sbr.rel (%p263) target = $region32
      $region31: #{discriminator_forward.12} parent=27 // pred_region
        _
      $region32: #{discriminator_forward.12} parent=27 // pred_fallthru
        _
    $region28: #{discriminator_forward.12} parent=5 // pred_fallthru
      _
    %p266 = scmp.le.s32.totalorder 2, %s8
    // Predicated region
    $region33: #{discriminator_forward.12} parent=5 // pred_check
      %p267 = pneg %p266
    $region34: #{discriminator_forward.12} parent=5 // pred_check_branch
      %269 = sbr.rel (%p267) target = $region36
    $region35: #{discriminator_forward.12} parent=5 // pred_region
      %s270 = ssub.s32 %s8, 2
      // Predicated region
      $region37: #{discriminator_forward.12} parent=35 // pred_check
        %p271 = pneg %p105
      $region38: #{discriminator_forward.12} parent=35 // pred_check_branch
        %273 = sbr.rel (%p271) target = $region40
      $region39: #{discriminator_forward.12} parent=35 // pred_region
        %p274 = scmp.lt.s32.totalorder %s19, 1
        %s275 = scalar_select %p274, %s19, 1
        %p276 = scmp.lt.s32.totalorder %s20, 0
        %s277 = scalar_select %p276, %s20, 0
        %s278 = smul.addr %s277, 2
        %s279 = smul.addr %s275, 2
        %s280 = sadd.s32 %s278, %s279
        %s281 = smul.addr %s280, 4
        %s282 = scalar_lea.vmem %s2, %s281
      $region40: #{discriminator_forward.12} parent=35 // pred_fallthru
        _
    $region36: #{discriminator_forward.12} parent=5 // pred_fallthru
      _
  $region6: #{discriminator_forward.12} parent=0 // loop_footer
    %s12 = sadd.s32 1, %s8
  $region7: #{discriminator_forward.12} parent=0 // loop_footer_branch
    %7 = sbr.rel target = $region3
  $region8: #{discriminator_forward.12} parent=0 // loop_exit
    _

// kernel: discriminator_forward.14
$region0: #{discriminator_forward.14}
  #allocation0 [shape = 'u32[]', space=smem, size = 0x4, offset = 0x4, fixed_abs, tag = 'smem constant byte address 0x4 - core index']
  #allocation1 [shape = 'u32[144,128]{1,0:T(1,128)}', space=vmem, size = 0x12000, scoped, tag = 'internal scratch']
  %s0 = inlined_call_operand.vmem [shape: bf16[2,8,512], index: 0, kind: input, shape index: {}]
  %s1 = inlined_call_operand.vmem [shape: f32[2,2,512], index: 1, kind: input, shape index: {}]
  %s2 = inlined_call_operand.vmem [shape: bf16[2,8,512], index: 2, kind: output, shape index: {}]
  %s3 = sld [smem:[#allocation0]]
  $region41: #{discriminator_forward.14} parent=0
    _
  %s5 = ssub.s32 1, %s3
  %s6 = scalar_select 0, %s5, %s3
  loop: start=0, step=1, limit=4
  $region2: #{discriminator_forward.14} parent=0 // loop_pre_header
    _
  $region3: #{discriminator_forward.14} parent=0 // loop_header
    %s8 = sphi 0, %s12
    %p9 = scmp.ge.s32.totalorder %s8, 4
    %s15 = sphi 0, %s27
    %s16 = sphi 0, %s23
    %s17 = sphi 0, %s15
    %s18 = sphi 0, %s16
    %s19 = sphi 0, %s17
    %s20 = sphi 0, %s18
    %s32 = sphi 0, %s34
    %s35 = sphi 0, %s32
    %s36 = sphi 0, %s35
    %s52 = sphi 0, %s36
    %s58 = sphi 0, %s60
    %s61 = sphi 0, %s58
    %s62 = sphi 0, %s61
    %s78 = sphi 0, %s62
    %s86 = sphi 0, %s88
    %s89 = sphi 0, %s86
    %s90 = sphi 0, %s89
    %s106 = sphi 0, %s90
  $region4: #{discriminator_forward.14} parent=0 // loop_header_branch
    %11 = sbr.rel (%p9) target = $region8
  $region5: #{discriminator_forward.14} parent=0 // loop_body
    %s13 = ssub.s32 %s8, 1
    %s14 = ssub.s32 %s8, 2
    %s21 = sadd.s32 1, %s16
    %p22 = scmp.ge.s32.totalorder %s21, 1
    %s23 = scalar_select %p22, 0, %s21
    %s24 = sadd.s32 1, %s15
    %s25 = scalar_select %p22, %s24, %s15
    %p26 = scmp.ge.s32.totalorder %s25, 2
    %s27 = scalar_select %p26, 0, %s25
    %s28 = ssub.s32 %s15, %s27
    %s29 = ssub.s32 %s16, %s23
    %s30 = sor.u32 %s28, %s29
    %p31 = scmp.eq.s32.totalorder %s30, 0
    %s33 = sadd.s32 %s32, 1
    %s34 = scalar_select %p31, %s32, %s33
    %p37 = pneg %p31
    %p38 = scmp.eq.s32.totalorder %s8, 1
    %p39 = por %p37, %p38
    %p40 = scmp.ne.s32.totalorder %s32, %s35
    %p41 = scmp.eq.s32.totalorder %s8, 0
    %p42 = por %p40, %p41
    %p43 = scmp.ne.s32.totalorder %s32, %s35
    %p44 = scmp.eq.s32.totalorder %s13, 1
    %p45 = por %p43, %p44
    %p46 = scmp.ne.s32.totalorder %s35, %s36
    %p47 = scmp.eq.s32.totalorder %s13, 0
    %p48 = por %p46, %p47
    %p49 = scmp.ne.s32.totalorder %s35, %s36
    %p50 = scmp.eq.s32.totalorder %s14, 1
    %p51 = por %p49, %p50
    %p53 = scmp.ne.s32.totalorder %s36, %s52
    %p54 = scmp.eq.s32.totalorder %s14, 0
    %p55 = por %p53, %p54
    %s56 = ssub.s32 %s15, %s27
    %p57 = scmp.eq.s32.totalorder %s56, 0
    %s59 = sadd.s32 %s58, 1
    %s60 = scalar_select %p57, %s58, %s59
    %p63 = pneg %p57
    %p64 = scmp.eq.s32.totalorder %s8, 1
    %p65 = por %p63, %p64
    %p66 = scmp.ne.s32.totalorder %s58, %s61
    %p67 = scmp.eq.s32.totalorder %s8, 0
    %p68 = por %p66, %p67
    %p69 = scmp.ne.s32.totalorder %s58, %s61
    %p70 = scmp.eq.s32.totalorder %s13, 1
    %p71 = por %p69, %p70
    %p72 = scmp.ne.s32.totalorder %s61, %s62
    %p73 = scmp.eq.s32.totalorder %s13, 0
    %p74 = por %p72, %p73
    %p75 = scmp.ne.s32.totalorder %s61, %s62
    %p76 = scmp.eq.s32.totalorder %s14, 1
    %p77 = por %p75, %p76
    %p79 = scmp.ne.s32.totalorder %s62, %s78
    %p80 = scmp.eq.s32.totalorder %s14, 0
    %p81 = por %p79, %p80
    %s82 = ssub.s32 %s15, %s27
    %s83 = ssub.s32 %s16, %s23
    %s84 = sor.u32 %s82, %s83
    %p85 = scmp.eq.s32.totalorder %s84, 0
    %s87 = sadd.s32 %s86, 1
    %s88 = scalar_select %p85, %s86, %s87
    %p91 = pneg %p85
    %p92 = scmp.eq.s32.totalorder %s8, 1
    %p93 = por %p91, %p92
    %p94 = scmp.ne.s32.totalorder %s86, %s89
    %p95 = scmp.eq.s32.totalorder %s8, 0
    %p96 = por %p94, %p95
    %p97 = scmp.ne.s32.totalorder %s86, %s89
    %p98 = scmp.eq.s32.totalorder %s13, 1
    %p99 = por %p97, %p98
    %p100 = scmp.ne.s32.totalorder %s89, %s90
    %p101 = scmp.eq.s32.totalorder %s13, 0
    %p102 = por %p100, %p101
    %p103 = scmp.ne.s32.totalorder %s89, %s90
    %p104 = scmp.eq.s32.totalorder %s14, 1
    %p105 = por %p103, %p104
    %p107 = scmp.ne.s32.totalorder %s90, %s106
    %p108 = scmp.eq.s32.totalorder %s14, 0
    %p109 = por %p107, %p108
    %p110 = scmp.le.s32.totalorder 1, %s8
    %p111 = scmp.lt.s32.totalorder %s8, 3
    %p112 = pnand %p110, %p111
    %p113 = pneg %p112
    // Predicated region
    $region9: #{discriminator_forward.14} parent=5 // pred_check
      _
    $region10: #{discriminator_forward.14} parent=5 // pred_check_branch
      %115 = sbr.rel (%p112) target = $region12
    $region11: #{discriminator_forward.14} parent=5 // pred_region
      %s116 = ssub.s32 %s8, 1
    $region12: #{discriminator_forward.14} parent=5 // pred_fallthru
      _
    %p117 = scmp.lt.s32.totalorder %s8, 2
    // Predicated region
    $region13: #{discriminator_forward.14} parent=5 // pred_check
      %p118 = pneg %p117
    $region14: #{discriminator_forward.14} parent=5 // pred_check_branch
      %120 = sbr.rel (%p118) target = $region16
    $region15: #{discriminator_forward.14} parent=5 // pred_region
      // Predicated region
      $region17: #{discriminator_forward.14} parent=15 // pred_check
        %p121 = pneg %p42
      $region18: #{discriminator_forward.14} parent=15 // pred_check_branch
        %123 = sbr.rel (%p121) target = $region20
      $region19: #{discriminator_forward.14} parent=15 // pred_region
        %p124 = scmp.lt.s32.totalorder %s15, 1
        %s125 = scalar_select %p124, %s15, 1
        %p126 = scmp.lt.s32.totalorder %s16, 0
        %s127 = scalar_select %p126, %s16, 0
        %s128 = smul.addr %s127, 4
        %s129 = smul.addr %s125, 4
        %s130 = sadd.s32 %s128, %s129
        %s131 = smul.addr %s130, 4
        %s132 = scalar_lea.vmem %s0, %s131
      $region20: #{discriminator_forward.14} parent=15 // pred_fallthru
        _
      // Predicated region
      $region21: #{discriminator_forward.14} parent=15 // pred_check
        %p133 = pneg %p68
      $region22: #{discriminator_forward.14} parent=15 // pred_check_branch
        %135 = sbr.rel (%p133) target = $region24
      $region23: #{discriminator_forward.14} parent=15 // pred_region
        %p136 = scmp.lt.s32.totalorder %s15, 1
        %s137 = scalar_select %p136, %s15, 1
        %s138 = smul.addr %s137, 4
        %s139 = smul.addr %s138, 2
        %s140 = scalar_lea.vmem %s1, %s139
      $region24: #{discriminator_forward.14} parent=15 // pred_fallthru
        _
    $region16: #{discriminator_forward.14} parent=5 // pred_fallthru
      _
    %p141 = scmp.le.s32.totalorder 1, %s8
    %p142 = scmp.lt.s32.totalorder %s8, 3
    %p143 = pnand %p141, %p142
    %p144 = pneg %p143
    // Predicated region
    $region25: #{discriminator_forward.14} parent=5 // pred_check
      _
    $region26: #{discriminator_forward.14} parent=5 // pred_check_branch
      %146 = sbr.rel (%p143) target = $region28
    $region27: #{discriminator_forward.14} parent=5 // pred_region
      %s147 = ssub.s32 %s8, 1
      %p148 = scmp.lt.s32.totalorder %s17, 1
      %s149 = scalar_select %p148, %s17, 1
      %p150 = scmp.lt.s32.totalorder %s18, 0
      %s151 = scalar_select %p150, %s18, 0
      %s152 = smul.addr %s151, 4
      %s153 = smul.addr %s149, 4
      %s154 = sadd.s32 %s152, %s153
      %s155 = smul.addr %s154, 4
      %s156 = scalar_lea.vmem %s0, %s155
      %p157 = pneg %p48
      %p158 = pneg %p45
      %p159 = scmp.lt.s32.totalorder %s17, 1
      %s160 = scalar_select %p159, %s17, 1
      %s161 = smul.addr %s160, 4
      %s162 = smul.addr %s161, 2
      %s163 = scalar_lea.vmem %s1, %s162
      %p164 = pneg %p74
      %p165 = pneg %p71
      %p166 = pneg %p102
      %p167 = pneg %p99
      %p168 = scmp.lt.s32.totalorder %s17, 1
      %s169 = scalar_select %p168, %s17, 1
      %p170 = scmp.lt.s32.totalorder %s18, 0
      %s171 = scalar_select %p170, %s18, 0
      %s172 = smul.addr %s171, 4
      %s173 = smul.addr %s169, 4
      %s174 = sadd.s32 %s172, %s173
      %s175 = smul.addr %s174, 4
      %s176 = scalar_lea.vmem %s2, %s175
      %p177 = scmp.lt.s32.totalorder %s17, 1
      %s178 = scalar_select %p177, %s17, 1
      %p179 = scmp.lt.s32.totalorder %s18, 0
      %s180 = scalar_select %p179, %s18, 0
      %s181 = smul.addr %s180, 4
      %s182 = smul.addr %s178, 4
      %s183 = sadd.s32 %s181, %s182
      %s184 = smul.addr %s183, 4
      %s185 = scalar_lea.vmem %s0, %s184
      %p186 = scmp.lt.s32.totalorder %s17, 1
      %s187 = scalar_select %p186, %s17, 1
      %s188 = smul.addr %s187, 4
      %s189 = smul.addr %s188, 2
      %s190 = scalar_lea.vmem %s1, %s189
      %p191 = scmp.lt.s32.totalorder %s17, 1
      %s192 = scalar_select %p191, %s17, 1
      %p193 = scmp.lt.s32.totalorder %s18, 0
      %s194 = scalar_select %p193, %s18, 0
      %s195 = smul.addr %s194, 4
      %s196 = smul.addr %s192, 4
      %s197 = sadd.s32 %s195, %s196
      %s198 = smul.addr %s197, 4
      %s199 = scalar_lea.vmem %s2, %s198
      %v200 = vld [vmem:[%s190] ss:$2 sm:$0xf]
      %v201 = vmul.f32 %v200, 0.25
      %s202 = scalar_lea.vmem %s190, 1
      %v203 = vld [vmem:[%s202] ss:$2 sm:$0xf]
      %v204 = vmul.f32 %v203, 0.25
      %v205 = vmul.f32 %v201, %v201
      %v206 = vsub.f32 %v204, %v205
      %v207 = vmax.f32 %v206, 0.0
      %v208 = vadd.f32 %v207, 1e-05
      %v209 = vrsqrt.pop %v208
      %v210 = vld [vmem:[%s185] sm:$0xff]
      %v211 = vld [vmem:[%s185 + $0x8] sm:$0xff]
      %v212 = vunpack.c.l.bf16 %v210
      %v213 = vunpack.c.h.bf16 %v210
      %v214 = vunpack.c.l.bf16 %v211
      %v215 = vunpack.c.h.bf16 %v211
      %v217 = vlaneseq
      %v218 = vshrl.u32 %v217, 7
      %v219 = vsub.s32 0, %v218
      %v220 = vrot.slane %v201, %v219
      %v221 = vlaneseq
      %v222 = vshrl.u32 %v221, 7
      %v223 = vsub.s32 1, %v222
      %v224 = vrot.slane %v201, %v223
      %v225 = vlaneseq
      %v226 = vshrl.u32 %v225, 7
      %v227 = vsub.s32 2, %v226
      %v228 = vrot.slane %v201, %v227
      %v229 = vlaneseq
      %v230 = vshrl.u32 %v229, 7
      %v231 = vsub.s32 3, %v230
      %v232 = vrot.slane %v201, %v231
      %v237 = vsub.f32 %v212, %v220
      %v238 = vsub.f32 %v213, %v224
      %v239 = vsub.f32 %v214, %v228
      %v240 = vsub.f32 %v215, %v232
      %v242 = vlaneseq
      %v243 = vshrl.u32 %v242, 7
      %v244 = vsub.s32 0, %v243
      %v245 = vrot.slane %v209, %v244
      %v246 = vlaneseq
      %v247 = vshrl.u32 %v246, 7
      %v248 = vsub.s32 1, %v247
      %v249 = vrot.slane %v209, %v248
      %v250 = vlaneseq
      %v251 = vshrl.u32 %v250, 7
      %v252 = vsub.s32 2, %v251
      %v253 = vrot.slane %v209, %v252
      %v254 = vlaneseq
      %v255 = vshrl.u32 %v254, 7
      %v256 = vsub.s32 3, %v255
      %v257 = vrot.slane %v209, %v256
      %v262 = vmul.f32 %v237, %v245
      %v263 = vmul.f32 %v238, %v249
      %v264 = vmul.f32 %v239, %v253
      %v265 = vmul.f32 %v240, %v257
      %vm266 = vcmp.ge.f32.partialorder %v262, 0.0
      %vm267 = vcmp.ge.f32.partialorder %v263, 0.0
      %vm268 = vcmp.ge.f32.partialorder %v264, 0.0
      %vm269 = vcmp.ge.f32.partialorder %v265, 0.0
      %v270 = vmul.f32 %v262, 0.2
      %v271 = vmul.f32 %v263, 0.2
      %v272 = vmul.f32 %v264, 0.2
      %v273 = vmul.f32 %v265, 0.2
      %v274 = vsel %vm266, %v262, %v270
      %v275 = vsel %vm267, %v263, %v271
      %v276 = vsel %vm268, %v264, %v272
      %v277 = vsel %vm269, %v265, %v273
      %v278 = vpack.c.bf16 %v274, %v274
      %v279 = vpack.c.bf16 %v275, %v275
      %v280 = vpack.c.bf16 %v276, %v276
      %v281 = vpack.c.bf16 %v277, %v277
      %v286 = vunpack.c.l.b16 %v278
      %v287 = vunpack.c.l.b16 %v279
      %v288 = vunpack.c.l.b16 %v280
      %v289 = vunpack.c.l.b16 %v281
      %v290 = vpack.c.b16 %v287, %v286
      %v291 = vpack.c.b16 %v289, %v288
      %294 = vst [vmem:[%s199] sm:$0xff] %v290
      %295 = vst [vmem:[%s199 + $0x8] sm:$0xff] %v291
      %p296 = scmp.lt.s32.totalorder %s17, 1
      %s297 = scalar_select %p296, %s17, 1
      %p298 = scmp.lt.s32.totalorder %s18, 0
      %s299 = scalar_select %p298, %s18, 0
      %s300 = smul.addr %s299, 4
      %s301 = smul.addr %s297, 4
      %s302 = sadd.s32 %s300, %s301
      %s303 = smul.addr %s302, 4
      %s304 = scalar_lea.vmem %s2, %s303
      // Predicated region
      $region29: #{discriminator_forward.14} parent=27 // pred_check
        %p305 = pneg %p99
      $region30: #{discriminator_forward.14} parent=27 // pred_check_branch
        %307 = sbr.rel (%p305) target = $region32
      $region31: #{discriminator_forward.14} parent=27 // pred_region
        _
      $region32: #{discriminator_forward.14} parent=27 // pred_fallthru
        _
    $region28: #{discriminator_forward.14} parent=5 // pred_fallthru
      _
    %p308 = scmp.le.s32.totalorder 2, %s8
    // Predicated region
    $region33: #{discriminator_forward.14} parent=5 // pred_check
      %p309 = pneg %p308
    $region34: #{discriminator_forward.14} parent=5 // pred_check_branch
      %311 = sbr.rel (%p309) target = $region36
    $region35: #{discriminator_forward.14} parent=5 // pred_region
      %s312 = ssub.s32 %s8, 2
      // Predicated region
      $region37: #{discriminator_forward.14} parent=35 // pred_check
        %p313 = pneg %p105
      $region38: #{discriminator_forward.14} parent=35 // pred_check_branch
        %315 = sbr.rel (%p313) target = $region40
      $region39: #{discriminator_forward.14} parent=35 // pred_region
        %p316 = scmp.lt.s32.totalorder %s19, 1
        %s317 = scalar_select %p316, %s19, 1
        %p318 = scmp.lt.s32.totalorder %s20, 0
        %s319 = scalar_select %p318, %s20, 0
        %s320 = smul.addr %s319, 4
        %s321 = smul.addr %s317, 4
        %s322 = sadd.s32 %s320, %s321
        %s323 = smul.addr %s322, 4
        %s324 = scalar_lea.vmem %s2, %s323
      $region40: #{discriminator_forward.14} parent=35 // pred_fallthru
        _
    $region36: #{discriminator_forward.14} parent=5 // pred_fallthru
      _
  $region6: #{discriminator_forward.14} parent=0 // loop_footer
    %s12 = sadd.s32 1, %s8
  $region7: #{discriminator_forward.14} parent=0 // loop_footer_branch
    %7 = sbr.rel target = $region3
  $region8: #{discriminator_forward.14} parent=0 // loop_exit
    _

// kernel: discriminator_forward.11
$region0: #{discriminator_forward.11}
  #allocation0 [shape = 'u32[]', space=smem, size = 0x4, offset = 0x4, fixed_abs, tag = 'smem constant byte address 0x4 - core index']
  #allocation1 [shape = 'u32[144,128]{1,0:T(1,128)}', space=vmem, size = 0x12000, scoped, tag = 'internal scratch']
  %s0 = inlined_call_operand.vmem [shape: bf16[2,8,1152], index: 0, kind: input, shape index: {}]
  %s1 = inlined_call_operand.vmem [shape: bf16[1152,256], index: 1, kind: input, shape index: {}]
  %s2 = inlined_call_operand.vmem [shape: f32[1,256], index: 2, kind: input, shape index: {}]
  %s3 = inlined_call_operand.vmem [shape: bf16[2,8,256], index: 3, kind: output, shape index: {0}]
  %s4 = inlined_call_operand.vmem [shape: f32[2,2,256], index: 4, kind: output, shape index: {1}]
  %5 = xla_tuple %s3, %s4
  %s6 = sld [smem:[#allocation0]]
  $region57: #{discriminator_forward.11} parent=0
    _
  %s8 = ssub.s32 1, %s6
  %s9 = scalar_select 0, %s8, %s6
  loop: start=0, step=1, limit=4
  $region2: #{discriminator_forward.11} parent=0 // loop_pre_header
    _
  $region3: #{discriminator_forward.11} parent=0 // loop_header
    %s11 = sphi 0, %s15
    %p12 = scmp.ge.s32.totalorder %s11, 4
    %s18 = sphi 0, %s30
    %s19 = sphi 0, %s26
    %s20 = sphi 0, %s18
    %s21 = sphi 0, %s19
    %s22 = sphi 0, %s20
    %s23 = sphi 0, %s21
    %s35 = sphi 0, %s37
    %s38 = sphi 0, %s35
    %s39 = sphi 0, %s38
    %s55 = sphi 0, %s39
    %s59 = sphi 0, %s59
    %s61 = sphi 0, %s59
    %s62 = sphi 0, %s61
    %s76 = sphi 0, %s62
    %s80 = sphi 0, %s80
    %s82 = sphi 0, %s80
    %s83 = sphi 0, %s82
    %s97 = sphi 0, %s83
    %s105 = sphi 0, %s107
    %s108 = sphi 0, %s105
    %s109 = sphi 0, %s108
    %s125 = sphi 0, %s109
    %s131 = sphi 0, %s133
    %s134 = sphi 0, %s131
    %s135 = sphi 0, %s134
    %s151 = sphi 0, %s135
  $region4: #{discriminator_forward.11} parent=0 // loop_header_branch
    %14 = sbr.rel (%p12) target = $region8
  $region5: #{discriminator_forward.11} parent=0 // loop_body
    %s16 = ssub.s32 %s11, 1
    %s17 = ssub.s32 %s11, 2
    %s24 = sadd.s32 1, %s19
    %p25 = scmp.ge.s32.totalorder %s24, 1
    %s26 = scalar_select %p25, 0, %s24
    %s27 = sadd.s32 1, %s18
    %s28 = scalar_select %p25, %s27, %s18
    %p29 = scmp.ge.s32.totalorder %s28, 2
    %s30 = scalar_select %p29, 0, %s28
    %s31 = ssub.s32 %s18, %s30
    %s32 = ssub.s32 %s19, %s26
    %s33 = sor.u32 %s31, %s32
    %p34 = scmp.eq.s32.totalorder %s33, 0
    %s36 = sadd.s32 %s35, 1
    %s37 = scalar_select %p34, %s35, %s36
    %p40 = pneg %p34
    %p41 = scmp.eq.s32.totalorder %s11, 1
    %p42 = por %p40, %p41
    %p43 = scmp.ne.s32.totalorder %s35, %s38
    %p44 = scmp.eq.s32.totalorder %s11, 0
    %p45 = por %p43, %p44
    %p46 = scmp.ne.s32.totalorder %s35, %s38
    %p47 = scmp.eq.s32.totalorder %s16, 1
    %p48 = por %p46, %p47
    %p49 = scmp.ne.s32.totalorder %s38, %s39
    %p50 = scmp.eq.s32.totalorder %s16, 0
    %p51 = por %p49, %p50
    %p52 = scmp.ne.s32.totalorder %s38, %s39
    %p53 = scmp.eq.s32.totalorder %s17, 1
    %p54 = por %p52, %p53
    %p56 = scmp.ne.s32.totalorder %s39, %s55
    %p57 = scmp.eq.s32.totalorder %s17, 0
    %p58 = por %p56, %p57
    %s60 = sadd.s32 %s59, 1
    %p63 = scmp.eq.s32.totalorder %s11, 1
    %p64 = scmp.ne.s32.totalorder %s59, %s61
    %p65 = scmp.eq.s32.totalorder %s11, 0
    %p66 = por %p64, %p65
    %p67 = scmp.ne.s32.totalorder %s59, %s61
    %p68 = scmp.eq.s32.totalorder %s16, 1
    %p69 = por %p67, %p68
    %p70 = scmp.ne.s32.totalorder %s61, %s62
    %p71 = scmp.eq.s32.totalorder %s16, 0
    %p72 = por %p70, %p71
    %p73 = scmp.ne.s32.totalorder %s61, %s62
    %p74 = scmp.eq.s32.totalorder %s17, 1
    %p75 = por %p73, %p74
    %p77 = scmp.ne.s32.totalorder %s62, %s76
    %p78 = scmp.eq.s32.totalorder %s17, 0
    %p79 = por %p77, %p78
    %s81 = sadd.s32 %s80, 1
    %p84 = scmp.eq.s32.totalorder %s11, 1
    %p85 = scmp.ne.s32.totalorder %s80, %s82
    %p86 = scmp.eq.s32.totalorder %s11, 0
    %p87 = por %p85, %p86
    %p88 = scmp.ne.s32.totalorder %s80, %s82
    %p89 = scmp.eq.s32.totalorder %s16, 1
    %p90 = por %p88, %p89
    %p91 = scmp.ne.s32.totalorder %s82, %s83
    %p92 = scmp.eq.s32.totalorder %s16, 0
    %p93 = por %p91, %p92
    %p94 = scmp.ne.s32.totalorder %s82, %s83
    %p95 = scmp.eq.s32.totalorder %s17, 1
    %p96 = por %p94, %p95
    %p98 = scmp.ne.s32.totalorder %s83, %s97
    %p99 = scmp.eq.s32.totalorder %s17, 0
    %p100 = por %p98, %p99
    %s101 = ssub.s32 %s18, %s30
    %s102 = ssub.s32 %s19, %s26
    %s103 = sor.u32 %s101, %s102
    %p104 = scmp.eq.s32.totalorder %s103, 0
    %s106 = sadd.s32 %s105, 1
    %s107 = scalar_select %p104, %s105, %s106
    %p110 = pneg %p104
    %p111 = scmp.eq.s32.totalorder %s11, 1
    %p112 = por %p110, %p111
    %p113 = scmp.ne.s32.totalorder %s105, %s108
    %p114 = scmp.eq.s32.totalorder %s11, 0
    %p115 = por %p113, %p114
    %p116 = scmp.ne.s32.totalorder %s105, %s108
    %p117 = scmp.eq.s32.totalorder %s16, 1
    %p118 = por %p116, %p117
    %p119 = scmp.ne.s32.totalorder %s108, %s109
    %p120 = scmp.eq.s32.totalorder %s16, 0
    %p121 = por %p119, %p120
    %p122 = scmp.ne.s32.totalorder %s108, %s109
    %p123 = scmp.eq.s32.totalorder %s17, 1
    %p124 = por %p122, %p123
    %p126 = scmp.ne.s32.totalorder %s109, %s125
    %p127 = scmp.eq.s32.totalorder %s17, 0
    %p128 = por %p126, %p127
    %s129 = ssub.s32 %s18, %s30
    %p130 = scmp.eq.s32.totalorder %s129, 0
    %s132 = sadd.s32 %s131, 1
    %s133 = scalar_select %p130, %s131, %s132
    %p136 = pneg %p130
    %p137 = scmp.eq.s32.totalorder %s11, 1
    %p138 = por %p136, %p137
    %p139 = scmp.ne.s32.totalorder %s131, %s134
    %p140 = scmp.eq.s32.totalorder %s11, 0
    %p141 = por %p139, %p140
    %p142 = scmp.ne.s32.totalorder %s131, %s134
    %p143 = scmp.eq.s32.totalorder %s16, 1
    %p144 = por %p142, %p143
    %p145 = scmp.ne.s32.totalorder %s134, %s135
    %p146 = scmp.eq.s32.totalorder %s16, 0
    %p147 = por %p145, %p146
    %p148 = scmp.ne.s32.totalorder %s134, %s135
    %p149 = scmp.eq.s32.totalorder %s17, 1
    %p150 = por %p148, %p149
    %p152 = scmp.ne.s32.totalorder %s135, %s151
    %p153 = scmp.eq.s32.totalorder %s17, 0
    %p154 = por %p152, %p153
    %p155 = scmp.le.s32.totalorder 1, %s11
    %p156 = scmp.lt.s32.totalorder %s11, 3
    %p157 = pnand %p155, %p156
    %p158 = pneg %p157
    // Predicated region
    $region9: #{discriminator_forward.11} parent=5 // pred_check
      _
    $region10: #{discriminator_forward.11} parent=5 // pred_check_branch
      %160 = sbr.rel (%p157) target = $region12
    $region11: #{discriminator_forward.11} parent=5 // pred_region
      %s161 = ssub.s32 %s11, 1
      // Predicated region
      $region13: #{discriminator_forward.11} parent=11 // pred_check
        %p162 = pneg %p72
      $region14: #{discriminator_forward.11} parent=11 // pred_check_branch
        %164 = sbr.rel (%p162) target = $region16
      $region15: #{discriminator_forward.11} parent=11 // pred_region
        _
      $region16: #{discriminator_forward.11} parent=11 // pred_fallthru
        _
      // Predicated region
      $region17: #{discriminator_forward.11} parent=11 // pred_check
        %p165 = pneg %p93
      $region18: #{discriminator_forward.11} parent=11 // pred_check_branch
        %167 = sbr.rel (%p165) target = $region20
      $region19: #{discriminator_forward.11} parent=11 // pred_region
        _
      $region20: #{discriminator_forward.11} parent=11 // pred_fallthru
        _
    $region12: #{discriminator_forward.11} parent=5 // pred_fallthru
      _
    %p168 = scmp.lt.s32.totalorder %s11, 2
    // Predicated region
    $region21: #{discriminator_forward.11} parent=5 // pred_check
      %p169 = pneg %p168
    $region22: #{discriminator_forward.11} parent=5 // pred_check_branch
      %171 = sbr.rel (%p169) target = $region24
    $region23: #{discriminator_forward.11} parent=5 // pred_region
      // Predicated region
      $region25: #{discriminator_forward.11} parent=23 // pred_check
        %p172 = pneg %p45
      $region26: #{discriminator_forward.11} parent=23 // pred_check_branch
        %174 = sbr.rel (%p172) target = $region28
      $region27: #{discriminator_forward.11} parent=23 // pred_region
        %p175 = scmp.lt.s32.totalorder %s18, 1
        %s176 = scalar_select %p175, %s18, 1
        %p177 = scmp.lt.s32.totalorder %s19, 0
        %s178 = scalar_select %p177, %s19, 0
        %s179 = smul.addr %s178, 9
        %s180 = smul.addr %s176, 9
        %s181 = sadd.s32 %s179, %s180
        %s182 = smul.addr %s181, 4
        %s183 = scalar_lea.vmem %s0, %s182
      $region28: #{discriminator_forward.11} parent=23 // pred_fallthru
        _
    $region24: #{discriminator_forward.11} parent=5 // pred_fallthru
      _
    %p184 = scmp.le.s32.totalorder 1, %s11
    %p185 = scmp.lt.s32.totalorder %s11, 3
    %p186 = pnand %p184, %p185
    %p187 = pneg %p186
    // Predicated region
    $region29: #{discriminator_forward.11} parent=5 // pred_check
      _
    $region30: #{discriminator_forward.11} parent=5 // pred_check_branch
      %189 = sbr.rel (%p186) target = $region32
    $region31: #{discriminator_forward.11} parent=5 // pred_region
      %s190 = ssub.s32 %s11, 1
      %p191 = scmp.lt.s32.totalorder %s20, 1
      %s192 = scalar_select %p191, %s20, 1
      %p193 = scmp.lt.s32.totalorder %s21, 0
      %s194 = scalar_select %p193, %s21, 0
      %s195 = smul.addr %s194, 9
      %s196 = smul.addr %s192, 9
      %s197 = sadd.s32 %s195, %s196
      %s198 = smul.addr %s197, 4
      %s199 = scalar_lea.vmem %s0, %s198
      %p200 = pneg %p51
      %p201 = pneg %p48
      %p202 = pneg %p72
      %p203 = pneg %p69
      %p204 = pneg %p93
      %p205 = pneg %p90
      %p206 = pneg %p121
      %p207 = pneg %p118
      %p208 = scmp.lt.s32.totalorder %s20, 1
      %s209 = scalar_select %p208, %s20, 1
      %p210 = scmp.lt.s32.totalorder %s21, 0
      %s211 = scalar_select %p210, %s21, 0
      %s212 = smul.addr %s211, 2
      %s213 = smul.addr %s209, 2
      %s214 = sadd.s32 %s212, %s213
      %s215 = smul.addr %s214, 4
      %s216 = scalar_lea.vmem %s3, %s215
      %p217 = pneg %p147
      %p218 = pneg %p144
      %p219 = scmp.lt.s32.totalorder %s20, 1
      %s220 = scalar_select %p219, %s20, 1
      %s221 = smul.addr %s220, 2
      %s222 = smul.addr %s221, 2
      %s223 = scalar_lea.vmem %s4, %s222
      %p224 = scmp.lt.s32.totalorder %s20, 1
      %s225 = scalar_select %p224, %s20, 1
      %p226 = scmp.lt.s32.totalorder %s21, 0
      %s227 = scalar_select %p226, %s21, 0
      %s228 = smul.addr %s227, 9
      %s229 = smul.addr %s225, 9
      %s230 = sadd.s32 %s228, %s229
      %s231 = smul.addr %s230, 4
      %s232 = scalar_lea.vmem %s0, %s231
      %p233 = scmp.lt.s32.totalorder %s20, 1
      %s234 = scalar_select %p233, %s20, 1
      %p235 = scmp.lt.s32.totalorder %s21, 0
      %s236 = scalar_select %p235, %s21, 0
      %s237 = smul.addr %s236, 2
      %s238 = smul.addr %s234, 2
      %s239 = sadd.s32 %s237, %s238
      %s240 = smul.addr %s239, 4
      %s241 = scalar_lea.vmem %s3, %s240
      %p242 = scmp.lt.s32.totalorder %s20, 1
      %s243 = scalar_select %p242, %s20, 1
      %s244 = smul.addr %s243, 2
      %s245 = smul.addr %s244, 2
      %s246 = scalar_lea.vmem %s4, %s245
      %p248 = scmp.eq.s32.totalorder %s21, 0
      // Predicated region
      $region33: #{discriminator_forward.11} parent=31 // pred_check
        %p249 = pneg %p248
      $region34: #{discriminator_forward.11} parent=31 // pred_check_branch
        %251 = sbr.rel (%p249) target = $region36
      $region35: #{discriminator_forward.11} parent=31 // pred_region
        %252 = vst [vmem:[%s246] sm:$0xf] 0.0
      $region36: #{discriminator_forward.11} parent=31 // pred_fallthru
        _
      %v253 = vld [vmem:[%s232] sm:$0xff]
      %v254 = vld [vmem:[%s232 + $0x8] sm:$0xff]
      %v255 = vld [vmem:[%s232 + $0x10] sm:$0xff]
      %v256 = vld [vmem:[%s232 + $0x18] sm:$0xff]
      %v257 = vld [vmem:[%s232 + $0x20] sm:$0xf]
      %v258 = vld [vmem:[%s1] sm:$0xff]
      %v259 = vld [vmem:[%s1 + $0x8] sm:$0xff]
      %v260 = vld [vmem:[%s1 + $0x10] sm:$0xff]
      %v261 = vld [vmem:[%s1 + $0x18] sm:$0xff]
      %v262 = vld [vmem:[%s1 + $0x20] sm:$0xff]
      %v263 = vld [vmem:[%s1 + $0x28] sm:$0xff]
      %v264 = vld [vmem:[%s1 + $0x30] sm:$0xff]
      %v265 = vld [vmem:[%s1 + $0x38] sm:$0xff]
      %v266 = vld [vmem:[%s1 + $0x40] sm:$0xff]
      %v267 = vld [vmem:[%s1 + $0x48] sm:$0xff]
      %v268 = vld [vmem:[%s1 + $0x50] sm:$0xff]
      %v269 = vld [vmem:[%s1 + $0x58] sm:$0xff]
      %v270 = vld [vmem:[%s1 + $0x60] sm:$0xff]
      %v271 = vld [vmem:[%s1 + $0x68] sm:$0xff]
      %v272 = vld [vmem:[%s1 + $0x70] sm:$0xff]
      %v273 = vld [vmem:[%s1 + $0x78] sm:$0xff]
      %v274 = vld [vmem:[%s1 + $0x80] sm:$0xff]
      %v275 = vld [vmem:[%s1 + $0x88] sm:$0xff]
      %v276 = vld [vmem:[%s1 + $0x90] sm:$0xff]
      %v277 = vld [vmem:[%s1 + $0x98] sm:$0xff]
      %v278 = vld [vmem:[%s1 + $0xa0] sm:$0xff]
      %v279 = vld [vmem:[%s1 + $0xa8] sm:$0xff]
      %v280 = vld [vmem:[%s1 + $0xb0] sm:$0xff]
      %v281 = vld [vmem:[%s1 + $0xb8] sm:$0xff]
      %v282 = vld [vmem:[%s1 + $0xc0] sm:$0xff]
      %v283 = vld [vmem:[%s1 + $0xc8] sm:$0xff]
      %v284 = vld [vmem:[%s1 + $0xd0] sm:$0xff]
      %v285 = vld [vmem:[%s1 + $0xd8] sm:$0xff]
      %v286 = vld [vmem:[%s1 + $0xe0] sm:$0xff]
      %v287 = vld [vmem:[%s1 + $0xe8] sm:$0xff]
      %v288 = vld [vmem:[%s1 + $0xf0] sm:$0xff]
      %v289 = vld [vmem:[%s1 + $0xf8] sm:$0xff]
      %v290 = vld [vmem:[%s1 + $0x100] sm:$0xff]
      %v291 = vld [vmem:[%s1 + $0x108] sm:$0xff]
      %v292 = vld [vmem:[%s1 + $0x110] sm:$0xff]
      %v293 = vld [vmem:[%s1 + $0x118] sm:$0xff]
      %v294 = vld [vmem:[%s1 + $0x120] sm:$0xff]
      %v295 = vld [vmem:[%s1 + $0x128] sm:$0xff]
      %v296 = vld [vmem:[%s1 + $0x130] sm:$0xff]
      %v297 = vld [vmem:[%s1 + $0x138] sm:$0xff]
      %v298 = vld [vmem:[%s1 + $0x140] sm:$0xff]
      %v299 = vld [vmem:[%s1 + $0x148] sm:$0xff]
      %v300 = vld [vmem:[%s1 + $0x150] sm:$0xff]
      %v301 = vld [vmem:[%s1 + $0x158] sm:$0xff]
      %v302 = vld [vmem:[%s1 + $0x160] sm:$0xff]
      %v303 = vld [vmem:[%s1 + $0x168] sm:$0xff]
      %v304 = vld [vmem:[%s1 + $0x170] sm:$0xff]
      %v305 = vld [vmem:[%s1 + $0x178] sm:$0xff]
      %v306 = vld [vmem:[%s1 + $0x180] sm:$0xff]
      %v307 = vld [vmem:[%s1 + $0x188] sm:$0xff]
      %v308 = vld [vmem:[%s1 + $0x190] sm:$0xff]
      %v309 = vld [vmem:[%s1 + $0x198] sm:$0xff]
      %v310 = vld [vmem:[%s1 + $0x1a0] sm:$0xff]
      %v311 = vld [vmem:[%s1 + $0x1a8] sm:$0xff]
      %v312 = vld [vmem:[%s1 + $0x1b0] sm:$0xff]
      %v313 = vld [vmem:[%s1 + $0x1b8] sm:$0xff]
      %v314 = vld [vmem:[%s1 + $0x1c0] sm:$0xff]
      %v315 = vld [vmem:[%s1 + $0x1c8] sm:$0xff]
      %v316 = vld [vmem:[%s1 + $0x1d0] sm:$0xff]
      %v317 = vld [vmem:[%s1 + $0x1d8] sm:$0xff]
      %v318 = vld [vmem:[%s1 + $0x1e0] sm:$0xff]
      %v319 = vld [vmem:[%s1 + $0x1e8] sm:$0xff]
      %v320 = vld [vmem:[%s1 + $0x1f0] sm:$0xff]
      %v321 = vld [vmem:[%s1 + $0x1f8] sm:$0xff]
      %v322 = vld [vmem:[%s1 + $0x200] sm:$0xff]
      %v323 = vld [vmem:[%s1 + $0x208] sm:$0xff]
      %v324 = vld [vmem:[%s1 + $0x210] sm:$0xff]
      %v325 = vld [vmem:[%s1 + $0x218] sm:$0xff]
      %v326 = vld [vmem:[%s1 + $0x220] sm:$0xff]
      %v327 = vld [vmem:[%s1 + $0x228] sm:$0xff]
      %v328 = vld [vmem:[%s1 + $0x230] sm:$0xff]
      %v329 = vld [vmem:[%s1 + $0x238] sm:$0xff]
      %v330 = vld [vmem:[%s1 + $0x240] sm:$0xff]
      %v331 = vld [vmem:[%s1 + $0x248] sm:$0xff]
      %v332 = vld [vmem:[%s1 + $0x250] sm:$0xff]
      %v333 = vld [vmem:[%s1 + $0x258] sm:$0xff]
      %v334 = vld [vmem:[%s1 + $0x260] sm:$0xff]
      %v335 = vld [vmem:[%s1 + $0x268] sm:$0xff]
      %v336 = vld [vmem:[%s1 + $0x270] sm:$0xff]
      %v337 = vld [vmem:[%s1 + $0x278] sm:$0xff]
      %v338 = vld [vmem:[%s1 + $0x280] sm:$0xff]
      %v339 = vld [vmem:[%s1 + $0x288] sm:$0xff]
      %v340 = vld [vmem:[%s1 + $0x290] sm:$0xff]
      %v341 = vld [vmem:[%s1 + $0x298] sm:$0xff]
      %v342 = vld [vmem:[%s1 + $0x2a0] sm:$0xff]
      %v343 = vld [vmem:[%s1 + $0x2a8] sm:$0xff]
      %v344 = vld [vmem:[%s1 + $0x2b0] sm:$0xff]
      %v345 = vld [vmem:[%s1 + $0x2b8] sm:$0xff]
      %v346 = vld [vmem:[%s1 + $0x2c0] sm:$0xff]
      %v347 = vld [vmem:[%s1 + $0x2c8] sm:$0xff]
      %v348 = vld [vmem:[%s1 + $0x2d0] sm:$0xff]
      %v349 = vld [vmem:[%s1 + $0x2d8] sm:$0xff]
      %v350 = vld [vmem:[%s1 + $0x2e0] sm:$0xff]
      %v351 = vld [vmem:[%s1 + $0x2e8] sm:$0xff]
      %v352 = vld [vmem:[%s1 + $0x2f0] sm:$0xff]
      %v353 = vld [vmem:[%s1 + $0x2f8] sm:$0xff]
      %v354 = vld [vmem:[%s1 + $0x300] sm:$0xff]
      %v355 = vld [vmem:[%s1 + $0x308] sm:$0xff]
      %v356 = vld [vmem:[%s1 + $0x310] sm:$0xff]
      %v357 = vld [vmem:[%s1 + $0x318] sm:$0xff]
      %v358 = vld [vmem:[%s1 + $0x320] sm:$0xff]
      %v359 = vld [vmem:[%s1 + $0x328] sm:$0xff]
      %v360 = vld [vmem:[%s1 + $0x330] sm:$0xff]
      %v361 = vld [vmem:[%s1 + $0x338] sm:$0xff]
      %v362 = vld [vmem:[%s1 + $0x340] sm:$0xff]
      %v363 = vld [vmem:[%s1 + $0x348] sm:$0xff]
      %v364 = vld [vmem:[%s1 + $0x350] sm:$0xff]
      %v365 = vld [vmem:[%s1 + $0x358] sm:$0xff]
      %v366 = vld [vmem:[%s1 + $0x360] sm:$0xff]
      %v367 = vld [vmem:[%s1 + $0x368] sm:$0xff]
      %v368 = vld [vmem:[%s1 + $0x370] sm:$0xff]
      %v369 = vld [vmem:[%s1 + $0x378] sm:$0xff]
      %v370 = vld [vmem:[%s1 + $0x380] sm:$0xff]
      %v371 = vld [vmem:[%s1 + $0x388] sm:$0xff]
      %v372 = vld [vmem:[%s1 + $0x390] sm:$0xff]
      %v373 = vld [vmem:[%s1 + $0x398] sm:$0xff]
      %v374 = vld [vmem:[%s1 + $0x3a0] sm:$0xff]
      %v375 = vld [vmem:[%s1 + $0x3a8] sm:$0xff]
      %v376 = vld [vmem:[%s1 + $0x3b0] sm:$0xff]
      %v377 = vld [vmem:[%s1 + $0x3b8] sm:$0xff]
      %v378 = vld [vmem:[%s1 + $0x3c0] sm:$0xff]
      %v379 = vld [vmem:[%s1 + $0x3c8] sm:$0xff]
      %v380 = vld [vmem:[%s1 + $0x3d0] sm:$0xff]
      %v381 = vld [vmem:[%s1 + $0x3d8] sm:$0xff]
      %v382 = vld [vmem:[%s1 + $0x3e0] sm:$0xff]
      %v383 = vld [vmem:[%s1 + $0x3e8] sm:$0xff]
      %v384 = vld [vmem:[%s1 + $0x3f0] sm:$0xff]
      %v385 = vld [vmem:[%s1 + $0x3f8] sm:$0xff]
      %v386 = vld [vmem:[%s1 + $0x400] sm:$0xff]
      %v387 = vld [vmem:[%s1 + $0x408] sm:$0xff]
      %v388 = vld [vmem:[%s1 + $0x410] sm:$0xff]
      %v389 = vld [vmem:[%s1 + $0x418] sm:$0xff]
      %v390 = vld [vmem:[%s1 + $0x420] sm:$0xff]
      %v391 = vld [vmem:[%s1 + $0x428] sm:$0xff]
      %v392 = vld [vmem:[%s1 + $0x430] sm:$0xff]
      %v393 = vld [vmem:[%s1 + $0x438] sm:$0xff]
      %v394 = vld [vmem:[%s1 + $0x440] sm:$0xff]
      %v395 = vld [vmem:[%s1 + $0x448] sm:$0xff]
      %v396 = vld [vmem:[%s1 + $0x450] sm:$0xff]
      %v397 = vld [vmem:[%s1 + $0x458] sm:$0xff]
      %v398 = vld [vmem:[%s1 + $0x460] sm:$0xff]
      %v399 = vld [vmem:[%s1 + $0x468] sm:$0xff]
      %v400 = vld [vmem:[%s1 + $0x470] sm:$0xff]
      %v401 = vld [vmem:[%s1 + $0x478] sm:$0xff]
      %v402 = vld [vmem:[%s2] sm:$0x3]
      %v404 = vlaneseq
      %v405 = vshrl.u32 %v404, 7
      %v406 = vsub.s32 0, %v405
      %v407 = vrot.slane %v402, %v406
      %v408 = vlaneseq
      %v409 = vshrl.u32 %v408, 7
      %v410 = vsub.s32 1, %v409
      %v411 = vrot.slane %v402, %v410
      %v419 = vunpack.c.l.b16 %v253
      %v420 = vunpack.c.h.b16 %v253
      %v421 = vunpack.c.l.b16 %v254
      %v422 = vunpack.c.h.b16 %v254
      %v423 = vunpack.c.l.b16 %v255
      %v424 = vunpack.c.h.b16 %v255
      %v425 = vunpack.c.l.b16 %v256
      %v426 = vunpack.c.h.b16 %v256
      %v427 = vunpack.c.l.b16 %v257
      %v428 = vpack.c.b16 %v419, %v419
      %v429 = vpack.c.b16 %v420, %v420
      %v430 = vpack.c.b16 %v421, %v421
      %v431 = vpack.c.b16 %v422, %v422
      %v432 = vpack.c.b16 %v423, %v423
      %v433 = vpack.c.b16 %v424, %v424
      %v434 = vpack.c.b16 %v425, %v425
      %v435 = vpack.c.b16 %v426, %v426
      %v436 = vpack.c.b16 %v427, %v427
      %v590 = vunpack.c.l.b16 %v258
      %v591 = vunpack.c.h.b16 %v258
      %v592 = vunpack.c.l.b16 %v259
      %v593 = vunpack.c.h.b16 %v259
      %v594 = vunpack.c.l.b16 %v260
      %v595 = vunpack.c.h.b16 %v260
      %v596 = vunpack.c.l.b16 %v261
      %v597 = vunpack.c.h.b16 %v261
      %v598 = vunpack.c.l.b16 %v262
      %v599 = vunpack.c.h.b16 %v262
      %v600 = vunpack.c.l.b16 %v263
      %v601 = vunpack.c.h.b16 %v263
      %v602 = vunpack.c.l.b16 %v264
      %v603 = vunpack.c.h.b16 %v264
      %v604 = vunpack.c.l.b16 %v265
      %v605 = vunpack.c.h.b16 %v265
      %v606 = vunpack.c.l.b16 %v266
      %v607 = vunpack.c.h.b16 %v266
      %v608 = vunpack.c.l.b16 %v267
      %v609 = vunpack.c.h.b16 %v267
      %v610 = vunpack.c.l.b16 %v268
      %v611 = vunpack.c.h.b16 %v268
      %v612 = vunpack.c.l.b16 %v269
      %v613 = vunpack.c.h.b16 %v269
      %v614 = vunpack.c.l.b16 %v270
      %v615 = vunpack.c.h.b16 %v270
      %v616 = vunpack.c.l.b16 %v271
      %v617 = vunpack.c.h.b16 %v271
      %v618 = vunpack.c.l.b16 %v272
      %v619 = vunpack.c.h.b16 %v272
      %v620 = vunpack.c.l.b16 %v273
      %v621 = vunpack.c.h.b16 %v273
      %v622 = vunpack.c.l.b16 %v274
      %v623 = vunpack.c.h.b16 %v274
      %v624 = vunpack.c.l.b16 %v275
      %v625 = vunpack.c.h.b16 %v275
      %v626 = vunpack.c.l.b16 %v276
      %v627 = vunpack.c.h.b16 %v276
      %v628 = vunpack.c.l.b16 %v277
      %v629 = vunpack.c.h.b16 %v277
      %v630 = vunpack.c.l.b16 %v278
      %v631 = vunpack.c.h.b16 %v278
      %v632 = vunpack.c.l.b16 %v279
      %v633 = vunpack.c.h.b16 %v279
      %v634 = vunpack.c.l.b16 %v280
      %v635 = vunpack.c.h.b16 %v280
      %v636 = vunpack.c.l.b16 %v281
      %v637 = vunpack.c.h.b16 %v281
      %v638 = vunpack.c.l.b16 %v282
      %v639 = vunpack.c.h.b16 %v282
      %v640 = vunpack.c.l.b16 %v283
      %v641 = vunpack.c.h.b16 %v283
      %v642 = vunpack.c.l.b16 %v284
      %v643 = vunpack.c.h.b16 %v284
      %v644 = vunpack.c.l.b16 %v285
      %v645 = vunpack.c.h.b16 %v285
      %v646 = vunpack.c.l.b16 %v286
      %v647 = vunpack.c.h.b16 %v286
      %v648 = vunpack.c.l.b16 %v287
      %v649 = vunpack.c.h.b16 %v287
      %v650 = vunpack.c.l.b16 %v288
      %v651 = vunpack.c.h.b16 %v288
      %v652 = vunpack.c.l.b16 %v289
      %v653 = vunpack.c.h.b16 %v289
      %v654 = vunpack.c.l.b16 %v290
      %v655 = vunpack.c.h.b16 %v290
      %v656 = vunpack.c.l.b16 %v291
      %v657 = vunpack.c.h.b16 %v291
      %v658 = vunpack.c.l.b16 %v292
      %v659 = vunpack.c.h.b16 %v292
      %v660 = vunpack.c.l.b16 %v293
      %v661 = vunpack.c.h.b16 %v293
      %v662 = vunpack.c.l.b16 %v294
      %v663 = vunpack.c.h.b16 %v294
      %v664 = vunpack.c.l.b16 %v295
      %v665 = vunpack.c.h.b16 %v295
      %v666 = vunpack.c.l.b16 %v296
      %v667 = vunpack.c.h.b16 %v296
      %v668 = vunpack.c.l.b16 %v297
      %v669 = vunpack.c.h.b16 %v297
      %v670 = vunpack.c.l.b16 %v298
      %v671 = vunpack.c.h.b16 %v298
      %v672 = vunpack.c.l.b16 %v299
      %v673 = vunpack.c.h.b16 %v299
      %v674 = vunpack.c.l.b16 %v300
      %v675 = vunpack.c.h.b16 %v300
      %v676 = vunpack.c.l.b16 %v301
      %v677 = vunpack.c.h.b16 %v301
      %v678 = vunpack.c.l.b16 %v302
      %v679 = vunpack.c.h.b16 %v302
      %v680 = vunpack.c.l.b16 %v303
      %v681 = vunpack.c.h.b16 %v303
      %v682 = vunpack.c.l.b16 %v304
      %v683 = vunpack.c.h.b16 %v304
      %v684 = vunpack.c.l.b16 %v305
      %v685 = vunpack.c.h.b16 %v305
      %v686 = vunpack.c.l.b16 %v306
      %v687 = vunpack.c.h.b16 %v306
      %v688 = vunpack.c.l.b16 %v307
      %v689 = vunpack.c.h.b16 %v307
      %v690 = vunpack.c.l.b16 %v308
      %v691 = vunpack.c.h.b16 %v308
      %v692 = vunpack.c.l.b16 %v309
      %v693 = vunpack.c.h.b16 %v309
      %v694 = vunpack.c.l.b16 %v310
      %v695 = vunpack.c.h.b16 %v310
      %v696 = vunpack.c.l.b16 %v311
      %v697 = vunpack.c.h.b16 %v311
      %v698 = vunpack.c.l.b16 %v312
      %v699 = vunpack.c.h.b16 %v312
      %v700 = vunpack.c.l.b16 %v313
      %v701 = vunpack.c.h.b16 %v313
      %v702 = vunpack.c.l.b16 %v314
      %v703 = vunpack.c.h.b16 %v314
      %v704 = vunpack.c.l.b16 %v315
      %v705 = vunpack.c.h.b16 %v315
      %v706 = vunpack.c.l.b16 %v316
      %v707 = vunpack.c.h.b16 %v316
      %v708 = vunpack.c.l.b16 %v317
      %v709 = vunpack.c.h.b16 %v317
      %v710 = vunpack.c.l.b16 %v318
      %v711 = vunpack.c.h.b16 %v318
      %v712 = vunpack.c.l.b16 %v319
      %v713 = vunpack.c.h.b16 %v319
      %v714 = vunpack.c.l.b16 %v320
      %v715 = vunpack.c.h.b16 %v320
      %v716 = vunpack.c.l.b16 %v321
      %v717 = vunpack.c.h.b16 %v321
      %v718 = vunpack.c.l.b16 %v322
      %v719 = vunpack.c.h.b16 %v322
      %v720 = vunpack.c.l.b16 %v323
      %v721 = vunpack.c.h.b16 %v323
      %v722 = vunpack.c.l.b16 %v324
      %v723 = vunpack.c.h.b16 %v324
      %v724 = vunpack.c.l.b16 %v325
      %v725 = vunpack.c.h.b16 %v325
      %v726 = vunpack.c.l.b16 %v326
      %v727 = vunpack.c.h.b16 %v326
      %v728 = vunpack.c.l.b16 %v327
      %v729 = vunpack.c.h.b16 %v327
      %v730 = vunpack.c.l.b16 %v328
      %v731 = vunpack.c.h.b16 %v328
      %v732 = vunpack.c.l.b16 %v329
      %v733 = vunpack.c.h.b16 %v329
      %v734 = vunpack.c.l.b16 %v330
      %v735 = vunpack.c.h.b16 %v330
      %v736 = vunpack.c.l.b16 %v331
      %v737 = vunpack.c.h.b16 %v331
      %v738 = vunpack.c.l.b16 %v332
      %v739 = vunpack.c.h.b16 %v332
      %v740 = vunpack.c.l.b16 %v333
      %v741 = vunpack.c.h.b16 %v333
      %v742 = vunpack.c.l.b16 %v334
      %v743 = vunpack.c.h.b16 %v334
      %v744 = vunpack.c.l.b16 %v335
      %v745 = vunpack.c.h.b16 %v335
      %v746 = vunpack.c.l.b16 %v336
      %v747 = vunpack.c.h.b16 %v336
      %v748 = vunpack.c.l.b16 %v337
      %v749 = vunpack.c.h.b16 %v337
      %v750 = vunpack.c.l.b16 %v338
      %v751 = vunpack.c.h.b16 %v338
      %v752 = vunpack.c.l.b16 %v339
      %v753 = vunpack.c.h.b16 %v339
      %v754 = vunpack.c.l.b16 %v340
      %v755 = vunpack.c.h.b16 %v340
      %v756 = vunpack.c.l.b16 %v341
      %v757 = vunpack.c.h.b16 %v341
      %v758 = vunpack.c.l.b16 %v342
      %v759 = vunpack.c.h.b16 %v342
      %v760 = vunpack.c.l.b16 %v343
      %v761 = vunpack.c.h.b16 %v343
      %v762 = vunpack.c.l.b16 %v344
      %v763 = vunpack.c.h.b16 %v344
      %v764 = vunpack.c.l.b16 %v345
      %v765 = vunpack.c.h.b16 %v345
      %v766 = vunpack.c.l.b16 %v346
      %v767 = vunpack.c.h.b16 %v346
      %v768 = vunpack.c.l.b16 %v347
      %v769 = vunpack.c.h.b16 %v347
      %v770 = vunpack.c.l.b16 %v348
      %v771 = vunpack.c.h.b16 %v348
      %v772 = vunpack.c.l.b16 %v349
      %v773 = vunpack.c.h.b16 %v349
      %v774 = vunpack.c.l.b16 %v350
      %v775 = vunpack.c.h.b16 %v350
      %v776 = vunpack.c.l.b16 %v351
      %v777 = vunpack.c.h.b16 %v351
      %v778 = vunpack.c.l.b16 %v352
      %v779 = vunpack.c.h.b16 %v352
      %v780 = vunpack.c.l.b16 %v353
      %v781 = vunpack.c.h.b16 %v353
      %v782 = vunpack.c.l.b16 %v354
      %v783 = vunpack.c.h.b16 %v354
      %v784 = vunpack.c.l.b16 %v355
      %v785 = vunpack.c.h.b16 %v355
      %v786 = vunpack.c.l.b16 %v356
      %v787 = vunpack.c.h.b16 %v356
      %v788 = vunpack.c.l.b16 %v357
      %v789 = vunpack.c.h.b16 %v357
      %v790 = vunpack.c.l.b16 %v358
      %v791 = vunpack.c.h.b16 %v358
      %v792 = vunpack.c.l.b16 %v359
      %v793 = vunpack.c.h.b16 %v359
      %v794 = vunpack.c.l.b16 %v360
      %v795 = vunpack.c.h.b16 %v360
      %v796 = vunpack.c.l.b16 %v361
      %v797 = vunpack.c.h.b16 %v361
      %v798 = vunpack.c.l.b16 %v362
      %v799 = vunpack.c.h.b16 %v362
      %v800 = vunpack.c.l.b16 %v363
      %v801 = vunpack.c.h.b16 %v363
      %v802 = vunpack.c.l.b16 %v364
      %v803 = vunpack.c.h.b16 %v364
      %v804 = vunpack.c.l.b16 %v365
      %v805 = vunpack.c.h.b16 %v365
      %v806 = vunpack.c.l.b16 %v366
      %v807 = vunpack.c.h.b16 %v366
      %v808 = vunpack.c.l.b16 %v367
      %v809 = vunpack.c.h.b16 %v367
      %v810 = vunpack.c.l.b16 %v368
      %v811 = vunpack.c.h.b16 %v368
      %v812 = vunpack.c.l.b16 %v369
      %v813 = vunpack.c.h.b16 %v369
      %v814 = vunpack.c.l.b16 %v370
      %v815 = vunpack.c.h.b16 %v370
      %v816 = vunpack.c.l.b16 %v371
      %v817 = vunpack.c.h.b16 %v371
      %v818 = vunpack.c.l.b16 %v372
      %v819 = vunpack.c.h.b16 %v372
      %v820 = vunpack.c.l.b16 %v373
      %v821 = vunpack.c.h.b16 %v373
      %v822 = vunpack.c.l.b16 %v374
      %v823 = vunpack.c.h.b16 %v374
      %v824 = vunpack.c.l.b16 %v375
      %v825 = vunpack.c.h.b16 %v375
      %v826 = vunpack.c.l.b16 %v376
      %v827 = vunpack.c.h.b16 %v376
      %v828 = vunpack.c.l.b16 %v377
      %v829 = vunpack.c.h.b16 %v377
      %v830 = vunpack.c.l.b16 %v378
      %v831 = vunpack.c.h.b16 %v378
      %v832 = vunpack.c.l.b16 %v379
      %v833 = vunpack.c.h.b16 %v379
      %v834 = vunpack.c.l.b16 %v380
      %v835 = vunpack.c.h.b16 %v380
      %v836 = vunpack.c.l.b16 %v381
      %v837 = vunpack.c.h.b16 %v381
      %v838 = vunpack.c.l.b16 %v382
      %v839 = vunpack.c.h.b16 %v382
      %v840 = vunpack.c.l.b16 %v383
      %v841 = vunpack.c.h.b16 %v383
      %v842 = vunpack.c.l.b16 %v384
      %v843 = vunpack.c.h.b16 %v384
      %v844 = vunpack.c.l.b16 %v385
      %v845 = vunpack.c.h.b16 %v385
      %v846 = vunpack.c.l.b16 %v386
      %v847 = vunpack.c.h.b16 %v386
      %v848 = vunpack.c.l.b16 %v387
      %v849 = vunpack.c.h.b16 %v387
      %v850 = vunpack.c.l.b16 %v388
      %v851 = vunpack.c.h.b16 %v388
      %v852 = vunpack.c.l.b16 %v389
      %v853 = vunpack.c.h.b16 %v389
      %v854 = vunpack.c.l.b16 %v390
      %v855 = vunpack.c.h.b16 %v390
      %v856 = vunpack.c.l.b16 %v391
      %v857 = vunpack.c.h.b16 %v391
      %v858 = vunpack.c.l.b16 %v392
      %v859 = vunpack.c.h.b16 %v392
      %v860 = vunpack.c.l.b16 %v393
      %v861 = vunpack.c.h.b16 %v393
      %v862 = vunpack.c.l.b16 %v394
      %v863 = vunpack.c.h.b16 %v394
      %v864 = vunpack.c.l.b16 %v395
      %v865 = vunpack.c.h.b16 %v395
      %v866 = vunpack.c.l.b16 %v396
      %v867 = vunpack.c.h.b16 %v396
      %v868 = vunpack.c.l.b16 %v397
      %v869 = vunpack.c.h.b16 %v397
      %v870 = vunpack.c.l.b16 %v398
      %v871 = vunpack.c.h.b16 %v398
      %v872 = vunpack.c.l.b16 %v399
      %v873 = vunpack.c.h.b16 %v399
      %v874 = vunpack.c.l.b16 %v400
      %v875 = vunpack.c.h.b16 %v400
      %v876 = vunpack.c.l.b16 %v401
      %v877 = vunpack.c.h.b16 %v401
      %v878 = vpack.c.b16 %v592, %v590
      %v879 = vpack.c.b16 %v593, %v591
      %v880 = vpack.c.b16 %v596, %v594
      %v881 = vpack.c.b16 %v597, %v595
      %v882 = vpack.c.b16 %v600, %v598
      %v883 = vpack.c.b16 %v601, %v599
      %v884 = vpack.c.b16 %v604, %v602
      %v885 = vpack.c.b16 %v605, %v603
      %v886 = vpack.c.b16 %v608, %v606
      %v887 = vpack.c.b16 %v609, %v607
      %v888 = vpack.c.b16 %v612, %v610
      %v889 = vpack.c.b16 %v613, %v611
      %v890 = vpack.c.b16 %v616, %v614
      %v891 = vpack.c.b16 %v617, %v615
      %v892 = vpack.c.b16 %v620, %v618
      %v893 = vpack.c.b16 %v621, %v619
      %v894 = vpack.c.b16 %v624, %v622
      %v895 = vpack.c.b16 %v625, %v623
      %v896 = vpack.c.b16 %v628, %v626
      %v897 = vpack.c.b16 %v629, %v627
      %v898 = vpack.c.b16 %v632, %v630
      %v899 = vpack.c.b16 %v633, %v631
      %v900 = vpack.c.b16 %v636, %v634
      %v901 = vpack.c.b16 %v637, %v635
      %v902 = vpack.c.b16 %v640, %v638
      %v903 = vpack.c.b16 %v641, %v639
      %v904 = vpack.c.b16 %v644, %v642
      %v905 = vpack.c.b16 %v645, %v643
      %v906 = vpack.c.b16 %v648, %v646
      %v907 = vpack.c.b16 %v649, %v647
      %v908 = vpack.c.b16 %v652, %v650
      %v909 = vpack.c.b16 %v653, %v651
      %v910 = vpack.c.b16 %v656, %v654
      %v911 = vpack.c.b16 %v657, %v655
      %v912 = vpack.c.b16 %v660, %v658
      %v913 = vpack.c.b16 %v661, %v659
      %v914 = vpack.c.b16 %v664, %v662
      %v915 = vpack.c.b16 %v665, %v663
      %v916 = vpack.c.b16 %v668, %v666
      %v917 = vpack.c.b16 %v669, %v667
      %v918 = vpack.c.b16 %v672, %v670
      %v919 = vpack.c.b16 %v673, %v671
      %v920 = vpack.c.b16 %v676, %v674
      %v921 = vpack.c.b16 %v677, %v675
      %v922 = vpack.c.b16 %v680, %v678
      %v923 = vpack.c.b16 %v681, %v679
      %v924 = vpack.c.b16 %v684, %v682
      %v925 = vpack.c.b16 %v685, %v683
      %v926 = vpack.c.b16 %v688, %v686
      %v927 = vpack.c.b16 %v689, %v687
      %v928 = vpack.c.b16 %v692, %v690
      %v929 = vpack.c.b16 %v693, %v691
      %v930 = vpack.c.b16 %v696, %v694
      %v931 = vpack.c.b16 %v697, %v695
      %v932 = vpack.c.b16 %v700, %v698
      %v933 = vpack.c.b16 %v701, %v699
      %v934 = vpack.c.b16 %v704, %v702
      %v935 = vpack.c.b16 %v705, %v703
      %v936 = vpack.c.b16 %v708, %v706
      %v937 = vpack.c.b16 %v709, %v707
      %v938 = vpack.c.b16 %v712, %v710
      %v939 = vpack.c.b16 %v713, %v711
      %v940 = vpack.c.b16 %v716, %v714
      %v941 = vpack.c.b16 %v717, %v715
      %v942 = vpack.c.b16 %v720, %v718
      %v943 = vpack.c.b16 %v721, %v719
      %v944 = vpack.c.b16 %v724, %v722
      %v945 = vpack.c.b16 %v725, %v723
      %v946 = vpack.c.b16 %v728, %v726
      %v947 = vpack.c.b16 %v729, %v727
      %v948 = vpack.c.b16 %v732, %v730
      %v949 = vpack.c.b16 %v733, %v731
      %v950 = vpack.c.b16 %v736, %v734
      %v951 = vpack.c.b16 %v737, %v735
      %v952 = vpack.c.b16 %v740, %v738
      %v953 = vpack.c.b16 %v741, %v739
      %v954 = vpack.c.b16 %v744, %v742
      %v955 = vpack.c.b16 %v745, %v743
      %v956 = vpack.c.b16 %v748, %v746
      %v957 = vpack.c.b16 %v749, %v747
      %v958 = vpack.c.b16 %v752, %v750
      %v959 = vpack.c.b16 %v753, %v751
      %v960 = vpack.c.b16 %v756, %v754
      %v961 = vpack.c.b16 %v757, %v755
      %v962 = vpack.c.b16 %v760, %v758
      %v963 = vpack.c.b16 %v761, %v759
      %v964 = vpack.c.b16 %v764, %v762
      %v965 = vpack.c.b16 %v765, %v763
      %v966 = vpack.c.b16 %v768, %v766
      %v967 = vpack.c.b16 %v769, %v767
      %v968 = vpack.c.b16 %v772, %v770
      %v969 = vpack.c.b16 %v773, %v771
      %v970 = vpack.c.b16 %v776, %v774
      %v971 = vpack.c.b16 %v777, %v775
      %v972 = vpack.c.b16 %v780, %v778
      %v973 = vpack.c.b16 %v781, %v779
      %v974 = vpack.c.b16 %v784, %v782
      %v975 = vpack.c.b16 %v785, %v783
      %v976 = vpack.c.b16 %v788, %v786
      %v977 = vpack.c.b16 %v789, %v787
      %v978 = vpack.c.b16 %v792, %v790
      %v979 = vpack.c.b16 %v793, %v791
      %v980 = vpack.c.b16 %v796, %v794
      %v981 = vpack.c.b16 %v797, %v795
      %v982 = vpack.c.b16 %v800, %v798
      %v983 = vpack.c.b16 %v801, %v799
      %v984 = vpack.c.b16 %v804, %v802
      %v985 = vpack.c.b16 %v805, %v803
      %v986 = vpack.c.b16 %v808, %v806
      %v987 = vpack.c.b16 %v809, %v807
      %v988 = vpack.c.b16 %v812, %v810
      %v989 = vpack.c.b16 %v813, %v811
      %v990 = vpack.c.b16 %v816, %v814
      %v991 = vpack.c.b16 %v817, %v815
      %v992 = vpack.c.b16 %v820, %v818
      %v993 = vpack.c.b16 %v821, %v819
      %v994 = vpack.c.b16 %v824, %v822
      %v995 = vpack.c.b16 %v825, %v823
      %v996 = vpack.c.b16 %v828, %v826
      %v997 = vpack.c.b16 %v829, %v827
      %v998 = vpack.c.b16 %v832, %v830
      %v999 = vpack.c.b16 %v833, %v831
      %v1000 = vpack.c.b16 %v836, %v834
      %v1001 = vpack.c.b16 %v837, %v835
      %v1002 = vpack.c.b16 %v840, %v838
      %v1003 = vpack.c.b16 %v841, %v839
      %v1004 = vpack.c.b16 %v844, %v842
      %v1005 = vpack.c.b16 %v845, %v843
      %v1006 = vpack.c.b16 %v848, %v846
      %v1007 = vpack.c.b16 %v849, %v847
      %v1008 = vpack.c.b16 %v852, %v850
      %v1009 = vpack.c.b16 %v853, %v851
      %v1010 = vpack.c.b16 %v856, %v854
      %v1011 = vpack.c.b16 %v857, %v855
      %v1012 = vpack.c.b16 %v860, %v858
      %v1013 = vpack.c.b16 %v861, %v859
      %v1014 = vpack.c.b16 %v864, %v862
      %v1015 = vpack.c.b16 %v865, %v863
      %v1016 = vpack.c.b16 %v868, %v866
      %v1017 = vpack.c.b16 %v869, %v867
      %v1018 = vpack.c.b16 %v872, %v870
      %v1019 = vpack.c.b16 %v873, %v871
      %v1020 = vpack.c.b16 %v876, %v874
      %v1021 = vpack.c.b16 %v877, %v875
      %1166 = vmatprep.subr.bf16.mxu0 %v893
      %1167 = vmatpush1.bf16.msra.mxu0 %v892
      %1168 = vmatprep.subr.bf16.mxu0 %v891
      %1169 = vmatpush1.bf16.msra.mxu0 %v890
      %1170 = vmatprep.subr.bf16.mxu0 %v889
      %1171 = vmatpush1.bf16.msra.mxu0 %v888
      %1172 = vmatprep.subr.bf16.mxu0 %v887
      %1173 = vmatpush1.bf16.msra.mxu0 %v886
      %1174 = vmatprep.subr.bf16.mxu0 %v885
      %1175 = vmatpush1.bf16.msra.mxu0 %v884
      %1176 = vmatprep.subr.bf16.mxu0 %v883
      %1177 = vmatpush1.bf16.msra.mxu0 %v882
      %1178 = vmatprep.subr.bf16.mxu0 %v881
      %1179 = vmatpush1.bf16.msra.mxu0 %v880
      %1180 = vmatprep.subr.bf16.mxu0 %v879
      %1181 = vmatpush1.bf16.msra.mxu0 %v878
      %1182 = vmatprep.subr.bf16.mxu0 %v909
      %1183 = vmatpush2.bf16.msra.mxu0 %v908
      %1184 = vmatprep.subr.bf16.mxu0 %v907
      %1185 = vmatpush2.bf16.msra.mxu0 %v906
      %1186 = vmatprep.subr.bf16.mxu0 %v905
      %1187 = vmatpush2.bf16.msra.mxu0 %v904
      %1188 = vmatprep.subr.bf16.mxu0 %v903
      %1189 = vmatpush2.bf16.msra.mxu0 %v902
      %1190 = vmatprep.subr.bf16.mxu0 %v901
      %1191 = vmatpush2.bf16.msra.mxu0 %v900
      %1192 = vmatprep.subr.bf16.mxu0 %v899
      %1193 = vmatpush2.bf16.msra.mxu0 %v898
      %1194 = vmatprep.subr.bf16.mxu0 %v897
      %1195 = vmatpush2.bf16.msra.mxu0 %v896
      %1196 = vmatprep.subr.bf16.mxu0 %v895
      %1197 = vmatpush2.bf16.msra.mxu0 %v894
      %1198 = vmatprep.mubr.bf16.mxu0 %v429
      %1199 = vmatmul.mubr.bf16.gmra.mxu0 %v428
      %v1200 = vpop.f32.mrf.mxu0
      %v1201 = vadd.f32 %v407, %v1200
      %v1202 = vpop.f32.mrf.mxu0
      %v1203 = vadd.f32 %v411, %v1202
      %v1204 = vpop.f32.mrf.mxu0
      %v1205 = vpop.f32.mrf.mxu0
      %1206 = vdwg.mxu0
      %1207 = vmatprep.subr.bf16.mxu0 %v925
      %1208 = vmatpush1.bf16.msra.mxu0 %v924
      %1209 = vmatprep.subr.bf16.mxu0 %v923
      %1210 = vmatpush1.bf16.msra.mxu0 %v922
      %1211 = vmatprep.subr.bf16.mxu0 %v921
      %1212 = vmatpush1.bf16.msra.mxu0 %v920
      %1213 = vmatprep.subr.bf16.mxu0 %v919
      %1214 = vmatpush1.bf16.msra.mxu0 %v918
      %1215 = vmatprep.subr.bf16.mxu0 %v917
      %1216 = vmatpush1.bf16.msra.mxu0 %v916
      %1217 = vmatprep.subr.bf16.mxu0 %v915
      %1218 = vmatpush1.bf16.msra.mxu0 %v914
      %1219 = vmatprep.subr.bf16.mxu0 %v913
      %1220 = vmatpush1.bf16.msra.mxu0 %v912
      %1221 = vmatprep.subr.bf16.mxu0 %v911
      %1222 = vmatpush1.bf16.msra.mxu0 %v910
      %1223 = vmatprep.subr.bf16.mxu0 %v941
      %1224 = vmatpush2.bf16.msra.mxu0 %v940
      %1225 = vmatprep.subr.bf16.mxu0 %v939
      %1226 = vmatpush2.bf16.msra.mxu0 %v938
      %1227 = vmatprep.subr.bf16.mxu0 %v937
      %1228 = vmatpush2.bf16.msra.mxu0 %v936
      %1229 = vmatprep.subr.bf16.mxu0 %v935
      %1230 = vmatpush2.bf16.msra.mxu0 %v934
      %1231 = vmatprep.subr.bf16.mxu0 %v933
      %1232 = vmatpush2.bf16.msra.mxu0 %v932
      %1233 = vmatprep.subr.bf16.mxu0 %v931
      %1234 = vmatpush2.bf16.msra.mxu0 %v930
      %1235 = vmatprep.subr.bf16.mxu0 %v929
      %1236 = vmatpush2.bf16.msra.mxu0 %v928
      %1237 = vmatprep.subr.bf16.mxu0 %v927
      %1238 = vmatpush2.bf16.msra.mxu0 %v926
      %1239 = vmatprep.mubr.bf16.mxu0 %v431
      %1240 = vmatmul.mubr.bf16.gmra.mxu0 %v430
      %v1241 = vpop.f32.mrf.mxu0
      %v1242 = vadd.f32 %v1201, %v1241
      %v1243 = vpop.f32.mrf.mxu0
      %v1244 = vadd.f32 %v1203, %v1243
      %v1245 = vpop.f32.mrf.mxu0
      %v1246 = vpop.f32.mrf.mxu0
      %1247 = vdwg.mxu0
      %1248 = vmatprep.subr.bf16.mxu0 %v957
      %1249 = vmatpush1.bf16.msra.mxu0 %v956
      %1250 = vmatprep.subr.bf16.mxu0 %v955
      %1251 = vmatpush1.bf16.msra.mxu0 %v954
      %1252 = vmatprep.subr.bf16.mxu0 %v953
      %1253 = vmatpush1.bf16.msra.mxu0 %v952
      %1254 = vmatprep.subr.bf16.mxu0 %v951
      %1255 = vmatpush1.bf16.msra.mxu0 %v950
      %1256 = vmatprep.subr.bf16.mxu0 %v949
      %1257 = vmatpush1.bf16.msra.mxu0 %v948
      %1258 = vmatprep.subr.bf16.mxu0 %v947
      %1259 = vmatpush1.bf16.msra.mxu0 %v946
      %1260 = vmatprep.subr.bf16.mxu0 %v945
      %1261 = vmatpush1.bf16.msra.mxu0 %v944
      %1262 = vmatprep.subr.bf16.mxu0 %v943
      %1263 = vmatpush1.bf16.msra.mxu0 %v942
      %1264 = vmatprep.subr.bf16.mxu0 %v973
      %1265 = vmatpush2.bf16.msra.mxu0 %v972
      %1266 = vmatprep.subr.bf16.mxu0 %v971
      %1267 = vmatpush2.bf16.msra.mxu0 %v970
      %1268 = vmatprep.subr.bf16.mxu0 %v969
      %1269 = vmatpush2.bf16.msra.mxu0 %v968
      %1270 = vmatprep.subr.bf16.mxu0 %v967
      %1271 = vmatpush2.bf16.msra.mxu0 %v966
      %1272 = vmatprep.subr.bf16.mxu0 %v965
      %1273 = vmatpush2.bf16.msra.mxu0 %v964
      %1274 = vmatprep.subr.bf16.mxu0 %v963
      %1275 = vmatpush2.bf16.msra.mxu0 %v962
      %1276 = vmatprep.subr.bf16.mxu0 %v961
      %1277 = vmatpush2.bf16.msra.mxu0 %v960
      %1278 = vmatprep.subr.bf16.mxu0 %v959
      %1279 = vmatpush2.bf16.msra.mxu0 %v958
      %1280 = vmatprep.mubr.bf16.mxu0 %v433
      %1281 = vmatmul.mubr.bf16.gmra.mxu0 %v432
      %v1282 = vpop.f32.mrf.mxu0
      %v1283 = vadd.f32 %v1242, %v1282
      %v1284 = vpop.f32.mrf.mxu0
      %v1285 = vadd.f32 %v1244, %v1284
      %v1286 = vpop.f32.mrf.mxu0
      %v1287 = vpop.f32.mrf.mxu0
      %1288 = vdwg.mxu0
      %1289 = vmatprep.subr.bf16.mxu0 %v989
      %1290 = vmatpush1.bf16.msra.mxu0 %v988
      %1291 = vmatprep.subr.bf16.mxu0 %v987
      %1292 = vmatpush1.bf16.msra.mxu0 %v986
      %1293 = vmatprep.subr.bf16.mxu0 %v985
      %1294 = vmatpush1.bf16.msra.mxu0 %v984
      %1295 = vmatprep.subr.bf16.mxu0 %v983
      %1296 = vmatpush1.bf16.msra.mxu0 %v982
      %1297 = vmatprep.subr.bf16.mxu0 %v981
      %1298 = vmatpush1.bf16.msra.mxu0 %v980
      %1299 = vmatprep.subr.bf16.mxu0 %v979
      %1300 = vmatpush1.bf16.msra.mxu0 %v978
      %1301 = vmatprep.subr.bf16.mxu0 %v977
      %1302 = vmatpush1.bf16.msra.mxu0 %v976
      %1303 = vmatprep.subr.bf16.mxu0 %v975
      %1304 = vmatpush1.bf16.msra.mxu0 %v974
      %1305 = vmatprep.subr.bf16.mxu0 %v1005
      %1306 = vmatpush2.bf16.msra.mxu0 %v1004
      %1307 = vmatprep.subr.bf16.mxu0 %v1003
      %1308 = vmatpush2.bf16.msra.mxu0 %v1002
      %1309 = vmatprep.subr.bf16.mxu0 %v1001
      %1310 = vmatpush2.bf16.msra.mxu0 %v1000
      %1311 = vmatprep.subr.bf16.mxu0 %v999
      %1312 = vmatpush2.bf16.msra.mxu0 %v998
      %1313 = vmatprep.subr.bf16.mxu0 %v997
      %1314 = vmatpush2.bf16.msra.mxu0 %v996
      %1315 = vmatprep.subr.bf16.mxu0 %v995
      %1316 = vmatpush2.bf16.msra.mxu0 %v994
      %1317 = vmatprep.subr.bf16.mxu0 %v993
      %1318 = vmatpush2.bf16.msra.mxu0 %v992
      %1319 = vmatprep.subr.bf16.mxu0 %v991
      %1320 = vmatpush2.bf16.msra.mxu0 %v990
      %1321 = vmatprep.mubr.bf16.mxu0 %v435
      %1322 = vmatmul.mubr.bf16.gmra.mxu0 %v434
      %v1323 = vpop.f32.mrf.mxu0
      %v1324 = vadd.f32 %v1283, %v1323
      %v1325 = vpop.f32.mrf.mxu0
      %v1326 = vadd.f32 %v1285, %v1325
      %v1327 = vpop.f32.mrf.mxu0
      %v1328 = vpop.f32.mrf.mxu0
      %1329 = vdwg.mxu0
      %1330 = vmatprep.subr.bf16.mxu0 %v1021
      %1331 = vmatpush1.bf16.msra.mxu0 %v1020
      %1332 = vmatprep.subr.bf16.mxu0 %v1019
      %1333 = vmatpush1.bf16.msra.mxu0 %v1018
      %1334 = vmatprep.subr.bf16.mxu0 %v1017
      %1335 = vmatpush1.bf16.msra.mxu0 %v1016
      %1336 = vmatprep.subr.bf16.mxu0 %v1015
      %1337 = vmatpush1.bf16.msra.mxu0 %v1014
      %1338 = vmatprep.subr.bf16.mxu0 %v1013
      %1339 = vmatpush1.bf16.msra.mxu0 %v1012
      %1340 = vmatprep.subr.bf16.mxu0 %v1011
      %1341 = vmatpush1.bf16.msra.mxu0 %v1010
      %1342 = vmatprep.subr.bf16.mxu0 %v1009
      %1343 = vmatpush1.bf16.msra.mxu0 %v1008
      %1344 = vmatprep.subr.bf16.mxu0 %v1007
      %1345 = vmatpush1.bf16.msra.mxu0 %v1006
      %1346 = vmatprep.subr.bf16.mxu0 0
      %1347 = vmatpush2.bf16.msra.mxu0 0
      %1348 = vmatprep.subr.bf16.mxu0 0
      %1349 = vmatpush2.bf16.msra.mxu0 0
      %1350 = vmatprep.subr.bf16.mxu0 0
      %1351 = vmatpush2.bf16.msra.mxu0 0
      %1352 = vmatprep.subr.bf16.mxu0 0
      %1353 = vmatpush2.bf16.msra.mxu0 0
      %1354 = vmatprep.subr.bf16.mxu0 0
      %1355 = vmatpush2.bf16.msra.mxu0 0
      %1356 = vmatprep.subr.bf16.mxu0 0
      %1357 = vmatpush2.bf16.msra.mxu0 0
      %1358 = vmatprep.subr.bf16.mxu0 0
      %1359 = vmatpush2.bf16.msra.mxu0 0
      %1360 = vmatprep.subr.bf16.mxu0 0
      %1361 = vmatpush2.bf16.msra.mxu0 0
      %1362 = vmatprep.mubr.bf16.mxu0 0
      %1363 = vmatmul.mubr.bf16.gmra.mxu0 %v436
      %v1364 = vpop.f32.mrf.mxu0
      %v1365 = vadd.f32 %v1324, %v1364
      %v1366 = vpop.f32.mrf.mxu0
      %v1367 = vadd.f32 %v1326, %v1366
      %v1368 = vpop.f32.mrf.mxu0
      %v1369 = vpop.f32.mrf.mxu0
      %1370 = vdwg.mxu0
      %v1371 = vpack.c.bf16 %v1365, %v1365
      %v1372 = vpack.c.bf16 %v1367, %v1367
      %v1375 = vunpack.c.l.b16 %v1371
      %v1376 = vunpack.c.l.b16 %v1372
      %v1377 = vpack.c.b16 %v1376, %v1375
      %1379 = vst [vmem:[%s241] sm:$0xff] %v1377
      %s1380 = smul.u32 %s21, 8
      %v1381 = vlaneseq
      %v1382 = vshrl.u32 %v1381, 7
      %v1383 = vstv %s1380
      %v1384 = vadd.s32 %v1383, %v1382
      %vm1385 = vcmp.lt.s32.totalorder %v1384, 4
      %v1386 = vsel %vm1385, 1, 0
      %vm1387 = vcmp.eq.s32.totalorder %v1386, 1
      %v1388 = vsel %vm1387, %v1365, 0.0
      %v1389 = vsel %vm1387, %v1367, 0.0
      %v1390 = vld [vmem:[%s246] ss:$2 sm:$0x3]
      %v1391 = vrot.slane %v1388, 4
      %v1392 = vadd.f32 %v1388, %v1391
      %v1393 = vrot.slane %v1392, 2
      %v1394 = vadd.f32 %v1392, %v1393
      %v1395 = vrot.slane %v1394, 1
      %v1396 = vadd.f32 %v1394, %v1395
      %v1397 = vrot.slane %v1389, 4
      %v1398 = vadd.f32 %v1389, %v1397
      %v1399 = vrot.slane %v1398, 2
      %v1400 = vadd.f32 %v1398, %v1399
      %v1401 = vrot.slane %v1400, 1
      %v1402 = vadd.f32 %v1400, %v1401
      %v1405 = vcombine.low %v1396, %v1402
      %v1407 = vunpack.c.l.s4 1966171168
      %v1408 = vunpack.c.0.s8 %v1407
      %v1409 = vlaneseq
      %v1410 = vshrl.u32 %v1409, 7
      %v1411 = vsub.s32 %v1408, %v1410
      %v1412 = vrot.slane %v1405, %v1411
      %v1414 = vunpack.c.l.s4 1966171168
      %v1415 = vunpack.c.0.s8 %v1414
      %v1416 = vlaneseq
      %v1417 = vshrl.u32 %v1416, 7
      %v1418 = vsub.s32 %v1415, %v1417
      %v1419 = vrot.slane %v1412, %v1418
      %v1421 = vadd.f32 %v1390, %v1419
      %v1422 = vlaneseq
      %vm1423 = vcmp.ge.s32.totalorder %v1422, 0
      %vm1424 = vcmp.lt.s32.totalorder %v1422, 256
      %vm1425 = vmand %vm1423, %vm1424
      %1426 = vst.msk [vmem:[%s246] ss:$2 sm:$0x3] %vm1425, %v1421
      %s1427 = scalar_lea.vmem %s246, 1
      %v1428 = vld [vmem:[%s1427] ss:$2 sm:$0x3]
      %v1429 = vmul.f32 %v1388, %v1388
      %v1430 = vmul.f32 %v1389, %v1389
      %v1431 = vrot.slane %v1429, 4
      %v1432 = vadd.f32 %v1429, %v1431
      %v1433 = vrot.slane %v1432, 2
      %v1434 = vadd.f32 %v1432, %v1433
      %v1435 = vrot.slane %v1434, 1
      %v1436 = vadd.f32 %v1434, %v1435
      %v1437 = vrot.slane %v1430, 4
      %v1438 = vadd.f32 %v1430, %v1437
      %v1439 = vrot.slane %v1438, 2
      %v1440 = vadd.f32 %v1438, %v1439
      %v1441 = vrot.slane %v1440, 1
      %v1442 = vadd.f32 %v1440, %v1441
      %v1445 = vcombine.low %v1436, %v1442
      %v1447 = vunpack.c.l.s4 1966171168
      %v1448 = vunpack.c.0.s8 %v1447
      %v1449 = vlaneseq
      %v1450 = vshrl.u32 %v1449, 7
      %v1451 = vsub.s32 %v1448, %v1450
      %v1452 = vrot.slane %v1445, %v1451
      %v1454 = vunpack.c.l.s4 1966171168
      %v1455 = vunpack.c.0.s8 %v1454
      %v1456 = vlaneseq
      %v1457 = vshrl.u32 %v1456, 7
      %v1458 = vsub.s32 %v1455, %v1457
      %v1459 = vrot.slane %v1452, %v1458
      %v1461 = vadd.f32 %v1428, %v1459
      %1462 = vst.msk [vmem:[%s1427] ss:$2 sm:$0x3] %vm1425, %v1461
      %p1463 = scmp.lt.s32.totalorder %s20, 1
      %s1464 = scalar_select %p1463, %s20, 1
      %p1465 = scmp.lt.s32.totalorder %s21, 0
      %s1466 = scalar_select %p1465, %s21, 0
      %s1467 = smul.addr %s1466, 2
      %s1468 = smul.addr %s1464, 2
      %s1469 = sadd.s32 %s1467, %s1468
      %s1470 = smul.addr %s1469, 4
      %s1471 = scalar_lea.vmem %s3, %s1470
      %p1472 = scmp.lt.s32.totalorder %s20, 1
      %s1473 = scalar_select %p1472, %s20, 1
      %s1474 = smul.addr %s1473, 2
      %s1475 = smul.addr %s1474, 2
      %s1476 = scalar_lea.vmem %s4, %s1475
      // Predicated region
      $region37: #{discriminator_forward.11} parent=31 // pred_check
        %p1477 = pneg %p118
      $region38: #{discriminator_forward.11} parent=31 // pred_check_branch
        %1479 = sbr.rel (%p1477) target = $region40
      $region39: #{discriminator_forward.11} parent=31 // pred_region
        _
      $region40: #{discriminator_forward.11} parent=31 // pred_fallthru
        _
      // Predicated region
      $region41: #{discriminator_forward.11} parent=31 // pred_check
        %p1480 = pneg %p144
      $region42: #{discriminator_forward.11} parent=31 // pred_check_branch
        %1482 = sbr.rel (%p1480) target = $region44
      $region43: #{discriminator_forward.11} parent=31 // pred_region
        _
      $region44: #{discriminator_forward.11} parent=31 // pred_fallthru
        _
    $region32: #{discriminator_forward.11} parent=5 // pred_fallthru
      _
    %p1483 = scmp.le.s32.totalorder 2, %s11
    // Predicated region
    $region45: #{discriminator_forward.11} parent=5 // pred_check
      %p1484 = pneg %p1483
    $region46: #{discriminator_forward.11} parent=5 // pred_check_branch
      %1486 = sbr.rel (%p1484) target = $region48
    $region47: #{discriminator_forward.11} parent=5 // pred_region
      %s1487 = ssub.s32 %s11, 2
      // Predicated region
      $region49: #{discriminator_forward.11} parent=47 // pred_check
        %p1488 = pneg %p124
      $region50: #{discriminator_forward.11} parent=47 // pred_check_branch
        %1490 = sbr.rel (%p1488) target = $region52
      $region51: #{discriminator_forward.11} parent=47 // pred_region
        %p1491 = scmp.lt.s32.totalorder %s22, 1
        %s1492 = scalar_select %p1491, %s22, 1
        %p1493 = scmp.lt.s32.totalorder %s23, 0
        %s1494 = scalar_select %p1493, %s23, 0
        %s1495 = smul.addr %s1494, 2
        %s1496 = smul.addr %s1492, 2
        %s1497 = sadd.s32 %s1495, %s1496
        %s1498 = smul.addr %s1497, 4
        %s1499 = scalar_lea.vmem %s3, %s1498
      $region52: #{discriminator_forward.11} parent=47 // pred_fallthru
        _
      // Predicated region
      $region53: #{discriminator_forward.11} parent=47 // pred_check
        %p1500 = pneg %p150
      $region54: #{discriminator_forward.11} parent=47 // pred_check_branch
        %1502 = sbr.rel (%p1500) target = $region56
      $region55: #{discriminator_forward.11} parent=47 // pred_region
        %p1503 = scmp.lt.s32.totalorder %s22, 1
        %s1504 = scalar_select %p1503, %s22, 1
        %s1505 = smul.addr %s1504, 2
        %s1506 = smul.addr %s1505, 2
        %s1507 = scalar_lea.vmem %s4, %s1506
      $region56: #{discriminator_forward.11} parent=47 // pred_fallthru
        _
    $region48: #{discriminator_forward.11} parent=5 // pred_fallthru
      _
  $region6: #{discriminator_forward.11} parent=0 // loop_footer
    %s15 = sadd.s32 1, %s11
  $region7: #{discriminator_forward.11} parent=0 // loop_footer_branch
    %10 = sbr.rel target = $region3
  $region8: #{discriminator_forward.11} parent=0 // loop_exit
    _

// kernel: discriminator_forward.13
$region0: #{discriminator_forward.13}
  #allocation0 [shape = 'u32[]', space=smem, size = 0x4, offset = 0x4, fixed_abs, tag = 'smem constant byte address 0x4 - core index']
  #allocation1 [shape = 'u32[144,128]{1,0:T(1,128)}', space=vmem, size = 0x12000, scoped, tag = 'internal scratch']
  %s0 = inlined_call_operand.vmem [shape: bf16[2,8,2304], index: 0, kind: input, shape index: {}]
  %s1 = inlined_call_operand.vmem [shape: bf16[2304,512], index: 1, kind: input, shape index: {}]
  %s2 = inlined_call_operand.vmem [shape: f32[1,512], index: 2, kind: input, shape index: {}]
  %s3 = inlined_call_operand.vmem [shape: bf16[2,8,512], index: 3, kind: output, shape index: {0}]
  %s4 = inlined_call_operand.vmem [shape: f32[2,2,512], index: 4, kind: output, shape index: {1}]
  %5 = xla_tuple %s3, %s4
  %s6 = sld [smem:[#allocation0]]
  $region57: #{discriminator_forward.13} parent=0
    _
  %s8 = ssub.s32 1, %s6
  %s9 = scalar_select 0, %s8, %s6
  loop: start=0, step=1, limit=4
  $region2: #{discriminator_forward.13} parent=0 // loop_pre_header
    _
  $region3: #{discriminator_forward.13} parent=0 // loop_header
    %s11 = sphi 0, %s15
    %p12 = scmp.ge.s32.totalorder %s11, 4
    %s18 = sphi 0, %s30
    %s19 = sphi 0, %s26
    %s20 = sphi 0, %s18
    %s21 = sphi 0, %s19
    %s22 = sphi 0, %s20
    %s23 = sphi 0, %s21
    %s35 = sphi 0, %s37
    %s38 = sphi 0, %s35
    %s39 = sphi 0, %s38
    %s55 = sphi 0, %s39
    %s59 = sphi 0, %s59
    %s61 = sphi 0, %s59
    %s62 = sphi 0, %s61
    %s76 = sphi 0, %s62
    %s80 = sphi 0, %s80
    %s82 = sphi 0, %s80
    %s83 = sphi 0, %s82
    %s97 = sphi 0, %s83
    %s105 = sphi 0, %s107
    %s108 = sphi 0, %s105
    %s109 = sphi 0, %s108
    %s125 = sphi 0, %s109
    %s131 = sphi 0, %s133
    %s134 = sphi 0, %s131
    %s135 = sphi 0, %s134
    %s151 = sphi 0, %s135
  $region4: #{discriminator_forward.13} parent=0 // loop_header_branch
    %14 = sbr.rel (%p12) target = $region8
  $region5: #{discriminator_forward.13} parent=0 // loop_body
    %s16 = ssub.s32 %s11, 1
    %s17 = ssub.s32 %s11, 2
    %s24 = sadd.s32 1, %s19
    %p25 = scmp.ge.s32.totalorder %s24, 1
    %s26 = scalar_select %p25, 0, %s24
    %s27 = sadd.s32 1, %s18
    %s28 = scalar_select %p25, %s27, %s18
    %p29 = scmp.ge.s32.totalorder %s28, 2
    %s30 = scalar_select %p29, 0, %s28
    %s31 = ssub.s32 %s18, %s30
    %s32 = ssub.s32 %s19, %s26
    %s33 = sor.u32 %s31, %s32
    %p34 = scmp.eq.s32.totalorder %s33, 0
    %s36 = sadd.s32 %s35, 1
    %s37 = scalar_select %p34, %s35, %s36
    %p40 = pneg %p34
    %p41 = scmp.eq.s32.totalorder %s11, 1
    %p42 = por %p40, %p41
    %p43 = scmp.ne.s32.totalorder %s35, %s38
    %p44 = scmp.eq.s32.totalorder %s11, 0
    %p45 = por %p43, %p44
    %p46 = scmp.ne.s32.totalorder %s35, %s38
    %p47 = scmp.eq.s32.totalorder %s16, 1
    %p48 = por %p46, %p47
    %p49 = scmp.ne.s32.totalorder %s38, %s39
    %p50 = scmp.eq.s32.totalorder %s16, 0
    %p51 = por %p49, %p50
    %p52 = scmp.ne.s32.totalorder %s38, %s39
    %p53 = scmp.eq.s32.totalorder %s17, 1
    %p54 = por %p52, %p53
    %p56 = scmp.ne.s32.totalorder %s39, %s55
    %p57 = scmp.eq.s32.totalorder %s17, 0
    %p58 = por %p56, %p57
    %s60 = sadd.s32 %s59, 1
    %p63 = scmp.eq.s32.totalorder %s11, 1
    %p64 = scmp.ne.s32.totalorder %s59, %s61
    %p65 = scmp.eq.s32.totalorder %s11, 0
    %p66 = por %p64, %p65
    %p67 = scmp.ne.s32.totalorder %s59, %s61
    %p68 = scmp.eq.s32.totalorder %s16, 1
    %p69 = por %p67, %p68
    %p70 = scmp.ne.s32.totalorder %s61, %s62
    %p71 = scmp.eq.s32.totalorder %s16, 0
    %p72 = por %p70, %p71
    %p73 = scmp.ne.s32.totalorder %s61, %s62
    %p74 = scmp.eq.s32.totalorder %s17, 1
    %p75 = por %p73, %p74
    %p77 = scmp.ne.s32.totalorder %s62, %s76
    %p78 = scmp.eq.s32.totalorder %s17, 0
    %p79 = por %p77, %p78
    %s81 = sadd.s32 %s80, 1
    %p84 = scmp.eq.s32.totalorder %s11, 1
    %p85 = scmp.ne.s32.totalorder %s80, %s82
    %p86 = scmp.eq.s32.totalorder %s11, 0
    %p87 = por %p85, %p86
    %p88 = scmp.ne.s32.totalorder %s80, %s82
    %p89 = scmp.eq.s32.totalorder %s16, 1
    %p90 = por %p88, %p89
    %p91 = scmp.ne.s32.totalorder %s82, %s83
    %p92 = scmp.eq.s32.totalorder %s16, 0
    %p93 = por %p91, %p92
    %p94 = scmp.ne.s32.totalorder %s82, %s83
    %p95 = scmp.eq.s32.totalorder %s17, 1
    %p96 = por %p94, %p95
    %p98 = scmp.ne.s32.totalorder %s83, %s97
    %p99 = scmp.eq.s32.totalorder %s17, 0
    %p100 = por %p98, %p99
    %s101 = ssub.s32 %s18, %s30
    %s102 = ssub.s32 %s19, %s26
    %s103 = sor.u32 %s101, %s102
    %p104 = scmp.eq.s32.totalorder %s103, 0
    %s106 = sadd.s32 %s105, 1
    %s107 = scalar_select %p104, %s105, %s106
    %p110 = pneg %p104
    %p111 = scmp.eq.s32.totalorder %s11, 1
    %p112 = por %p110, %p111
    %p113 = scmp.ne.s32.totalorder %s105, %s108
    %p114 = scmp.eq.s32.totalorder %s11, 0
    %p115 = por %p113, %p114
    %p116 = scmp.ne.s32.totalorder %s105, %s108
    %p117 = scmp.eq.s32.totalorder %s16, 1
    %p118 = por %p116, %p117
    %p119 = scmp.ne.s32.totalorder %s108, %s109
    %p120 = scmp.eq.s32.totalorder %s16, 0
    %p121 = por %p119, %p120
    %p122 = scmp.ne.s32.totalorder %s108, %s109
    %p123 = scmp.eq.s32.totalorder %s17, 1
    %p124 = por %p122, %p123
    %p126 = scmp.ne.s32.totalorder %s109, %s125
    %p127 = scmp.eq.s32.totalorder %s17, 0
    %p128 = por %p126, %p127
    %s129 = ssub.s32 %s18, %s30
    %p130 = scmp.eq.s32.totalorder %s129, 0
    %s132 = sadd.s32 %s131, 1
    %s133 = scalar_select %p130, %s131, %s132
    %p136 = pneg %p130
    %p137 = scmp.eq.s32.totalorder %s11, 1
    %p138 = por %p136, %p137
    %p139 = scmp.ne.s32.totalorder %s131, %s134
    %p140 = scmp.eq.s32.totalorder %s11, 0
    %p141 = por %p139, %p140
    %p142 = scmp.ne.s32.totalorder %s131, %s134
    %p143 = scmp.eq.s32.totalorder %s16, 1
    %p144 = por %p142, %p143
    %p145 = scmp.ne.s32.totalorder %s134, %s135
    %p146 = scmp.eq.s32.totalorder %s16, 0
    %p147 = por %p145, %p146
    %p148 = scmp.ne.s32.totalorder %s134, %s135
    %p149 = scmp.eq.s32.totalorder %s17, 1
    %p150 = por %p148, %p149
    %p152 = scmp.ne.s32.totalorder %s135, %s151
    %p153 = scmp.eq.s32.totalorder %s17, 0
    %p154 = por %p152, %p153
    %p155 = scmp.le.s32.totalorder 1, %s11
    %p156 = scmp.lt.s32.totalorder %s11, 3
    %p157 = pnand %p155, %p156
    %p158 = pneg %p157
    // Predicated region
    $region9: #{discriminator_forward.13} parent=5 // pred_check
      _
    $region10: #{discriminator_forward.13} parent=5 // pred_check_branch
      %160 = sbr.rel (%p157) target = $region12
    $region11: #{discriminator_forward.13} parent=5 // pred_region
      %s161 = ssub.s32 %s11, 1
      // Predicated region
      $region13: #{discriminator_forward.13} parent=11 // pred_check
        %p162 = pneg %p72
      $region14: #{discriminator_forward.13} parent=11 // pred_check_branch
        %164 = sbr.rel (%p162) target = $region16
      $region15: #{discriminator_forward.13} parent=11 // pred_region
        _
      $region16: #{discriminator_forward.13} parent=11 // pred_fallthru
        _
      // Predicated region
      $region17: #{discriminator_forward.13} parent=11 // pred_check
        %p165 = pneg %p93
      $region18: #{discriminator_forward.13} parent=11 // pred_check_branch
        %167 = sbr.rel (%p165) target = $region20
      $region19: #{discriminator_forward.13} parent=11 // pred_region
        _
      $region20: #{discriminator_forward.13} parent=11 // pred_fallthru
        _
    $region12: #{discriminator_forward.13} parent=5 // pred_fallthru
      _
    %p168 = scmp.lt.s32.totalorder %s11, 2
    // Predicated region
    $region21: #{discriminator_forward.13} parent=5 // pred_check
      %p169 = pneg %p168
    $region22: #{discriminator_forward.13} parent=5 // pred_check_branch
      %171 = sbr.rel (%p169) target = $region24
    $region23: #{discriminator_forward.13} parent=5 // pred_region
      // Predicated region
      $region25: #{discriminator_forward.13} parent=23 // pred_check
        %p172 = pneg %p45
      $region26: #{discriminator_forward.13} parent=23 // pred_check_branch
        %174 = sbr.rel (%p172) target = $region28
      $region27: #{discriminator_forward.13} parent=23 // pred_region
        %p175 = scmp.lt.s32.totalorder %s18, 1
        %s176 = scalar_select %p175, %s18, 1
        %p177 = scmp.lt.s32.totalorder %s19, 0
        %s178 = scalar_select %p177, %s19, 0
        %s179 = smul.addr %s178, 18
        %s180 = smul.addr %s176, 18
        %s181 = sadd.s32 %s179, %s180
        %s182 = smul.addr %s181, 4
        %s183 = scalar_lea.vmem %s0, %s182
      $region28: #{discriminator_forward.13} parent=23 // pred_fallthru
        _
    $region24: #{discriminator_forward.13} parent=5 // pred_fallthru
      _
    %p184 = scmp.le.s32.totalorder 1, %s11
    %p185 = scmp.lt.s32.totalorder %s11, 3
    %p186 = pnand %p184, %p185
    %p187 = pneg %p186
    // Predicated region
    $region29: #{discriminator_forward.13} parent=5 // pred_check
      _
    $region30: #{discriminator_forward.13} parent=5 // pred_check_branch
      %189 = sbr.rel (%p186) target = $region32
    $region31: #{discriminator_forward.13} parent=5 // pred_region
      %s190 = ssub.s32 %s11, 1
      %p191 = scmp.lt.s32.totalorder %s20, 1
      %s192 = scalar_select %p191, %s20, 1
      %p193 = scmp.lt.s32.totalorder %s21, 0
      %s194 = scalar_select %p193, %s21, 0
      %s195 = smul.addr %s194, 18
      %s196 = smul.addr %s192, 18
      %s197 = sadd.s32 %s195, %s196
      %s198 = smul.addr %s197, 4
      %s199 = scalar_lea.vmem %s0, %s198
      %p200 = pneg %p51
      %p201 = pneg %p48
      %p202 = pneg %p72
      %p203 = pneg %p69
      %p204 = pneg %p93
      %p205 = pneg %p90
      %p206 = pneg %p121
      %p207 = pneg %p118
      %p208 = scmp.lt.s32.totalorder %s20, 1
      %s209 = scalar_select %p208, %s20, 1
      %p210 = scmp.lt.s32.totalorder %s21, 0
      %s211 = scalar_select %p210, %s21, 0
      %s212 = smul.addr %s211, 4
      %s213 = smul.addr %s209, 4
      %s214 = sadd.s32 %s212, %s213
      %s215 = smul.addr %s214, 4
      %s216 = scalar_lea.vmem %s3, %s215
      %p217 = pneg %p147
      %p218 = pneg %p144
      %p219 = scmp.lt.s32.totalorder %s20, 1
      %s220 = scalar_select %p219, %s20, 1
      %s221 = smul.addr %s220, 4
      %s222 = smul.addr %s221, 2
      %s223 = scalar_lea.vmem %s4, %s222
      %p224 = scmp.lt.s32.totalorder %s20, 1
      %s225 = scalar_select %p224, %s20, 1
      %p226 = scmp.lt.s32.totalorder %s21, 0
      %s227 = scalar_select %p226, %s21, 0
      %s228 = smul.addr %s227, 18
      %s229 = smul.addr %s225, 18
      %s230 = sadd.s32 %s228, %s229
      %s231 = smul.addr %s230, 4
      %s232 = scalar_lea.vmem %s0, %s231
      %p233 = scmp.lt.s32.totalorder %s20, 1
      %s234 = scalar_select %p233, %s20, 1
      %p235 = scmp.lt.s32.totalorder %s21, 0
      %s236 = scalar_select %p235, %s21, 0
      %s237 = smul.addr %s236, 4
      %s238 = smul.addr %s234, 4
      %s239 = sadd.s32 %s237, %s238
      %s240 = smul.addr %s239, 4
      %s241 = scalar_lea.vmem %s3, %s240
      %p242 = scmp.lt.s32.totalorder %s20, 1
      %s243 = scalar_select %p242, %s20, 1
      %s244 = smul.addr %s243, 4
      %s245 = smul.addr %s244, 2
      %s246 = scalar_lea.vmem %s4, %s245
      %p247 = scmp.eq.s32.totalorder %s21, 0
      // Predicated region
      $region33: #{discriminator_forward.13} parent=31 // pred_check
        %p248 = pneg %p247
      $region34: #{discriminator_forward.13} parent=31 // pred_check_branch
        %250 = sbr.rel (%p248) target = $region36
      $region35: #{discriminator_forward.13} parent=31 // pred_region
        %251 = vst [vmem:[%s246] sm:$0xff] 0.0
      $region36: #{discriminator_forward.13} parent=31 // pred_fallthru
        _
      %v252 = vld [vmem:[%s232] sm:$0xff]
      %v253 = vld [vmem:[%s232 + $0x8] sm:$0xff]
      %v254 = vld [vmem:[%s232 + $0x10] sm:$0xff]
      %v255 = vld [vmem:[%s232 + $0x18] sm:$0xff]
      %v256 = vld [vmem:[%s232 + $0x20] sm:$0xff]
      %v257 = vld [vmem:[%s232 + $0x28] sm:$0xff]
      %v258 = vld [vmem:[%s232 + $0x30] sm:$0xff]
      %v259 = vld [vmem:[%s232 + $0x38] sm:$0xff]
      %v260 = vld [vmem:[%s232 + $0x40] sm:$0xff]
      %v261 = vld [vmem:[%s1] sm:$0xff]
      %v262 = vld [vmem:[%s1 + $0x8] sm:$0xff]
      %v263 = vld [vmem:[%s1 + $0x10] sm:$0xff]
      %v264 = vld [vmem:[%s1 + $0x18] sm:$0xff]
      %v265 = vld [vmem:[%s1 + $0x20] sm:$0xff]
      %v266 = vld [vmem:[%s1 + $0x28] sm:$0xff]
      %v267 = vld [vmem:[%s1 + $0x30] sm:$0xff]
      %v268 = vld [vmem:[%s1 + $0x38] sm:$0xff]
      %v269 = vld [vmem:[%s1 + $0x40] sm:$0xff]
      %v270 = vld [vmem:[%s1 + $0x48] sm:$0xff]
      %v271 = vld [vmem:[%s1 + $0x50] sm:$0xff]
      %v272 = vld [vmem:[%s1 + $0x58] sm:$0xff]
      %v273 = vld [vmem:[%s1 + $0x60] sm:$0xff]
      %v274 = vld [vmem:[%s1 + $0x68] sm:$0xff]
      %v275 = vld [vmem:[%s1 + $0x70] sm:$0xff]
      %v276 = vld [vmem:[%s1 + $0x78] sm:$0xff]
      %v277 = vld [vmem:[%s1 + $0x80] sm:$0xff]
      %v278 = vld [vmem:[%s1 + $0x88] sm:$0xff]
      %v279 = vld [vmem:[%s1 + $0x90] sm:$0xff]
      %v280 = vld [vmem:[%s1 + $0x98] sm:$0xff]
      %v281 = vld [vmem:[%s1 + $0xa0] sm:$0xff]
      %v282 = vld [vmem:[%s1 + $0xa8] sm:$0xff]
      %v283 = vld [vmem:[%s1 + $0xb0] sm:$0xff]
      %v284 = vld [vmem:[%s1 + $0xb8] sm:$0xff]
      %v285 = vld [vmem:[%s1 + $0xc0] sm:$0xff]
      %v286 = vld [vmem:[%s1 + $0xc8] sm:$0xff]
      %v287 = vld [vmem:[%s1 + $0xd0] sm:$0xff]
      %v288 = vld [vmem:[%s1 + $0xd8] sm:$0xff]
      %v289 = vld [vmem:[%s1 + $0xe0] sm:$0xff]
      %v290 = vld [vmem:[%s1 + $0xe8] sm:$0xff]
      %v291 = vld [vmem:[%s1 + $0xf0] sm:$0xff]
      %v292 = vld [vmem:[%s1 + $0xf8] sm:$0xff]
      %v293 = vld [vmem:[%s1 + $0x100] sm:$0xff]
      %v294 = vld [vmem:[%s1 + $0x108] sm:$0xff]
      %v295 = vld [vmem:[%s1 + $0x110] sm:$0xff]
      %v296 = vld [vmem:[%s1 + $0x118] sm:$0xff]
      %v297 = vld [vmem:[%s1 + $0x120] sm:$0xff]
      %v298 = vld [vmem:[%s1 + $0x128] sm:$0xff]
      %v299 = vld [vmem:[%s1 + $0x130] sm:$0xff]
      %v300 = vld [vmem:[%s1 + $0x138] sm:$0xff]
      %v301 = vld [vmem:[%s1 + $0x140] sm:$0xff]
      %v302 = vld [vmem:[%s1 + $0x148] sm:$0xff]
      %v303 = vld [vmem:[%s1 + $0x150] sm:$0xff]
      %v304 = vld [vmem:[%s1 + $0x158] sm:$0xff]
      %v305 = vld [vmem:[%s1 + $0x160] sm:$0xff]
      %v306 = vld [vmem:[%s1 + $0x168] sm:$0xff]
      %v307 = vld [vmem:[%s1 + $0x170] sm:$0xff]
      %v308 = vld [vmem:[%s1 + $0x178] sm:$0xff]
      %v309 = vld [vmem:[%s1 + $0x180] sm:$0xff]
      %v310 = vld [vmem:[%s1 + $0x188] sm:$0xff]
      %v311 = vld [vmem:[%s1 + $0x190] sm:$0xff]
      %v312 = vld [vmem:[%s1 + $0x198] sm:$0xff]
      %v313 = vld [vmem:[%s1 + $0x1a0] sm:$0xff]
      %v314 = vld [vmem:[%s1 + $0x1a8] sm:$0xff]
      %v315 = vld [vmem:[%s1 + $0x1b0] sm:$0xff]
      %v316 = vld [vmem:[%s1 + $0x1b8] sm:$0xff]
      %v317 = vld [vmem:[%s1 + $0x1c0] sm:$0xff]
      %v318 = vld [vmem:[%s1 + $0x1c8] sm:$0xff]
      %v319 = vld [vmem:[%s1 + $0x1d0] sm:$0xff]
      %v320 = vld [vmem:[%s1 + $0x1d8] sm:$0xff]
      %v321 = vld [vmem:[%s1 + $0x1e0] sm:$0xff]
      %v322 = vld [vmem:[%s1 + $0x1e8] sm:$0xff]
      %v323 = vld [vmem:[%s1 + $0x1f0] sm:$0xff]
      %v324 = vld [vmem:[%s1 + $0x1f8] sm:$0xff]
      %v325 = vld [vmem:[%s1 + $0x200] sm:$0xff]
      %v326 = vld [vmem:[%s1 + $0x208] sm:$0xff]
      %v327 = vld [vmem:[%s1 + $0x210] sm:$0xff]
      %v328 = vld [vmem:[%s1 + $0x218] sm:$0xff]
      %v329 = vld [vmem:[%s1 + $0x220] sm:$0xff]
      %v330 = vld [vmem:[%s1 + $0x228] sm:$0xff]
      %v331 = vld [vmem:[%s1 + $0x230] sm:$0xff]
      %v332 = vld [vmem:[%s1 + $0x238] sm:$0xff]
      %v333 = vld [vmem:[%s1 + $0x240] sm:$0xff]
      %v334 = vld [vmem:[%s1 + $0x248] sm:$0xff]
      %v335 = vld [vmem:[%s1 + $0x250] sm:$0xff]
      %v336 = vld [vmem:[%s1 + $0x258] sm:$0xff]
      %v337 = vld [vmem:[%s1 + $0x260] sm:$0xff]
      %v338 = vld [vmem:[%s1 + $0x268] sm:$0xff]
      %v339 = vld [vmem:[%s1 + $0x270] sm:$0xff]
      %v340 = vld [vmem:[%s1 + $0x278] sm:$0xff]
      %v341 = vld [vmem:[%s1 + $0x280] sm:$0xff]
      %v342 = vld [vmem:[%s1 + $0x288] sm:$0xff]
      %v343 = vld [vmem:[%s1 + $0x290] sm:$0xff]
      %v344 = vld [vmem:[%s1 + $0x298] sm:$0xff]
      %v345 = vld [vmem:[%s1 + $0x2a0] sm:$0xff]
      %v346 = vld [vmem:[%s1 + $0x2a8] sm:$0xff]
      %v347 = vld [vmem:[%s1 + $0x2b0] sm:$0xff]
      %v348 = vld [vmem:[%s1 + $0x2b8] sm:$0xff]
      %v349 = vld [vmem:[%s1 + $0x2c0] sm:$0xff]
      %v350 = vld [vmem:[%s1 + $0x2c8] sm:$0xff]
      %v351 = vld [vmem:[%s1 + $0x2d0] sm:$0xff]
      %v352 = vld [vmem:[%s1 + $0x2d8] sm:$0xff]
      %v353 = vld [vmem:[%s1 + $0x2e0] sm:$0xff]
      %v354 = vld [vmem:[%s1 + $0x2e8] sm:$0xff]
      %v355 = vld [vmem:[%s1 + $0x2f0] sm:$0xff]
      %v356 = vld [vmem:[%s1 + $0x2f8] sm:$0xff]
      %v357 = vld [vmem:[%s1 + $0x300] sm:$0xff]
      %v358 = vld [vmem:[%s1 + $0x308] sm:$0xff]
      %v359 = vld [vmem:[%s1 + $0x310] sm:$0xff]
      %v360 = vld [vmem:[%s1 + $0x318] sm:$0xff]
      %v361 = vld [vmem:[%s1 + $0x320] sm:$0xff]
      %v362 = vld [vmem:[%s1 + $0x328] sm:$0xff]
      %v363 = vld [vmem:[%s1 + $0x330] sm:$0xff]
      %v364 = vld [vmem:[%s1 + $0x338] sm:$0xff]
      %v365 = vld [vmem:[%s1 + $0x340] sm:$0xff]
      %v366 = vld [vmem:[%s1 + $0x348] sm:$0xff]
      %v367 = vld [vmem:[%s1 + $0x350] sm:$0xff]
      %v368 = vld [vmem:[%s1 + $0x358] sm:$0xff]
      %v369 = vld [vmem:[%s1 + $0x360] sm:$0xff]
      %v370 = vld [vmem:[%s1 + $0x368] sm:$0xff]
      %v371 = vld [vmem:[%s1 + $0x370] sm:$0xff]
      %v372 = vld [vmem:[%s1 + $0x378] sm:$0xff]
      %v373 = vld [vmem:[%s1 + $0x380] sm:$0xff]
      %v374 = vld [vmem:[%s1 + $0x388] sm:$0xff]
      %v375 = vld [vmem:[%s1 + $0x390] sm:$0xff]
      %v376 = vld [vmem:[%s1 + $0x398] sm:$0xff]
      %v377 = vld [vmem:[%s1 + $0x3a0] sm:$0xff]
      %v378 = vld [vmem:[%s1 + $0x3a8] sm:$0xff]
      %v379 = vld [vmem:[%s1 + $0x3b0] sm:$0xff]
      %v380 = vld [vmem:[%s1 + $0x3b8] sm:$0xff]
      %v381 = vld [vmem:[%s1 + $0x3c0] sm:$0xff]
      %v382 = vld [vmem:[%s1 + $0x3c8] sm:$0xff]
      %v383 = vld [vmem:[%s1 + $0x3d0] sm:$0xff]
      %v384 = vld [vmem:[%s1 + $0x3d8] sm:$0xff]
      %v385 = vld [vmem:[%s1 + $0x3e0] sm:$0xff]
      %v386 = vld [vmem:[%s1 + $0x3e8] sm:$0xff]
      %v387 = vld [vmem:[%s1 + $0x3f0] sm:$0xff]
      %v388 = vld [vmem:[%s1 + $0x3f8] sm:$0xff]
      %v389 = vld [vmem:[%s1 + $0x400] sm:$0xff]
      %v390 = vld [vmem:[%s1 + $0x408] sm:$0xff]
      %v391 = vld [vmem:[%s1 + $0x410] sm:$0xff]
      %v392 = vld [vmem:[%s1 + $0x418] sm:$0xff]
      %v393 = vld [vmem:[%s1 + $0x420] sm:$0xff]
      %v394 = vld [vmem:[%s1 + $0x428] sm:$0xff]
      %v395 = vld [vmem:[%s1 + $0x430] sm:$0xff]
      %v396 = vld [vmem:[%s1 + $0x438] sm:$0xff]
      %v397 = vld [vmem:[%s1 + $0x440] sm:$0xff]
      %v398 = vld [vmem:[%s1 + $0x448] sm:$0xff]
      %v399 = vld [vmem:[%s1 + $0x450] sm:$0xff]
      %v400 = vld [vmem:[%s1 + $0x458] sm:$0xff]
      %v401 = vld [vmem:[%s1 + $0x460] sm:$0xff]
      %v402 = vld [vmem:[%s1 + $0x468] sm:$0xff]
      %v403 = vld [vmem:[%s1 + $0x470] sm:$0xff]
      %v404 = vld [vmem:[%s1 + $0x478] sm:$0xff]
      %v405 = vld [vmem:[%s1 + $0x480] sm:$0xff]
      %v406 = vld [vmem:[%s1 + $0x488] sm:$0xff]
      %v407 = vld [vmem:[%s1 + $0x490] sm:$0xff]
      %v408 = vld [vmem:[%s1 + $0x498] sm:$0xff]
      %v409 = vld [vmem:[%s1 + $0x4a0] sm:$0xff]
      %v410 = vld [vmem:[%s1 + $0x4a8] sm:$0xff]
      %v411 = vld [vmem:[%s1 + $0x4b0] sm:$0xff]
      %v412 = vld [vmem:[%s1 + $0x4b8] sm:$0xff]
      %v413 = vld [vmem:[%s1 + $0x4c0] sm:$0xff]
      %v414 = vld [vmem:[%s1 + $0x4c8] sm:$0xff]
      %v415 = vld [vmem:[%s1 + $0x4d0] sm:$0xff]
      %v416 = vld [vmem:[%s1 + $0x4d8] sm:$0xff]
      %v417 = vld [vmem:[%s1 + $0x4e0] sm:$0xff]
      %v418 = vld [vmem:[%s1 + $0x4e8] sm:$0xff]
      %v419 = vld [vmem:[%s1 + $0x4f0] sm:$0xff]
      %v420 = vld [vmem:[%s1 + $0x4f8] sm:$0xff]
      %v421 = vld [vmem:[%s1 + $0x500] sm:$0xff]
      %v422 = vld [vmem:[%s1 + $0x508] sm:$0xff]
      %v423 = vld [vmem:[%s1 + $0x510] sm:$0xff]
      %v424 = vld [vmem:[%s1 + $0x518] sm:$0xff]
      %v425 = vld [vmem:[%s1 + $0x520] sm:$0xff]
      %v426 = vld [vmem:[%s1 + $0x528] sm:$0xff]
      %v427 = vld [vmem:[%s1 + $0x530] sm:$0xff]
      %v428 = vld [vmem:[%s1 + $0x538] sm:$0xff]
      %v429 = vld [vmem:[%s1 + $0x540] sm:$0xff]
      %v430 = vld [vmem:[%s1 + $0x548] sm:$0xff]
      %v431 = vld [vmem:[%s1 + $0x550] sm:$0xff]
      %v432 = vld [vmem:[%s1 + $0x558] sm:$0xff]
      %v433 = vld [vmem:[%s1 + $0x560] sm:$0xff]
      %v434 = vld [vmem:[%s1 + $0x568] sm:$0xff]
      %v435 = vld [vmem:[%s1 + $0x570] sm:$0xff]
      %v436 = vld [vmem:[%s1 + $0x578] sm:$0xff]
      %v437 = vld [vmem:[%s1 + $0x580] sm:$0xff]
      %v438 = vld [vmem:[%s1 + $0x588] sm:$0xff]
      %v439 = vld [vmem:[%s1 + $0x590] sm:$0xff]
      %v440 = vld [vmem:[%s1 + $0x598] sm:$0xff]
      %v441 = vld [vmem:[%s1 + $0x5a0] sm:$0xff]
      %v442 = vld [vmem:[%s1 + $0x5a8] sm:$0xff]
      %v443 = vld [vmem:[%s1 + $0x5b0] sm:$0xff]
      %v444 = vld [vmem:[%s1 + $0x5b8] sm:$0xff]
      %v445 = vld [vmem:[%s1 + $0x5c0] sm:$0xff]
      %v446 = vld [vmem:[%s1 + $0x5c8] sm:$0xff]
      %v447 = vld [vmem:[%s1 + $0x5d0] sm:$0xff]
      %v448 = vld [vmem:[%s1 + $0x5d8] sm:$0xff]
      %v449 = vld [vmem:[%s1 + $0x5e0] sm:$0xff]
      %v450 = vld [vmem:[%s1 + $0x5e8] sm:$0xff]
      %v451 = vld [vmem:[%s1 + $0x5f0] sm:$0xff]
      %v452 = vld [vmem:[%s1 + $0x5f8] sm:$0xff]
      %v453 = vld [vmem:[%s1 + $0x600] sm:$0xff]
      %v454 = vld [vmem:[%s1 + $0x608] sm:$0xff]
      %v455 = vld [vmem:[%s1 + $0x610] sm:$0xff]
      %v456 = vld [vmem:[%s1 + $0x618] sm:$0xff]
      %v457 = vld [vmem:[%s1 + $0x620] sm:$0xff]
      %v458 = vld [vmem:[%s1 + $0x628] sm:$0xff]
      %v459 = vld [vmem:[%s1 + $0x630] sm:$0xff]
      %v460 = vld [vmem:[%s1 + $0x638] sm:$0xff]
      %v461 = vld [vmem:[%s1 + $0x640] sm:$0xff]
      %v462 = vld [vmem:[%s1 + $0x648] sm:$0xff]
      %v463 = vld [vmem:[%s1 + $0x650] sm:$0xff]
      %v464 = vld [vmem:[%s1 + $0x658] sm:$0xff]
      %v465 = vld [vmem:[%s1 + $0x660] sm:$0xff]
      %v466 = vld [vmem:[%s1 + $0x668] sm:$0xff]
      %v467 = vld [vmem:[%s1 + $0x670] sm:$0xff]
      %v468 = vld [vmem:[%s1 + $0x678] sm:$0xff]
      %v469 = vld [vmem:[%s1 + $0x680] sm:$0xff]
      %v470 = vld [vmem:[%s1 + $0x688] sm:$0xff]
      %v471 = vld [vmem:[%s1 + $0x690] sm:$0xff]
      %v472 = vld [vmem:[%s1 + $0x698] sm:$0xff]
      %v473 = vld [vmem:[%s1 + $0x6a0] sm:$0xff]
      %v474 = vld [vmem:[%s1 + $0x6a8] sm:$0xff]
      %v475 = vld [vmem:[%s1 + $0x6b0] sm:$0xff]
      %v476 = vld [vmem:[%s1 + $0x6b8] sm:$0xff]
      %v477 = vld [vmem:[%s1 + $0x6c0] sm:$0xff]
      %v478 = vld [vmem:[%s1 + $0x6c8] sm:$0xff]
      %v479 = vld [vmem:[%s1 + $0x6d0] sm:$0xff]
      %v480 = vld [vmem:[%s1 + $0x6d8] sm:$0xff]
      %v481 = vld [vmem:[%s1 + $0x6e0] sm:$0xff]
      %v482 = vld [vmem:[%s1 + $0x6e8] sm:$0xff]
      %v483 = vld [vmem:[%s1 + $0x6f0] sm:$0xff]
      %v484 = vld [vmem:[%s1 + $0x6f8] sm:$0xff]
      %v485 = vld [vmem:[%s1 + $0x700] sm:$0xff]
      %v486 = vld [vmem:[%s1 + $0x708] sm:$0xff]
      %v487 = vld [vmem:[%s1 + $0x710] sm:$0xff]
      %v488 = vld [vmem:[%s1 + $0x718] sm:$0xff]
      %v489 = vld [vmem:[%s1 + $0x720] sm:$0xff]
      %v490 = vld [vmem:[%s1 + $0x728] sm:$0xff]
      %v491 = vld [vmem:[%s1 + $0x730] sm:$0xff]
      %v492 = vld [vmem:[%s1 + $0x738] sm:$0xff]
      %v493 = vld [vmem:[%s1 + $0x740] sm:$0xff]
      %v494 = vld [vmem:[%s1 + $0x748] sm:$0xff]
      %v495 = vld [vmem:[%s1 + $0x750] sm:$0xff]
      %v496 = vld [vmem:[%s1 + $0x758] sm:$0xff]
      %v497 = vld [vmem:[%s1 + $0x760] sm:$0xff]
      %v498 = vld [vmem:[%s1 + $0x768] sm:$0xff]
      %v499 = vld [vmem:[%s1 + $0x770] sm:$0xff]
      %v500 = vld [vmem:[%s1 + $0x778] sm:$0xff]
      %v501 = vld [vmem:[%s1 + $0x780] sm:$0xff]
      %v502 = vld [vmem:[%s1 + $0x788] sm:$0xff]
      %v503 = vld [vmem:[%s1 + $0x790] sm:$0xff]
      %v504 = vld [vmem:[%s1 + $0x798] sm:$0xff]
      %v505 = vld [vmem:[%s1 + $0x7a0] sm:$0xff]
      %v506 = vld [vmem:[%s1 + $0x7a8] sm:$0xff]
      %v507 = vld [vmem:[%s1 + $0x7b0] sm:$0xff]
      %v508 = vld [vmem:[%s1 + $0x7b8] sm:$0xff]
      %v509 = vld [vmem:[%s1 + $0x7c0] sm:$0xff]
      %v510 = vld [vmem:[%s1 + $0x7c8] sm:$0xff]
      %v511 = vld [vmem:[%s1 + $0x7d0] sm:$0xff]
      %v512 = vld [vmem:[%s1 + $0x7d8] sm:$0xff]
      %v513 = vld [vmem:[%s1 + $0x7e0] sm:$0xff]
      %v514 = vld [vmem:[%s1 + $0x7e8] sm:$0xff]
      %v515 = vld [vmem:[%s1 + $0x7f0] sm:$0xff]
      %v516 = vld [vmem:[%s1 + $0x7f8] sm:$0xff]
      %v517 = vld [vmem:[%s1 + $0x800] sm:$0xff]
      %v518 = vld [vmem:[%s1 + $0x808] sm:$0xff]
      %v519 = vld [vmem:[%s1 + $0x810] sm:$0xff]
      %v520 = vld [vmem:[%s1 + $0x818] sm:$0xff]
      %v521 = vld [vmem:[%s1 + $0x820] sm:$0xff]
      %v522 = vld [vmem:[%s1 + $0x828] sm:$0xff]
      %v523 = vld [vmem:[%s1 + $0x830] sm:$0xff]
      %v524 = vld [vmem:[%s1 + $0x838] sm:$0xff]
      %v525 = vld [vmem:[%s1 + $0x840] sm:$0xff]
      %v526 = vld [vmem:[%s1 + $0x848] sm:$0xff]
      %v527 = vld [vmem:[%s1 + $0x850] sm:$0xff]
      %v528 = vld [vmem:[%s1 + $0x858] sm:$0xff]
      %v529 = vld [vmem:[%s1 + $0x860] sm:$0xff]
      %v530 = vld [vmem:[%s1 + $0x868] sm:$0xff]
      %v531 = vld [vmem:[%s1 + $0x870] sm:$0xff]
      %v532 = vld [vmem:[%s1 + $0x878] sm:$0xff]
      %v533 = vld [vmem:[%s1 + $0x880] sm:$0xff]
      %v534 = vld [vmem:[%s1 + $0x888] sm:$0xff]
      %v535 = vld [vmem:[%s1 + $0x890] sm:$0xff]
      %v536 = vld [vmem:[%s1 + $0x898] sm:$0xff]
      %v537 = vld [vmem:[%s1 + $0x8a0] sm:$0xff]
      %v538 = vld [vmem:[%s1 + $0x8a8] sm:$0xff]
      %v539 = vld [vmem:[%s1 + $0x8b0] sm:$0xff]
      %v540 = vld [vmem:[%s1 + $0x8b8] sm:$0xff]
      %v541 = vld [vmem:[%s1 + $0x8c0] sm:$0xff]
      %v542 = vld [vmem:[%s1 + $0x8c8] sm:$0xff]
      %v543 = vld [vmem:[%s1 + $0x8d0] sm:$0xff]
      %v544 = vld [vmem:[%s1 + $0x8d8] sm:$0xff]
      %v545 = vld [vmem:[%s1 + $0x8e0] sm:$0xff]
      %v546 = vld [vmem:[%s1 + $0x8e8] sm:$0xff]
      %v547 = vld [vmem:[%s1 + $0x8f0] sm:$0xff]
      %v548 = vld [vmem:[%s1 + $0x8f8] sm:$0xff]
      %v549 = vld [vmem:[%s1 + $0x900] sm:$0xff]
      %v550 = vld [vmem:[%s1 + $0x908] sm:$0xff]
      %v551 = vld [vmem:[%s1 + $0x910] sm:$0xff]
      %v552 = vld [vmem:[%s1 + $0x918] sm:$0xff]
      %v553 = vld [vmem:[%s1 + $0x920] sm:$0xff]
      %v554 = vld [vmem:[%s1 + $0x928] sm:$0xff]
      %v555 = vld [vmem:[%s1 + $0x930] sm:$0xff]
      %v556 = vld [vmem:[%s1 + $0x938] sm:$0xff]
      %v557 = vld [vmem:[%s1 + $0x940] sm:$0xff]
      %v558 = vld [vmem:[%s1 + $0x948] sm:$0xff]
      %v559 = vld [vmem:[%s1 + $0x950] sm:$0xff]
      %v560 = vld [vmem:[%s1 + $0x958] sm:$0xff]
      %v561 = vld [vmem:[%s1 + $0x960] sm:$0xff]
      %v562 = vld [vmem:[%s1 + $0x968] sm:$0xff]
      %v563 = vld [vmem:[%s1 + $0x970] sm:$0xff]
      %v564 = vld [vmem:[%s1 + $0x978] sm:$0xff]
      %v565 = vld [vmem:[%s1 + $0x980] sm:$0xff]
      %v566 = vld [vmem:[%s1 + $0x988] sm:$0xff]
      %v567 = vld [vmem:[%s1 + $0x990] sm:$0xff]
      %v568 = vld [vmem:[%s1 + $0x998] sm:$0xff]
      %v569 = vld [vmem:[%s1 + $0x9a0] sm:$0xff]
      %v570 = vld [vmem:[%s1 + $0x9a8] sm:$0xff]
      %v571 = vld [vmem:[%s1 + $0x9b0] sm:$0xff]
      %v572 = vld [vmem:[%s1 + $0x9b8] sm:$0xff]
      %v573 = vld [vmem:[%s1 + $0x9c0] sm:$0xff]
      %v574 = vld [vmem:[%s1 + $0x9c8] sm:$0xff]
      %v575 = vld [vmem:[%s1 + $0x9d0] sm:$0xff]
      %v576 = vld [vmem:[%s1 + $0x9d8] sm:$0xff]
      %v577 = vld [vmem:[%s1 + $0x9e0] sm:$0xff]
      %v578 = vld [vmem:[%s1 + $0x9e8] sm:$0xff]
      %v579 = vld [vmem:[%s1 + $0x9f0] sm:$0xff]
      %v580 = vld [vmem:[%s1 + $0x9f8] sm:$0xff]
      %v581 = vld [vmem:[%s1 + $0xa00] sm:$0xff]
      %v582 = vld [vmem:[%s1 + $0xa08] sm:$0xff]
      %v583 = vld [vmem:[%s1 + $0xa10] sm:$0xff]
      %v584 = vld [vmem:[%s1 + $0xa18] sm:$0xff]
      %v585 = vld [vmem:[%s1 + $0xa20] sm:$0xff]
      %v586 = vld [vmem:[%s1 + $0xa28] sm:$0xff]
      %v587 = vld [vmem:[%s1 + $0xa30] sm:$0xff]
      %v588 = vld [vmem:[%s1 + $0xa38] sm:$0xff]
      %v589 = vld [vmem:[%s1 + $0xa40] sm:$0xff]
      %v590 = vld [vmem:[%s1 + $0xa48] sm:$0xff]
      %v591 = vld [vmem:[%s1 + $0xa50] sm:$0xff]
      %v592 = vld [vmem:[%s1 + $0xa58] sm:$0xff]
      %v593 = vld [vmem:[%s1 + $0xa60] sm:$0xff]
      %v594 = vld [vmem:[%s1 + $0xa68] sm:$0xff]
      %v595 = vld [vmem:[%s1 + $0xa70] sm:$0xff]
      %v596 = vld [vmem:[%s1 + $0xa78] sm:$0xff]
      %v597 = vld [vmem:[%s1 + $0xa80] sm:$0xff]
      %v598 = vld [vmem:[%s1 + $0xa88] sm:$0xff]
      %v599 = vld [vmem:[%s1 + $0xa90] sm:$0xff]
      %v600 = vld [vmem:[%s1 + $0xa98] sm:$0xff]
      %v601 = vld [vmem:[%s1 + $0xaa0] sm:$0xff]
      %v602 = vld [vmem:[%s1 + $0xaa8] sm:$0xff]
      %v603 = vld [vmem:[%s1 + $0xab0] sm:$0xff]
      %v604 = vld [vmem:[%s1 + $0xab8] sm:$0xff]
      %v605 = vld [vmem:[%s1 + $0xac0] sm:$0xff]
      %v606 = vld [vmem:[%s1 + $0xac8] sm:$0xff]
      %v607 = vld [vmem:[%s1 + $0xad0] sm:$0xff]
      %v608 = vld [vmem:[%s1 + $0xad8] sm:$0xff]
      %v609 = vld [vmem:[%s1 + $0xae0] sm:$0xff]
      %v610 = vld [vmem:[%s1 + $0xae8] sm:$0xff]
      %v611 = vld [vmem:[%s1 + $0xaf0] sm:$0xff]
      %v612 = vld [vmem:[%s1 + $0xaf8] sm:$0xff]
      %v613 = vld [vmem:[%s1 + $0xb00] sm:$0xff]
      %v614 = vld [vmem:[%s1 + $0xb08] sm:$0xff]
      %v615 = vld [vmem:[%s1 + $0xb10] sm:$0xff]
      %v616 = vld [vmem:[%s1 + $0xb18] sm:$0xff]
      %v617 = vld [vmem:[%s1 + $0xb20] sm:$0xff]
      %v618 = vld [vmem:[%s1 + $0xb28] sm:$0xff]
      %v619 = vld [vmem:[%s1 + $0xb30] sm:$0xff]
      %v620 = vld [vmem:[%s1 + $0xb38] sm:$0xff]
      %v621 = vld [vmem:[%s1 + $0xb40] sm:$0xff]
      %v622 = vld [vmem:[%s1 + $0xb48] sm:$0xff]
      %v623 = vld [vmem:[%s1 + $0xb50] sm:$0xff]
      %v624 = vld [vmem:[%s1 + $0xb58] sm:$0xff]
      %v625 = vld [vmem:[%s1 + $0xb60] sm:$0xff]
      %v626 = vld [vmem:[%s1 + $0xb68] sm:$0xff]
      %v627 = vld [vmem:[%s1 + $0xb70] sm:$0xff]
      %v628 = vld [vmem:[%s1 + $0xb78] sm:$0xff]
      %v629 = vld [vmem:[%s1 + $0xb80] sm:$0xff]
      %v630 = vld [vmem:[%s1 + $0xb88] sm:$0xff]
      %v631 = vld [vmem:[%s1 + $0xb90] sm:$0xff]
      %v632 = vld [vmem:[%s1 + $0xb98] sm:$0xff]
      %v633 = vld [vmem:[%s1 + $0xba0] sm:$0xff]
      %v634 = vld [vmem:[%s1 + $0xba8] sm:$0xff]
      %v635 = vld [vmem:[%s1 + $0xbb0] sm:$0xff]
      %v636 = vld [vmem:[%s1 + $0xbb8] sm:$0xff]
      %v637 = vld [vmem:[%s1 + $0xbc0] sm:$0xff]
      %v638 = vld [vmem:[%s1 + $0xbc8] sm:$0xff]
      %v639 = vld [vmem:[%s1 + $0xbd0] sm:$0xff]
      %v640 = vld [vmem:[%s1 + $0xbd8] sm:$0xff]
      %v641 = vld [vmem:[%s1 + $0xbe0] sm:$0xff]
      %v642 = vld [vmem:[%s1 + $0xbe8] sm:$0xff]
      %v643 = vld [vmem:[%s1 + $0xbf0] sm:$0xff]
      %v644 = vld [vmem:[%s1 + $0xbf8] sm:$0xff]
      %v645 = vld [vmem:[%s1 + $0xc00] sm:$0xff]
      %v646 = vld [vmem:[%s1 + $0xc08] sm:$0xff]
      %v647 = vld [vmem:[%s1 + $0xc10] sm:$0xff]
      %v648 = vld [vmem:[%s1 + $0xc18] sm:$0xff]
      %v649 = vld [vmem:[%s1 + $0xc20] sm:$0xff]
      %v650 = vld [vmem:[%s1 + $0xc28] sm:$0xff]
      %v651 = vld [vmem:[%s1 + $0xc30] sm:$0xff]
      %v652 = vld [vmem:[%s1 + $0xc38] sm:$0xff]
      %v653 = vld [vmem:[%s1 + $0xc40] sm:$0xff]
      %v654 = vld [vmem:[%s1 + $0xc48] sm:$0xff]
      %v655 = vld [vmem:[%s1 + $0xc50] sm:$0xff]
      %v656 = vld [vmem:[%s1 + $0xc58] sm:$0xff]
      %v657 = vld [vmem:[%s1 + $0xc60] sm:$0xff]
      %v658 = vld [vmem:[%s1 + $0xc68] sm:$0xff]
      %v659 = vld [vmem:[%s1 + $0xc70] sm:$0xff]
      %v660 = vld [vmem:[%s1 + $0xc78] sm:$0xff]
      %v661 = vld [vmem:[%s1 + $0xc80] sm:$0xff]
      %v662 = vld [vmem:[%s1 + $0xc88] sm:$0xff]
      %v663 = vld [vmem:[%s1 + $0xc90] sm:$0xff]
      %v664 = vld [vmem:[%s1 + $0xc98] sm:$0xff]
      %v665 = vld [vmem:[%s1 + $0xca0] sm:$0xff]
      %v666 = vld [vmem:[%s1 + $0xca8] sm:$0xff]
      %v667 = vld [vmem:[%s1 + $0xcb0] sm:$0xff]
      %v668 = vld [vmem:[%s1 + $0xcb8] sm:$0xff]
      %v669 = vld [vmem:[%s1 + $0xcc0] sm:$0xff]
      %v670 = vld [vmem:[%s1 + $0xcc8] sm:$0xff]
      %v671 = vld [vmem:[%s1 + $0xcd0] sm:$0xff]
      %v672 = vld [vmem:[%s1 + $0xcd8] sm:$0xff]
      %v673 = vld [vmem:[%s1 + $0xce0] sm:$0xff]
      %v674 = vld [vmem:[%s1 + $0xce8] sm:$0xff]
      %v675 = vld [vmem:[%s1 + $0xcf0] sm:$0xff]
      %v676 = vld [vmem:[%s1 + $0xcf8] sm:$0xff]
      %v677 = vld [vmem:[%s1 + $0xd00] sm:$0xff]
      %v678 = vld [vmem:[%s1 + $0xd08] sm:$0xff]
      %v679 = vld [vmem:[%s1 + $0xd10] sm:$0xff]
      %v680 = vld [vmem:[%s1 + $0xd18] sm:$0xff]
      %v681 = vld [vmem:[%s1 + $0xd20] sm:$0xff]
      %v682 = vld [vmem:[%s1 + $0xd28] sm:$0xff]
      %v683 = vld [vmem:[%s1 + $0xd30] sm:$0xff]
      %v684 = vld [vmem:[%s1 + $0xd38] sm:$0xff]
      %v685 = vld [vmem:[%s1 + $0xd40] sm:$0xff]
      %v686 = vld [vmem:[%s1 + $0xd48] sm:$0xff]
      %v687 = vld [vmem:[%s1 + $0xd50] sm:$0xff]
      %v688 = vld [vmem:[%s1 + $0xd58] sm:$0xff]
      %v689 = vld [vmem:[%s1 + $0xd60] sm:$0xff]
      %v690 = vld [vmem:[%s1 + $0xd68] sm:$0xff]
      %v691 = vld [vmem:[%s1 + $0xd70] sm:$0xff]
      %v692 = vld [vmem:[%s1 + $0xd78] sm:$0xff]
      %v693 = vld [vmem:[%s1 + $0xd80] sm:$0xff]
      %v694 = vld [vmem:[%s1 + $0xd88] sm:$0xff]
      %v695 = vld [vmem:[%s1 + $0xd90] sm:$0xff]
      %v696 = vld [vmem:[%s1 + $0xd98] sm:$0xff]
      %v697 = vld [vmem:[%s1 + $0xda0] sm:$0xff]
      %v698 = vld [vmem:[%s1 + $0xda8] sm:$0xff]
      %v699 = vld [vmem:[%s1 + $0xdb0] sm:$0xff]
      %v700 = vld [vmem:[%s1 + $0xdb8] sm:$0xff]
      %v701 = vld [vmem:[%s1 + $0xdc0] sm:$0xff]
      %v702 = vld [vmem:[%s1 + $0xdc8] sm:$0xff]
      %v703 = vld [vmem:[%s1 + $0xdd0] sm:$0xff]
      %v704 = vld [vmem:[%s1 + $0xdd8] sm:$0xff]
      %v705 = vld [vmem:[%s1 + $0xde0] sm:$0xff]
      %v706 = vld [vmem:[%s1 + $0xde8] sm:$0xff]
      %v707 = vld [vmem:[%s1 + $0xdf0] sm:$0xff]
      %v708 = vld [vmem:[%s1 + $0xdf8] sm:$0xff]
      %v709 = vld [vmem:[%s1 + $0xe00] sm:$0xff]
      %v710 = vld [vmem:[%s1 + $0xe08] sm:$0xff]
      %v711 = vld [vmem:[%s1 + $0xe10] sm:$0xff]
      %v712 = vld [vmem:[%s1 + $0xe18] sm:$0xff]
      %v713 = vld [vmem:[%s1 + $0xe20] sm:$0xff]
      %v714 = vld [vmem:[%s1 + $0xe28] sm:$0xff]
      %v715 = vld [vmem:[%s1 + $0xe30] sm:$0xff]
      %v716 = vld [vmem:[%s1 + $0xe38] sm:$0xff]
      %v717 = vld [vmem:[%s1 + $0xe40] sm:$0xff]
      %v718 = vld [vmem:[%s1 + $0xe48] sm:$0xff]
      %v719 = vld [vmem:[%s1 + $0xe50] sm:$0xff]
      %v720 = vld [vmem:[%s1 + $0xe58] sm:$0xff]
      %v721 = vld [vmem:[%s1 + $0xe60] sm:$0xff]
      %v722 = vld [vmem:[%s1 + $0xe68] sm:$0xff]
      %v723 = vld [vmem:[%s1 + $0xe70] sm:$0xff]
      %v724 = vld [vmem:[%s1 + $0xe78] sm:$0xff]
      %v725 = vld [vmem:[%s1 + $0xe80] sm:$0xff]
      %v726 = vld [vmem:[%s1 + $0xe88] sm:$0xff]
      %v727 = vld [vmem:[%s1 + $0xe90] sm:$0xff]
      %v728 = vld [vmem:[%s1 + $0xe98] sm:$0xff]
      %v729 = vld [vmem:[%s1 + $0xea0] sm:$0xff]
      %v730 = vld [vmem:[%s1 + $0xea8] sm:$0xff]
      %v731 = vld [vmem:[%s1 + $0xeb0] sm:$0xff]
      %v732 = vld [vmem:[%s1 + $0xeb8] sm:$0xff]
      %v733 = vld [vmem:[%s1 + $0xec0] sm:$0xff]
      %v734 = vld [vmem:[%s1 + $0xec8] sm:$0xff]
      %v735 = vld [vmem:[%s1 + $0xed0] sm:$0xff]
      %v736 = vld [vmem:[%s1 + $0xed8] sm:$0xff]
      %v737 = vld [vmem:[%s1 + $0xee0] sm:$0xff]
      %v738 = vld [vmem:[%s1 + $0xee8] sm:$0xff]
      %v739 = vld [vmem:[%s1 + $0xef0] sm:$0xff]
      %v740 = vld [vmem:[%s1 + $0xef8] sm:$0xff]
      %v741 = vld [vmem:[%s1 + $0xf00] sm:$0xff]
      %v742 = vld [vmem:[%s1 + $0xf08] sm:$0xff]
      %v743 = vld [vmem:[%s1 + $0xf10] sm:$0xff]
      %v744 = vld [vmem:[%s1 + $0xf18] sm:$0xff]
      %v745 = vld [vmem:[%s1 + $0xf20] sm:$0xff]
      %v746 = vld [vmem:[%s1 + $0xf28] sm:$0xff]
      %v747 = vld [vmem:[%s1 + $0xf30] sm:$0xff]
      %v748 = vld [vmem:[%s1 + $0xf38] sm:$0xff]
      %v749 = vld [vmem:[%s1 + $0xf40] sm:$0xff]
      %v750 = vld [vmem:[%s1 + $0xf48] sm:$0xff]
      %v751 = vld [vmem:[%s1 + $0xf50] sm:$0xff]
      %v752 = vld [vmem:[%s1 + $0xf58] sm:$0xff]
      %v753 = vld [vmem:[%s1 + $0xf60] sm:$0xff]
      %v754 = vld [vmem:[%s1 + $0xf68] sm:$0xff]
      %v755 = vld [vmem:[%s1 + $0xf70] sm:$0xff]
      %v756 = vld [vmem:[%s1 + $0xf78] sm:$0xff]
      %v757 = vld [vmem:[%s1 + $0xf80] sm:$0xff]
      %v758 = vld [vmem:[%s1 + $0xf88] sm:$0xff]
      %v759 = vld [vmem:[%s1 + $0xf90] sm:$0xff]
      %v760 = vld [vmem:[%s1 + $0xf98] sm:$0xff]
      %v761 = vld [vmem:[%s1 + $0xfa0] sm:$0xff]
      %v762 = vld [vmem:[%s1 + $0xfa8] sm:$0xff]
      %v763 = vld [vmem:[%s1 + $0xfb0] sm:$0xff]
      %v764 = vld [vmem:[%s1 + $0xfb8] sm:$0xff]
      %v765 = vld [vmem:[%s1 + $0xfc0] sm:$0xff]
      %v766 = vld [vmem:[%s1 + $0xfc8] sm:$0xff]
      %v767 = vld [vmem:[%s1 + $0xfd0] sm:$0xff]
      %v768 = vld [vmem:[%s1 + $0xfd8] sm:$0xff]
      %v769 = vld [vmem:[%s1 + $0xfe0] sm:$0xff]
      %v770 = vld [vmem:[%s1 + $0xfe8] sm:$0xff]
      %v771 = vld [vmem:[%s1 + $0xff0] sm:$0xff]
      %v772 = vld [vmem:[%s1 + $0xff8] sm:$0xff]
      %v773 = vld [vmem:[%s1 + $0x1000] sm:$0xff]
      %v774 = vld [vmem:[%s1 + $0x1008] sm:$0xff]
      %v775 = vld [vmem:[%s1 + $0x1010] sm:$0xff]
      %v776 = vld [vmem:[%s1 + $0x1018] sm:$0xff]
      %v777 = vld [vmem:[%s1 + $0x1020] sm:$0xff]
      %v778 = vld [vmem:[%s1 + $0x1028] sm:$0xff]
      %v779 = vld [vmem:[%s1 + $0x1030] sm:$0xff]
      %v780 = vld [vmem:[%s1 + $0x1038] sm:$0xff]
      %v781 = vld [vmem:[%s1 + $0x1040] sm:$0xff]
      %v782 = vld [vmem:[%s1 + $0x1048] sm:$0xff]
      %v783 = vld [vmem:[%s1 + $0x1050] sm:$0xff]
      %v784 = vld [vmem:[%s1 + $0x1058] sm:$0xff]
      %v785 = vld [vmem:[%s1 + $0x1060] sm:$0xff]
      %v786 = vld [vmem:[%s1 + $0x1068] sm:$0xff]
      %v787 = vld [vmem:[%s1 + $0x1070] sm:$0xff]
      %v788 = vld [vmem:[%s1 + $0x1078] sm:$0xff]
      %v789 = vld [vmem:[%s1 + $0x1080] sm:$0xff]
      %v790 = vld [vmem:[%s1 + $0x1088] sm:$0xff]
      %v791 = vld [vmem:[%s1 + $0x1090] sm:$0xff]
      %v792 = vld [vmem:[%s1 + $0x1098] sm:$0xff]
      %v793 = vld [vmem:[%s1 + $0x10a0] sm:$0xff]
      %v794 = vld [vmem:[%s1 + $0x10a8] sm:$0xff]
      %v795 = vld [vmem:[%s1 + $0x10b0] sm:$0xff]
      %v796 = vld [vmem:[%s1 + $0x10b8] sm:$0xff]
      %v797 = vld [vmem:[%s1 + $0x10c0] sm:$0xff]
      %v798 = vld [vmem:[%s1 + $0x10c8] sm:$0xff]
      %v799 = vld [vmem:[%s1 + $0x10d0] sm:$0xff]
      %v800 = vld [vmem:[%s1 + $0x10d8] sm:$0xff]
      %v801 = vld [vmem:[%s1 + $0x10e0] sm:$0xff]
      %v802 = vld [vmem:[%s1 + $0x10e8] sm:$0xff]
      %v803 = vld [vmem:[%s1 + $0x10f0] sm:$0xff]
      %v804 = vld [vmem:[%s1 + $0x10f8] sm:$0xff]
      %v805 = vld [vmem:[%s1 + $0x1100] sm:$0xff]
      %v806 = vld [vmem:[%s1 + $0x1108] sm:$0xff]
      %v807 = vld [vmem:[%s1 + $0x1110] sm:$0xff]
      %v808 = vld [vmem:[%s1 + $0x1118] sm:$0xff]
      %v809 = vld [vmem:[%s1 + $0x1120] sm:$0xff]
      %v810 = vld [vmem:[%s1 + $0x1128] sm:$0xff]
      %v811 = vld [vmem:[%s1 + $0x1130] sm:$0xff]
      %v812 = vld [vmem:[%s1 + $0x1138] sm:$0xff]
      %v813 = vld [vmem:[%s1 + $0x1140] sm:$0xff]
      %v814 = vld [vmem:[%s1 + $0x1148] sm:$0xff]
      %v815 = vld [vmem:[%s1 + $0x1150] sm:$0xff]
      %v816 = vld [vmem:[%s1 + $0x1158] sm:$0xff]
      %v817 = vld [vmem:[%s1 + $0x1160] sm:$0xff]
      %v818 = vld [vmem:[%s1 + $0x1168] sm:$0xff]
      %v819 = vld [vmem:[%s1 + $0x1170] sm:$0xff]
      %v820 = vld [vmem:[%s1 + $0x1178] sm:$0xff]
      %v821 = vld [vmem:[%s1 + $0x1180] sm:$0xff]
      %v822 = vld [vmem:[%s1 + $0x1188] sm:$0xff]
      %v823 = vld [vmem:[%s1 + $0x1190] sm:$0xff]
      %v824 = vld [vmem:[%s1 + $0x1198] sm:$0xff]
      %v825 = vld [vmem:[%s1 + $0x11a0] sm:$0xff]
      %v826 = vld [vmem:[%s1 + $0x11a8] sm:$0xff]
      %v827 = vld [vmem:[%s1 + $0x11b0] sm:$0xff]
      %v828 = vld [vmem:[%s1 + $0x11b8] sm:$0xff]
      %v829 = vld [vmem:[%s1 + $0x11c0] sm:$0xff]
      %v830 = vld [vmem:[%s1 + $0x11c8] sm:$0xff]
      %v831 = vld [vmem:[%s1 + $0x11d0] sm:$0xff]
      %v832 = vld [vmem:[%s1 + $0x11d8] sm:$0xff]
      %v833 = vld [vmem:[%s1 + $0x11e0] sm:$0xff]
      %v834 = vld [vmem:[%s1 + $0x11e8] sm:$0xff]
      %v835 = vld [vmem:[%s1 + $0x11f0] sm:$0xff]
      %v836 = vld [vmem:[%s1 + $0x11f8] sm:$0xff]
      %v837 = vld [vmem:[%s2] sm:$0xf]
      %v839 = vlaneseq
      %v840 = vshrl.u32 %v839, 7
      %v841 = vsub.s32 0, %v840
      %v842 = vrot.slane %v837, %v841
      %v843 = vlaneseq
      %v844 = vshrl.u32 %v843, 7
      %v845 = vsub.s32 1, %v844
      %v846 = vrot.slane %v837, %v845
      %v847 = vlaneseq
      %v848 = vshrl.u32 %v847, 7
      %v849 = vsub.s32 2, %v848
      %v850 = vrot.slane %v837, %v849
      %v851 = vlaneseq
      %v852 = vshrl.u32 %v851, 7
      %v853 = vsub.s32 3, %v852
      %v854 = vrot.slane %v837, %v853
      %v868 = vunpack.c.l.b16 %v252
      %v869 = vunpack.c.h.b16 %v252
      %v870 = vunpack.c.l.b16 %v253
      %v871 = vunpack.c.h.b16 %v253
      %v872 = vunpack.c.l.b16 %v254
      %v873 = vunpack.c.h.b16 %v254
      %v874 = vunpack.c.l.b16 %v255
      %v875 = vunpack.c.h.b16 %v255
      %v876 = vunpack.c.l.b16 %v256
      %v877 = vunpack.c.h.b16 %v256
      %v878 = vunpack.c.l.b16 %v257
      %v879 = vunpack.c.h.b16 %v257
      %v880 = vunpack.c.l.b16 %v258
      %v881 = vunpack.c.h.b16 %v258
      %v882 = vunpack.c.l.b16 %v259
      %v883 = vunpack.c.h.b16 %v259
      %v884 = vunpack.c.l.b16 %v260
      %v885 = vunpack.c.h.b16 %v260
      %v886 = vpack.c.b16 %v868, %v868
      %v887 = vpack.c.b16 %v869, %v869
      %v888 = vpack.c.b16 %v870, %v870
      %v889 = vpack.c.b16 %v871, %v871
      %v890 = vpack.c.b16 %v872, %v872
      %v891 = vpack.c.b16 %v873, %v873
      %v892 = vpack.c.b16 %v874, %v874
      %v893 = vpack.c.b16 %v875, %v875
      %v894 = vpack.c.b16 %v876, %v876
      %v895 = vpack.c.b16 %v877, %v877
      %v896 = vpack.c.b16 %v878, %v878
      %v897 = vpack.c.b16 %v879, %v879
      %v898 = vpack.c.b16 %v880, %v880
      %v899 = vpack.c.b16 %v881, %v881
      %v900 = vpack.c.b16 %v882, %v882
      %v901 = vpack.c.b16 %v883, %v883
      %v902 = vpack.c.b16 %v884, %v884
      %v903 = vpack.c.b16 %v885, %v885
      %v1498 = vunpack.c.l.b16 %v261
      %v1499 = vunpack.c.h.b16 %v261
      %v1500 = vunpack.c.l.b16 %v262
      %v1501 = vunpack.c.h.b16 %v262
      %v1502 = vunpack.c.l.b16 %v263
      %v1503 = vunpack.c.h.b16 %v263
      %v1504 = vunpack.c.l.b16 %v264
      %v1505 = vunpack.c.h.b16 %v264
      %v1506 = vunpack.c.l.b16 %v265
      %v1507 = vunpack.c.h.b16 %v265
      %v1508 = vunpack.c.l.b16 %v266
      %v1509 = vunpack.c.h.b16 %v266
      %v1510 = vunpack.c.l.b16 %v267
      %v1511 = vunpack.c.h.b16 %v267
      %v1512 = vunpack.c.l.b16 %v268
      %v1513 = vunpack.c.h.b16 %v268
      %v1514 = vunpack.c.l.b16 %v269
      %v1515 = vunpack.c.h.b16 %v269
      %v1516 = vunpack.c.l.b16 %v270
      %v1517 = vunpack.c.h.b16 %v270
      %v1518 = vunpack.c.l.b16 %v271
      %v1519 = vunpack.c.h.b16 %v271
      %v1520 = vunpack.c.l.b16 %v272
      %v1521 = vunpack.c.h.b16 %v272
      %v1522 = vunpack.c.l.b16 %v273
      %v1523 = vunpack.c.h.b16 %v273
      %v1524 = vunpack.c.l.b16 %v274
      %v1525 = vunpack.c.h.b16 %v274
      %v1526 = vunpack.c.l.b16 %v275
      %v1527 = vunpack.c.h.b16 %v275
      %v1528 = vunpack.c.l.b16 %v276
      %v1529 = vunpack.c.h.b16 %v276
      %v1530 = vunpack.c.l.b16 %v277
      %v1531 = vunpack.c.h.b16 %v277
      %v1532 = vunpack.c.l.b16 %v278
      %v1533 = vunpack.c.h.b16 %v278
      %v1534 = vunpack.c.l.b16 %v279
      %v1535 = vunpack.c.h.b16 %v279
      %v1536 = vunpack.c.l.b16 %v280
      %v1537 = vunpack.c.h.b16 %v280
      %v1538 = vunpack.c.l.b16 %v281
      %v1539 = vunpack.c.h.b16 %v281
      %v1540 = vunpack.c.l.b16 %v282
      %v1541 = vunpack.c.h.b16 %v282
      %v1542 = vunpack.c.l.b16 %v283
      %v1543 = vunpack.c.h.b16 %v283
      %v1544 = vunpack.c.l.b16 %v284
      %v1545 = vunpack.c.h.b16 %v284
      %v1546 = vunpack.c.l.b16 %v285
      %v1547 = vunpack.c.h.b16 %v285
      %v1548 = vunpack.c.l.b16 %v286
      %v1549 = vunpack.c.h.b16 %v286
      %v1550 = vunpack.c.l.b16 %v287
      %v1551 = vunpack.c.h.b16 %v287
      %v1552 = vunpack.c.l.b16 %v288
      %v1553 = vunpack.c.h.b16 %v288
      %v1554 = vunpack.c.l.b16 %v289
      %v1555 = vunpack.c.h.b16 %v289
      %v1556 = vunpack.c.l.b16 %v290
      %v1557 = vunpack.c.h.b16 %v290
      %v1558 = vunpack.c.l.b16 %v291
      %v1559 = vunpack.c.h.b16 %v291
      %v1560 = vunpack.c.l.b16 %v292
      %v1561 = vunpack.c.h.b16 %v292
      %v1562 = vunpack.c.l.b16 %v293
      %v1563 = vunpack.c.h.b16 %v293
      %v1564 = vunpack.c.l.b16 %v294
      %v1565 = vunpack.c.h.b16 %v294
      %v1566 = vunpack.c.l.b16 %v295
      %v1567 = vunpack.c.h.b16 %v295
      %v1568 = vunpack.c.l.b16 %v296
      %v1569 = vunpack.c.h.b16 %v296
      %v1570 = vunpack.c.l.b16 %v297
      %v1571 = vunpack.c.h.b16 %v297
      %v1572 = vunpack.c.l.b16 %v298
      %v1573 = vunpack.c.h.b16 %v298
      %v1574 = vunpack.c.l.b16 %v299
      %v1575 = vunpack.c.h.b16 %v299
      %v1576 = vunpack.c.l.b16 %v300
      %v1577 = vunpack.c.h.b16 %v300
      %v1578 = vunpack.c.l.b16 %v301
      %v1579 = vunpack.c.h.b16 %v301
      %v1580 = vunpack.c.l.b16 %v302
      %v1581 = vunpack.c.h.b16 %v302
      %v1582 = vunpack.c.l.b16 %v303
      %v1583 = vunpack.c.h.b16 %v303
      %v1584 = vunpack.c.l.b16 %v304
      %v1585 = vunpack.c.h.b16 %v304
      %v1586 = vunpack.c.l.b16 %v305
      %v1587 = vunpack.c.h.b16 %v305
      %v1588 = vunpack.c.l.b16 %v306
      %v1589 = vunpack.c.h.b16 %v306
      %v1590 = vunpack.c.l.b16 %v307
      %v1591 = vunpack.c.h.b16 %v307
      %v1592 = vunpack.c.l.b16 %v308
      %v1593 = vunpack.c.h.b16 %v308
      %v1594 = vunpack.c.l.b16 %v309
      %v1595 = vunpack.c.h.b16 %v309
      %v1596 = vunpack.c.l.b16 %v310
      %v1597 = vunpack.c.h.b16 %v310
      %v1598 = vunpack.c.l.b16 %v311
      %v1599 = vunpack.c.h.b16 %v311
      %v1600 = vunpack.c.l.b16 %v312
      %v1601 = vunpack.c.h.b16 %v312
      %v1602 = vunpack.c.l.b16 %v313
      %v1603 = vunpack.c.h.b16 %v313
      %v1604 = vunpack.c.l.b16 %v314
      %v1605 = vunpack.c.h.b16 %v314
      %v1606 = vunpack.c.l.b16 %v315
      %v1607 = vunpack.c.h.b16 %v315
      %v1608 = vunpack.c.l.b16 %v316
      %v1609 = vunpack.c.h.b16 %v316
      %v1610 = vunpack.c.l.b16 %v317
      %v1611 = vunpack.c.h.b16 %v317
      %v1612 = vunpack.c.l.b16 %v318
      %v1613 = vunpack.c.h.b16 %v318
      %v1614 = vunpack.c.l.b16 %v319
      %v1615 = vunpack.c.h.b16 %v319
      %v1616 = vunpack.c.l.b16 %v320
      %v1617 = vunpack.c.h.b16 %v320
      %v1618 = vunpack.c.l.b16 %v321
      %v1619 = vunpack.c.h.b16 %v321
      %v1620 = vunpack.c.l.b16 %v322
      %v1621 = vunpack.c.h.b16 %v322
      %v1622 = vunpack.c.l.b16 %v323
      %v1623 = vunpack.c.h.b16 %v323
      %v1624 = vunpack.c.l.b16 %v324
      %v1625 = vunpack.c.h.b16 %v324
      %v1626 = vunpack.c.l.b16 %v325
      %v1627 = vunpack.c.h.b16 %v325
      %v1628 = vunpack.c.l.b16 %v326
      %v1629 = vunpack.c.h.b16 %v326
      %v1630 = vunpack.c.l.b16 %v327
      %v1631 = vunpack.c.h.b16 %v327
      %v1632 = vunpack.c.l.b16 %v328
      %v1633 = vunpack.c.h.b16 %v328
      %v1634 = vunpack.c.l.b16 %v329
      %v1635 = vunpack.c.h.b16 %v329
      %v1636 = vunpack.c.l.b16 %v330
      %v1637 = vunpack.c.h.b16 %v330
      %v1638 = vunpack.c.l.b16 %v331
      %v1639 = vunpack.c.h.b16 %v331
      %v1640 = vunpack.c.l.b16 %v332
      %v1641 = vunpack.c.h.b16 %v332
      %v1642 = vunpack.c.l.b16 %v333
      %v1643 = vunpack.c.h.b16 %v333
      %v1644 = vunpack.c.l.b16 %v334
      %v1645 = vunpack.c.h.b16 %v334
      %v1646 = vunpack.c.l.b16 %v335
      %v1647 = vunpack.c.h.b16 %v335
      %v1648 = vunpack.c.l.b16 %v336
      %v1649 = vunpack.c.h.b16 %v336
      %v1650 = vunpack.c.l.b16 %v337
      %v1651 = vunpack.c.h.b16 %v337
      %v1652 = vunpack.c.l.b16 %v338
      %v1653 = vunpack.c.h.b16 %v338
      %v1654 = vunpack.c.l.b16 %v339
      %v1655 = vunpack.c.h.b16 %v339
      %v1656 = vunpack.c.l.b16 %v340
      %v1657 = vunpack.c.h.b16 %v340
      %v1658 = vunpack.c.l.b16 %v341
      %v1659 = vunpack.c.h.b16 %v341
      %v1660 = vunpack.c.l.b16 %v342
      %v1661 = vunpack.c.h.b16 %v342
      %v1662 = vunpack.c.l.b16 %v343
      %v1663 = vunpack.c.h.b16 %v343
      %v1664 = vunpack.c.l.b16 %v344
      %v1665 = vunpack.c.h.b16 %v344
      %v1666 = vunpack.c.l.b16 %v345
      %v1667 = vunpack.c.h.b16 %v345
      %v1668 = vunpack.c.l.b16 %v346
      %v1669 = vunpack.c.h.b16 %v346
      %v1670 = vunpack.c.l.b16 %v347
      %v1671 = vunpack.c.h.b16 %v347
      %v1672 = vunpack.c.l.b16 %v348
      %v1673 = vunpack.c.h.b16 %v348
      %v1674 = vunpack.c.l.b16 %v349
      %v1675 = vunpack.c.h.b16 %v349
      %v1676 = vunpack.c.l.b16 %v350
      %v1677 = vunpack.c.h.b16 %v350
      %v1678 = vunpack.c.l.b16 %v351
      %v1679 = vunpack.c.h.b16 %v351
      %v1680 = vunpack.c.l.b16 %v352
      %v1681 = vunpack.c.h.b16 %v352
      %v1682 = vunpack.c.l.b16 %v353
      %v1683 = vunpack.c.h.b16 %v353
      %v1684 = vunpack.c.l.b16 %v354
      %v1685 = vunpack.c.h.b16 %v354
      %v1686 = vunpack.c.l.b16 %v355
      %v1687 = vunpack.c.h.b16 %v355
      %v1688 = vunpack.c.l.b16 %v356
      %v1689 = vunpack.c.h.b16 %v356
      %v1690 = vunpack.c.l.b16 %v357
      %v1691 = vunpack.c.h.b16 %v357
      %v1692 = vunpack.c.l.b16 %v358
      %v1693 = vunpack.c.h.b16 %v358
      %v1694 = vunpack.c.l.b16 %v359
      %v1695 = vunpack.c.h.b16 %v359
      %v1696 = vunpack.c.l.b16 %v360
      %v1697 = vunpack.c.h.b16 %v360
      %v1698 = vunpack.c.l.b16 %v361
      %v1699 = vunpack.c.h.b16 %v361
      %v1700 = vunpack.c.l.b16 %v362
      %v1701 = vunpack.c.h.b16 %v362
      %v1702 = vunpack.c.l.b16 %v363
      %v1703 = vunpack.c.h.b16 %v363
      %v1704 = vunpack.c.l.b16 %v364
      %v1705 = vunpack.c.h.b16 %v364
      %v1706 = vunpack.c.l.b16 %v365
      %v1707 = vunpack.c.h.b16 %v365
      %v1708 = vunpack.c.l.b16 %v366
      %v1709 = vunpack.c.h.b16 %v366
      %v1710 = vunpack.c.l.b16 %v367
      %v1711 = vunpack.c.h.b16 %v367
      %v1712 = vunpack.c.l.b16 %v368
      %v1713 = vunpack.c.h.b16 %v368
      %v1714 = vunpack.c.l.b16 %v369
      %v1715 = vunpack.c.h.b16 %v369
      %v1716 = vunpack.c.l.b16 %v370
      %v1717 = vunpack.c.h.b16 %v370
      %v1718 = vunpack.c.l.b16 %v371
      %v1719 = vunpack.c.h.b16 %v371
      %v1720 = vunpack.c.l.b16 %v372
      %v1721 = vunpack.c.h.b16 %v372
      %v1722 = vunpack.c.l.b16 %v373
      %v1723 = vunpack.c.h.b16 %v373
      %v1724 = vunpack.c.l.b16 %v374
      %v1725 = vunpack.c.h.b16 %v374
      %v1726 = vunpack.c.l.b16 %v375
      %v1727 = vunpack.c.h.b16 %v375
      %v1728 = vunpack.c.l.b16 %v376
      %v1729 = vunpack.c.h.b16 %v376
      %v1730 = vunpack.c.l.b16 %v377
      %v1731 = vunpack.c.h.b16 %v377
      %v1732 = vunpack.c.l.b16 %v378
      %v1733 = vunpack.c.h.b16 %v378
      %v1734 = vunpack.c.l.b16 %v379
      %v1735 = vunpack.c.h.b16 %v379
      %v1736 = vunpack.c.l.b16 %v380
      %v1737 = vunpack.c.h.b16 %v380
      %v1738 = vunpack.c.l.b16 %v381
      %v1739 = vunpack.c.h.b16 %v381
      %v1740 = vunpack.c.l.b16 %v382
      %v1741 = vunpack.c.h.b16 %v382
      %v1742 = vunpack.c.l.b16 %v383
      %v1743 = vunpack.c.h.b16 %v383
      %v1744 = vunpack.c.l.b16 %v384
      %v1745 = vunpack.c.h.b16 %v384
      %v1746 = vunpack.c.l.b16 %v385
      %v1747 = vunpack.c.h.b16 %v385
      %v1748 = vunpack.c.l.b16 %v386
      %v1749 = vunpack.c.h.b16 %v386
      %v1750 = vunpack.c.l.b16 %v387
      %v1751 = vunpack.c.h.b16 %v387
      %v1752 = vunpack.c.l.b16 %v388
      %v1753 = vunpack.c.h.b16 %v388
      %v1754 = vunpack.c.l.b16 %v389
      %v1755 = vunpack.c.h.b16 %v389
      %v1756 = vunpack.c.l.b16 %v390
      %v1757 = vunpack.c.h.b16 %v390
      %v1758 = vunpack.c.l.b16 %v391
      %v1759 = vunpack.c.h.b16 %v391
      %v1760 = vunpack.c.l.b16 %v392
      %v1761 = vunpack.c.h.b16 %v392
      %v1762 = vunpack.c.l.b16 %v393
      %v1763 = vunpack.c.h.b16 %v393
      %v1764 = vunpack.c.l.b16 %v394
      %v1765 = vunpack.c.h.b16 %v394
      %v1766 = vunpack.c.l.b16 %v395
      %v1767 = vunpack.c.h.b16 %v395
      %v1768 = vunpack.c.l.b16 %v396
      %v1769 = vunpack.c.h.b16 %v396
      %v1770 = vunpack.c.l.b16 %v397
      %v1771 = vunpack.c.h.b16 %v397
      %v1772 = vunpack.c.l.b16 %v398
      %v1773 = vunpack.c.h.b16 %v398
      %v1774 = vunpack.c.l.b16 %v399
      %v1775 = vunpack.c.h.b16 %v399
      %v1776 = vunpack.c.l.b16 %v400
      %v1777 = vunpack.c.h.b16 %v400
      %v1778 = vunpack.c.l.b16 %v401
      %v1779 = vunpack.c.h.b16 %v401
      %v1780 = vunpack.c.l.b16 %v402
      %v1781 = vunpack.c.h.b16 %v402
      %v1782 = vunpack.c.l.b16 %v403
      %v1783 = vunpack.c.h.b16 %v403
      %v1784 = vunpack.c.l.b16 %v404
      %v1785 = vunpack.c.h.b16 %v404
      %v1786 = vunpack.c.l.b16 %v405
      %v1787 = vunpack.c.h.b16 %v405
      %v1788 = vunpack.c.l.b16 %v406
      %v1789 = vunpack.c.h.b16 %v406
      %v1790 = vunpack.c.l.b16 %v407
      %v1791 = vunpack.c.h.b16 %v407
      %v1792 = vunpack.c.l.b16 %v408
      %v1793 = vunpack.c.h.b16 %v408
      %v1794 = vunpack.c.l.b16 %v409
      %v1795 = vunpack.c.h.b16 %v409
      %v1796 = vunpack.c.l.b16 %v410
      %v1797 = vunpack.c.h.b16 %v410
      %v1798 = vunpack.c.l.b16 %v411
      %v1799 = vunpack.c.h.b16 %v411
      %v1800 = vunpack.c.l.b16 %v412
      %v1801 = vunpack.c.h.b16 %v412
      %v1802 = vunpack.c.l.b16 %v413
      %v1803 = vunpack.c.h.b16 %v413
      %v1804 = vunpack.c.l.b16 %v414
      %v1805 = vunpack.c.h.b16 %v414
      %v1806 = vunpack.c.l.b16 %v415
      %v1807 = vunpack.c.h.b16 %v415
      %v1808 = vunpack.c.l.b16 %v416
      %v1809 = vunpack.c.h.b16 %v416
      %v1810 = vunpack.c.l.b16 %v417
      %v1811 = vunpack.c.h.b16 %v417
      %v1812 = vunpack.c.l.b16 %v418
      %v1813 = vunpack.c.h.b16 %v418
      %v1814 = vunpack.c.l.b16 %v419
      %v1815 = vunpack.c.h.b16 %v419
      %v1816 = vunpack.c.l.b16 %v420
      %v1817 = vunpack.c.h.b16 %v420
      %v1818 = vunpack.c.l.b16 %v421
      %v1819 = vunpack.c.h.b16 %v421
      %v1820 = vunpack.c.l.b16 %v422
      %v1821 = vunpack.c.h.b16 %v422
      %v1822 = vunpack.c.l.b16 %v423
      %v1823 = vunpack.c.h.b16 %v423
      %v1824 = vunpack.c.l.b16 %v424
      %v1825 = vunpack.c.h.b16 %v424
      %v1826 = vunpack.c.l.b16 %v425
      %v1827 = vunpack.c.h.b16 %v425
      %v1828 = vunpack.c.l.b16 %v426
      %v1829 = vunpack.c.h.b16 %v426
      %v1830 = vunpack.c.l.b16 %v427
      %v1831 = vunpack.c.h.b16 %v427
      %v1832 = vunpack.c.l.b16 %v428
      %v1833 = vunpack.c.h.b16 %v428
      %v1834 = vunpack.c.l.b16 %v429
      %v1835 = vunpack.c.h.b16 %v429
      %v1836 = vunpack.c.l.b16 %v430
      %v1837 = vunpack.c.h.b16 %v430
      %v1838 = vunpack.c.l.b16 %v431
      %v1839 = vunpack.c.h.b16 %v431
      %v1840 = vunpack.c.l.b16 %v432
      %v1841 = vunpack.c.h.b16 %v432
      %v1842 = vunpack.c.l.b16 %v433
      %v1843 = vunpack.c.h.b16 %v433
      %v1844 = vunpack.c.l.b16 %v434
      %v1845 = vunpack.c.h.b16 %v434
      %v1846 = vunpack.c.l.b16 %v435
      %v1847 = vunpack.c.h.b16 %v435
      %v1848 = vunpack.c.l.b16 %v436
      %v1849 = vunpack.c.h.b16 %v436
      %v1850 = vunpack.c.l.b16 %v437
      %v1851 = vunpack.c.h.b16 %v437
      %v1852 = vunpack.c.l.b16 %v438
      %v1853 = vunpack.c.h.b16 %v438
      %v1854 = vunpack.c.l.b16 %v439
      %v1855 = vunpack.c.h.b16 %v439
      %v1856 = vunpack.c.l.b16 %v440
      %v1857 = vunpack.c.h.b16 %v440
      %v1858 = vunpack.c.l.b16 %v441
      %v1859 = vunpack.c.h.b16 %v441
      %v1860 = vunpack.c.l.b16 %v442
      %v1861 = vunpack.c.h.b16 %v442
      %v1862 = vunpack.c.l.b16 %v443
      %v1863 = vunpack.c.h.b16 %v443
      %v1864 = vunpack.c.l.b16 %v444
      %v1865 = vunpack.c.h.b16 %v444
      %v1866 = vunpack.c.l.b16 %v445
      %v1867 = vunpack.c.h.b16 %v445
      %v1868 = vunpack.c.l.b16 %v446
      %v1869 = vunpack.c.h.b16 %v446
      %v1870 = vunpack.c.l.b16 %v447
      %v1871 = vunpack.c.h.b16 %v447
      %v1872 = vunpack.c.l.b16 %v448
      %v1873 = vunpack.c.h.b16 %v448
      %v1874 = vunpack.c.l.b16 %v449
      %v1875 = vunpack.c.h.b16 %v449
      %v1876 = vunpack.c.l.b16 %v450
      %v1877 = vunpack.c.h.b16 %v450
      %v1878 = vunpack.c.l.b16 %v451
      %v1879 = vunpack.c.h.b16 %v451
      %v1880 = vunpack.c.l.b16 %v452
      %v1881 = vunpack.c.h.b16 %v452
      %v1882 = vunpack.c.l.b16 %v453
      %v1883 = vunpack.c.h.b16 %v453
      %v1884 = vunpack.c.l.b16 %v454
      %v1885 = vunpack.c.h.b16 %v454
      %v1886 = vunpack.c.l.b16 %v455
      %v1887 = vunpack.c.h.b16 %v455
      %v1888 = vunpack.c.l.b16 %v456
      %v1889 = vunpack.c.h.b16 %v456
      %v1890 = vunpack.c.l.b16 %v457
      %v1891 = vunpack.c.h.b16 %v457
      %v1892 = vunpack.c.l.b16 %v458
      %v1893 = vunpack.c.h.b16 %v458
      %v1894 = vunpack.c.l.b16 %v459
      %v1895 = vunpack.c.h.b16 %v459
      %v1896 = vunpack.c.l.b16 %v460
      %v1897 = vunpack.c.h.b16 %v460
      %v1898 = vunpack.c.l.b16 %v461
      %v1899 = vunpack.c.h.b16 %v461
      %v1900 = vunpack.c.l.b16 %v462
      %v1901 = vunpack.c.h.b16 %v462
      %v1902 = vunpack.c.l.b16 %v463
      %v1903 = vunpack.c.h.b16 %v463
      %v1904 = vunpack.c.l.b16 %v464
      %v1905 = vunpack.c.h.b16 %v464
      %v1906 = vunpack.c.l.b16 %v465
      %v1907 = vunpack.c.h.b16 %v465
      %v1908 = vunpack.c.l.b16 %v466
      %v1909 = vunpack.c.h.b16 %v466
      %v1910 = vunpack.c.l.b16 %v467
      %v1911 = vunpack.c.h.b16 %v467
      %v1912 = vunpack.c.l.b16 %v468
      %v1913 = vunpack.c.h.b16 %v468
      %v1914 = vunpack.c.l.b16 %v469
      %v1915 = vunpack.c.h.b16 %v469
      %v1916 = vunpack.c.l.b16 %v470
      %v1917 = vunpack.c.h.b16 %v470
      %v1918 = vunpack.c.l.b16 %v471
      %v1919 = vunpack.c.h.b16 %v471
      %v1920 = vunpack.c.l.b16 %v472
      %v1921 = vunpack.c.h.b16 %v472
      %v1922 = vunpack.c.l.b16 %v473
      %v1923 = vunpack.c.h.b16 %v473
      %v1924 = vunpack.c.l.b16 %v474
      %v1925 = vunpack.c.h.b16 %v474
      %v1926 = vunpack.c.l.b16 %v475
      %v1927 = vunpack.c.h.b16 %v475
      %v1928 = vunpack.c.l.b16 %v476
      %v1929 = vunpack.c.h.b16 %v476
      %v1930 = vunpack.c.l.b16 %v477
      %v1931 = vunpack.c.h.b16 %v477
      %v1932 = vunpack.c.l.b16 %v478
      %v1933 = vunpack.c.h.b16 %v478
      %v1934 = vunpack.c.l.b16 %v479
      %v1935 = vunpack.c.h.b16 %v479
      %v1936 = vunpack.c.l.b16 %v480
      %v1937 = vunpack.c.h.b16 %v480
      %v1938 = vunpack.c.l.b16 %v481
      %v1939 = vunpack.c.h.b16 %v481
      %v1940 = vunpack.c.l.b16 %v482
      %v1941 = vunpack.c.h.b16 %v482
      %v1942 = vunpack.c.l.b16 %v483
      %v1943 = vunpack.c.h.b16 %v483
      %v1944 = vunpack.c.l.b16 %v484
      %v1945 = vunpack.c.h.b16 %v484
      %v1946 = vunpack.c.l.b16 %v485
      %v1947 = vunpack.c.h.b16 %v485
      %v1948 = vunpack.c.l.b16 %v486
      %v1949 = vunpack.c.h.b16 %v486
      %v1950 = vunpack.c.l.b16 %v487
      %v1951 = vunpack.c.h.b16 %v487
      %v1952 = vunpack.c.l.b16 %v488
      %v1953 = vunpack.c.h.b16 %v488
      %v1954 = vunpack.c.l.b16 %v489
      %v1955 = vunpack.c.h.b16 %v489
      %v1956 = vunpack.c.l.b16 %v490
      %v1957 = vunpack.c.h.b16 %v490
      %v1958 = vunpack.c.l.b16 %v491
      %v1959 = vunpack.c.h.b16 %v491
      %v1960 = vunpack.c.l.b16 %v492
      %v1961 = vunpack.c.h.b16 %v492
      %v1962 = vunpack.c.l.b16 %v493
      %v1963 = vunpack.c.h.b16 %v493
      %v1964 = vunpack.c.l.b16 %v494
      %v1965 = vunpack.c.h.b16 %v494
      %v1966 = vunpack.c.l.b16 %v495
      %v1967 = vunpack.c.h.b16 %v495
      %v1968 = vunpack.c.l.b16 %v496
      %v1969 = vunpack.c.h.b16 %v496
      %v1970 = vunpack.c.l.b16 %v497
      %v1971 = vunpack.c.h.b16 %v497
      %v1972 = vunpack.c.l.b16 %v498
      %v1973 = vunpack.c.h.b16 %v498
      %v1974 = vunpack.c.l.b16 %v499
      %v1975 = vunpack.c.h.b16 %v499
      %v1976 = vunpack.c.l.b16 %v500
      %v1977 = vunpack.c.h.b16 %v500
      %v1978 = vunpack.c.l.b16 %v501
      %v1979 = vunpack.c.h.b16 %v501
      %v1980 = vunpack.c.l.b16 %v502
      %v1981 = vunpack.c.h.b16 %v502
      %v1982 = vunpack.c.l.b16 %v503
      %v1983 = vunpack.c.h.b16 %v503
      %v1984 = vunpack.c.l.b16 %v504
      %v1985 = vunpack.c.h.b16 %v504
      %v1986 = vunpack.c.l.b16 %v505
      %v1987 = vunpack.c.h.b16 %v505
      %v1988 = vunpack.c.l.b16 %v506
      %v1989 = vunpack.c.h.b16 %v506
      %v1990 = vunpack.c.l.b16 %v507
      %v1991 = vunpack.c.h.b16 %v507
      %v1992 = vunpack.c.l.b16 %v508
      %v1993 = vunpack.c.h.b16 %v508
      %v1994 = vunpack.c.l.b16 %v509
      %v1995 = vunpack.c.h.b16 %v509
      %v1996 = vunpack.c.l.b16 %v510
      %v1997 = vunpack.c.h.b16 %v510
      %v1998 = vunpack.c.l.b16 %v511
      %v1999 = vunpack.c.h.b16 %v511
      %v2000 = vunpack.c.l.b16 %v512
      %v2001 = vunpack.c.h.b16 %v512
      %v2002 = vunpack.c.l.b16 %v513
      %v2003 = vunpack.c.h.b16 %v513
      %v2004 = vunpack.c.l.b16 %v514
      %v2005 = vunpack.c.h.b16 %v514
      %v2006 = vunpack.c.l.b16 %v515
      %v2007 = vunpack.c.h.b16 %v515
      %v2008 = vunpack.c.l.b16 %v516
      %v2009 = vunpack.c.h.b16 %v516
      %v2010 = vunpack.c.l.b16 %v517
      %v2011 = vunpack.c.h.b16 %v517
      %v2012 = vunpack.c.l.b16 %v518
      %v2013 = vunpack.c.h.b16 %v518
      %v2014 = vunpack.c.l.b16 %v519
      %v2015 = vunpack.c.h.b16 %v519
      %v2016 = vunpack.c.l.b16 %v520
      %v2017 = vunpack.c.h.b16 %v520
      %v2018 = vunpack.c.l.b16 %v521
      %v2019 = vunpack.c.h.b16 %v521
      %v2020 = vunpack.c.l.b16 %v522
      %v2021 = vunpack.c.h.b16 %v522
      %v2022 = vunpack.c.l.b16 %v523
      %v2023 = vunpack.c.h.b16 %v523
      %v2024 = vunpack.c.l.b16 %v524
      %v2025 = vunpack.c.h.b16 %v524
      %v2026 = vunpack.c.l.b16 %v525
      %v2027 = vunpack.c.h.b16 %v525
      %v2028 = vunpack.c.l.b16 %v526
      %v2029 = vunpack.c.h.b16 %v526
      %v2030 = vunpack.c.l.b16 %v527
      %v2031 = vunpack.c.h.b16 %v527
      %v2032 = vunpack.c.l.b16 %v528
      %v2033 = vunpack.c.h.b16 %v528
      %v2034 = vunpack.c.l.b16 %v529
      %v2035 = vunpack.c.h.b16 %v529
      %v2036 = vunpack.c.l.b16 %v530
      %v2037 = vunpack.c.h.b16 %v530
      %v2038 = vunpack.c.l.b16 %v531
      %v2039 = vunpack.c.h.b16 %v531
      %v2040 = vunpack.c.l.b16 %v532
      %v2041 = vunpack.c.h.b16 %v532
      %v2042 = vunpack.c.l.b16 %v533
      %v2043 = vunpack.c.h.b16 %v533
      %v2044 = vunpack.c.l.b16 %v534
      %v2045 = vunpack.c.h.b16 %v534
      %v2046 = vunpack.c.l.b16 %v535
      %v2047 = vunpack.c.h.b16 %v535
      %v2048 = vunpack.c.l.b16 %v536
      %v2049 = vunpack.c.h.b16 %v536
      %v2050 = vunpack.c.l.b16 %v537
      %v2051 = vunpack.c.h.b16 %v537
      %v2052 = vunpack.c.l.b16 %v538
      %v2053 = vunpack.c.h.b16 %v538
      %v2054 = vunpack.c.l.b16 %v539
      %v2055 = vunpack.c.h.b16 %v539
      %v2056 = vunpack.c.l.b16 %v540
      %v2057 = vunpack.c.h.b16 %v540
      %v2058 = vunpack.c.l.b16 %v541
      %v2059 = vunpack.c.h.b16 %v541
      %v2060 = vunpack.c.l.b16 %v542
      %v2061 = vunpack.c.h.b16 %v542
      %v2062 = vunpack.c.l.b16 %v543
      %v2063 = vunpack.c.h.b16 %v543
      %v2064 = vunpack.c.l.b16 %v544
      %v2065 = vunpack.c.h.b16 %v544
      %v2066 = vunpack.c.l.b16 %v545
      %v2067 = vunpack.c.h.b16 %v545
      %v2068 = vunpack.c.l.b16 %v546
      %v2069 = vunpack.c.h.b16 %v546
      %v2070 = vunpack.c.l.b16 %v547
      %v2071 = vunpack.c.h.b16 %v547
      %v2072 = vunpack.c.l.b16 %v548
      %v2073 = vunpack.c.h.b16 %v548
      %v2074 = vunpack.c.l.b16 %v549
      %v2075 = vunpack.c.h.b16 %v549
      %v2076 = vunpack.c.l.b16 %v550
      %v2077 = vunpack.c.h.b16 %v550
      %v2078 = vunpack.c.l.b16 %v551
      %v2079 = vunpack.c.h.b16 %v551
      %v2080 = vunpack.c.l.b16 %v552
      %v2081 = vunpack.c.h.b16 %v552
      %v2082 = vunpack.c.l.b16 %v553
      %v2083 = vunpack.c.h.b16 %v553
      %v2084 = vunpack.c.l.b16 %v554
      %v2085 = vunpack.c.h.b16 %v554
      %v2086 = vunpack.c.l.b16 %v555
      %v2087 = vunpack.c.h.b16 %v555
      %v2088 = vunpack.c.l.b16 %v556
      %v2089 = vunpack.c.h.b16 %v556
      %v2090 = vunpack.c.l.b16 %v557
      %v2091 = vunpack.c.h.b16 %v557
      %v2092 = vunpack.c.l.b16 %v558
      %v2093 = vunpack.c.h.b16 %v558
      %v2094 = vunpack.c.l.b16 %v559
      %v2095 = vunpack.c.h.b16 %v559
      %v2096 = vunpack.c.l.b16 %v560
      %v2097 = vunpack.c.h.b16 %v560
      %v2098 = vunpack.c.l.b16 %v561
      %v2099 = vunpack.c.h.b16 %v561
      %v2100 = vunpack.c.l.b16 %v562
      %v2101 = vunpack.c.h.b16 %v562
      %v2102 = vunpack.c.l.b16 %v563
      %v2103 = vunpack.c.h.b16 %v563
      %v2104 = vunpack.c.l.b16 %v564
      %v2105 = vunpack.c.h.b16 %v564
      %v2106 = vunpack.c.l.b16 %v565
      %v2107 = vunpack.c.h.b16 %v565
      %v2108 = vunpack.c.l.b16 %v566
      %v2109 = vunpack.c.h.b16 %v566
      %v2110 = vunpack.c.l.b16 %v567
      %v2111 = vunpack.c.h.b16 %v567
      %v2112 = vunpack.c.l.b16 %v568
      %v2113 = vunpack.c.h.b16 %v568
      %v2114 = vunpack.c.l.b16 %v569
      %v2115 = vunpack.c.h.b16 %v569
      %v2116 = vunpack.c.l.b16 %v570
      %v2117 = vunpack.c.h.b16 %v570
      %v2118 = vunpack.c.l.b16 %v571
      %v2119 = vunpack.c.h.b16 %v571
      %v2120 = vunpack.c.l.b16 %v572
      %v2121 = vunpack.c.h.b16 %v572
      %v2122 = vunpack.c.l.b16 %v573
      %v2123 = vunpack.c.h.b16 %v573
      %v2124 = vunpack.c.l.b16 %v574
      %v2125 = vunpack.c.h.b16 %v574
      %v2126 = vunpack.c.l.b16 %v575
      %v2127 = vunpack.c.h.b16 %v575
      %v2128 = vunpack.c.l.b16 %v576
      %v2129 = vunpack.c.h.b16 %v576
      %v2130 = vunpack.c.l.b16 %v577
      %v2131 = vunpack.c.h.b16 %v577
      %v2132 = vunpack.c.l.b16 %v578
      %v2133 = vunpack.c.h.b16 %v578
      %v2134 = vunpack.c.l.b16 %v579
      %v2135 = vunpack.c.h.b16 %v579
      %v2136 = vunpack.c.l.b16 %v580
      %v2137 = vunpack.c.h.b16 %v580
      %v2138 = vunpack.c.l.b16 %v581
      %v2139 = vunpack.c.h.b16 %v581
      %v2140 = vunpack.c.l.b16 %v582
      %v2141 = vunpack.c.h.b16 %v582
      %v2142 = vunpack.c.l.b16 %v583
      %v2143 = vunpack.c.h.b16 %v583
      %v2144 = vunpack.c.l.b16 %v584
      %v2145 = vunpack.c.h.b16 %v584
      %v2146 = vunpack.c.l.b16 %v585
      %v2147 = vunpack.c.h.b16 %v585
      %v2148 = vunpack.c.l.b16 %v586
      %v2149 = vunpack.c.h.b16 %v586
      %v2150 = vunpack.c.l.b16 %v587
      %v2151 = vunpack.c.h.b16 %v587
      %v2152 = vunpack.c.l.b16 %v588
      %v2153 = vunpack.c.h.b16 %v588
      %v2154 = vunpack.c.l.b16 %v589
      %v2155 = vunpack.c.h.b16 %v589
      %v2156 = vunpack.c.l.b16 %v590
      %v2157 = vunpack.c.h.b16 %v590
      %v2158 = vunpack.c.l.b16 %v591
      %v2159 = vunpack.c.h.b16 %v591
      %v2160 = vunpack.c.l.b16 %v592
      %v2161 = vunpack.c.h.b16 %v592
      %v2162 = vunpack.c.l.b16 %v593
      %v2163 = vunpack.c.h.b16 %v593
      %v2164 = vunpack.c.l.b16 %v594
      %v2165 = vunpack.c.h.b16 %v594
      %v2166 = vunpack.c.l.b16 %v595
      %v2167 = vunpack.c.h.b16 %v595
      %v2168 = vunpack.c.l.b16 %v596
      %v2169 = vunpack.c.h.b16 %v596
      %v2170 = vunpack.c.l.b16 %v597
      %v2171 = vunpack.c.h.b16 %v597
      %v2172 = vunpack.c.l.b16 %v598
      %v2173 = vunpack.c.h.b16 %v598
      %v2174 = vunpack.c.l.b16 %v599
      %v2175 = vunpack.c.h.b16 %v599
      %v2176 = vunpack.c.l.b16 %v600
      %v2177 = vunpack.c.h.b16 %v600
      %v2178 = vunpack.c.l.b16 %v601
      %v2179 = vunpack.c.h.b16 %v601
      %v2180 = vunpack.c.l.b16 %v602
      %v2181 = vunpack.c.h.b16 %v602
      %v2182 = vunpack.c.l.b16 %v603
      %v2183 = vunpack.c.h.b16 %v603
      %v2184 = vunpack.c.l.b16 %v604
      %v2185 = vunpack.c.h.b16 %v604
      %v2186 = vunpack.c.l.b16 %v605
      %v2187 = vunpack.c.h.b16 %v605
      %v2188 = vunpack.c.l.b16 %v606
      %v2189 = vunpack.c.h.b16 %v606
      %v2190 = vunpack.c.l.b16 %v607
      %v2191 = vunpack.c.h.b16 %v607
      %v2192 = vunpack.c.l.b16 %v608
      %v2193 = vunpack.c.h.b16 %v608
      %v2194 = vunpack.c.l.b16 %v609
      %v2195 = vunpack.c.h.b16 %v609
      %v2196 = vunpack.c.l.b16 %v610
      %v2197 = vunpack.c.h.b16 %v610
      %v2198 = vunpack.c.l.b16 %v611
      %v2199 = vunpack.c.h.b16 %v611
      %v2200 = vunpack.c.l.b16 %v612
      %v2201 = vunpack.c.h.b16 %v612
      %v2202 = vunpack.c.l.b16 %v613
      %v2203 = vunpack.c.h.b16 %v613
      %v2204 = vunpack.c.l.b16 %v614
      %v2205 = vunpack.c.h.b16 %v614
      %v2206 = vunpack.c.l.b16 %v615
      %v2207 = vunpack.c.h.b16 %v615
      %v2208 = vunpack.c.l.b16 %v616
      %v2209 = vunpack.c.h.b16 %v616
      %v2210 = vunpack.c.l.b16 %v617
      %v2211 = vunpack.c.h.b16 %v617
      %v2212 = vunpack.c.l.b16 %v618
      %v2213 = vunpack.c.h.b16 %v618
      %v2214 = vunpack.c.l.b16 %v619
      %v2215 = vunpack.c.h.b16 %v619
      %v2216 = vunpack.c.l.b16 %v620
      %v2217 = vunpack.c.h.b16 %v620
      %v2218 = vunpack.c.l.b16 %v621
      %v2219 = vunpack.c.h.b16 %v621
      %v2220 = vunpack.c.l.b16 %v622
      %v2221 = vunpack.c.h.b16 %v622
      %v2222 = vunpack.c.l.b16 %v623
      %v2223 = vunpack.c.h.b16 %v623
      %v2224 = vunpack.c.l.b16 %v624
      %v2225 = vunpack.c.h.b16 %v624
      %v2226 = vunpack.c.l.b16 %v625
      %v2227 = vunpack.c.h.b16 %v625
      %v2228 = vunpack.c.l.b16 %v626
      %v2229 = vunpack.c.h.b16 %v626
      %v2230 = vunpack.c.l.b16 %v627
      %v2231 = vunpack.c.h.b16 %v627
      %v2232 = vunpack.c.l.b16 %v628
      %v2233 = vunpack.c.h.b16 %v628
      %v2234 = vunpack.c.l.b16 %v629
      %v2235 = vunpack.c.h.b16 %v629
      %v2236 = vunpack.c.l.b16 %v630
      %v2237 = vunpack.c.h.b16 %v630
      %v2238 = vunpack.c.l.b16 %v631
      %v2239 = vunpack.c.h.b16 %v631
      %v2240 = vunpack.c.l.b16 %v632
      %v2241 = vunpack.c.h.b16 %v632
      %v2242 = vunpack.c.l.b16 %v633
      %v2243 = vunpack.c.h.b16 %v633
      %v2244 = vunpack.c.l.b16 %v634
      %v2245 = vunpack.c.h.b16 %v634
      %v2246 = vunpack.c.l.b16 %v635
      %v2247 = vunpack.c.h.b16 %v635
      %v2248 = vunpack.c.l.b16 %v636
      %v2249 = vunpack.c.h.b16 %v636
      %v2250 = vunpack.c.l.b16 %v637
      %v2251 = vunpack.c.h.b16 %v637
      %v2252 = vunpack.c.l.b16 %v638
      %v2253 = vunpack.c.h.b16 %v638
      %v2254 = vunpack.c.l.b16 %v639
      %v2255 = vunpack.c.h.b16 %v639
      %v2256 = vunpack.c.l.b16 %v640
      %v2257 = vunpack.c.h.b16 %v640
      %v2258 = vunpack.c.l.b16 %v641
      %v2259 = vunpack.c.h.b16 %v641
      %v2260 = vunpack.c.l.b16 %v642
      %v2261 = vunpack.c.h.b16 %v642
      %v2262 = vunpack.c.l.b16 %v643
      %v2263 = vunpack.c.h.b16 %v643
      %v2264 = vunpack.c.l.b16 %v644
      %v2265 = vunpack.c.h.b16 %v644
      %v2266 = vunpack.c.l.b16 %v645
      %v2267 = vunpack.c.h.b16 %v645
      %v2268 = vunpack.c.l.b16 %v646
      %v2269 = vunpack.c.h.b16 %v646
      %v2270 = vunpack.c.l.b16 %v647
      %v2271 = vunpack.c.h.b16 %v647
      %v2272 = vunpack.c.l.b16 %v648
      %v2273 = vunpack.c.h.b16 %v648
      %v2274 = vunpack.c.l.b16 %v649
      %v2275 = vunpack.c.h.b16 %v649
      %v2276 = vunpack.c.l.b16 %v650
      %v2277 = vunpack.c.h.b16 %v650
      %v2278 = vunpack.c.l.b16 %v651
      %v2279 = vunpack.c.h.b16 %v651
      %v2280 = vunpack.c.l.b16 %v652
      %v2281 = vunpack.c.h.b16 %v652
      %v2282 = vunpack.c.l.b16 %v653
      %v2283 = vunpack.c.h.b16 %v653
      %v2284 = vunpack.c.l.b16 %v654
      %v2285 = vunpack.c.h.b16 %v654
      %v2286 = vunpack.c.l.b16 %v655
      %v2287 = vunpack.c.h.b16 %v655
      %v2288 = vunpack.c.l.b16 %v656
      %v2289 = vunpack.c.h.b16 %v656
      %v2290 = vunpack.c.l.b16 %v657
      %v2291 = vunpack.c.h.b16 %v657
      %v2292 = vunpack.c.l.b16 %v658
      %v2293 = vunpack.c.h.b16 %v658
      %v2294 = vunpack.c.l.b16 %v659
      %v2295 = vunpack.c.h.b16 %v659
      %v2296 = vunpack.c.l.b16 %v660
      %v2297 = vunpack.c.h.b16 %v660
      %v2298 = vunpack.c.l.b16 %v661
      %v2299 = vunpack.c.h.b16 %v661
      %v2300 = vunpack.c.l.b16 %v662
      %v2301 = vunpack.c.h.b16 %v662
      %v2302 = vunpack.c.l.b16 %v663
      %v2303 = vunpack.c.h.b16 %v663
      %v2304 = vunpack.c.l.b16 %v664
      %v2305 = vunpack.c.h.b16 %v664
      %v2306 = vunpack.c.l.b16 %v665
      %v2307 = vunpack.c.h.b16 %v665
      %v2308 = vunpack.c.l.b16 %v666
      %v2309 = vunpack.c.h.b16 %v666
      %v2310 = vunpack.c.l.b16 %v667
      %v2311 = vunpack.c.h.b16 %v667
      %v2312 = vunpack.c.l.b16 %v668
      %v2313 = vunpack.c.h.b16 %v668
      %v2314 = vunpack.c.l.b16 %v669
      %v2315 = vunpack.c.h.b16 %v669
      %v2316 = vunpack.c.l.b16 %v670
      %v2317 = vunpack.c.h.b16 %v670
      %v2318 = vunpack.c.l.b16 %v671
      %v2319 = vunpack.c.h.b16 %v671
      %v2320 = vunpack.c.l.b16 %v672
      %v2321 = vunpack.c.h.b16 %v672
      %v2322 = vunpack.c.l.b16 %v673
      %v2323 = vunpack.c.h.b16 %v673
      %v2324 = vunpack.c.l.b16 %v674
      %v2325 = vunpack.c.h.b16 %v674
      %v2326 = vunpack.c.l.b16 %v675
      %v2327 = vunpack.c.h.b16 %v675
      %v2328 = vunpack.c.l.b16 %v676
      %v2329 = vunpack.c.h.b16 %v676
      %v2330 = vunpack.c.l.b16 %v677
      %v2331 = vunpack.c.h.b16 %v677
      %v2332 = vunpack.c.l.b16 %v678
      %v2333 = vunpack.c.h.b16 %v678
      %v2334 = vunpack.c.l.b16 %v679
      %v2335 = vunpack.c.h.b16 %v679
      %v2336 = vunpack.c.l.b16 %v680
      %v2337 = vunpack.c.h.b16 %v680
      %v2338 = vunpack.c.l.b16 %v681
      %v2339 = vunpack.c.h.b16 %v681
      %v2340 = vunpack.c.l.b16 %v682
      %v2341 = vunpack.c.h.b16 %v682
      %v2342 = vunpack.c.l.b16 %v683
      %v2343 = vunpack.c.h.b16 %v683
      %v2344 = vunpack.c.l.b16 %v684
      %v2345 = vunpack.c.h.b16 %v684
      %v2346 = vunpack.c.l.b16 %v685
      %v2347 = vunpack.c.h.b16 %v685
      %v2348 = vunpack.c.l.b16 %v686
      %v2349 = vunpack.c.h.b16 %v686
      %v2350 = vunpack.c.l.b16 %v687
      %v2351 = vunpack.c.h.b16 %v687
      %v2352 = vunpack.c.l.b16 %v688
      %v2353 = vunpack.c.h.b16 %v688
      %v2354 = vunpack.c.l.b16 %v689
      %v2355 = vunpack.c.h.b16 %v689
      %v2356 = vunpack.c.l.b16 %v690
      %v2357 = vunpack.c.h.b16 %v690
      %v2358 = vunpack.c.l.b16 %v691
      %v2359 = vunpack.c.h.b16 %v691
      %v2360 = vunpack.c.l.b16 %v692
      %v2361 = vunpack.c.h.b16 %v692
      %v2362 = vunpack.c.l.b16 %v693
      %v2363 = vunpack.c.h.b16 %v693
      %v2364 = vunpack.c.l.b16 %v694
      %v2365 = vunpack.c.h.b16 %v694
      %v2366 = vunpack.c.l.b16 %v695
      %v2367 = vunpack.c.h.b16 %v695
      %v2368 = vunpack.c.l.b16 %v696
      %v2369 = vunpack.c.h.b16 %v696
      %v2370 = vunpack.c.l.b16 %v697
      %v2371 = vunpack.c.h.b16 %v697
      %v2372 = vunpack.c.l.b16 %v698
      %v2373 = vunpack.c.h.b16 %v698
      %v2374 = vunpack.c.l.b16 %v699
      %v2375 = vunpack.c.h.b16 %v699
      %v2376 = vunpack.c.l.b16 %v700
      %v2377 = vunpack.c.h.b16 %v700
      %v2378 = vunpack.c.l.b16 %v701
      %v2379 = vunpack.c.h.b16 %v701
      %v2380 = vunpack.c.l.b16 %v702
      %v2381 = vunpack.c.h.b16 %v702
      %v2382 = vunpack.c.l.b16 %v703
      %v2383 = vunpack.c.h.b16 %v703
      %v2384 = vunpack.c.l.b16 %v704
      %v2385 = vunpack.c.h.b16 %v704
      %v2386 = vunpack.c.l.b16 %v705
      %v2387 = vunpack.c.h.b16 %v705
      %v2388 = vunpack.c.l.b16 %v706
      %v2389 = vunpack.c.h.b16 %v706
      %v2390 = vunpack.c.l.b16 %v707
      %v2391 = vunpack.c.h.b16 %v707
      %v2392 = vunpack.c.l.b16 %v708
      %v2393 = vunpack.c.h.b16 %v708
      %v2394 = vunpack.c.l.b16 %v709
      %v2395 = vunpack.c.h.b16 %v709
      %v2396 = vunpack.c.l.b16 %v710
      %v2397 = vunpack.c.h.b16 %v710
      %v2398 = vunpack.c.l.b16 %v711
      %v2399 = vunpack.c.h.b16 %v711
      %v2400 = vunpack.c.l.b16 %v712
      %v2401 = vunpack.c.h.b16 %v712
      %v2402 = vunpack.c.l.b16 %v713
      %v2403 = vunpack.c.h.b16 %v713
      %v2404 = vunpack.c.l.b16 %v714
      %v2405 = vunpack.c.h.b16 %v714
      %v2406 = vunpack.c.l.b16 %v715
      %v2407 = vunpack.c.h.b16 %v715
      %v2408 = vunpack.c.l.b16 %v716
      %v2409 = vunpack.c.h.b16 %v716
      %v2410 = vunpack.c.l.b16 %v717
      %v2411 = vunpack.c.h.b16 %v717
      %v2412 = vunpack.c.l.b16 %v718
      %v2413 = vunpack.c.h.b16 %v718
      %v2414 = vunpack.c.l.b16 %v719
      %v2415 = vunpack.c.h.b16 %v719
      %v2416 = vunpack.c.l.b16 %v720
      %v2417 = vunpack.c.h.b16 %v720
      %v2418 = vunpack.c.l.b16 %v721
      %v2419 = vunpack.c.h.b16 %v721
      %v2420 = vunpack.c.l.b16 %v722
      %v2421 = vunpack.c.h.b16 %v722
      %v2422 = vunpack.c.l.b16 %v723
      %v2423 = vunpack.c.h.b16 %v723
      %v2424 = vunpack.c.l.b16 %v724
      %v2425 = vunpack.c.h.b16 %v724
      %v2426 = vunpack.c.l.b16 %v725
      %v2427 = vunpack.c.h.b16 %v725
      %v2428 = vunpack.c.l.b16 %v726
      %v2429 = vunpack.c.h.b16 %v726
      %v2430 = vunpack.c.l.b16 %v727
      %v2431 = vunpack.c.h.b16 %v727
      %v2432 = vunpack.c.l.b16 %v728
      %v2433 = vunpack.c.h.b16 %v728
      %v2434 = vunpack.c.l.b16 %v729
      %v2435 = vunpack.c.h.b16 %v729
      %v2436 = vunpack.c.l.b16 %v730
      %v2437 = vunpack.c.h.b16 %v730
      %v2438 = vunpack.c.l.b16 %v731
      %v2439 = vunpack.c.h.b16 %v731
      %v2440 = vunpack.c.l.b16 %v732
      %v2441 = vunpack.c.h.b16 %v732
      %v2442 = vunpack.c.l.b16 %v733
      %v2443 = vunpack.c.h.b16 %v733
      %v2444 = vunpack.c.l.b16 %v734
      %v2445 = vunpack.c.h.b16 %v734
      %v2446 = vunpack.c.l.b16 %v735
      %v2447 = vunpack.c.h.b16 %v735
      %v2448 = vunpack.c.l.b16 %v736
      %v2449 = vunpack.c.h.b16 %v736
      %v2450 = vunpack.c.l.b16 %v737
      %v2451 = vunpack.c.h.b16 %v737
      %v2452 = vunpack.c.l.b16 %v738
      %v2453 = vunpack.c.h.b16 %v738
      %v2454 = vunpack.c.l.b16 %v739
      %v2455 = vunpack.c.h.b16 %v739
      %v2456 = vunpack.c.l.b16 %v740
      %v2457 = vunpack.c.h.b16 %v740
      %v2458 = vunpack.c.l.b16 %v741
      %v2459 = vunpack.c.h.b16 %v741
      %v2460 = vunpack.c.l.b16 %v742
      %v2461 = vunpack.c.h.b16 %v742
      %v2462 = vunpack.c.l.b16 %v743
      %v2463 = vunpack.c.h.b16 %v743
      %v2464 = vunpack.c.l.b16 %v744
      %v2465 = vunpack.c.h.b16 %v744
      %v2466 = vunpack.c.l.b16 %v745
      %v2467 = vunpack.c.h.b16 %v745
      %v2468 = vunpack.c.l.b16 %v746
      %v2469 = vunpack.c.h.b16 %v746
      %v2470 = vunpack.c.l.b16 %v747
      %v2471 = vunpack.c.h.b16 %v747
      %v2472 = vunpack.c.l.b16 %v748
      %v2473 = vunpack.c.h.b16 %v748
      %v2474 = vunpack.c.l.b16 %v749
      %v2475 = vunpack.c.h.b16 %v749
      %v2476 = vunpack.c.l.b16 %v750
      %v2477 = vunpack.c.h.b16 %v750
      %v2478 = vunpack.c.l.b16 %v751
      %v2479 = vunpack.c.h.b16 %v751
      %v2480 = vunpack.c.l.b16 %v752
      %v2481 = vunpack.c.h.b16 %v752
      %v2482 = vunpack.c.l.b16 %v753
      %v2483 = vunpack.c.h.b16 %v753
      %v2484 = vunpack.c.l.b16 %v754
      %v2485 = vunpack.c.h.b16 %v754
      %v2486 = vunpack.c.l.b16 %v755
      %v2487 = vunpack.c.h.b16 %v755
      %v2488 = vunpack.c.l.b16 %v756
      %v2489 = vunpack.c.h.b16 %v756
      %v2490 = vunpack.c.l.b16 %v757
      %v2491 = vunpack.c.h.b16 %v757
      %v2492 = vunpack.c.l.b16 %v758
      %v2493 = vunpack.c.h.b16 %v758
      %v2494 = vunpack.c.l.b16 %v759
      %v2495 = vunpack.c.h.b16 %v759
      %v2496 = vunpack.c.l.b16 %v760
      %v2497 = vunpack.c.h.b16 %v760
      %v2498 = vunpack.c.l.b16 %v761
      %v2499 = vunpack.c.h.b16 %v761
      %v2500 = vunpack.c.l.b16 %v762
      %v2501 = vunpack.c.h.b16 %v762
      %v2502 = vunpack.c.l.b16 %v763
      %v2503 = vunpack.c.h.b16 %v763
      %v2504 = vunpack.c.l.b16 %v764
      %v2505 = vunpack.c.h.b16 %v764
      %v2506 = vunpack.c.l.b16 %v765
      %v2507 = vunpack.c.h.b16 %v765
      %v2508 = vunpack.c.l.b16 %v766
      %v2509 = vunpack.c.h.b16 %v766
      %v2510 = vunpack.c.l.b16 %v767
      %v2511 = vunpack.c.h.b16 %v767
      %v2512 = vunpack.c.l.b16 %v768
      %v2513 = vunpack.c.h.b16 %v768
      %v2514 = vunpack.c.l.b16 %v769
      %v2515 = vunpack.c.h.b16 %v769
      %v2516 = vunpack.c.l.b16 %v770
      %v2517 = vunpack.c.h.b16 %v770
      %v2518 = vunpack.c.l.b16 %v771
      %v2519 = vunpack.c.h.b16 %v771
      %v2520 = vunpack.c.l.b16 %v772
      %v2521 = vunpack.c.h.b16 %v772
      %v2522 = vunpack.c.l.b16 %v773
      %v2523 = vunpack.c.h.b16 %v773
      %v2524 = vunpack.c.l.b16 %v774
      %v2525 = vunpack.c.h.b16 %v774
      %v2526 = vunpack.c.l.b16 %v775
      %v2527 = vunpack.c.h.b16 %v775
      %v2528 = vunpack.c.l.b16 %v776
      %v2529 = vunpack.c.h.b16 %v776
      %v2530 = vunpack.c.l.b16 %v777
      %v2531 = vunpack.c.h.b16 %v777
      %v2532 = vunpack.c.l.b16 %v778
      %v2533 = vunpack.c.h.b16 %v778
      %v2534 = vunpack.c.l.b16 %v779
      %v2535 = vunpack.c.h.b16 %v779
      %v2536 = vunpack.c.l.b16 %v780
      %v2537 = vunpack.c.h.b16 %v780
      %v2538 = vunpack.c.l.b16 %v781
      %v2539 = vunpack.c.h.b16 %v781
      %v2540 = vunpack.c.l.b16 %v782
      %v2541 = vunpack.c.h.b16 %v782
      %v2542 = vunpack.c.l.b16 %v783
      %v2543 = vunpack.c.h.b16 %v783
      %v2544 = vunpack.c.l.b16 %v784
      %v2545 = vunpack.c.h.b16 %v784
      %v2546 = vunpack.c.l.b16 %v785
      %v2547 = vunpack.c.h.b16 %v785
      %v2548 = vunpack.c.l.b16 %v786
      %v2549 = vunpack.c.h.b16 %v786
      %v2550 = vunpack.c.l.b16 %v787
      %v2551 = vunpack.c.h.b16 %v787
      %v2552 = vunpack.c.l.b16 %v788
      %v2553 = vunpack.c.h.b16 %v788
      %v2554 = vunpack.c.l.b16 %v789
      %v2555 = vunpack.c.h.b16 %v789
      %v2556 = vunpack.c.l.b16 %v790
      %v2557 = vunpack.c.h.b16 %v790
      %v2558 = vunpack.c.l.b16 %v791
      %v2559 = vunpack.c.h.b16 %v791
      %v2560 = vunpack.c.l.b16 %v792
      %v2561 = vunpack.c.h.b16 %v792
      %v2562 = vunpack.c.l.b16 %v793
      %v2563 = vunpack.c.h.b16 %v793
      %v2564 = vunpack.c.l.b16 %v794
      %v2565 = vunpack.c.h.b16 %v794
      %v2566 = vunpack.c.l.b16 %v795
      %v2567 = vunpack.c.h.b16 %v795
      %v2568 = vunpack.c.l.b16 %v796
      %v2569 = vunpack.c.h.b16 %v796
      %v2570 = vunpack.c.l.b16 %v797
      %v2571 = vunpack.c.h.b16 %v797
      %v2572 = vunpack.c.l.b16 %v798
      %v2573 = vunpack.c.h.b16 %v798
      %v2574 = vunpack.c.l.b16 %v799
      %v2575 = vunpack.c.h.b16 %v799
      %v2576 = vunpack.c.l.b16 %v800
      %v2577 = vunpack.c.h.b16 %v800
      %v2578 = vunpack.c.l.b16 %v801
      %v2579 = vunpack.c.h.b16 %v801
      %v2580 = vunpack.c.l.b16 %v802
      %v2581 = vunpack.c.h.b16 %v802
      %v2582 = vunpack.c.l.b16 %v803
      %v2583 = vunpack.c.h.b16 %v803
      %v2584 = vunpack.c.l.b16 %v804
      %v2585 = vunpack.c.h.b16 %v804
      %v2586 = vunpack.c.l.b16 %v805
      %v2587 = vunpack.c.h.b16 %v805
      %v2588 = vunpack.c.l.b16 %v806
      %v2589 = vunpack.c.h.b16 %v806
      %v2590 = vunpack.c.l.b16 %v807
      %v2591 = vunpack.c.h.b16 %v807
      %v2592 = vunpack.c.l.b16 %v808
      %v2593 = vunpack.c.h.b16 %v808
      %v2594 = vunpack.c.l.b16 %v809
      %v2595 = vunpack.c.h.b16 %v809
      %v2596 = vunpack.c.l.b16 %v810
      %v2597 = vunpack.c.h.b16 %v810
      %v2598 = vunpack.c.l.b16 %v811
      %v2599 = vunpack.c.h.b16 %v811
      %v2600 = vunpack.c.l.b16 %v812
      %v2601 = vunpack.c.h.b16 %v812
      %v2602 = vunpack.c.l.b16 %v813
      %v2603 = vunpack.c.h.b16 %v813
      %v2604 = vunpack.c.l.b16 %v814
      %v2605 = vunpack.c.h.b16 %v814
      %v2606 = vunpack.c.l.b16 %v815
      %v2607 = vunpack.c.h.b16 %v815
      %v2608 = vunpack.c.l.b16 %v816
      %v2609 = vunpack.c.h.b16 %v816
      %v2610 = vunpack.c.l.b16 %v817
      %v2611 = vunpack.c.h.b16 %v817
      %v2612 = vunpack.c.l.b16 %v818
      %v2613 = vunpack.c.h.b16 %v818
      %v2614 = vunpack.c.l.b16 %v819
      %v2615 = vunpack.c.h.b16 %v819
      %v2616 = vunpack.c.l.b16 %v820
      %v2617 = vunpack.c.h.b16 %v820
      %v2618 = vunpack.c.l.b16 %v821
      %v2619 = vunpack.c.h.b16 %v821
      %v2620 = vunpack.c.l.b16 %v822
      %v2621 = vunpack.c.h.b16 %v822
      %v2622 = vunpack.c.l.b16 %v823
      %v2623 = vunpack.c.h.b16 %v823
      %v2624 = vunpack.c.l.b16 %v824
      %v2625 = vunpack.c.h.b16 %v824
      %v2626 = vunpack.c.l.b16 %v825
      %v2627 = vunpack.c.h.b16 %v825
      %v2628 = vunpack.c.l.b16 %v826
      %v2629 = vunpack.c.h.b16 %v826
      %v2630 = vunpack.c.l.b16 %v827
      %v2631 = vunpack.c.h.b16 %v827
      %v2632 = vunpack.c.l.b16 %v828
      %v2633 = vunpack.c.h.b16 %v828
      %v2634 = vunpack.c.l.b16 %v829
      %v2635 = vunpack.c.h.b16 %v829
      %v2636 = vunpack.c.l.b16 %v830
      %v2637 = vunpack.c.h.b16 %v830
      %v2638 = vunpack.c.l.b16 %v831
      %v2639 = vunpack.c.h.b16 %v831
      %v2640 = vunpack.c.l.b16 %v832
      %v2641 = vunpack.c.h.b16 %v832
      %v2642 = vunpack.c.l.b16 %v833
      %v2643 = vunpack.c.h.b16 %v833
      %v2644 = vunpack.c.l.b16 %v834
      %v2645 = vunpack.c.h.b16 %v834
      %v2646 = vunpack.c.l.b16 %v835
      %v2647 = vunpack.c.h.b16 %v835
      %v2648 = vunpack.c.l.b16 %v836
      %v2649 = vunpack.c.h.b16 %v836
      %v2650 = vpack.c.b16 %v1502, %v1498
      %v2651 = vpack.c.b16 %v1503, %v1499
      %v2652 = vpack.c.b16 %v1504, %v1500
      %v2653 = vpack.c.b16 %v1505, %v1501
      %v2654 = vpack.c.b16 %v1510, %v1506
      %v2655 = vpack.c.b16 %v1511, %v1507
      %v2656 = vpack.c.b16 %v1512, %v1508
      %v2657 = vpack.c.b16 %v1513, %v1509
      %v2658 = vpack.c.b16 %v1518, %v1514
      %v2659 = vpack.c.b16 %v1519, %v1515
      %v2660 = vpack.c.b16 %v1520, %v1516
      %v2661 = vpack.c.b16 %v1521, %v1517
      %v2662 = vpack.c.b16 %v1526, %v1522
      %v2663 = vpack.c.b16 %v1527, %v1523
      %v2664 = vpack.c.b16 %v1528, %v1524
      %v2665 = vpack.c.b16 %v1529, %v1525
      %v2666 = vpack.c.b16 %v1534, %v1530
      %v2667 = vpack.c.b16 %v1535, %v1531
      %v2668 = vpack.c.b16 %v1536, %v1532
      %v2669 = vpack.c.b16 %v1537, %v1533
      %v2670 = vpack.c.b16 %v1542, %v1538
      %v2671 = vpack.c.b16 %v1543, %v1539
      %v2672 = vpack.c.b16 %v1544, %v1540
      %v2673 = vpack.c.b16 %v1545, %v1541
      %v2674 = vpack.c.b16 %v1550, %v1546
      %v2675 = vpack.c.b16 %v1551, %v1547
      %v2676 = vpack.c.b16 %v1552, %v1548
      %v2677 = vpack.c.b16 %v1553, %v1549
      %v2678 = vpack.c.b16 %v1558, %v1554
      %v2679 = vpack.c.b16 %v1559, %v1555
      %v2680 = vpack.c.b16 %v1560, %v1556
      %v2681 = vpack.c.b16 %v1561, %v1557
      %v2682 = vpack.c.b16 %v1566, %v1562
      %v2683 = vpack.c.b16 %v1567, %v1563
      %v2684 = vpack.c.b16 %v1568, %v1564
      %v2685 = vpack.c.b16 %v1569, %v1565
      %v2686 = vpack.c.b16 %v1574, %v1570
      %v2687 = vpack.c.b16 %v1575, %v1571
      %v2688 = vpack.c.b16 %v1576, %v1572
      %v2689 = vpack.c.b16 %v1577, %v1573
      %v2690 = vpack.c.b16 %v1582, %v1578
      %v2691 = vpack.c.b16 %v1583, %v1579
      %v2692 = vpack.c.b16 %v1584, %v1580
      %v2693 = vpack.c.b16 %v1585, %v1581
      %v2694 = vpack.c.b16 %v1590, %v1586
      %v2695 = vpack.c.b16 %v1591, %v1587
      %v2696 = vpack.c.b16 %v1592, %v1588
      %v2697 = vpack.c.b16 %v1593, %v1589
      %v2698 = vpack.c.b16 %v1598, %v1594
      %v2699 = vpack.c.b16 %v1599, %v1595
      %v2700 = vpack.c.b16 %v1600, %v1596
      %v2701 = vpack.c.b16 %v1601, %v1597
      %v2702 = vpack.c.b16 %v1606, %v1602
      %v2703 = vpack.c.b16 %v1607, %v1603
      %v2704 = vpack.c.b16 %v1608, %v1604
      %v2705 = vpack.c.b16 %v1609, %v1605
      %v2706 = vpack.c.b16 %v1614, %v1610
      %v2707 = vpack.c.b16 %v1615, %v1611
      %v2708 = vpack.c.b16 %v1616, %v1612
      %v2709 = vpack.c.b16 %v1617, %v1613
      %v2710 = vpack.c.b16 %v1622, %v1618
      %v2711 = vpack.c.b16 %v1623, %v1619
      %v2712 = vpack.c.b16 %v1624, %v1620
      %v2713 = vpack.c.b16 %v1625, %v1621
      %v2714 = vpack.c.b16 %v1630, %v1626
      %v2715 = vpack.c.b16 %v1631, %v1627
      %v2716 = vpack.c.b16 %v1632, %v1628
      %v2717 = vpack.c.b16 %v1633, %v1629
      %v2718 = vpack.c.b16 %v1638, %v1634
      %v2719 = vpack.c.b16 %v1639, %v1635
      %v2720 = vpack.c.b16 %v1640, %v1636
      %v2721 = vpack.c.b16 %v1641, %v1637
      %v2722 = vpack.c.b16 %v1646, %v1642
      %v2723 = vpack.c.b16 %v1647, %v1643
      %v2724 = vpack.c.b16 %v1648, %v1644
      %v2725 = vpack.c.b16 %v1649, %v1645
      %v2726 = vpack.c.b16 %v1654, %v1650
      %v2727 = vpack.c.b16 %v1655, %v1651
      %v2728 = vpack.c.b16 %v1656, %v1652
      %v2729 = vpack.c.b16 %v1657, %v1653
      %v2730 = vpack.c.b16 %v1662, %v1658
      %v2731 = vpack.c.b16 %v1663, %v1659
      %v2732 = vpack.c.b16 %v1664, %v1660
      %v2733 = vpack.c.b16 %v1665, %v1661
      %v2734 = vpack.c.b16 %v1670, %v1666
      %v2735 = vpack.c.b16 %v1671, %v1667
      %v2736 = vpack.c.b16 %v1672, %v1668
      %v2737 = vpack.c.b16 %v1673, %v1669
      %v2738 = vpack.c.b16 %v1678, %v1674
      %v2739 = vpack.c.b16 %v1679, %v1675
      %v2740 = vpack.c.b16 %v1680, %v1676
      %v2741 = vpack.c.b16 %v1681, %v1677
      %v2742 = vpack.c.b16 %v1686, %v1682
      %v2743 = vpack.c.b16 %v1687, %v1683
      %v2744 = vpack.c.b16 %v1688, %v1684
      %v2745 = vpack.c.b16 %v1689, %v1685
      %v2746 = vpack.c.b16 %v1694, %v1690
      %v2747 = vpack.c.b16 %v1695, %v1691
      %v2748 = vpack.c.b16 %v1696, %v1692
      %v2749 = vpack.c.b16 %v1697, %v1693
      %v2750 = vpack.c.b16 %v1702, %v1698
      %v2751 = vpack.c.b16 %v1703, %v1699
      %v2752 = vpack.c.b16 %v1704, %v1700
      %v2753 = vpack.c.b16 %v1705, %v1701
      %v2754 = vpack.c.b16 %v1710, %v1706
      %v2755 = vpack.c.b16 %v1711, %v1707
      %v2756 = vpack.c.b16 %v1712, %v1708
      %v2757 = vpack.c.b16 %v1713, %v1709
      %v2758 = vpack.c.b16 %v1718, %v1714
      %v2759 = vpack.c.b16 %v1719, %v1715
      %v2760 = vpack.c.b16 %v1720, %v1716
      %v2761 = vpack.c.b16 %v1721, %v1717
      %v2762 = vpack.c.b16 %v1726, %v1722
      %v2763 = vpack.c.b16 %v1727, %v1723
      %v2764 = vpack.c.b16 %v1728, %v1724
      %v2765 = vpack.c.b16 %v1729, %v1725
      %v2766 = vpack.c.b16 %v1734, %v1730
      %v2767 = vpack.c.b16 %v1735, %v1731
      %v2768 = vpack.c.b16 %v1736, %v1732
      %v2769 = vpack.c.b16 %v1737, %v1733
      %v2770 = vpack.c.b16 %v1742, %v1738
      %v2771 = vpack.c.b16 %v1743, %v1739
      %v2772 = vpack.c.b16 %v1744, %v1740
      %v2773 = vpack.c.b16 %v1745, %v1741
      %v2774 = vpack.c.b16 %v1750, %v1746
      %v2775 = vpack.c.b16 %v1751, %v1747
      %v2776 = vpack.c.b16 %v1752, %v1748
      %v2777 = vpack.c.b16 %v1753, %v1749
      %v2778 = vpack.c.b16 %v1758, %v1754
      %v2779 = vpack.c.b16 %v1759, %v1755
      %v2780 = vpack.c.b16 %v1760, %v1756
      %v2781 = vpack.c.b16 %v1761, %v1757
      %v2782 = vpack.c.b16 %v1766, %v1762
      %v2783 = vpack.c.b16 %v1767, %v1763
      %v2784 = vpack.c.b16 %v1768, %v1764
      %v2785 = vpack.c.b16 %v1769, %v1765
      %v2786 = vpack.c.b16 %v1774, %v1770
      %v2787 = vpack.c.b16 %v1775, %v1771
      %v2788 = vpack.c.b16 %v1776, %v1772
      %v2789 = vpack.c.b16 %v1777, %v1773
      %v2790 = vpack.c.b16 %v1782, %v1778
      %v2791 = vpack.c.b16 %v1783, %v1779
      %v2792 = vpack.c.b16 %v1784, %v1780
      %v2793 = vpack.c.b16 %v1785, %v1781
      %v2794 = vpack.c.b16 %v1790, %v1786
      %v2795 = vpack.c.b16 %v1791, %v1787
      %v2796 = vpack.c.b16 %v1792, %v1788
      %v2797 = vpack.c.b16 %v1793, %v1789
      %v2798 = vpack.c.b16 %v1798, %v1794
      %v2799 = vpack.c.b16 %v1799, %v1795
      %v2800 = vpack.c.b16 %v1800, %v1796
      %v2801 = vpack.c.b16 %v1801, %v1797
      %v2802 = vpack.c.b16 %v1806, %v1802
      %v2803 = vpack.c.b16 %v1807, %v1803
      %v2804 = vpack.c.b16 %v1808, %v1804
      %v2805 = vpack.c.b16 %v1809, %v1805
      %v2806 = vpack.c.b16 %v1814, %v1810
      %v2807 = vpack.c.b16 %v1815, %v1811
      %v2808 = vpack.c.b16 %v1816, %v1812
      %v2809 = vpack.c.b16 %v1817, %v1813
      %v2810 = vpack.c.b16 %v1822, %v1818
      %v2811 = vpack.c.b16 %v1823, %v1819
      %v2812 = vpack.c.b16 %v1824, %v1820
      %v2813 = vpack.c.b16 %v1825, %v1821
      %v2814 = vpack.c.b16 %v1830, %v1826
      %v2815 = vpack.c.b16 %v1831, %v1827
      %v2816 = vpack.c.b16 %v1832, %v1828
      %v2817 = vpack.c.b16 %v1833, %v1829
      %v2818 = vpack.c.b16 %v1838, %v1834
      %v2819 = vpack.c.b16 %v1839, %v1835
      %v2820 = vpack.c.b16 %v1840, %v1836
      %v2821 = vpack.c.b16 %v1841, %v1837
      %v2822 = vpack.c.b16 %v1846, %v1842
      %v2823 = vpack.c.b16 %v1847, %v1843
      %v2824 = vpack.c.b16 %v1848, %v1844
      %v2825 = vpack.c.b16 %v1849, %v1845
      %v2826 = vpack.c.b16 %v1854, %v1850
      %v2827 = vpack.c.b16 %v1855, %v1851
      %v2828 = vpack.c.b16 %v1856, %v1852
      %v2829 = vpack.c.b16 %v1857, %v1853
      %v2830 = vpack.c.b16 %v1862, %v1858
      %v2831 = vpack.c.b16 %v1863, %v1859
      %v2832 = vpack.c.b16 %v1864, %v1860
      %v2833 = vpack.c.b16 %v1865, %v1861
      %v2834 = vpack.c.b16 %v1870, %v1866
      %v2835 = vpack.c.b16 %v1871, %v1867
      %v2836 = vpack.c.b16 %v1872, %v1868
      %v2837 = vpack.c.b16 %v1873, %v1869
      %v2838 = vpack.c.b16 %v1878, %v1874
      %v2839 = vpack.c.b16 %v1879, %v1875
      %v2840 = vpack.c.b16 %v1880, %v1876
      %v2841 = vpack.c.b16 %v1881, %v1877
      %v2842 = vpack.c.b16 %v1886, %v1882
      %v2843 = vpack.c.b16 %v1887, %v1883
      %v2844 = vpack.c.b16 %v1888, %v1884
      %v2845 = vpack.c.b16 %v1889, %v1885
      %v2846 = vpack.c.b16 %v1894, %v1890
      %v2847 = vpack.c.b16 %v1895, %v1891
      %v2848 = vpack.c.b16 %v1896, %v1892
      %v2849 = vpack.c.b16 %v1897, %v1893
      %v2850 = vpack.c.b16 %v1902, %v1898
      %v2851 = vpack.c.b16 %v1903, %v1899
      %v2852 = vpack.c.b16 %v1904, %v1900
      %v2853 = vpack.c.b16 %v1905, %v1901
      %v2854 = vpack.c.b16 %v1910, %v1906
      %v2855 = vpack.c.b16 %v1911, %v1907
      %v2856 = vpack.c.b16 %v1912, %v1908
      %v2857 = vpack.c.b16 %v1913, %v1909
      %v2858 = vpack.c.b16 %v1918, %v1914
      %v2859 = vpack.c.b16 %v1919, %v1915
      %v2860 = vpack.c.b16 %v1920, %v1916
      %v2861 = vpack.c.b16 %v1921, %v1917
      %v2862 = vpack.c.b16 %v1926, %v1922
      %v2863 = vpack.c.b16 %v1927, %v1923
      %v2864 = vpack.c.b16 %v1928, %v1924
      %v2865 = vpack.c.b16 %v1929, %v1925
      %v2866 = vpack.c.b16 %v1934, %v1930
      %v2867 = vpack.c.b16 %v1935, %v1931
      %v2868 = vpack.c.b16 %v1936, %v1932
      %v2869 = vpack.c.b16 %v1937, %v1933
      %v2870 = vpack.c.b16 %v1942, %v1938
      %v2871 = vpack.c.b16 %v1943, %v1939
      %v2872 = vpack.c.b16 %v1944, %v1940
      %v2873 = vpack.c.b16 %v1945, %v1941
      %v2874 = vpack.c.b16 %v1950, %v1946
      %v2875 = vpack.c.b16 %v1951, %v1947
      %v2876 = vpack.c.b16 %v1952, %v1948
      %v2877 = vpack.c.b16 %v1953, %v1949
      %v2878 = vpack.c.b16 %v1958, %v1954
      %v2879 = vpack.c.b16 %v1959, %v1955
      %v2880 = vpack.c.b16 %v1960, %v1956
      %v2881 = vpack.c.b16 %v1961, %v1957
      %v2882 = vpack.c.b16 %v1966, %v1962
      %v2883 = vpack.c.b16 %v1967, %v1963
      %v2884 = vpack.c.b16 %v1968, %v1964
      %v2885 = vpack.c.b16 %v1969, %v1965
      %v2886 = vpack.c.b16 %v1974, %v1970
      %v2887 = vpack.c.b16 %v1975, %v1971
      %v2888 = vpack.c.b16 %v1976, %v1972
      %v2889 = vpack.c.b16 %v1977, %v1973
      %v2890 = vpack.c.b16 %v1982, %v1978
      %v2891 = vpack.c.b16 %v1983, %v1979
      %v2892 = vpack.c.b16 %v1984, %v1980
      %v2893 = vpack.c.b16 %v1985, %v1981
      %v2894 = vpack.c.b16 %v1990, %v1986
      %v2895 = vpack.c.b16 %v1991, %v1987
      %v2896 = vpack.c.b16 %v1992, %v1988
      %v2897 = vpack.c.b16 %v1993, %v1989
      %v2898 = vpack.c.b16 %v1998, %v1994
      %v2899 = vpack.c.b16 %v1999, %v1995
      %v2900 = vpack.c.b16 %v2000, %v1996
      %v2901 = vpack.c.b16 %v2001, %v1997
      %v2902 = vpack.c.b16 %v2006, %v2002
      %v2903 = vpack.c.b16 %v2007, %v2003
      %v2904 = vpack.c.b16 %v2008, %v2004
      %v2905 = vpack.c.b16 %v2009, %v2005
      %v2906 = vpack.c.b16 %v2014, %v2010
      %v2907 = vpack.c.b16 %v2015, %v2011
      %v2908 = vpack.c.b16 %v2016, %v2012
      %v2909 = vpack.c.b16 %v2017, %v2013
      %v2910 = vpack.c.b16 %v2022, %v2018
      %v2911 = vpack.c.b16 %v2023, %v2019
      %v2912 = vpack.c.b16 %v2024, %v2020
      %v2913 = vpack.c.b16 %v2025, %v2021
      %v2914 = vpack.c.b16 %v2030, %v2026
      %v2915 = vpack.c.b16 %v2031, %v2027
      %v2916 = vpack.c.b16 %v2032, %v2028
      %v2917 = vpack.c.b16 %v2033, %v2029
      %v2918 = vpack.c.b16 %v2038, %v2034
      %v2919 = vpack.c.b16 %v2039, %v2035
      %v2920 = vpack.c.b16 %v2040, %v2036
      %v2921 = vpack.c.b16 %v2041, %v2037
      %v2922 = vpack.c.b16 %v2046, %v2042
      %v2923 = vpack.c.b16 %v2047, %v2043
      %v2924 = vpack.c.b16 %v2048, %v2044
      %v2925 = vpack.c.b16 %v2049, %v2045
      %v2926 = vpack.c.b16 %v2054, %v2050
      %v2927 = vpack.c.b16 %v2055, %v2051
      %v2928 = vpack.c.b16 %v2056, %v2052
      %v2929 = vpack.c.b16 %v2057, %v2053
      %v2930 = vpack.c.b16 %v2062, %v2058
      %v2931 = vpack.c.b16 %v2063, %v2059
      %v2932 = vpack.c.b16 %v2064, %v2060
      %v2933 = vpack.c.b16 %v2065, %v2061
      %v2934 = vpack.c.b16 %v2070, %v2066
      %v2935 = vpack.c.b16 %v2071, %v2067
      %v2936 = vpack.c.b16 %v2072, %v2068
      %v2937 = vpack.c.b16 %v2073, %v2069
      %v2938 = vpack.c.b16 %v2078, %v2074
      %v2939 = vpack.c.b16 %v2079, %v2075
      %v2940 = vpack.c.b16 %v2080, %v2076
      %v2941 = vpack.c.b16 %v2081, %v2077
      %v2942 = vpack.c.b16 %v2086, %v2082
      %v2943 = vpack.c.b16 %v2087, %v2083
      %v2944 = vpack.c.b16 %v2088, %v2084
      %v2945 = vpack.c.b16 %v2089, %v2085
      %v2946 = vpack.c.b16 %v2094, %v2090
      %v2947 = vpack.c.b16 %v2095, %v2091
      %v2948 = vpack.c.b16 %v2096, %v2092
      %v2949 = vpack.c.b16 %v2097, %v2093
      %v2950 = vpack.c.b16 %v2102, %v2098
      %v2951 = vpack.c.b16 %v2103, %v2099
      %v2952 = vpack.c.b16 %v2104, %v2100
      %v2953 = vpack.c.b16 %v2105, %v2101
      %v2954 = vpack.c.b16 %v2110, %v2106
      %v2955 = vpack.c.b16 %v2111, %v2107
      %v2956 = vpack.c.b16 %v2112, %v2108
      %v2957 = vpack.c.b16 %v2113, %v2109
      %v2958 = vpack.c.b16 %v2118, %v2114
      %v2959 = vpack.c.b16 %v2119, %v2115
      %v2960 = vpack.c.b16 %v2120, %v2116
      %v2961 = vpack.c.b16 %v2121, %v2117
      %v2962 = vpack.c.b16 %v2126, %v2122
      %v2963 = vpack.c.b16 %v2127, %v2123
      %v2964 = vpack.c.b16 %v2128, %v2124
      %v2965 = vpack.c.b16 %v2129, %v2125
      %v2966 = vpack.c.b16 %v2134, %v2130
      %v2967 = vpack.c.b16 %v2135, %v2131
      %v2968 = vpack.c.b16 %v2136, %v2132
      %v2969 = vpack.c.b16 %v2137, %v2133
      %v2970 = vpack.c.b16 %v2142, %v2138
      %v2971 = vpack.c.b16 %v2143, %v2139
      %v2972 = vpack.c.b16 %v2144, %v2140
      %v2973 = vpack.c.b16 %v2145, %v2141
      %v2974 = vpack.c.b16 %v2150, %v2146
      %v2975 = vpack.c.b16 %v2151, %v2147
      %v2976 = vpack.c.b16 %v2152, %v2148
      %v2977 = vpack.c.b16 %v2153, %v2149
      %v2978 = vpack.c.b16 %v2158, %v2154
      %v2979 = vpack.c.b16 %v2159, %v2155
      %v2980 = vpack.c.b16 %v2160, %v2156
      %v2981 = vpack.c.b16 %v2161, %v2157
      %v2982 = vpack.c.b16 %v2166, %v2162
      %v2983 = vpack.c.b16 %v2167, %v2163
      %v2984 = vpack.c.b16 %v2168, %v2164
      %v2985 = vpack.c.b16 %v2169, %v2165
      %v2986 = vpack.c.b16 %v2174, %v2170
      %v2987 = vpack.c.b16 %v2175, %v2171
      %v2988 = vpack.c.b16 %v2176, %v2172
      %v2989 = vpack.c.b16 %v2177, %v2173
      %v2990 = vpack.c.b16 %v2182, %v2178
      %v2991 = vpack.c.b16 %v2183, %v2179
      %v2992 = vpack.c.b16 %v2184, %v2180
      %v2993 = vpack.c.b16 %v2185, %v2181
      %v2994 = vpack.c.b16 %v2190, %v2186
      %v2995 = vpack.c.b16 %v2191, %v2187
      %v2996 = vpack.c.b16 %v2192, %v2188
      %v2997 = vpack.c.b16 %v2193, %v2189
      %v2998 = vpack.c.b16 %v2198, %v2194
      %v2999 = vpack.c.b16 %v2199, %v2195
      %v3000 = vpack.c.b16 %v2200, %v2196
      %v3001 = vpack.c.b16 %v2201, %v2197
      %v3002 = vpack.c.b16 %v2206, %v2202
      %v3003 = vpack.c.b16 %v2207, %v2203
      %v3004 = vpack.c.b16 %v2208, %v2204
      %v3005 = vpack.c.b16 %v2209, %v2205
      %v3006 = vpack.c.b16 %v2214, %v2210
      %v3007 = vpack.c.b16 %v2215, %v2211
      %v3008 = vpack.c.b16 %v2216, %v2212
      %v3009 = vpack.c.b16 %v2217, %v2213
      %v3010 = vpack.c.b16 %v2222, %v2218
      %v3011 = vpack.c.b16 %v2223, %v2219
      %v3012 = vpack.c.b16 %v2224, %v2220
      %v3013 = vpack.c.b16 %v2225, %v2221
      %v3014 = vpack.c.b16 %v2230, %v2226
      %v3015 = vpack.c.b16 %v2231, %v2227
      %v3016 = vpack.c.b16 %v2232, %v2228
      %v3017 = vpack.c.b16 %v2233, %v2229
      %v3018 = vpack.c.b16 %v2238, %v2234
      %v3019 = vpack.c.b16 %v2239, %v2235
      %v3020 = vpack.c.b16 %v2240, %v2236
      %v3021 = vpack.c.b16 %v2241, %v2237
      %v3022 = vpack.c.b16 %v2246, %v2242
      %v3023 = vpack.c.b16 %v2247, %v2243
      %v3024 = vpack.c.b16 %v2248, %v2244
      %v3025 = vpack.c.b16 %v2249, %v2245
      %v3026 = vpack.c.b16 %v2254, %v2250
      %v3027 = vpack.c.b16 %v2255, %v2251
      %v3028 = vpack.c.b16 %v2256, %v2252
      %v3029 = vpack.c.b16 %v2257, %v2253
      %v3030 = vpack.c.b16 %v2262, %v2258
      %v3031 = vpack.c.b16 %v2263, %v2259
      %v3032 = vpack.c.b16 %v2264, %v2260
      %v3033 = vpack.c.b16 %v2265, %v2261
      %v3034 = vpack.c.b16 %v2270, %v2266
      %v3035 = vpack.c.b16 %v2271, %v2267
      %v3036 = vpack.c.b16 %v2272, %v2268
      %v3037 = vpack.c.b16 %v2273, %v2269
      %v3038 = vpack.c.b16 %v2278, %v2274
      %v3039 = vpack.c.b16 %v2279, %v2275
      %v3040 = vpack.c.b16 %v2280, %v2276
      %v3041 = vpack.c.b16 %v2281, %v2277
      %v3042 = vpack.c.b16 %v2286, %v2282
      %v3043 = vpack.c.b16 %v2287, %v2283
      %v3044 = vpack.c.b16 %v2288, %v2284
      %v3045 = vpack.c.b16 %v2289, %v2285
      %v3046 = vpack.c.b16 %v2294, %v2290
      %v3047 = vpack.c.b16 %v2295, %v2291
      %v3048 = vpack.c.b16 %v2296, %v2292
      %v3049 = vpack.c.b16 %v2297, %v2293
      %v3050 = vpack.c.b16 %v2302, %v2298
      %v3051 = vpack.c.b16 %v2303, %v2299
      %v3052 = vpack.c.b16 %v2304, %v2300
      %v3053 = vpack.c.b16 %v2305, %v2301
      %v3054 = vpack.c.b16 %v2310, %v2306
      %v3055 = vpack.c.b16 %v2311, %v2307
      %v3056 = vpack.c.b16 %v2312, %v2308
      %v3057 = vpack.c.b16 %v2313, %v2309
      %v3058 = vpack.c.b16 %v2318, %v2314
      %v3059 = vpack.c.b16 %v2319, %v2315
      %v3060 = vpack.c.b16 %v2320, %v2316
      %v3061 = vpack.c.b16 %v2321, %v2317
      %v3062 = vpack.c.b16 %v2326, %v2322
      %v3063 = vpack.c.b16 %v2327, %v2323
      %v3064 = vpack.c.b16 %v2328, %v2324
      %v3065 = vpack.c.b16 %v2329, %v2325
      %v3066 = vpack.c.b16 %v2334, %v2330
      %v3067 = vpack.c.b16 %v2335, %v2331
      %v3068 = vpack.c.b16 %v2336, %v2332
      %v3069 = vpack.c.b16 %v2337, %v2333
      %v3070 = vpack.c.b16 %v2342, %v2338
      %v3071 = vpack.c.b16 %v2343, %v2339
      %v3072 = vpack.c.b16 %v2344, %v2340
      %v3073 = vpack.c.b16 %v2345, %v2341
      %v3074 = vpack.c.b16 %v2350, %v2346
      %v3075 = vpack.c.b16 %v2351, %v2347
      %v3076 = vpack.c.b16 %v2352, %v2348
      %v3077 = vpack.c.b16 %v2353, %v2349
      %v3078 = vpack.c.b16 %v2358, %v2354
      %v3079 = vpack.c.b16 %v2359, %v2355
      %v3080 = vpack.c.b16 %v2360, %v2356
      %v3081 = vpack.c.b16 %v2361, %v2357
      %v3082 = vpack.c.b16 %v2366, %v2362
      %v3083 = vpack.c.b16 %v2367, %v2363
      %v3084 = vpack.c.b16 %v2368, %v2364
      %v3085 = vpack.c.b16 %v2369, %v2365
      %v3086 = vpack.c.b16 %v2374, %v2370
      %v3087 = vpack.c.b16 %v2375, %v2371
      %v3088 = vpack.c.b16 %v2376, %v2372
      %v3089 = vpack.c.b16 %v2377, %v2373
      %v3090 = vpack.c.b16 %v2382, %v2378
      %v3091 = vpack.c.b16 %v2383, %v2379
      %v3092 = vpack.c.b16 %v2384, %v2380
      %v3093 = vpack.c.b16 %v2385, %v2381
      %v3094 = vpack.c.b16 %v2390, %v2386
      %v3095 = vpack.c.b16 %v2391, %v2387
      %v3096 = vpack.c.b16 %v2392, %v2388
      %v3097 = vpack.c.b16 %v2393, %v2389
      %v3098 = vpack.c.b16 %v2398, %v2394
      %v3099 = vpack.c.b16 %v2399, %v2395
      %v3100 = vpack.c.b16 %v2400, %v2396
      %v3101 = vpack.c.b16 %v2401, %v2397
      %v3102 = vpack.c.b16 %v2406, %v2402
      %v3103 = vpack.c.b16 %v2407, %v2403
      %v3104 = vpack.c.b16 %v2408, %v2404
      %v3105 = vpack.c.b16 %v2409, %v2405
      %v3106 = vpack.c.b16 %v2414, %v2410
      %v3107 = vpack.c.b16 %v2415, %v2411
      %v3108 = vpack.c.b16 %v2416, %v2412
      %v3109 = vpack.c.b16 %v2417, %v2413
      %v3110 = vpack.c.b16 %v2422, %v2418
      %v3111 = vpack.c.b16 %v2423, %v2419
      %v3112 = vpack.c.b16 %v2424, %v2420
      %v3113 = vpack.c.b16 %v2425, %v2421
      %v3114 = vpack.c.b16 %v2430, %v2426
      %v3115 = vpack.c.b16 %v2431, %v2427
      %v3116 = vpack.c.b16 %v2432, %v2428
      %v3117 = vpack.c.b16 %v2433, %v2429
      %v3118 = vpack.c.b16 %v2438, %v2434
      %v3119 = vpack.c.b16 %v2439, %v2435
      %v3120 = vpack.c.b16 %v2440, %v2436
      %v3121 = vpack.c.b16 %v2441, %v2437
      %v3122 = vpack.c.b16 %v2446, %v2442
      %v3123 = vpack.c.b16 %v2447, %v2443
      %v3124 = vpack.c.b16 %v2448, %v2444
      %v3125 = vpack.c.b16 %v2449, %v2445
      %v3126 = vpack.c.b16 %v2454, %v2450
      %v3127 = vpack.c.b16 %v2455, %v2451
      %v3128 = vpack.c.b16 %v2456, %v2452
      %v3129 = vpack.c.b16 %v2457, %v2453
      %v3130 = vpack.c.b16 %v2462, %v2458
      %v3131 = vpack.c.b16 %v2463, %v2459
      %v3132 = vpack.c.b16 %v2464, %v2460
      %v3133 = vpack.c.b16 %v2465, %v2461
      %v3134 = vpack.c.b16 %v2470, %v2466
      %v3135 = vpack.c.b16 %v2471, %v2467
      %v3136 = vpack.c.b16 %v2472, %v2468
      %v3137 = vpack.c.b16 %v2473, %v2469
      %v3138 = vpack.c.b16 %v2478, %v2474
      %v3139 = vpack.c.b16 %v2479, %v2475
      %v3140 = vpack.c.b16 %v2480, %v2476
      %v3141 = vpack.c.b16 %v2481, %v2477
      %v3142 = vpack.c.b16 %v2486, %v2482
      %v3143 = vpack.c.b16 %v2487, %v2483
      %v3144 = vpack.c.b16 %v2488, %v2484
      %v3145 = vpack.c.b16 %v2489, %v2485
      %v3146 = vpack.c.b16 %v2494, %v2490
      %v3147 = vpack.c.b16 %v2495, %v2491
      %v3148 = vpack.c.b16 %v2496, %v2492
      %v3149 = vpack.c.b16 %v2497, %v2493
      %v3150 = vpack.c.b16 %v2502, %v2498
      %v3151 = vpack.c.b16 %v2503, %v2499
      %v3152 = vpack.c.b16 %v2504, %v2500
      %v3153 = vpack.c.b16 %v2505, %v2501
      %v3154 = vpack.c.b16 %v2510, %v2506
      %v3155 = vpack.c.b16 %v2511, %v2507
      %v3156 = vpack.c.b16 %v2512, %v2508
      %v3157 = vpack.c.b16 %v2513, %v2509
      %v3158 = vpack.c.b16 %v2518, %v2514
      %v3159 = vpack.c.b16 %v2519, %v2515
      %v3160 = vpack.c.b16 %v2520, %v2516
      %v3161 = vpack.c.b16 %v2521, %v2517
      %v3162 = vpack.c.b16 %v2526, %v2522
      %v3163 = vpack.c.b16 %v2527, %v2523
      %v3164 = vpack.c.b16 %v2528, %v2524
      %v3165 = vpack.c.b16 %v2529, %v2525
      %v3166 = vpack.c.b16 %v2534, %v2530
      %v3167 = vpack.c.b16 %v2535, %v2531
      %v3168 = vpack.c.b16 %v2536, %v2532
      %v3169 = vpack.c.b16 %v2537, %v2533
      %v3170 = vpack.c.b16 %v2542, %v2538
      %v3171 = vpack.c.b16 %v2543, %v2539
      %v3172 = vpack.c.b16 %v2544, %v2540
      %v3173 = vpack.c.b16 %v2545, %v2541
      %v3174 = vpack.c.b16 %v2550, %v2546
      %v3175 = vpack.c.b16 %v2551, %v2547
      %v3176 = vpack.c.b16 %v2552, %v2548
      %v3177 = vpack.c.b16 %v2553, %v2549
      %v3178 = vpack.c.b16 %v2558, %v2554
      %v3179 = vpack.c.b16 %v2559, %v2555
      %v3180 = vpack.c.b16 %v2560, %v2556
      %v3181 = vpack.c.b16 %v2561, %v2557
      %v3182 = vpack.c.b16 %v2566, %v2562
      %v3183 = vpack.c.b16 %v2567, %v2563
      %v3184 = vpack.c.b16 %v2568, %v2564
      %v3185 = vpack.c.b16 %v2569, %v2565
      %v3186 = vpack.c.b16 %v2574, %v2570
      %v3187 = vpack.c.b16 %v2575, %v2571
      %v3188 = vpack.c.b16 %v2576, %v2572
      %v3189 = vpack.c.b16 %v2577, %v2573
      %v3190 = vpack.c.b16 %v2582, %v2578
      %v3191 = vpack.c.b16 %v2583, %v2579
      %v3192 = vpack.c.b16 %v2584, %v2580
      %v3193 = vpack.c.b16 %v2585, %v2581
      %v3194 = vpack.c.b16 %v2590, %v2586
      %v3195 = vpack.c.b16 %v2591, %v2587
      %v3196 = vpack.c.b16 %v2592, %v2588
      %v3197 = vpack.c.b16 %v2593, %v2589
      %v3198 = vpack.c.b16 %v2598, %v2594
      %v3199 = vpack.c.b16 %v2599, %v2595
      %v3200 = vpack.c.b16 %v2600, %v2596
      %v3201 = vpack.c.b16 %v2601, %v2597
      %v3202 = vpack.c.b16 %v2606, %v2602
      %v3203 = vpack.c.b16 %v2607, %v2603
      %v3204 = vpack.c.b16 %v2608, %v2604
      %v3205 = vpack.c.b16 %v2609, %v2605
      %v3206 = vpack.c.b16 %v2614, %v2610
      %v3207 = vpack.c.b16 %v2615, %v2611
      %v3208 = vpack.c.b16 %v2616, %v2612
      %v3209 = vpack.c.b16 %v2617, %v2613
      %v3210 = vpack.c.b16 %v2622, %v2618
      %v3211 = vpack.c.b16 %v2623, %v2619
      %v3212 = vpack.c.b16 %v2624, %v2620
      %v3213 = vpack.c.b16 %v2625, %v2621
      %v3214 = vpack.c.b16 %v2630, %v2626
      %v3215 = vpack.c.b16 %v2631, %v2627
      %v3216 = vpack.c.b16 %v2632, %v2628
      %v3217 = vpack.c.b16 %v2633, %v2629
      %v3218 = vpack.c.b16 %v2638, %v2634
      %v3219 = vpack.c.b16 %v2639, %v2635
      %v3220 = vpack.c.b16 %v2640, %v2636
      %v3221 = vpack.c.b16 %v2641, %v2637
      %v3222 = vpack.c.b16 %v2646, %v2642
      %v3223 = vpack.c.b16 %v2647, %v2643
      %v3224 = vpack.c.b16 %v2648, %v2644
      %v3225 = vpack.c.b16 %v2649, %v2645
      %3802 = vmatprep.subr.bf16.mxu0 %v2679
      %3803 = vmatpush1.bf16.msra.mxu0 %v2678
      %3804 = vmatprep.subr.bf16.mxu0 %v2675
      %3805 = vmatpush1.bf16.msra.mxu0 %v2674
      %3806 = vmatprep.subr.bf16.mxu0 %v2671
      %3807 = vmatpush1.bf16.msra.mxu0 %v2670
      %3808 = vmatprep.subr.bf16.mxu0 %v2667
      %3809 = vmatpush1.bf16.msra.mxu0 %v2666
      %3810 = vmatprep.subr.bf16.mxu0 %v2663
      %3811 = vmatpush1.bf16.msra.mxu0 %v2662
      %3812 = vmatprep.subr.bf16.mxu0 %v2659
      %3813 = vmatpush1.bf16.msra.mxu0 %v2658
      %3814 = vmatprep.subr.bf16.mxu0 %v2655
      %3815 = vmatpush1.bf16.msra.mxu0 %v2654
      %3816 = vmatprep.subr.bf16.mxu0 %v2651
      %3817 = vmatpush1.bf16.msra.mxu0 %v2650
      %3818 = vmatprep.subr.bf16.mxu0 %v2711
      %3819 = vmatpush2.bf16.msra.mxu0 %v2710
      %3820 = vmatprep.subr.bf16.mxu0 %v2707
      %3821 = vmatpush2.bf16.msra.mxu0 %v2706
      %3822 = vmatprep.subr.bf16.mxu0 %v2703
      %3823 = vmatpush2.bf16.msra.mxu0 %v2702
      %3824 = vmatprep.subr.bf16.mxu0 %v2699
      %3825 = vmatpush2.bf16.msra.mxu0 %v2698
      %3826 = vmatprep.subr.bf16.mxu0 %v2695
      %3827 = vmatpush2.bf16.msra.mxu0 %v2694
      %3828 = vmatprep.subr.bf16.mxu0 %v2691
      %3829 = vmatpush2.bf16.msra.mxu0 %v2690
      %3830 = vmatprep.subr.bf16.mxu0 %v2687
      %3831 = vmatpush2.bf16.msra.mxu0 %v2686
      %3832 = vmatprep.subr.bf16.mxu0 %v2683
      %3833 = vmatpush2.bf16.msra.mxu0 %v2682
      %3834 = vmatprep.mubr.bf16.mxu0 %v887
      %3835 = vmatmul.mubr.bf16.gmra.mxu0 %v886
      %v3836 = vpop.f32.mrf.mxu0
      %v3837 = vadd.f32 %v842, %v3836
      %v3838 = vpop.f32.mrf.mxu0
      %v3839 = vadd.f32 %v846, %v3838
      %v3840 = vpop.f32.mrf.mxu0
      %v3841 = vpop.f32.mrf.mxu0
      %3842 = vdwg.mxu0
      %3843 = vmatprep.subr.bf16.mxu0 %v2743
      %3844 = vmatpush1.bf16.msra.mxu0 %v2742
      %3845 = vmatprep.subr.bf16.mxu0 %v2739
      %3846 = vmatpush1.bf16.msra.mxu0 %v2738
      %3847 = vmatprep.subr.bf16.mxu0 %v2735
      %3848 = vmatpush1.bf16.msra.mxu0 %v2734
      %3849 = vmatprep.subr.bf16.mxu0 %v2731
      %3850 = vmatpush1.bf16.msra.mxu0 %v2730
      %3851 = vmatprep.subr.bf16.mxu0 %v2727
      %3852 = vmatpush1.bf16.msra.mxu0 %v2726
      %3853 = vmatprep.subr.bf16.mxu0 %v2723
      %3854 = vmatpush1.bf16.msra.mxu0 %v2722
      %3855 = vmatprep.subr.bf16.mxu0 %v2719
      %3856 = vmatpush1.bf16.msra.mxu0 %v2718
      %3857 = vmatprep.subr.bf16.mxu0 %v2715
      %3858 = vmatpush1.bf16.msra.mxu0 %v2714
      %3859 = vmatprep.subr.bf16.mxu0 %v2775
      %3860 = vmatpush2.bf16.msra.mxu0 %v2774
      %3861 = vmatprep.subr.bf16.mxu0 %v2771
      %3862 = vmatpush2.bf16.msra.mxu0 %v2770
      %3863 = vmatprep.subr.bf16.mxu0 %v2767
      %3864 = vmatpush2.bf16.msra.mxu0 %v2766
      %3865 = vmatprep.subr.bf16.mxu0 %v2763
      %3866 = vmatpush2.bf16.msra.mxu0 %v2762
      %3867 = vmatprep.subr.bf16.mxu0 %v2759
      %3868 = vmatpush2.bf16.msra.mxu0 %v2758
      %3869 = vmatprep.subr.bf16.mxu0 %v2755
      %3870 = vmatpush2.bf16.msra.mxu0 %v2754
      %3871 = vmatprep.subr.bf16.mxu0 %v2751
      %3872 = vmatpush2.bf16.msra.mxu0 %v2750
      %3873 = vmatprep.subr.bf16.mxu0 %v2747
      %3874 = vmatpush2.bf16.msra.mxu0 %v2746
      %3875 = vmatprep.mubr.bf16.mxu0 %v889
      %3876 = vmatmul.mubr.bf16.gmra.mxu0 %v888
      %v3877 = vpop.f32.mrf.mxu0
      %v3878 = vadd.f32 %v3837, %v3877
      %v3879 = vpop.f32.mrf.mxu0
      %v3880 = vadd.f32 %v3839, %v3879
      %v3881 = vpop.f32.mrf.mxu0
      %v3882 = vpop.f32.mrf.mxu0
      %3883 = vdwg.mxu0
      %3884 = vmatprep.subr.bf16.mxu0 %v2807
      %3885 = vmatpush1.bf16.msra.mxu0 %v2806
      %3886 = vmatprep.subr.bf16.mxu0 %v2803
      %3887 = vmatpush1.bf16.msra.mxu0 %v2802
      %3888 = vmatprep.subr.bf16.mxu0 %v2799
      %3889 = vmatpush1.bf16.msra.mxu0 %v2798
      %3890 = vmatprep.subr.bf16.mxu0 %v2795
      %3891 = vmatpush1.bf16.msra.mxu0 %v2794
      %3892 = vmatprep.subr.bf16.mxu0 %v2791
      %3893 = vmatpush1.bf16.msra.mxu0 %v2790
      %3894 = vmatprep.subr.bf16.mxu0 %v2787
      %3895 = vmatpush1.bf16.msra.mxu0 %v2786
      %3896 = vmatprep.subr.bf16.mxu0 %v2783
      %3897 = vmatpush1.bf16.msra.mxu0 %v2782
      %3898 = vmatprep.subr.bf16.mxu0 %v2779
      %3899 = vmatpush1.bf16.msra.mxu0 %v2778
      %3900 = vmatprep.subr.bf16.mxu0 %v2839
      %3901 = vmatpush2.bf16.msra.mxu0 %v2838
      %3902 = vmatprep.subr.bf16.mxu0 %v2835
      %3903 = vmatpush2.bf16.msra.mxu0 %v2834
      %3904 = vmatprep.subr.bf16.mxu0 %v2831
      %3905 = vmatpush2.bf16.msra.mxu0 %v2830
      %3906 = vmatprep.subr.bf16.mxu0 %v2827
      %3907 = vmatpush2.bf16.msra.mxu0 %v2826
      %3908 = vmatprep.subr.bf16.mxu0 %v2823
      %3909 = vmatpush2.bf16.msra.mxu0 %v2822
      %3910 = vmatprep.subr.bf16.mxu0 %v2819
      %3911 = vmatpush2.bf16.msra.mxu0 %v2818
      %3912 = vmatprep.subr.bf16.mxu0 %v2815
      %3913 = vmatpush2.bf16.msra.mxu0 %v2814
      %3914 = vmatprep.subr.bf16.mxu0 %v2811
      %3915 = vmatpush2.bf16.msra.mxu0 %v2810
      %3916 = vmatprep.mubr.bf16.mxu0 %v891
      %3917 = vmatmul.mubr.bf16.gmra.mxu0 %v890
      %v3918 = vpop.f32.mrf.mxu0
      %v3919 = vadd.f32 %v3878, %v3918
      %v3920 = vpop.f32.mrf.mxu0
      %v3921 = vadd.f32 %v3880, %v3920
      %v3922 = vpop.f32.mrf.mxu0
      %v3923 = vpop.f32.mrf.mxu0
      %3924 = vdwg.mxu0
      %3925 = vmatprep.subr.bf16.mxu0 %v2871
      %3926 = vmatpush1.bf16.msra.mxu0 %v2870
      %3927 = vmatprep.subr.bf16.mxu0 %v2867
      %3928 = vmatpush1.bf16.msra.mxu0 %v2866
      %3929 = vmatprep.subr.bf16.mxu0 %v2863
      %3930 = vmatpush1.bf16.msra.mxu0 %v2862
      %3931 = vmatprep.subr.bf16.mxu0 %v2859
      %3932 = vmatpush1.bf16.msra.mxu0 %v2858
      %3933 = vmatprep.subr.bf16.mxu0 %v2855
      %3934 = vmatpush1.bf16.msra.mxu0 %v2854
      %3935 = vmatprep.subr.bf16.mxu0 %v2851
      %3936 = vmatpush1.bf16.msra.mxu0 %v2850
      %3937 = vmatprep.subr.bf16.mxu0 %v2847
      %3938 = vmatpush1.bf16.msra.mxu0 %v2846
      %3939 = vmatprep.subr.bf16.mxu0 %v2843
      %3940 = vmatpush1.bf16.msra.mxu0 %v2842
      %3941 = vmatprep.subr.bf16.mxu0 %v2903
      %3942 = vmatpush2.bf16.msra.mxu0 %v2902
      %3943 = vmatprep.subr.bf16.mxu0 %v2899
      %3944 = vmatpush2.bf16.msra.mxu0 %v2898
      %3945 = vmatprep.subr.bf16.mxu0 %v2895
      %3946 = vmatpush2.bf16.msra.mxu0 %v2894
      %3947 = vmatprep.subr.bf16.mxu0 %v2891
      %3948 = vmatpush2.bf16.msra.mxu0 %v2890
      %3949 = vmatprep.subr.bf16.mxu0 %v2887
      %3950 = vmatpush2.bf16.msra.mxu0 %v2886
      %3951 = vmatprep.subr.bf16.mxu0 %v2883
      %3952 = vmatpush2.bf16.msra.mxu0 %v2882
      %3953 = vmatprep.subr.bf16.mxu0 %v2879
      %3954 = vmatpush2.bf16.msra.mxu0 %v2878
      %3955 = vmatprep.subr.bf16.mxu0 %v2875
      %3956 = vmatpush2.bf16.msra.mxu0 %v2874
      %3957 = vmatprep.mubr.bf16.mxu0 %v893
      %3958 = vmatmul.mubr.bf16.gmra.mxu0 %v892
      %v3959 = vpop.f32.mrf.mxu0
      %v3960 = vadd.f32 %v3919, %v3959
      %v3961 = vpop.f32.mrf.mxu0
      %v3962 = vadd.f32 %v3921, %v3961
      %v3963 = vpop.f32.mrf.mxu0
      %v3964 = vpop.f32.mrf.mxu0
      %3965 = vdwg.mxu0
      %3966 = vmatprep.subr.bf16.mxu0 %v2935
      %3967 = vmatpush1.bf16.msra.mxu0 %v2934
      %3968 = vmatprep.subr.bf16.mxu0 %v2931
      %3969 = vmatpush1.bf16.msra.mxu0 %v2930
      %3970 = vmatprep.subr.bf16.mxu0 %v2927
      %3971 = vmatpush1.bf16.msra.mxu0 %v2926
      %3972 = vmatprep.subr.bf16.mxu0 %v2923
      %3973 = vmatpush1.bf16.msra.mxu0 %v2922
      %3974 = vmatprep.subr.bf16.mxu0 %v2919
      %3975 = vmatpush1.bf16.msra.mxu0 %v2918
      %3976 = vmatprep.subr.bf16.mxu0 %v2915
      %3977 = vmatpush1.bf16.msra.mxu0 %v2914
      %3978 = vmatprep.subr.bf16.mxu0 %v2911
      %3979 = vmatpush1.bf16.msra.mxu0 %v2910
      %3980 = vmatprep.subr.bf16.mxu0 %v2907
      %3981 = vmatpush1.bf16.msra.mxu0 %v2906
      %3982 = vmatprep.subr.bf16.mxu0 %v2967
      %3983 = vmatpush2.bf16.msra.mxu0 %v2966
      %3984 = vmatprep.subr.bf16.mxu0 %v2963
      %3985 = vmatpush2.bf16.msra.mxu0 %v2962
      %3986 = vmatprep.subr.bf16.mxu0 %v2959
      %3987 = vmatpush2.bf16.msra.mxu0 %v2958
      %3988 = vmatprep.subr.bf16.mxu0 %v2955
      %3989 = vmatpush2.bf16.msra.mxu0 %v2954
      %3990 = vmatprep.subr.bf16.mxu0 %v2951
      %3991 = vmatpush2.bf16.msra.mxu0 %v2950
      %3992 = vmatprep.subr.bf16.mxu0 %v2947
      %3993 = vmatpush2.bf16.msra.mxu0 %v2946
      %3994 = vmatprep.subr.bf16.mxu0 %v2943
      %3995 = vmatpush2.bf16.msra.mxu0 %v2942
      %3996 = vmatprep.subr.bf16.mxu0 %v2939
      %3997 = vmatpush2.bf16.msra.mxu0 %v2938
      %3998 = vmatprep.mubr.bf16.mxu0 %v895
      %3999 = vmatmul.mubr.bf16.gmra.mxu0 %v894
      %v4000 = vpop.f32.mrf.mxu0
      %v4001 = vadd.f32 %v3960, %v4000
      %v4002 = vpop.f32.mrf.mxu0
      %v4003 = vadd.f32 %v3962, %v4002
      %v4004 = vpop.f32.mrf.mxu0
      %v4005 = vpop.f32.mrf.mxu0
      %4006 = vdwg.mxu0
      %4007 = vmatprep.subr.bf16.mxu0 %v2999
      %4008 = vmatpush1.bf16.msra.mxu0 %v2998
      %4009 = vmatprep.subr.bf16.mxu0 %v2995
      %4010 = vmatpush1.bf16.msra.mxu0 %v2994
      %4011 = vmatprep.subr.bf16.mxu0 %v2991
      %4012 = vmatpush1.bf16.msra.mxu0 %v2990
      %4013 = vmatprep.subr.bf16.mxu0 %v2987
      %4014 = vmatpush1.bf16.msra.mxu0 %v2986
      %4015 = vmatprep.subr.bf16.mxu0 %v2983
      %4016 = vmatpush1.bf16.msra.mxu0 %v2982
      %4017 = vmatprep.subr.bf16.mxu0 %v2979
      %4018 = vmatpush1.bf16.msra.mxu0 %v2978
      %4019 = vmatprep.subr.bf16.mxu0 %v2975
      %4020 = vmatpush1.bf16.msra.mxu0 %v2974
      %4021 = vmatprep.subr.bf16.mxu0 %v2971
      %4022 = vmatpush1.bf16.msra.mxu0 %v2970
      %4023 = vmatprep.subr.bf16.mxu0 %v3031
      %4024 = vmatpush2.bf16.msra.mxu0 %v3030
      %4025 = vmatprep.subr.bf16.mxu0 %v3027
      %4026 = vmatpush2.bf16.msra.mxu0 %v3026
      %4027 = vmatprep.subr.bf16.mxu0 %v3023
      %4028 = vmatpush2.bf16.msra.mxu0 %v3022
      %4029 = vmatprep.subr.bf16.mxu0 %v3019
      %4030 = vmatpush2.bf16.msra.mxu0 %v3018
      %4031 = vmatprep.subr.bf16.mxu0 %v3015
      %4032 = vmatpush2.bf16.msra.mxu0 %v3014
      %4033 = vmatprep.subr.bf16.mxu0 %v3011
      %4034 = vmatpush2.bf16.msra.mxu0 %v3010
      %4035 = vmatprep.subr.bf16.mxu0 %v3007
      %4036 = vmatpush2.bf16.msra.mxu0 %v3006
      %4037 = vmatprep.subr.bf16.mxu0 %v3003
      %4038 = vmatpush2.bf16.msra.mxu0 %v3002
      %4039 = vmatprep.mubr.bf16.mxu0 %v897
      %4040 = vmatmul.mubr.bf16.gmra.mxu0 %v896
      %v4041 = vpop.f32.mrf.mxu0
      %v4042 = vadd.f32 %v4001, %v4041
      %v4043 = vpop.f32.mrf.mxu0
      %v4044 = vadd.f32 %v4003, %v4043
      %v4045 = vpop.f32.mrf.mxu0
      %v4046 = vpop.f32.mrf.mxu0
      %4047 = vdwg.mxu0
      %4048 = vmatprep.subr.bf16.mxu0 %v3063
      %4049 = vmatpush1.bf16.msra.mxu0 %v3062
      %4050 = vmatprep.subr.bf16.mxu0 %v3059
      %4051 = vmatpush1.bf16.msra.mxu0 %v3058
      %4052 = vmatprep.subr.bf16.mxu0 %v3055
      %4053 = vmatpush1.bf16.msra.mxu0 %v3054
      %4054 = vmatprep.subr.bf16.mxu0 %v3051
      %4055 = vmatpush1.bf16.msra.mxu0 %v3050
      %4056 = vmatprep.subr.bf16.mxu0 %v3047
      %4057 = vmatpush1.bf16.msra.mxu0 %v3046
      %4058 = vmatprep.subr.bf16.mxu0 %v3043
      %4059 = vmatpush1.bf16.msra.mxu0 %v3042
      %4060 = vmatprep.subr.bf16.mxu0 %v3039
      %4061 = vmatpush1.bf16.msra.mxu0 %v3038
      %4062 = vmatprep.subr.bf16.mxu0 %v3035
      %4063 = vmatpush1.bf16.msra.mxu0 %v3034
      %4064 = vmatprep.subr.bf16.mxu0 %v3095
      %4065 = vmatpush2.bf16.msra.mxu0 %v3094
      %4066 = vmatprep.subr.bf16.mxu0 %v3091
      %4067 = vmatpush2.bf16.msra.mxu0 %v3090
      %4068 = vmatprep.subr.bf16.mxu0 %v3087
      %4069 = vmatpush2.bf16.msra.mxu0 %v3086
      %4070 = vmatprep.subr.bf16.mxu0 %v3083
      %4071 = vmatpush2.bf16.msra.mxu0 %v3082
      %4072 = vmatprep.subr.bf16.mxu0 %v3079
      %4073 = vmatpush2.bf16.msra.mxu0 %v3078
      %4074 = vmatprep.subr.bf16.mxu0 %v3075
      %4075 = vmatpush2.bf16.msra.mxu0 %v3074
      %4076 = vmatprep.subr.bf16.mxu0 %v3071
      %4077 = vmatpush2.bf16.msra.mxu0 %v3070
      %4078 = vmatprep.subr.bf16.mxu0 %v3067
      %4079 = vmatpush2.bf16.msra.mxu0 %v3066
      %4080 = vmatprep.mubr.bf16.mxu0 %v899
      %4081 = vmatmul.mubr.bf16.gmra.mxu0 %v898
      %v4082 = vpop.f32.mrf.mxu0
      %v4083 = vadd.f32 %v4042, %v4082
      %v4084 = vpop.f32.mrf.mxu0
      %v4085 = vadd.f32 %v4044, %v4084
      %v4086 = vpop.f32.mrf.mxu0
      %v4087 = vpop.f32.mrf.mxu0
      %4088 = vdwg.mxu0
      %4089 = vmatprep.subr.bf16.mxu0 %v3127
      %4090 = vmatpush1.bf16.msra.mxu0 %v3126
      %4091 = vmatprep.subr.bf16.mxu0 %v3123
      %4092 = vmatpush1.bf16.msra.mxu0 %v3122
      %4093 = vmatprep.subr.bf16.mxu0 %v3119
      %4094 = vmatpush1.bf16.msra.mxu0 %v3118
      %4095 = vmatprep.subr.bf16.mxu0 %v3115
      %4096 = vmatpush1.bf16.msra.mxu0 %v3114
      %4097 = vmatprep.subr.bf16.mxu0 %v3111
      %4098 = vmatpush1.bf16.msra.mxu0 %v3110
      %4099 = vmatprep.subr.bf16.mxu0 %v3107
      %4100 = vmatpush1.bf16.msra.mxu0 %v3106
      %4101 = vmatprep.subr.bf16.mxu0 %v3103
      %4102 = vmatpush1.bf16.msra.mxu0 %v3102
      %4103 = vmatprep.subr.bf16.mxu0 %v3099
      %4104 = vmatpush1.bf16.msra.mxu0 %v3098
      %4105 = vmatprep.subr.bf16.mxu0 %v3159
      %4106 = vmatpush2.bf16.msra.mxu0 %v3158
      %4107 = vmatprep.subr.bf16.mxu0 %v3155
      %4108 = vmatpush2.bf16.msra.mxu0 %v3154
      %4109 = vmatprep.subr.bf16.mxu0 %v3151
      %4110 = vmatpush2.bf16.msra.mxu0 %v3150
      %4111 = vmatprep.subr.bf16.mxu0 %v3147
      %4112 = vmatpush2.bf16.msra.mxu0 %v3146
      %4113 = vmatprep.subr.bf16.mxu0 %v3143
      %4114 = vmatpush2.bf16.msra.mxu0 %v3142
      %4115 = vmatprep.subr.bf16.mxu0 %v3139
      %4116 = vmatpush2.bf16.msra.mxu0 %v3138
      %4117 = vmatprep.subr.bf16.mxu0 %v3135
      %4118 = vmatpush2.bf16.msra.mxu0 %v3134
      %4119 = vmatprep.subr.bf16.mxu0 %v3131
      %4120 = vmatpush2.bf16.msra.mxu0 %v3130
      %4121 = vmatprep.mubr.bf16.mxu0 %v901
      %4122 = vmatmul.mubr.bf16.gmra.mxu0 %v900
      %v4123 = vpop.f32.mrf.mxu0
      %v4124 = vadd.f32 %v4083, %v4123
      %v4125 = vpop.f32.mrf.mxu0
      %v4126 = vadd.f32 %v4085, %v4125
      %v4127 = vpop.f32.mrf.mxu0
      %v4128 = vpop.f32.mrf.mxu0
      %4129 = vdwg.mxu0
      %4130 = vmatprep.subr.bf16.mxu0 %v3191
      %4131 = vmatpush1.bf16.msra.mxu0 %v3190
      %4132 = vmatprep.subr.bf16.mxu0 %v3187
      %4133 = vmatpush1.bf16.msra.mxu0 %v3186
      %4134 = vmatprep.subr.bf16.mxu0 %v3183
      %4135 = vmatpush1.bf16.msra.mxu0 %v3182
      %4136 = vmatprep.subr.bf16.mxu0 %v3179
      %4137 = vmatpush1.bf16.msra.mxu0 %v3178
      %4138 = vmatprep.subr.bf16.mxu0 %v3175
      %4139 = vmatpush1.bf16.msra.mxu0 %v3174
      %4140 = vmatprep.subr.bf16.mxu0 %v3171
      %4141 = vmatpush1.bf16.msra.mxu0 %v3170
      %4142 = vmatprep.subr.bf16.mxu0 %v3167
      %4143 = vmatpush1.bf16.msra.mxu0 %v3166
      %4144 = vmatprep.subr.bf16.mxu0 %v3163
      %4145 = vmatpush1.bf16.msra.mxu0 %v3162
      %4146 = vmatprep.subr.bf16.mxu0 %v3223
      %4147 = vmatpush2.bf16.msra.mxu0 %v3222
      %4148 = vmatprep.subr.bf16.mxu0 %v3219
      %4149 = vmatpush2.bf16.msra.mxu0 %v3218
      %4150 = vmatprep.subr.bf16.mxu0 %v3215
      %4151 = vmatpush2.bf16.msra.mxu0 %v3214
      %4152 = vmatprep.subr.bf16.mxu0 %v3211
      %4153 = vmatpush2.bf16.msra.mxu0 %v3210
      %4154 = vmatprep.subr.bf16.mxu0 %v3207
      %4155 = vmatpush2.bf16.msra.mxu0 %v3206
      %4156 = vmatprep.subr.bf16.mxu0 %v3203
      %4157 = vmatpush2.bf16.msra.mxu0 %v3202
      %4158 = vmatprep.subr.bf16.mxu0 %v3199
      %4159 = vmatpush2.bf16.msra.mxu0 %v3198
      %4160 = vmatprep.subr.bf16.mxu0 %v3195
      %4161 = vmatpush2.bf16.msra.mxu0 %v3194
      %4162 = vmatprep.mubr.bf16.mxu0 %v903
      %4163 = vmatmul.mubr.bf16.gmra.mxu0 %v902
      %v4164 = vpop.f32.mrf.mxu0
      %v4165 = vadd.f32 %v4124, %v4164
      %v4166 = vpop.f32.mrf.mxu0
      %v4167 = vadd.f32 %v4126, %v4166
      %v4168 = vpop.f32.mrf.mxu0
      %v4169 = vpop.f32.mrf.mxu0
      %4170 = vdwg.mxu0
      %4171 = vmatprep.subr.bf16.mxu0 %v2681
      %4172 = vmatpush1.bf16.msra.mxu0 %v2680
      %4173 = vmatprep.subr.bf16.mxu0 %v2677
      %4174 = vmatpush1.bf16.msra.mxu0 %v2676
      %4175 = vmatprep.subr.bf16.mxu0 %v2673
      %4176 = vmatpush1.bf16.msra.mxu0 %v2672
      %4177 = vmatprep.subr.bf16.mxu0 %v2669
      %4178 = vmatpush1.bf16.msra.mxu0 %v2668
      %4179 = vmatprep.subr.bf16.mxu0 %v2665
      %4180 = vmatpush1.bf16.msra.mxu0 %v2664
      %4181 = vmatprep.subr.bf16.mxu0 %v2661
      %4182 = vmatpush1.bf16.msra.mxu0 %v2660
      %4183 = vmatprep.subr.bf16.mxu0 %v2657
      %4184 = vmatpush1.bf16.msra.mxu0 %v2656
      %4185 = vmatprep.subr.bf16.mxu0 %v2653
      %4186 = vmatpush1.bf16.msra.mxu0 %v2652
      %4187 = vmatprep.subr.bf16.mxu0 %v2713
      %4188 = vmatpush2.bf16.msra.mxu0 %v2712
      %4189 = vmatprep.subr.bf16.mxu0 %v2709
      %4190 = vmatpush2.bf16.msra.mxu0 %v2708
      %4191 = vmatprep.subr.bf16.mxu0 %v2705
      %4192 = vmatpush2.bf16.msra.mxu0 %v2704
      %4193 = vmatprep.subr.bf16.mxu0 %v2701
      %4194 = vmatpush2.bf16.msra.mxu0 %v2700
      %4195 = vmatprep.subr.bf16.mxu0 %v2697
      %4196 = vmatpush2.bf16.msra.mxu0 %v2696
      %4197 = vmatprep.subr.bf16.mxu0 %v2693
      %4198 = vmatpush2.bf16.msra.mxu0 %v2692
      %4199 = vmatprep.subr.bf16.mxu0 %v2689
      %4200 = vmatpush2.bf16.msra.mxu0 %v2688
      %4201 = vmatprep.subr.bf16.mxu0 %v2685
      %4202 = vmatpush2.bf16.msra.mxu0 %v2684
      %4203 = vmatprep.mubr.bf16.mxu0 %v887
      %4204 = vmatmul.mubr.bf16.gmra.mxu0 %v886
      %v4205 = vpop.f32.mrf.mxu0
      %v4206 = vadd.f32 %v850, %v4205
      %v4207 = vpop.f32.mrf.mxu0
      %v4208 = vadd.f32 %v854, %v4207
      %v4209 = vpop.f32.mrf.mxu0
      %v4210 = vpop.f32.mrf.mxu0
      %4211 = vdwg.mxu0
      %4212 = vmatprep.subr.bf16.mxu0 %v2745
      %4213 = vmatpush1.bf16.msra.mxu0 %v2744
      %4214 = vmatprep.subr.bf16.mxu0 %v2741
      %4215 = vmatpush1.bf16.msra.mxu0 %v2740
      %4216 = vmatprep.subr.bf16.mxu0 %v2737
      %4217 = vmatpush1.bf16.msra.mxu0 %v2736
      %4218 = vmatprep.subr.bf16.mxu0 %v2733
      %4219 = vmatpush1.bf16.msra.mxu0 %v2732
      %4220 = vmatprep.subr.bf16.mxu0 %v2729
      %4221 = vmatpush1.bf16.msra.mxu0 %v2728
      %4222 = vmatprep.subr.bf16.mxu0 %v2725
      %4223 = vmatpush1.bf16.msra.mxu0 %v2724
      %4224 = vmatprep.subr.bf16.mxu0 %v2721
      %4225 = vmatpush1.bf16.msra.mxu0 %v2720
      %4226 = vmatprep.subr.bf16.mxu0 %v2717
      %4227 = vmatpush1.bf16.msra.mxu0 %v2716
      %4228 = vmatprep.subr.bf16.mxu0 %v2777
      %4229 = vmatpush2.bf16.msra.mxu0 %v2776
      %4230 = vmatprep.subr.bf16.mxu0 %v2773
      %4231 = vmatpush2.bf16.msra.mxu0 %v2772
      %4232 = vmatprep.subr.bf16.mxu0 %v2769
      %4233 = vmatpush2.bf16.msra.mxu0 %v2768
      %4234 = vmatprep.subr.bf16.mxu0 %v2765
      %4235 = vmatpush2.bf16.msra.mxu0 %v2764
      %4236 = vmatprep.subr.bf16.mxu0 %v2761
      %4237 = vmatpush2.bf16.msra.mxu0 %v2760
      %4238 = vmatprep.subr.bf16.mxu0 %v2757
      %4239 = vmatpush2.bf16.msra.mxu0 %v2756
      %4240 = vmatprep.subr.bf16.mxu0 %v2753
      %4241 = vmatpush2.bf16.msra.mxu0 %v2752
      %4242 = vmatprep.subr.bf16.mxu0 %v2749
      %4243 = vmatpush2.bf16.msra.mxu0 %v2748
      %4244 = vmatprep.mubr.bf16.mxu0 %v889
      %4245 = vmatmul.mubr.bf16.gmra.mxu0 %v888
      %v4246 = vpop.f32.mrf.mxu0
      %v4247 = vadd.f32 %v4206, %v4246
      %v4248 = vpop.f32.mrf.mxu0
      %v4249 = vadd.f32 %v4208, %v4248
      %v4250 = vpop.f32.mrf.mxu0
      %v4251 = vpop.f32.mrf.mxu0
      %4252 = vdwg.mxu0
      %4253 = vmatprep.subr.bf16.mxu0 %v2809
      %4254 = vmatpush1.bf16.msra.mxu0 %v2808
      %4255 = vmatprep.subr.bf16.mxu0 %v2805
      %4256 = vmatpush1.bf16.msra.mxu0 %v2804
      %4257 = vmatprep.subr.bf16.mxu0 %v2801
      %4258 = vmatpush1.bf16.msra.mxu0 %v2800
      %4259 = vmatprep.subr.bf16.mxu0 %v2797
      %4260 = vmatpush1.bf16.msra.mxu0 %v2796
      %4261 = vmatprep.subr.bf16.mxu0 %v2793
      %4262 = vmatpush1.bf16.msra.mxu0 %v2792
      %4263 = vmatprep.subr.bf16.mxu0 %v2789
      %4264 = vmatpush1.bf16.msra.mxu0 %v2788
      %4265 = vmatprep.subr.bf16.mxu0 %v2785
      %4266 = vmatpush1.bf16.msra.mxu0 %v2784
      %4267 = vmatprep.subr.bf16.mxu0 %v2781
      %4268 = vmatpush1.bf16.msra.mxu0 %v2780
      %4269 = vmatprep.subr.bf16.mxu0 %v2841
      %4270 = vmatpush2.bf16.msra.mxu0 %v2840
      %4271 = vmatprep.subr.bf16.mxu0 %v2837
      %4272 = vmatpush2.bf16.msra.mxu0 %v2836
      %4273 = vmatprep.subr.bf16.mxu0 %v2833
      %4274 = vmatpush2.bf16.msra.mxu0 %v2832
      %4275 = vmatprep.subr.bf16.mxu0 %v2829
      %4276 = vmatpush2.bf16.msra.mxu0 %v2828
      %4277 = vmatprep.subr.bf16.mxu0 %v2825
      %4278 = vmatpush2.bf16.msra.mxu0 %v2824
      %4279 = vmatprep.subr.bf16.mxu0 %v2821
      %4280 = vmatpush2.bf16.msra.mxu0 %v2820
      %4281 = vmatprep.subr.bf16.mxu0 %v2817
      %4282 = vmatpush2.bf16.msra.mxu0 %v2816
      %4283 = vmatprep.subr.bf16.mxu0 %v2813
      %4284 = vmatpush2.bf16.msra.mxu0 %v2812
      %4285 = vmatprep.mubr.bf16.mxu0 %v891
      %4286 = vmatmul.mubr.bf16.gmra.mxu0 %v890
      %v4287 = vpop.f32.mrf.mxu0
      %v4288 = vadd.f32 %v4247, %v4287
      %v4289 = vpop.f32.mrf.mxu0
      %v4290 = vadd.f32 %v4249, %v4289
      %v4291 = vpop.f32.mrf.mxu0
      %v4292 = vpop.f32.mrf.mxu0
      %4293 = vdwg.mxu0
      %4294 = vmatprep.subr.bf16.mxu0 %v2873
      %4295 = vmatpush1.bf16.msra.mxu0 %v2872
      %4296 = vmatprep.subr.bf16.mxu0 %v2869
      %4297 = vmatpush1.bf16.msra.mxu0 %v2868
      %4298 = vmatprep.subr.bf16.mxu0 %v2865
      %4299 = vmatpush1.bf16.msra.mxu0 %v2864
      %4300 = vmatprep.subr.bf16.mxu0 %v2861
      %4301 = vmatpush1.bf16.msra.mxu0 %v2860
      %4302 = vmatprep.subr.bf16.mxu0 %v2857
      %4303 = vmatpush1.bf16.msra.mxu0 %v2856
      %4304 = vmatprep.subr.bf16.mxu0 %v2853
      %4305 = vmatpush1.bf16.msra.mxu0 %v2852
      %4306 = vmatprep.subr.bf16.mxu0 %v2849
      %4307 = vmatpush1.bf16.msra.mxu0 %v2848
      %4308 = vmatprep.subr.bf16.mxu0 %v2845
      %4309 = vmatpush1.bf16.msra.mxu0 %v2844
      %4310 = vmatprep.subr.bf16.mxu0 %v2905
      %4311 = vmatpush2.bf16.msra.mxu0 %v2904
      %4312 = vmatprep.subr.bf16.mxu0 %v2901
      %4313 = vmatpush2.bf16.msra.mxu0 %v2900
      %4314 = vmatprep.subr.bf16.mxu0 %v2897
      %4315 = vmatpush2.bf16.msra.mxu0 %v2896
      %4316 = vmatprep.subr.bf16.mxu0 %v2893
      %4317 = vmatpush2.bf16.msra.mxu0 %v2892
      %4318 = vmatprep.subr.bf16.mxu0 %v2889
      %4319 = vmatpush2.bf16.msra.mxu0 %v2888
      %4320 = vmatprep.subr.bf16.mxu0 %v2885
      %4321 = vmatpush2.bf16.msra.mxu0 %v2884
      %4322 = vmatprep.subr.bf16.mxu0 %v2881
      %4323 = vmatpush2.bf16.msra.mxu0 %v2880
      %4324 = vmatprep.subr.bf16.mxu0 %v2877
      %4325 = vmatpush2.bf16.msra.mxu0 %v2876
      %4326 = vmatprep.mubr.bf16.mxu0 %v893
      %4327 = vmatmul.mubr.bf16.gmra.mxu0 %v892
      %v4328 = vpop.f32.mrf.mxu0
      %v4329 = vadd.f32 %v4288, %v4328
      %v4330 = vpop.f32.mrf.mxu0
      %v4331 = vadd.f32 %v4290, %v4330
      %v4332 = vpop.f32.mrf.mxu0
      %v4333 = vpop.f32.mrf.mxu0
      %4334 = vdwg.mxu0
      %4335 = vmatprep.subr.bf16.mxu0 %v2937
      %4336 = vmatpush1.bf16.msra.mxu0 %v2936
      %4337 = vmatprep.subr.bf16.mxu0 %v2933
      %4338 = vmatpush1.bf16.msra.mxu0 %v2932
      %4339 = vmatprep.subr.bf16.mxu0 %v2929
      %4340 = vmatpush1.bf16.msra.mxu0 %v2928
      %4341 = vmatprep.subr.bf16.mxu0 %v2925
      %4342 = vmatpush1.bf16.msra.mxu0 %v2924
      %4343 = vmatprep.subr.bf16.mxu0 %v2921
      %4344 = vmatpush1.bf16.msra.mxu0 %v2920
      %4345 = vmatprep.subr.bf16.mxu0 %v2917
      %4346 = vmatpush1.bf16.msra.mxu0 %v2916
      %4347 = vmatprep.subr.bf16.mxu0 %v2913
      %4348 = vmatpush1.bf16.msra.mxu0 %v2912
      %4349 = vmatprep.subr.bf16.mxu0 %v2909
      %4350 = vmatpush1.bf16.msra.mxu0 %v2908
      %4351 = vmatprep.subr.bf16.mxu0 %v2969
      %4352 = vmatpush2.bf16.msra.mxu0 %v2968
      %4353 = vmatprep.subr.bf16.mxu0 %v2965
      %4354 = vmatpush2.bf16.msra.mxu0 %v2964
      %4355 = vmatprep.subr.bf16.mxu0 %v2961
      %4356 = vmatpush2.bf16.msra.mxu0 %v2960
      %4357 = vmatprep.subr.bf16.mxu0 %v2957
      %4358 = vmatpush2.bf16.msra.mxu0 %v2956
      %4359 = vmatprep.subr.bf16.mxu0 %v2953
      %4360 = vmatpush2.bf16.msra.mxu0 %v2952
      %4361 = vmatprep.subr.bf16.mxu0 %v2949
      %4362 = vmatpush2.bf16.msra.mxu0 %v2948
      %4363 = vmatprep.subr.bf16.mxu0 %v2945
      %4364 = vmatpush2.bf16.msra.mxu0 %v2944
      %4365 = vmatprep.subr.bf16.mxu0 %v2941
      %4366 = vmatpush2.bf16.msra.mxu0 %v2940
      %4367 = vmatprep.mubr.bf16.mxu0 %v895
      %4368 = vmatmul.mubr.bf16.gmra.mxu0 %v894
      %v4369 = vpop.f32.mrf.mxu0
      %v4370 = vadd.f32 %v4329, %v4369
      %v4371 = vpop.f32.mrf.mxu0
      %v4372 = vadd.f32 %v4331, %v4371
      %v4373 = vpop.f32.mrf.mxu0
      %v4374 = vpop.f32.mrf.mxu0
      %4375 = vdwg.mxu0
      %4376 = vmatprep.subr.bf16.mxu0 %v3001
      %4377 = vmatpush1.bf16.msra.mxu0 %v3000
      %4378 = vmatprep.subr.bf16.mxu0 %v2997
      %4379 = vmatpush1.bf16.msra.mxu0 %v2996
      %4380 = vmatprep.subr.bf16.mxu0 %v2993
      %4381 = vmatpush1.bf16.msra.mxu0 %v2992
      %4382 = vmatprep.subr.bf16.mxu0 %v2989
      %4383 = vmatpush1.bf16.msra.mxu0 %v2988
      %4384 = vmatprep.subr.bf16.mxu0 %v2985
      %4385 = vmatpush1.bf16.msra.mxu0 %v2984
      %4386 = vmatprep.subr.bf16.mxu0 %v2981
      %4387 = vmatpush1.bf16.msra.mxu0 %v2980
      %4388 = vmatprep.subr.bf16.mxu0 %v2977
      %4389 = vmatpush1.bf16.msra.mxu0 %v2976
      %4390 = vmatprep.subr.bf16.mxu0 %v2973
      %4391 = vmatpush1.bf16.msra.mxu0 %v2972
      %4392 = vmatprep.subr.bf16.mxu0 %v3033
      %4393 = vmatpush2.bf16.msra.mxu0 %v3032
      %4394 = vmatprep.subr.bf16.mxu0 %v3029
      %4395 = vmatpush2.bf16.msra.mxu0 %v3028
      %4396 = vmatprep.subr.bf16.mxu0 %v3025
      %4397 = vmatpush2.bf16.msra.mxu0 %v3024
      %4398 = vmatprep.subr.bf16.mxu0 %v3021
      %4399 = vmatpush2.bf16.msra.mxu0 %v3020
      %4400 = vmatprep.subr.bf16.mxu0 %v3017
      %4401 = vmatpush2.bf16.msra.mxu0 %v3016
      %4402 = vmatprep.subr.bf16.mxu0 %v3013
      %4403 = vmatpush2.bf16.msra.mxu0 %v3012
      %4404 = vmatprep.subr.bf16.mxu0 %v3009
      %4405 = vmatpush2.bf16.msra.mxu0 %v3008
      %4406 = vmatprep.subr.bf16.mxu0 %v3005
      %4407 = vmatpush2.bf16.msra.mxu0 %v3004
      %4408 = vmatprep.mubr.bf16.mxu0 %v897
      %4409 = vmatmul.mubr.bf16.gmra.mxu0 %v896
      %v4410 = vpop.f32.mrf.mxu0
      %v4411 = vadd.f32 %v4370, %v4410
      %v4412 = vpop.f32.mrf.mxu0
      %v4413 = vadd.f32 %v4372, %v4412
      %v4414 = vpop.f32.mrf.mxu0
      %v4415 = vpop.f32.mrf.mxu0
      %4416 = vdwg.mxu0
      %4417 = vmatprep.subr.bf16.mxu0 %v3065
      %4418 = vmatpush1.bf16.msra.mxu0 %v3064
      %4419 = vmatprep.subr.bf16.mxu0 %v3061
      %4420 = vmatpush1.bf16.msra.mxu0 %v3060
      %4421 = vmatprep.subr.bf16.mxu0 %v3057
      %4422 = vmatpush1.bf16.msra.mxu0 %v3056
      %4423 = vmatprep.subr.bf16.mxu0 %v3053
      %4424 = vmatpush1.bf16.msra.mxu0 %v3052
      %4425 = vmatprep.subr.bf16.mxu0 %v3049
      %4426 = vmatpush1.bf16.msra.mxu0 %v3048
      %4427 = vmatprep.subr.bf16.mxu0 %v3045
      %4428 = vmatpush1.bf16.msra.mxu0 %v3044
      %4429 = vmatprep.subr.bf16.mxu0 %v3041
      %4430 = vmatpush1.bf16.msra.mxu0 %v3040
      %4431 = vmatprep.subr.bf16.mxu0 %v3037
      %4432 = vmatpush1.bf16.msra.mxu0 %v3036
      %4433 = vmatprep.subr.bf16.mxu0 %v3097
      %4434 = vmatpush2.bf16.msra.mxu0 %v3096
      %4435 = vmatprep.subr.bf16.mxu0 %v3093
      %4436 = vmatpush2.bf16.msra.mxu0 %v3092
      %4437 = vmatprep.subr.bf16.mxu0 %v3089
      %4438 = vmatpush2.bf16.msra.mxu0 %v3088
      %4439 = vmatprep.subr.bf16.mxu0 %v3085
      %4440 = vmatpush2.bf16.msra.mxu0 %v3084
      %4441 = vmatprep.subr.bf16.mxu0 %v3081
      %4442 = vmatpush2.bf16.msra.mxu0 %v3080
      %4443 = vmatprep.subr.bf16.mxu0 %v3077
      %4444 = vmatpush2.bf16.msra.mxu0 %v3076
      %4445 = vmatprep.subr.bf16.mxu0 %v3073
      %4446 = vmatpush2.bf16.msra.mxu0 %v3072
      %4447 = vmatprep.subr.bf16.mxu0 %v3069
      %4448 = vmatpush2.bf16.msra.mxu0 %v3068
      %4449 = vmatprep.mubr.bf16.mxu0 %v899
      %4450 = vmatmul.mubr.bf16.gmra.mxu0 %v898
      %v4451 = vpop.f32.mrf.mxu0
      %v4452 = vadd.f32 %v4411, %v4451
      %v4453 = vpop.f32.mrf.mxu0
      %v4454 = vadd.f32 %v4413, %v4453
      %v4455 = vpop.f32.mrf.mxu0
      %v4456 = vpop.f32.mrf.mxu0
      %4457 = vdwg.mxu0
      %4458 = vmatprep.subr.bf16.mxu0 %v3129
      %4459 = vmatpush1.bf16.msra.mxu0 %v3128
      %4460 = vmatprep.subr.bf16.mxu0 %v3125
      %4461 = vmatpush1.bf16.msra.mxu0 %v3124
      %4462 = vmatprep.subr.bf16.mxu0 %v3121
      %4463 = vmatpush1.bf16.msra.mxu0 %v3120
      %4464 = vmatprep.subr.bf16.mxu0 %v3117
      %4465 = vmatpush1.bf16.msra.mxu0 %v3116
      %4466 = vmatprep.subr.bf16.mxu0 %v3113
      %4467 = vmatpush1.bf16.msra.mxu0 %v3112
      %4468 = vmatprep.subr.bf16.mxu0 %v3109
      %4469 = vmatpush1.bf16.msra.mxu0 %v3108
      %4470 = vmatprep.subr.bf16.mxu0 %v3105
      %4471 = vmatpush1.bf16.msra.mxu0 %v3104
      %4472 = vmatprep.subr.bf16.mxu0 %v3101
      %4473 = vmatpush1.bf16.msra.mxu0 %v3100
      %4474 = vmatprep.subr.bf16.mxu0 %v3161
      %4475 = vmatpush2.bf16.msra.mxu0 %v3160
      %4476 = vmatprep.subr.bf16.mxu0 %v3157
      %4477 = vmatpush2.bf16.msra.mxu0 %v3156
      %4478 = vmatprep.subr.bf16.mxu0 %v3153
      %4479 = vmatpush2.bf16.msra.mxu0 %v3152
      %4480 = vmatprep.subr.bf16.mxu0 %v3149
      %4481 = vmatpush2.bf16.msra.mxu0 %v3148
      %4482 = vmatprep.subr.bf16.mxu0 %v3145
      %4483 = vmatpush2.bf16.msra.mxu0 %v3144
      %4484 = vmatprep.subr.bf16.mxu0 %v3141
      %4485 = vmatpush2.bf16.msra.mxu0 %v3140
      %4486 = vmatprep.subr.bf16.mxu0 %v3137
      %4487 = vmatpush2.bf16.msra.mxu0 %v3136
      %4488 = vmatprep.subr.bf16.mxu0 %v3133
      %4489 = vmatpush2.bf16.msra.mxu0 %v3132
      %4490 = vmatprep.mubr.bf16.mxu0 %v901
      %4491 = vmatmul.mubr.bf16.gmra.mxu0 %v900
      %v4492 = vpop.f32.mrf.mxu0
      %v4493 = vadd.f32 %v4452, %v4492
      %v4494 = vpop.f32.mrf.mxu0
      %v4495 = vadd.f32 %v4454, %v4494
      %v4496 = vpop.f32.mrf.mxu0
      %v4497 = vpop.f32.mrf.mxu0
      %4498 = vdwg.mxu0
      %4499 = vmatprep.subr.bf16.mxu0 %v3193
      %4500 = vmatpush1.bf16.msra.mxu0 %v3192
      %4501 = vmatprep.subr.bf16.mxu0 %v3189
      %4502 = vmatpush1.bf16.msra.mxu0 %v3188
      %4503 = vmatprep.subr.bf16.mxu0 %v3185
      %4504 = vmatpush1.bf16.msra.mxu0 %v3184
      %4505 = vmatprep.subr.bf16.mxu0 %v3181
      %4506 = vmatpush1.bf16.msra.mxu0 %v3180
      %4507 = vmatprep.subr.bf16.mxu0 %v3177
      %4508 = vmatpush1.bf16.msra.mxu0 %v3176
      %4509 = vmatprep.subr.bf16.mxu0 %v3173
      %4510 = vmatpush1.bf16.msra.mxu0 %v3172
      %4511 = vmatprep.subr.bf16.mxu0 %v3169
      %4512 = vmatpush1.bf16.msra.mxu0 %v3168
      %4513 = vmatprep.subr.bf16.mxu0 %v3165
      %4514 = vmatpush1.bf16.msra.mxu0 %v3164
      %4515 = vmatprep.subr.bf16.mxu0 %v3225
      %4516 = vmatpush2.bf16.msra.mxu0 %v3224
      %4517 = vmatprep.subr.bf16.mxu0 %v3221
      %4518 = vmatpush2.bf16.msra.mxu0 %v3220
      %4519 = vmatprep.subr.bf16.mxu0 %v3217
      %4520 = vmatpush2.bf16.msra.mxu0 %v3216
      %4521 = vmatprep.subr.bf16.mxu0 %v3213
      %4522 = vmatpush2.bf16.msra.mxu0 %v3212
      %4523 = vmatprep.subr.bf16.mxu0 %v3209
      %4524 = vmatpush2.bf16.msra.mxu0 %v3208
      %4525 = vmatprep.subr.bf16.mxu0 %v3205
      %4526 = vmatpush2.bf16.msra.mxu0 %v3204
      %4527 = vmatprep.subr.bf16.mxu0 %v3201
      %4528 = vmatpush2.bf16.msra.mxu0 %v3200
      %4529 = vmatprep.subr.bf16.mxu0 %v3197
      %4530 = vmatpush2.bf16.msra.mxu0 %v3196
      %4531 = vmatprep.mubr.bf16.mxu0 %v903
      %4532 = vmatmul.mubr.bf16.gmra.mxu0 %v902
      %v4533 = vpop.f32.mrf.mxu0
      %v4534 = vadd.f32 %v4493, %v4533
      %v4535 = vpop.f32.mrf.mxu0
      %v4536 = vadd.f32 %v4495, %v4535
      %v4537 = vpop.f32.mrf.mxu0
      %v4538 = vpop.f32.mrf.mxu0
      %4539 = vdwg.mxu0
      %v4540 = vpack.c.bf16 %v4165, %v4165
      %v4541 = vpack.c.bf16 %v4167, %v4167
      %v4542 = vpack.c.bf16 %v4534, %v4534
      %v4543 = vpack.c.bf16 %v4536, %v4536
      %v4548 = vunpack.c.l.b16 %v4540
      %v4549 = vunpack.c.l.b16 %v4541
      %v4550 = vunpack.c.l.b16 %v4542
      %v4551 = vunpack.c.l.b16 %v4543
      %v4552 = vpack.c.b16 %v4549, %v4548
      %v4553 = vpack.c.b16 %v4551, %v4550
      %4556 = vst [vmem:[%s241] sm:$0xff] %v4552
      %4557 = vst [vmem:[%s241 + $0x8] sm:$0xff] %v4553
      %s4558 = smul.u32 %s21, 8
      %v4559 = vlaneseq
      %v4560 = vshrl.u32 %v4559, 7
      %v4561 = vstv %s4558
      %v4562 = vadd.s32 %v4561, %v4560
      %vm4563 = vcmp.lt.s32.totalorder %v4562, 4
      %v4564 = vsel %vm4563, 1, 0
      %vm4565 = vcmp.eq.s32.totalorder %v4564, 1
      %v4566 = vsel %vm4565, %v4165, 0.0
      %v4567 = vsel %vm4565, %v4167, 0.0
      %v4568 = vsel %vm4565, %v4534, 0.0
      %v4569 = vsel %vm4565, %v4536, 0.0
      %v4570 = vld [vmem:[%s246] ss:$2 sm:$0xf]
      %v4571 = vrot.slane %v4566, 4
      %v4572 = vadd.f32 %v4566, %v4571
      %v4573 = vrot.slane %v4572, 2
      %v4574 = vadd.f32 %v4572, %v4573
      %v4575 = vrot.slane %v4574, 1
      %v4576 = vadd.f32 %v4574, %v4575
      %v4577 = vrot.slane %v4567, 4
      %v4578 = vadd.f32 %v4567, %v4577
      %v4579 = vrot.slane %v4578, 2
      %v4580 = vadd.f32 %v4578, %v4579
      %v4581 = vrot.slane %v4580, 1
      %v4582 = vadd.f32 %v4580, %v4581
      %v4583 = vrot.slane %v4568, 4
      %v4584 = vadd.f32 %v4568, %v4583
      %v4585 = vrot.slane %v4584, 2
      %v4586 = vadd.f32 %v4584, %v4585
      %v4587 = vrot.slane %v4586, 1
      %v4588 = vadd.f32 %v4586, %v4587
      %v4589 = vrot.slane %v4569, 4
      %v4590 = vadd.f32 %v4569, %v4589
      %v4591 = vrot.slane %v4590, 2
      %v4592 = vadd.f32 %v4590, %v4591
      %v4593 = vrot.slane %v4592, 1
      %v4594 = vadd.f32 %v4592, %v4593
      %v4599 = vcombine.low %v4576, %v4582
      %v4600 = vcombine.low %v4588, %v4594
      %v4602 = vunpack.c.l.s4 1966171168
      %v4603 = vunpack.c.0.s8 %v4602
      %v4604 = vlaneseq
      %v4605 = vshrl.u32 %v4604, 7
      %v4606 = vsub.s32 %v4603, %v4605
      %v4607 = vrot.slane %v4599, %v4606
      %v4609 = vunpack.c.l.s4 1966171168
      %v4610 = vunpack.c.0.s8 %v4609
      %v4611 = vlaneseq
      %v4612 = vshrl.u32 %v4611, 7
      %v4613 = vsub.s32 %v4610, %v4612
      %v4614 = vrot.slane %v4600, %v4613
      %v4615 = vcombine.low %v4607, %v4614
      %v4617 = vunpack.c.l.s4 1966171168
      %v4618 = vunpack.c.0.s8 %v4617
      %v4619 = vlaneseq
      %v4620 = vshrl.u32 %v4619, 7
      %v4621 = vsub.s32 %v4618, %v4620
      %v4622 = vrot.slane %v4615, %v4621
      %v4624 = vadd.f32 %v4570, %v4622
      %v4625 = vlaneseq
      %vm4626 = vcmp.ge.s32.totalorder %v4625, 0
      %vm4627 = vcmp.lt.s32.totalorder %v4625, 512
      %vm4628 = vmand %vm4626, %vm4627
      %4629 = vst.msk [vmem:[%s246] ss:$2 sm:$0xf] %vm4628, %v4624
      %s4630 = scalar_lea.vmem %s246, 1
      %v4631 = vld [vmem:[%s4630] ss:$2 sm:$0xf]
      %v4632 = vmul.f32 %v4566, %v4566
      %v4633 = vmul.f32 %v4567, %v4567
      %v4634 = vmul.f32 %v4568, %v4568
      %v4635 = vmul.f32 %v4569, %v4569
      %v4636 = vrot.slane %v4632, 4
      %v4637 = vadd.f32 %v4632, %v4636
      %v4638 = vrot.slane %v4637, 2
      %v4639 = vadd.f32 %v4637, %v4638
      %v4640 = vrot.slane %v4639, 1
      %v4641 = vadd.f32 %v4639, %v4640
      %v4642 = vrot.slane %v4633, 4
      %v4643 = vadd.f32 %v4633, %v4642
      %v4644 = vrot.slane %v4643, 2
      %v4645 = vadd.f32 %v4643, %v4644
      %v4646 = vrot.slane %v4645, 1
      %v4647 = vadd.f32 %v4645, %v4646
      %v4648 = vrot.slane %v4634, 4
      %v4649 = vadd.f32 %v4634, %v4648
      %v4650 = vrot.slane %v4649, 2
      %v4651 = vadd.f32 %v4649, %v4650
      %v4652 = vrot.slane %v4651, 1
      %v4653 = vadd.f32 %v4651, %v4652
      %v4654 = vrot.slane %v4635, 4
      %v4655 = vadd.f32 %v4635, %v4654
      %v4656 = vrot.slane %v4655, 2
      %v4657 = vadd.f32 %v4655, %v4656
      %v4658 = vrot.slane %v4657, 1
      %v4659 = vadd.f32 %v4657, %v4658
      %v4664 = vcombine.low %v4641, %v4647
      %v4665 = vcombine.low %v4653, %v4659
      %v4667 = vunpack.c.l.s4 1966171168
      %v4668 = vunpack.c.0.s8 %v4667
      %v4669 = vlaneseq
      %v4670 = vshrl.u32 %v4669, 7
      %v4671 = vsub.s32 %v4668, %v4670
      %v4672 = vrot.slane %v4664, %v4671
      %v4674 = vunpack.c.l.s4 1966171168
      %v4675 = vunpack.c.0.s8 %v4674
      %v4676 = vlaneseq
      %v4677 = vshrl.u32 %v4676, 7
      %v4678 = vsub.s32 %v4675, %v4677
      %v4679 = vrot.slane %v4665, %v4678
      %v4680 = vcombine.low %v4672, %v4679
      %v4682 = vunpack.c.l.s4 1966171168
      %v4683 = vunpack.c.0.s8 %v4682
      %v4684 = vlaneseq
      %v4685 = vshrl.u32 %v4684, 7
      %v4686 = vsub.s32 %v4683, %v4685
      %v4687 = vrot.slane %v4680, %v4686
      %v4689 = vadd.f32 %v4631, %v4687
      %4690 = vst.msk [vmem:[%s4630] ss:$2 sm:$0xf] %vm4628, %v4689
      %p4691 = scmp.lt.s32.totalorder %s20, 1
      %s4692 = scalar_select %p4691, %s20, 1
      %p4693 = scmp.lt.s32.totalorder %s21, 0
      %s4694 = scalar_select %p4693, %s21, 0
      %s4695 = smul.addr %s4694, 4
      %s4696 = smul.addr %s4692, 4
      %s4697 = sadd.s32 %s4695, %s4696
      %s4698 = smul.addr %s4697, 4
      %s4699 = scalar_lea.vmem %s3, %s4698
      %p4700 = scmp.lt.s32.totalorder %s20, 1
      %s4701 = scalar_select %p4700, %s20, 1
      %s4702 = smul.addr %s4701, 4
      %s4703 = smul.addr %s4702, 2
      %s4704 = scalar_lea.vmem %s4, %s4703
      // Predicated region
      $region37: #{discriminator_forward.13} parent=31 // pred_check
        %p4705 = pneg %p118
      $region38: #{discriminator_forward.13} parent=31 // pred_check_branch
        %4707 = sbr.rel (%p4705) target = $region40
      $region39: #{discriminator_forward.13} parent=31 // pred_region
        _
      $region40: #{discriminator_forward.13} parent=31 // pred_fallthru
        _
      // Predicated region
      $region41: #{discriminator_forward.13} parent=31 // pred_check
        %p4708 = pneg %p144
      $region42: #{discriminator_forward.13} parent=31 // pred_check_branch
        %4710 = sbr.rel (%p4708) target = $region44
      $region43: #{discriminator_forward.13} parent=31 // pred_region
        _
      $region44: #{discriminator_forward.13} parent=31 // pred_fallthru
        _
    $region32: #{discriminator_forward.13} parent=5 // pred_fallthru
      _
    %p4711 = scmp.le.s32.totalorder 2, %s11
    // Predicated region
    $region45: #{discriminator_forward.13} parent=5 // pred_check
      %p4712 = pneg %p4711
    $region46: #{discriminator_forward.13} parent=5 // pred_check_branch
      %4714 = sbr.rel (%p4712) target = $region48
    $region47: #{discriminator_forward.13} parent=5 // pred_region
      %s4715 = ssub.s32 %s11, 2
      // Predicated region
      $region49: #{discriminator_forward.13} parent=47 // pred_check
        %p4716 = pneg %p124
      $region50: #{discriminator_forward.13} parent=47 // pred_check_branch
        %4718 = sbr.rel (%p4716) target = $region52
      $region51: #{discriminator_forward.13} parent=47 // pred_region
        %p4719 = scmp.lt.s32.totalorder %s22, 1
        %s4720 = scalar_select %p4719, %s22, 1
        %p4721 = scmp.lt.s32.totalorder %s23, 0
        %s4722 = scalar_select %p4721, %s23, 0
        %s4723 = smul.addr %s4722, 4
        %s4724 = smul.addr %s4720, 4
        %s4725 = sadd.s32 %s4723, %s4724
        %s4726 = smul.addr %s4725, 4
        %s4727 = scalar_lea.vmem %s3, %s4726
      $region52: #{discriminator_forward.13} parent=47 // pred_fallthru
        _
      // Predicated region
      $region53: #{discriminator_forward.13} parent=47 // pred_check
        %p4728 = pneg %p150
      $region54: #{discriminator_forward.13} parent=47 // pred_check_branch
        %4730 = sbr.rel (%p4728) target = $region56
      $region55: #{discriminator_forward.13} parent=47 // pred_region
        %p4731 = scmp.lt.s32.totalorder %s22, 1
        %s4732 = scalar_select %p4731, %s22, 1
        %s4733 = smul.addr %s4732, 4
        %s4734 = smul.addr %s4733, 2
        %s4735 = scalar_lea.vmem %s4, %s4734
      $region56: #{discriminator_forward.13} parent=47 // pred_fallthru
        _
    $region48: #{discriminator_forward.13} parent=5 // pred_fallthru
      _
  $region6: #{discriminator_forward.13} parent=0 // loop_footer
    %s15 = sadd.s32 1, %s11
  $region7: #{discriminator_forward.13} parent=0 // loop_footer_branch
    %10 = sbr.rel target = $region3
  $region8: #{discriminator_forward.13} parent=0 // loop_exit
    _

// kernel: discriminator_forward.15
$region0: #{discriminator_forward.15}
  #allocation0 [shape = 'u32[]', space=smem, size = 0x4, offset = 0x4, fixed_abs, tag = 'smem constant byte address 0x4 - core index']
  #allocation1 [shape = 'u32[144,128]{1,0:T(1,128)}', space=vmem, size = 0x12000, scoped, tag = 'internal scratch']
  %s0 = inlined_call_operand.vmem [shape: bf16[8,4608], index: 0, kind: input, shape index: {}]
  %s1 = inlined_call_operand.vmem [shape: bf16[4608,128], index: 1, kind: input, shape index: {}]
  %s2 = inlined_call_operand.vmem [shape: f32[1,128], index: 2, kind: input, shape index: {}]
  %s3 = inlined_call_operand.vmem [shape: f32[8,128], index: 3, kind: output, shape index: {}]
  %s4 = sld [smem:[#allocation0]]
  $region22: #{discriminator_forward.15} parent=0
    _
  %s6 = ssub.s32 1, %s4
  %s7 = scalar_select 0, %s6, %s4
  // Predicated region
  $region2: #{discriminator_forward.15} parent=0 // pred_check
    _
  $region3: #{discriminator_forward.15} parent=0 // pred_check_branch
    %9 = sbr.rel (0) target = $region5
  $region4: #{discriminator_forward.15} parent=0 // pred_region
    _
  $region5: #{discriminator_forward.15} parent=0 // pred_fallthru
    _
  // Predicated region
  $region6: #{discriminator_forward.15} parent=0 // pred_check
    _
  $region7: #{discriminator_forward.15} parent=0 // pred_check_branch
    %11 = sbr.rel (0) target = $region9
  $region8: #{discriminator_forward.15} parent=0 // pred_region
    _
  $region9: #{discriminator_forward.15} parent=0 // pred_fallthru
    _
  // Predicated region
  $region10: #{discriminator_forward.15} parent=0 // pred_check
    _
  $region11: #{discriminator_forward.15} parent=0 // pred_check_branch
    %13 = sbr.rel (0) target = $region13
  $region12: #{discriminator_forward.15} parent=0 // pred_region
    _
  $region13: #{discriminator_forward.15} parent=0 // pred_fallthru
    _
  %v15 = vld [vmem:[%s0] sm:$0xff]
  %v16 = vld [vmem:[%s0 + $0x8] sm:$0xff]
  %v17 = vld [vmem:[%s0 + $0x10] sm:$0xff]
  %v18 = vld [vmem:[%s0 + $0x18] sm:$0xff]
  %v19 = vld [vmem:[%s0 + $0x20] sm:$0xff]
  %v20 = vld [vmem:[%s0 + $0x28] sm:$0xff]
  %v21 = vld [vmem:[%s0 + $0x30] sm:$0xff]
  %v22 = vld [vmem:[%s0 + $0x38] sm:$0xff]
  %v23 = vld [vmem:[%s0 + $0x40] sm:$0xff]
  %v24 = vld [vmem:[%s0 + $0x48] sm:$0xff]
  %v25 = vld [vmem:[%s0 + $0x50] sm:$0xff]
  %v26 = vld [vmem:[%s0 + $0x58] sm:$0xff]
  %v27 = vld [vmem:[%s0 + $0x60] sm:$0xff]
  %v28 = vld [vmem:[%s0 + $0x68] sm:$0xff]
  %v29 = vld [vmem:[%s0 + $0x70] sm:$0xff]
  %v30 = vld [vmem:[%s0 + $0x78] sm:$0xff]
  %v31 = vld [vmem:[%s0 + $0x80] sm:$0xff]
  %v32 = vld [vmem:[%s0 + $0x88] sm:$0xff]
  %v33 = vld [vmem:[%s1] sm:$0xf]
  %v34 = vld [vmem:[%s1 + $0x4] sm:$0xf]
  %v35 = vld [vmem:[%s1 + $0x8] sm:$0xf]
  %v36 = vld [vmem:[%s1 + $0xc] sm:$0xf]
  %v37 = vld [vmem:[%s1 + $0x10] sm:$0xf]
  %v38 = vld [vmem:[%s1 + $0x14] sm:$0xf]
  %v39 = vld [vmem:[%s1 + $0x18] sm:$0xf]
  %v40 = vld [vmem:[%s1 + $0x1c] sm:$0xf]
  %v41 = vld [vmem:[%s1 + $0x20] sm:$0xf]
  %v42 = vld [vmem:[%s1 + $0x24] sm:$0xf]
  %v43 = vld [vmem:[%s1 + $0x28] sm:$0xf]
  %v44 = vld [vmem:[%s1 + $0x2c] sm:$0xf]
  %v45 = vld [vmem:[%s1 + $0x30] sm:$0xf]
  %v46 = vld [vmem:[%s1 + $0x34] sm:$0xf]
  %v47 = vld [vmem:[%s1 + $0x38] sm:$0xf]
  %v48 = vld [vmem:[%s1 + $0x3c] sm:$0xf]
  %v49 = vld [vmem:[%s1 + $0x40] sm:$0xf]
  %v50 = vld [vmem:[%s1 + $0x44] sm:$0xf]
  %v51 = vld [vmem:[%s1 + $0x48] sm:$0xf]
  %v52 = vld [vmem:[%s1 + $0x4c] sm:$0xf]
  %v53 = vld [vmem:[%s1 + $0x50] sm:$0xf]
  %v54 = vld [vmem:[%s1 + $0x54] sm:$0xf]
  %v55 = vld [vmem:[%s1 + $0x58] sm:$0xf]
  %v56 = vld [vmem:[%s1 + $0x5c] sm:$0xf]
  %v57 = vld [vmem:[%s1 + $0x60] sm:$0xf]
  %v58 = vld [vmem:[%s1 + $0x64] sm:$0xf]
  %v59 = vld [vmem:[%s1 + $0x68] sm:$0xf]
  %v60 = vld [vmem:[%s1 + $0x6c] sm:$0xf]
  %v61 = vld [vmem:[%s1 + $0x70] sm:$0xf]
  %v62 = vld [vmem:[%s1 + $0x74] sm:$0xf]
  %v63 = vld [vmem:[%s1 + $0x78] sm:$0xf]
  %v64 = vld [vmem:[%s1 + $0x7c] sm:$0xf]
  %v65 = vld [vmem:[%s1 + $0x80] sm:$0xf]
  %v66 = vld [vmem:[%s1 + $0x84] sm:$0xf]
  %v67 = vld [vmem:[%s1 + $0x88] sm:$0xf]
  %v68 = vld [vmem:[%s1 + $0x8c] sm:$0xf]
  %v69 = vld [vmem:[%s1 + $0x90] sm:$0xf]
  %v70 = vld [vmem:[%s1 + $0x94] sm:$0xf]
  %v71 = vld [vmem:[%s1 + $0x98] sm:$0xf]
  %v72 = vld [vmem:[%s1 + $0x9c] sm:$0xf]
  %v73 = vld [vmem:[%s1 + $0xa0] sm:$0xf]
  %v74 = vld [vmem:[%s1 + $0xa4] sm:$0xf]
  %v75 = vld [vmem:[%s1 + $0xa8] sm:$0xf]
  %v76 = vld [vmem:[%s1 + $0xac] sm:$0xf]
  %v77 = vld [vmem:[%s1 + $0xb0] sm:$0xf]
  %v78 = vld [vmem:[%s1 + $0xb4] sm:$0xf]
  %v79 = vld [vmem:[%s1 + $0xb8] sm:$0xf]
  %v80 = vld [vmem:[%s1 + $0xbc] sm:$0xf]
  %v81 = vld [vmem:[%s1 + $0xc0] sm:$0xf]
  %v82 = vld [vmem:[%s1 + $0xc4] sm:$0xf]
  %v83 = vld [vmem:[%s1 + $0xc8] sm:$0xf]
  %v84 = vld [vmem:[%s1 + $0xcc] sm:$0xf]
  %v85 = vld [vmem:[%s1 + $0xd0] sm:$0xf]
  %v86 = vld [vmem:[%s1 + $0xd4] sm:$0xf]
  %v87 = vld [vmem:[%s1 + $0xd8] sm:$0xf]
  %v88 = vld [vmem:[%s1 + $0xdc] sm:$0xf]
  %v89 = vld [vmem:[%s1 + $0xe0] sm:$0xf]
  %v90 = vld [vmem:[%s1 + $0xe4] sm:$0xf]
  %v91 = vld [vmem:[%s1 + $0xe8] sm:$0xf]
  %v92 = vld [vmem:[%s1 + $0xec] sm:$0xf]
  %v93 = vld [vmem:[%s1 + $0xf0] sm:$0xf]
  %v94 = vld [vmem:[%s1 + $0xf4] sm:$0xf]
  %v95 = vld [vmem:[%s1 + $0xf8] sm:$0xf]
  %v96 = vld [vmem:[%s1 + $0xfc] sm:$0xf]
  %v97 = vld [vmem:[%s1 + $0x100] sm:$0xf]
  %v98 = vld [vmem:[%s1 + $0x104] sm:$0xf]
  %v99 = vld [vmem:[%s1 + $0x108] sm:$0xf]
  %v100 = vld [vmem:[%s1 + $0x10c] sm:$0xf]
  %v101 = vld [vmem:[%s1 + $0x110] sm:$0xf]
  %v102 = vld [vmem:[%s1 + $0x114] sm:$0xf]
  %v103 = vld [vmem:[%s1 + $0x118] sm:$0xf]
  %v104 = vld [vmem:[%s1 + $0x11c] sm:$0xf]
  %v105 = vld [vmem:[%s1 + $0x120] sm:$0xf]
  %v106 = vld [vmem:[%s1 + $0x124] sm:$0xf]
  %v107 = vld [vmem:[%s1 + $0x128] sm:$0xf]
  %v108 = vld [vmem:[%s1 + $0x12c] sm:$0xf]
  %v109 = vld [vmem:[%s1 + $0x130] sm:$0xf]
  %v110 = vld [vmem:[%s1 + $0x134] sm:$0xf]
  %v111 = vld [vmem:[%s1 + $0x138] sm:$0xf]
  %v112 = vld [vmem:[%s1 + $0x13c] sm:$0xf]
  %v113 = vld [vmem:[%s1 + $0x140] sm:$0xf]
  %v114 = vld [vmem:[%s1 + $0x144] sm:$0xf]
  %v115 = vld [vmem:[%s1 + $0x148] sm:$0xf]
  %v116 = vld [vmem:[%s1 + $0x14c] sm:$0xf]
  %v117 = vld [vmem:[%s1 + $0x150] sm:$0xf]
  %v118 = vld [vmem:[%s1 + $0x154] sm:$0xf]
  %v119 = vld [vmem:[%s1 + $0x158] sm:$0xf]
  %v120 = vld [vmem:[%s1 + $0x15c] sm:$0xf]
  %v121 = vld [vmem:[%s1 + $0x160] sm:$0xf]
  %v122 = vld [vmem:[%s1 + $0x164] sm:$0xf]
  %v123 = vld [vmem:[%s1 + $0x168] sm:$0xf]
  %v124 = vld [vmem:[%s1 + $0x16c] sm:$0xf]
  %v125 = vld [vmem:[%s1 + $0x170] sm:$0xf]
  %v126 = vld [vmem:[%s1 + $0x174] sm:$0xf]
  %v127 = vld [vmem:[%s1 + $0x178] sm:$0xf]
  %v128 = vld [vmem:[%s1 + $0x17c] sm:$0xf]
  %v129 = vld [vmem:[%s1 + $0x180] sm:$0xf]
  %v130 = vld [vmem:[%s1 + $0x184] sm:$0xf]
  %v131 = vld [vmem:[%s1 + $0x188] sm:$0xf]
  %v132 = vld [vmem:[%s1 + $0x18c] sm:$0xf]
  %v133 = vld [vmem:[%s1 + $0x190] sm:$0xf]
  %v134 = vld [vmem:[%s1 + $0x194] sm:$0xf]
  %v135 = vld [vmem:[%s1 + $0x198] sm:$0xf]
  %v136 = vld [vmem:[%s1 + $0x19c] sm:$0xf]
  %v137 = vld [vmem:[%s1 + $0x1a0] sm:$0xf]
  %v138 = vld [vmem:[%s1 + $0x1a4] sm:$0xf]
  %v139 = vld [vmem:[%s1 + $0x1a8] sm:$0xf]
  %v140 = vld [vmem:[%s1 + $0x1ac] sm:$0xf]
  %v141 = vld [vmem:[%s1 + $0x1b0] sm:$0xf]
  %v142 = vld [vmem:[%s1 + $0x1b4] sm:$0xf]
  %v143 = vld [vmem:[%s1 + $0x1b8] sm:$0xf]
  %v144 = vld [vmem:[%s1 + $0x1bc] sm:$0xf]
  %v145 = vld [vmem:[%s1 + $0x1c0] sm:$0xf]
  %v146 = vld [vmem:[%s1 + $0x1c4] sm:$0xf]
  %v147 = vld [vmem:[%s1 + $0x1c8] sm:$0xf]
  %v148 = vld [vmem:[%s1 + $0x1cc] sm:$0xf]
  %v149 = vld [vmem:[%s1 + $0x1d0] sm:$0xf]
  %v150 = vld [vmem:[%s1 + $0x1d4] sm:$0xf]
  %v151 = vld [vmem:[%s1 + $0x1d8] sm:$0xf]
  %v152 = vld [vmem:[%s1 + $0x1dc] sm:$0xf]
  %v153 = vld [vmem:[%s1 + $0x1e0] sm:$0xf]
  %v154 = vld [vmem:[%s1 + $0x1e4] sm:$0xf]
  %v155 = vld [vmem:[%s1 + $0x1e8] sm:$0xf]
  %v156 = vld [vmem:[%s1 + $0x1ec] sm:$0xf]
  %v157 = vld [vmem:[%s1 + $0x1f0] sm:$0xf]
  %v158 = vld [vmem:[%s1 + $0x1f4] sm:$0xf]
  %v159 = vld [vmem:[%s1 + $0x1f8] sm:$0xf]
  %v160 = vld [vmem:[%s1 + $0x1fc] sm:$0xf]
  %v161 = vld [vmem:[%s1 + $0x200] sm:$0xf]
  %v162 = vld [vmem:[%s1 + $0x204] sm:$0xf]
  %v163 = vld [vmem:[%s1 + $0x208] sm:$0xf]
  %v164 = vld [vmem:[%s1 + $0x20c] sm:$0xf]
  %v165 = vld [vmem:[%s1 + $0x210] sm:$0xf]
  %v166 = vld [vmem:[%s1 + $0x214] sm:$0xf]
  %v167 = vld [vmem:[%s1 + $0x218] sm:$0xf]
  %v168 = vld [vmem:[%s1 + $0x21c] sm:$0xf]
  %v169 = vld [vmem:[%s1 + $0x220] sm:$0xf]
  %v170 = vld [vmem:[%s1 + $0x224] sm:$0xf]
  %v171 = vld [vmem:[%s1 + $0x228] sm:$0xf]
  %v172 = vld [vmem:[%s1 + $0x22c] sm:$0xf]
  %v173 = vld [vmem:[%s1 + $0x230] sm:$0xf]
  %v174 = vld [vmem:[%s1 + $0x234] sm:$0xf]
  %v175 = vld [vmem:[%s1 + $0x238] sm:$0xf]
  %v176 = vld [vmem:[%s1 + $0x23c] sm:$0xf]
  %v177 = vld [vmem:[%s1 + $0x240] sm:$0xf]
  %v178 = vld [vmem:[%s1 + $0x244] sm:$0xf]
  %v179 = vld [vmem:[%s1 + $0x248] sm:$0xf]
  %v180 = vld [vmem:[%s1 + $0x24c] sm:$0xf]
  %v181 = vld [vmem:[%s1 + $0x250] sm:$0xf]
  %v182 = vld [vmem:[%s1 + $0x254] sm:$0xf]
  %v183 = vld [vmem:[%s1 + $0x258] sm:$0xf]
  %v184 = vld [vmem:[%s1 + $0x25c] sm:$0xf]
  %v185 = vld [vmem:[%s1 + $0x260] sm:$0xf]
  %v186 = vld [vmem:[%s1 + $0x264] sm:$0xf]
  %v187 = vld [vmem:[%s1 + $0x268] sm:$0xf]
  %v188 = vld [vmem:[%s1 + $0x26c] sm:$0xf]
  %v189 = vld [vmem:[%s1 + $0x270] sm:$0xf]
  %v190 = vld [vmem:[%s1 + $0x274] sm:$0xf]
  %v191 = vld [vmem:[%s1 + $0x278] sm:$0xf]
  %v192 = vld [vmem:[%s1 + $0x27c] sm:$0xf]
  %v193 = vld [vmem:[%s1 + $0x280] sm:$0xf]
  %v194 = vld [vmem:[%s1 + $0x284] sm:$0xf]
  %v195 = vld [vmem:[%s1 + $0x288] sm:$0xf]
  %v196 = vld [vmem:[%s1 + $0x28c] sm:$0xf]
  %v197 = vld [vmem:[%s1 + $0x290] sm:$0xf]
  %v198 = vld [vmem:[%s1 + $0x294] sm:$0xf]
  %v199 = vld [vmem:[%s1 + $0x298] sm:$0xf]
  %v200 = vld [vmem:[%s1 + $0x29c] sm:$0xf]
  %v201 = vld [vmem:[%s1 + $0x2a0] sm:$0xf]
  %v202 = vld [vmem:[%s1 + $0x2a4] sm:$0xf]
  %v203 = vld [vmem:[%s1 + $0x2a8] sm:$0xf]
  %v204 = vld [vmem:[%s1 + $0x2ac] sm:$0xf]
  %v205 = vld [vmem:[%s1 + $0x2b0] sm:$0xf]
  %v206 = vld [vmem:[%s1 + $0x2b4] sm:$0xf]
  %v207 = vld [vmem:[%s1 + $0x2b8] sm:$0xf]
  %v208 = vld [vmem:[%s1 + $0x2bc] sm:$0xf]
  %v209 = vld [vmem:[%s1 + $0x2c0] sm:$0xf]
  %v210 = vld [vmem:[%s1 + $0x2c4] sm:$0xf]
  %v211 = vld [vmem:[%s1 + $0x2c8] sm:$0xf]
  %v212 = vld [vmem:[%s1 + $0x2cc] sm:$0xf]
  %v213 = vld [vmem:[%s1 + $0x2d0] sm:$0xf]
  %v214 = vld [vmem:[%s1 + $0x2d4] sm:$0xf]
  %v215 = vld [vmem:[%s1 + $0x2d8] sm:$0xf]
  %v216 = vld [vmem:[%s1 + $0x2dc] sm:$0xf]
  %v217 = vld [vmem:[%s1 + $0x2e0] sm:$0xf]
  %v218 = vld [vmem:[%s1 + $0x2e4] sm:$0xf]
  %v219 = vld [vmem:[%s1 + $0x2e8] sm:$0xf]
  %v220 = vld [vmem:[%s1 + $0x2ec] sm:$0xf]
  %v221 = vld [vmem:[%s1 + $0x2f0] sm:$0xf]
  %v222 = vld [vmem:[%s1 + $0x2f4] sm:$0xf]
  %v223 = vld [vmem:[%s1 + $0x2f8] sm:$0xf]
  %v224 = vld [vmem:[%s1 + $0x2fc] sm:$0xf]
  %v225 = vld [vmem:[%s1 + $0x300] sm:$0xf]
  %v226 = vld [vmem:[%s1 + $0x304] sm:$0xf]
  %v227 = vld [vmem:[%s1 + $0x308] sm:$0xf]
  %v228 = vld [vmem:[%s1 + $0x30c] sm:$0xf]
  %v229 = vld [vmem:[%s1 + $0x310] sm:$0xf]
  %v230 = vld [vmem:[%s1 + $0x314] sm:$0xf]
  %v231 = vld [vmem:[%s1 + $0x318] sm:$0xf]
  %v232 = vld [vmem:[%s1 + $0x31c] sm:$0xf]
  %v233 = vld [vmem:[%s1 + $0x320] sm:$0xf]
  %v234 = vld [vmem:[%s1 + $0x324] sm:$0xf]
  %v235 = vld [vmem:[%s1 + $0x328] sm:$0xf]
  %v236 = vld [vmem:[%s1 + $0x32c] sm:$0xf]
  %v237 = vld [vmem:[%s1 + $0x330] sm:$0xf]
  %v238 = vld [vmem:[%s1 + $0x334] sm:$0xf]
  %v239 = vld [vmem:[%s1 + $0x338] sm:$0xf]
  %v240 = vld [vmem:[%s1 + $0x33c] sm:$0xf]
  %v241 = vld [vmem:[%s1 + $0x340] sm:$0xf]
  %v242 = vld [vmem:[%s1 + $0x344] sm:$0xf]
  %v243 = vld [vmem:[%s1 + $0x348] sm:$0xf]
  %v244 = vld [vmem:[%s1 + $0x34c] sm:$0xf]
  %v245 = vld [vmem:[%s1 + $0x350] sm:$0xf]
  %v246 = vld [vmem:[%s1 + $0x354] sm:$0xf]
  %v247 = vld [vmem:[%s1 + $0x358] sm:$0xf]
  %v248 = vld [vmem:[%s1 + $0x35c] sm:$0xf]
  %v249 = vld [vmem:[%s1 + $0x360] sm:$0xf]
  %v250 = vld [vmem:[%s1 + $0x364] sm:$0xf]
  %v251 = vld [vmem:[%s1 + $0x368] sm:$0xf]
  %v252 = vld [vmem:[%s1 + $0x36c] sm:$0xf]
  %v253 = vld [vmem:[%s1 + $0x370] sm:$0xf]
  %v254 = vld [vmem:[%s1 + $0x374] sm:$0xf]
  %v255 = vld [vmem:[%s1 + $0x378] sm:$0xf]
  %v256 = vld [vmem:[%s1 + $0x37c] sm:$0xf]
  %v257 = vld [vmem:[%s1 + $0x380] sm:$0xf]
  %v258 = vld [vmem:[%s1 + $0x384] sm:$0xf]
  %v259 = vld [vmem:[%s1 + $0x388] sm:$0xf]
  %v260 = vld [vmem:[%s1 + $0x38c] sm:$0xf]
  %v261 = vld [vmem:[%s1 + $0x390] sm:$0xf]
  %v262 = vld [vmem:[%s1 + $0x394] sm:$0xf]
  %v263 = vld [vmem:[%s1 + $0x398] sm:$0xf]
  %v264 = vld [vmem:[%s1 + $0x39c] sm:$0xf]
  %v265 = vld [vmem:[%s1 + $0x3a0] sm:$0xf]
  %v266 = vld [vmem:[%s1 + $0x3a4] sm:$0xf]
  %v267 = vld [vmem:[%s1 + $0x3a8] sm:$0xf]
  %v268 = vld [vmem:[%s1 + $0x3ac] sm:$0xf]
  %v269 = vld [vmem:[%s1 + $0x3b0] sm:$0xf]
  %v270 = vld [vmem:[%s1 + $0x3b4] sm:$0xf]
  %v271 = vld [vmem:[%s1 + $0x3b8] sm:$0xf]
  %v272 = vld [vmem:[%s1 + $0x3bc] sm:$0xf]
  %v273 = vld [vmem:[%s1 + $0x3c0] sm:$0xf]
  %v274 = vld [vmem:[%s1 + $0x3c4] sm:$0xf]
  %v275 = vld [vmem:[%s1 + $0x3c8] sm:$0xf]
  %v276 = vld [vmem:[%s1 + $0x3cc] sm:$0xf]
  %v277 = vld [vmem:[%s1 + $0x3d0] sm:$0xf]
  %v278 = vld [vmem:[%s1 + $0x3d4] sm:$0xf]
  %v279 = vld [vmem:[%s1 + $0x3d8] sm:$0xf]
  %v280 = vld [vmem:[%s1 + $0x3dc] sm:$0xf]
  %v281 = vld [vmem:[%s1 + $0x3e0] sm:$0xf]
  %v282 = vld [vmem:[%s1 + $0x3e4] sm:$0xf]
  %v283 = vld [vmem:[%s1 + $0x3e8] sm:$0xf]
  %v284 = vld [vmem:[%s1 + $0x3ec] sm:$0xf]
  %v285 = vld [vmem:[%s1 + $0x3f0] sm:$0xf]
  %v286 = vld [vmem:[%s1 + $0x3f4] sm:$0xf]
  %v287 = vld [vmem:[%s1 + $0x3f8] sm:$0xf]
  %v288 = vld [vmem:[%s1 + $0x3fc] sm:$0xf]
  %v289 = vld [vmem:[%s1 + $0x400] sm:$0xf]
  %v290 = vld [vmem:[%s1 + $0x404] sm:$0xf]
  %v291 = vld [vmem:[%s1 + $0x408] sm:$0xf]
  %v292 = vld [vmem:[%s1 + $0x40c] sm:$0xf]
  %v293 = vld [vmem:[%s1 + $0x410] sm:$0xf]
  %v294 = vld [vmem:[%s1 + $0x414] sm:$0xf]
  %v295 = vld [vmem:[%s1 + $0x418] sm:$0xf]
  %v296 = vld [vmem:[%s1 + $0x41c] sm:$0xf]
  %v297 = vld [vmem:[%s1 + $0x420] sm:$0xf]
  %v298 = vld [vmem:[%s1 + $0x424] sm:$0xf]
  %v299 = vld [vmem:[%s1 + $0x428] sm:$0xf]
  %v300 = vld [vmem:[%s1 + $0x42c] sm:$0xf]
  %v301 = vld [vmem:[%s1 + $0x430] sm:$0xf]
  %v302 = vld [vmem:[%s1 + $0x434] sm:$0xf]
  %v303 = vld [vmem:[%s1 + $0x438] sm:$0xf]
  %v304 = vld [vmem:[%s1 + $0x43c] sm:$0xf]
  %v305 = vld [vmem:[%s1 + $0x440] sm:$0xf]
  %v306 = vld [vmem:[%s1 + $0x444] sm:$0xf]
  %v307 = vld [vmem:[%s1 + $0x448] sm:$0xf]
  %v308 = vld [vmem:[%s1 + $0x44c] sm:$0xf]
  %v309 = vld [vmem:[%s1 + $0x450] sm:$0xf]
  %v310 = vld [vmem:[%s1 + $0x454] sm:$0xf]
  %v311 = vld [vmem:[%s1 + $0x458] sm:$0xf]
  %v312 = vld [vmem:[%s1 + $0x45c] sm:$0xf]
  %v313 = vld [vmem:[%s1 + $0x460] sm:$0xf]
  %v314 = vld [vmem:[%s1 + $0x464] sm:$0xf]
  %v315 = vld [vmem:[%s1 + $0x468] sm:$0xf]
  %v316 = vld [vmem:[%s1 + $0x46c] sm:$0xf]
  %v317 = vld [vmem:[%s1 + $0x470] sm:$0xf]
  %v318 = vld [vmem:[%s1 + $0x474] sm:$0xf]
  %v319 = vld [vmem:[%s1 + $0x478] sm:$0xf]
  %v320 = vld [vmem:[%s1 + $0x47c] sm:$0xf]
  %v321 = vld [vmem:[%s1 + $0x480] sm:$0xf]
  %v322 = vld [vmem:[%s1 + $0x484] sm:$0xf]
  %v323 = vld [vmem:[%s1 + $0x488] sm:$0xf]
  %v324 = vld [vmem:[%s1 + $0x48c] sm:$0xf]
  %v325 = vld [vmem:[%s1 + $0x490] sm:$0xf]
  %v326 = vld [vmem:[%s1 + $0x494] sm:$0xf]
  %v327 = vld [vmem:[%s1 + $0x498] sm:$0xf]
  %v328 = vld [vmem:[%s1 + $0x49c] sm:$0xf]
  %v329 = vld [vmem:[%s1 + $0x4a0] sm:$0xf]
  %v330 = vld [vmem:[%s1 + $0x4a4] sm:$0xf]
  %v331 = vld [vmem:[%s1 + $0x4a8] sm:$0xf]
  %v332 = vld [vmem:[%s1 + $0x4ac] sm:$0xf]
  %v333 = vld [vmem:[%s1 + $0x4b0] sm:$0xf]
  %v334 = vld [vmem:[%s1 + $0x4b4] sm:$0xf]
  %v335 = vld [vmem:[%s1 + $0x4b8] sm:$0xf]
  %v336 = vld [vmem:[%s1 + $0x4bc] sm:$0xf]
  %v337 = vld [vmem:[%s1 + $0x4c0] sm:$0xf]
  %v338 = vld [vmem:[%s1 + $0x4c4] sm:$0xf]
  %v339 = vld [vmem:[%s1 + $0x4c8] sm:$0xf]
  %v340 = vld [vmem:[%s1 + $0x4cc] sm:$0xf]
  %v341 = vld [vmem:[%s1 + $0x4d0] sm:$0xf]
  %v342 = vld [vmem:[%s1 + $0x4d4] sm:$0xf]
  %v343 = vld [vmem:[%s1 + $0x4d8] sm:$0xf]
  %v344 = vld [vmem:[%s1 + $0x4dc] sm:$0xf]
  %v345 = vld [vmem:[%s1 + $0x4e0] sm:$0xf]
  %v346 = vld [vmem:[%s1 + $0x4e4] sm:$0xf]
  %v347 = vld [vmem:[%s1 + $0x4e8] sm:$0xf]
  %v348 = vld [vmem:[%s1 + $0x4ec] sm:$0xf]
  %v349 = vld [vmem:[%s1 + $0x4f0] sm:$0xf]
  %v350 = vld [vmem:[%s1 + $0x4f4] sm:$0xf]
  %v351 = vld [vmem:[%s1 + $0x4f8] sm:$0xf]
  %v352 = vld [vmem:[%s1 + $0x4fc] sm:$0xf]
  %v353 = vld [vmem:[%s1 + $0x500] sm:$0xf]
  %v354 = vld [vmem:[%s1 + $0x504] sm:$0xf]
  %v355 = vld [vmem:[%s1 + $0x508] sm:$0xf]
  %v356 = vld [vmem:[%s1 + $0x50c] sm:$0xf]
  %v357 = vld [vmem:[%s1 + $0x510] sm:$0xf]
  %v358 = vld [vmem:[%s1 + $0x514] sm:$0xf]
  %v359 = vld [vmem:[%s1 + $0x518] sm:$0xf]
  %v360 = vld [vmem:[%s1 + $0x51c] sm:$0xf]
  %v361 = vld [vmem:[%s1 + $0x520] sm:$0xf]
  %v362 = vld [vmem:[%s1 + $0x524] sm:$0xf]
  %v363 = vld [vmem:[%s1 + $0x528] sm:$0xf]
  %v364 = vld [vmem:[%s1 + $0x52c] sm:$0xf]
  %v365 = vld [vmem:[%s1 + $0x530] sm:$0xf]
  %v366 = vld [vmem:[%s1 + $0x534] sm:$0xf]
  %v367 = vld [vmem:[%s1 + $0x538] sm:$0xf]
  %v368 = vld [vmem:[%s1 + $0x53c] sm:$0xf]
  %v369 = vld [vmem:[%s1 + $0x540] sm:$0xf]
  %v370 = vld [vmem:[%s1 + $0x544] sm:$0xf]
  %v371 = vld [vmem:[%s1 + $0x548] sm:$0xf]
  %v372 = vld [vmem:[%s1 + $0x54c] sm:$0xf]
  %v373 = vld [vmem:[%s1 + $0x550] sm:$0xf]
  %v374 = vld [vmem:[%s1 + $0x554] sm:$0xf]
  %v375 = vld [vmem:[%s1 + $0x558] sm:$0xf]
  %v376 = vld [vmem:[%s1 + $0x55c] sm:$0xf]
  %v377 = vld [vmem:[%s1 + $0x560] sm:$0xf]
  %v378 = vld [vmem:[%s1 + $0x564] sm:$0xf]
  %v379 = vld [vmem:[%s1 + $0x568] sm:$0xf]
  %v380 = vld [vmem:[%s1 + $0x56c] sm:$0xf]
  %v381 = vld [vmem:[%s1 + $0x570] sm:$0xf]
  %v382 = vld [vmem:[%s1 + $0x574] sm:$0xf]
  %v383 = vld [vmem:[%s1 + $0x578] sm:$0xf]
  %v384 = vld [vmem:[%s1 + $0x57c] sm:$0xf]
  %v385 = vld [vmem:[%s1 + $0x580] sm:$0xf]
  %v386 = vld [vmem:[%s1 + $0x584] sm:$0xf]
  %v387 = vld [vmem:[%s1 + $0x588] sm:$0xf]
  %v388 = vld [vmem:[%s1 + $0x58c] sm:$0xf]
  %v389 = vld [vmem:[%s1 + $0x590] sm:$0xf]
  %v390 = vld [vmem:[%s1 + $0x594] sm:$0xf]
  %v391 = vld [vmem:[%s1 + $0x598] sm:$0xf]
  %v392 = vld [vmem:[%s1 + $0x59c] sm:$0xf]
  %v393 = vld [vmem:[%s1 + $0x5a0] sm:$0xf]
  %v394 = vld [vmem:[%s1 + $0x5a4] sm:$0xf]
  %v395 = vld [vmem:[%s1 + $0x5a8] sm:$0xf]
  %v396 = vld [vmem:[%s1 + $0x5ac] sm:$0xf]
  %v397 = vld [vmem:[%s1 + $0x5b0] sm:$0xf]
  %v398 = vld [vmem:[%s1 + $0x5b4] sm:$0xf]
  %v399 = vld [vmem:[%s1 + $0x5b8] sm:$0xf]
  %v400 = vld [vmem:[%s1 + $0x5bc] sm:$0xf]
  %v401 = vld [vmem:[%s1 + $0x5c0] sm:$0xf]
  %v402 = vld [vmem:[%s1 + $0x5c4] sm:$0xf]
  %v403 = vld [vmem:[%s1 + $0x5c8] sm:$0xf]
  %v404 = vld [vmem:[%s1 + $0x5cc] sm:$0xf]
  %v405 = vld [vmem:[%s1 + $0x5d0] sm:$0xf]
  %v406 = vld [vmem:[%s1 + $0x5d4] sm:$0xf]
  %v407 = vld [vmem:[%s1 + $0x5d8] sm:$0xf]
  %v408 = vld [vmem:[%s1 + $0x5dc] sm:$0xf]
  %v409 = vld [vmem:[%s1 + $0x5e0] sm:$0xf]
  %v410 = vld [vmem:[%s1 + $0x5e4] sm:$0xf]
  %v411 = vld [vmem:[%s1 + $0x5e8] sm:$0xf]
  %v412 = vld [vmem:[%s1 + $0x5ec] sm:$0xf]
  %v413 = vld [vmem:[%s1 + $0x5f0] sm:$0xf]
  %v414 = vld [vmem:[%s1 + $0x5f4] sm:$0xf]
  %v415 = vld [vmem:[%s1 + $0x5f8] sm:$0xf]
  %v416 = vld [vmem:[%s1 + $0x5fc] sm:$0xf]
  %v417 = vld [vmem:[%s1 + $0x600] sm:$0xf]
  %v418 = vld [vmem:[%s1 + $0x604] sm:$0xf]
  %v419 = vld [vmem:[%s1 + $0x608] sm:$0xf]
  %v420 = vld [vmem:[%s1 + $0x60c] sm:$0xf]
  %v421 = vld [vmem:[%s1 + $0x610] sm:$0xf]
  %v422 = vld [vmem:[%s1 + $0x614] sm:$0xf]
  %v423 = vld [vmem:[%s1 + $0x618] sm:$0xf]
  %v424 = vld [vmem:[%s1 + $0x61c] sm:$0xf]
  %v425 = vld [vmem:[%s1 + $0x620] sm:$0xf]
  %v426 = vld [vmem:[%s1 + $0x624] sm:$0xf]
  %v427 = vld [vmem:[%s1 + $0x628] sm:$0xf]
  %v428 = vld [vmem:[%s1 + $0x62c] sm:$0xf]
  %v429 = vld [vmem:[%s1 + $0x630] sm:$0xf]
  %v430 = vld [vmem:[%s1 + $0x634] sm:$0xf]
  %v431 = vld [vmem:[%s1 + $0x638] sm:$0xf]
  %v432 = vld [vmem:[%s1 + $0x63c] sm:$0xf]
  %v433 = vld [vmem:[%s1 + $0x640] sm:$0xf]
  %v434 = vld [vmem:[%s1 + $0x644] sm:$0xf]
  %v435 = vld [vmem:[%s1 + $0x648] sm:$0xf]
  %v436 = vld [vmem:[%s1 + $0x64c] sm:$0xf]
  %v437 = vld [vmem:[%s1 + $0x650] sm:$0xf]
  %v438 = vld [vmem:[%s1 + $0x654] sm:$0xf]
  %v439 = vld [vmem:[%s1 + $0x658] sm:$0xf]
  %v440 = vld [vmem:[%s1 + $0x65c] sm:$0xf]
  %v441 = vld [vmem:[%s1 + $0x660] sm:$0xf]
  %v442 = vld [vmem:[%s1 + $0x664] sm:$0xf]
  %v443 = vld [vmem:[%s1 + $0x668] sm:$0xf]
  %v444 = vld [vmem:[%s1 + $0x66c] sm:$0xf]
  %v445 = vld [vmem:[%s1 + $0x670] sm:$0xf]
  %v446 = vld [vmem:[%s1 + $0x674] sm:$0xf]
  %v447 = vld [vmem:[%s1 + $0x678] sm:$0xf]
  %v448 = vld [vmem:[%s1 + $0x67c] sm:$0xf]
  %v449 = vld [vmem:[%s1 + $0x680] sm:$0xf]
  %v450 = vld [vmem:[%s1 + $0x684] sm:$0xf]
  %v451 = vld [vmem:[%s1 + $0x688] sm:$0xf]
  %v452 = vld [vmem:[%s1 + $0x68c] sm:$0xf]
  %v453 = vld [vmem:[%s1 + $0x690] sm:$0xf]
  %v454 = vld [vmem:[%s1 + $0x694] sm:$0xf]
  %v455 = vld [vmem:[%s1 + $0x698] sm:$0xf]
  %v456 = vld [vmem:[%s1 + $0x69c] sm:$0xf]
  %v457 = vld [vmem:[%s1 + $0x6a0] sm:$0xf]
  %v458 = vld [vmem:[%s1 + $0x6a4] sm:$0xf]
  %v459 = vld [vmem:[%s1 + $0x6a8] sm:$0xf]
  %v460 = vld [vmem:[%s1 + $0x6ac] sm:$0xf]
  %v461 = vld [vmem:[%s1 + $0x6b0] sm:$0xf]
  %v462 = vld [vmem:[%s1 + $0x6b4] sm:$0xf]
  %v463 = vld [vmem:[%s1 + $0x6b8] sm:$0xf]
  %v464 = vld [vmem:[%s1 + $0x6bc] sm:$0xf]
  %v465 = vld [vmem:[%s1 + $0x6c0] sm:$0xf]
  %v466 = vld [vmem:[%s1 + $0x6c4] sm:$0xf]
  %v467 = vld [vmem:[%s1 + $0x6c8] sm:$0xf]
  %v468 = vld [vmem:[%s1 + $0x6cc] sm:$0xf]
  %v469 = vld [vmem:[%s1 + $0x6d0] sm:$0xf]
  %v470 = vld [vmem:[%s1 + $0x6d4] sm:$0xf]
  %v471 = vld [vmem:[%s1 + $0x6d8] sm:$0xf]
  %v472 = vld [vmem:[%s1 + $0x6dc] sm:$0xf]
  %v473 = vld [vmem:[%s1 + $0x6e0] sm:$0xf]
  %v474 = vld [vmem:[%s1 + $0x6e4] sm:$0xf]
  %v475 = vld [vmem:[%s1 + $0x6e8] sm:$0xf]
  %v476 = vld [vmem:[%s1 + $0x6ec] sm:$0xf]
  %v477 = vld [vmem:[%s1 + $0x6f0] sm:$0xf]
  %v478 = vld [vmem:[%s1 + $0x6f4] sm:$0xf]
  %v479 = vld [vmem:[%s1 + $0x6f8] sm:$0xf]
  %v480 = vld [vmem:[%s1 + $0x6fc] sm:$0xf]
  %v481 = vld [vmem:[%s1 + $0x700] sm:$0xf]
  %v482 = vld [vmem:[%s1 + $0x704] sm:$0xf]
  %v483 = vld [vmem:[%s1 + $0x708] sm:$0xf]
  %v484 = vld [vmem:[%s1 + $0x70c] sm:$0xf]
  %v485 = vld [vmem:[%s1 + $0x710] sm:$0xf]
  %v486 = vld [vmem:[%s1 + $0x714] sm:$0xf]
  %v487 = vld [vmem:[%s1 + $0x718] sm:$0xf]
  %v488 = vld [vmem:[%s1 + $0x71c] sm:$0xf]
  %v489 = vld [vmem:[%s1 + $0x720] sm:$0xf]
  %v490 = vld [vmem:[%s1 + $0x724] sm:$0xf]
  %v491 = vld [vmem:[%s1 + $0x728] sm:$0xf]
  %v492 = vld [vmem:[%s1 + $0x72c] sm:$0xf]
  %v493 = vld [vmem:[%s1 + $0x730] sm:$0xf]
  %v494 = vld [vmem:[%s1 + $0x734] sm:$0xf]
  %v495 = vld [vmem:[%s1 + $0x738] sm:$0xf]
  %v496 = vld [vmem:[%s1 + $0x73c] sm:$0xf]
  %v497 = vld [vmem:[%s1 + $0x740] sm:$0xf]
  %v498 = vld [vmem:[%s1 + $0x744] sm:$0xf]
  %v499 = vld [vmem:[%s1 + $0x748] sm:$0xf]
  %v500 = vld [vmem:[%s1 + $0x74c] sm:$0xf]
  %v501 = vld [vmem:[%s1 + $0x750] sm:$0xf]
  %v502 = vld [vmem:[%s1 + $0x754] sm:$0xf]
  %v503 = vld [vmem:[%s1 + $0x758] sm:$0xf]
  %v504 = vld [vmem:[%s1 + $0x75c] sm:$0xf]
  %v505 = vld [vmem:[%s1 + $0x760] sm:$0xf]
  %v506 = vld [vmem:[%s1 + $0x764] sm:$0xf]
  %v507 = vld [vmem:[%s1 + $0x768] sm:$0xf]
  %v508 = vld [vmem:[%s1 + $0x76c] sm:$0xf]
  %v509 = vld [vmem:[%s1 + $0x770] sm:$0xf]
  %v510 = vld [vmem:[%s1 + $0x774] sm:$0xf]
  %v511 = vld [vmem:[%s1 + $0x778] sm:$0xf]
  %v512 = vld [vmem:[%s1 + $0x77c] sm:$0xf]
  %v513 = vld [vmem:[%s1 + $0x780] sm:$0xf]
  %v514 = vld [vmem:[%s1 + $0x784] sm:$0xf]
  %v515 = vld [vmem:[%s1 + $0x788] sm:$0xf]
  %v516 = vld [vmem:[%s1 + $0x78c] sm:$0xf]
  %v517 = vld [vmem:[%s1 + $0x790] sm:$0xf]
  %v518 = vld [vmem:[%s1 + $0x794] sm:$0xf]
  %v519 = vld [vmem:[%s1 + $0x798] sm:$0xf]
  %v520 = vld [vmem:[%s1 + $0x79c] sm:$0xf]
  %v521 = vld [vmem:[%s1 + $0x7a0] sm:$0xf]
  %v522 = vld [vmem:[%s1 + $0x7a4] sm:$0xf]
  %v523 = vld [vmem:[%s1 + $0x7a8] sm:$0xf]
  %v524 = vld [vmem:[%s1 + $0x7ac] sm:$0xf]
  %v525 = vld [vmem:[%s1 + $0x7b0] sm:$0xf]
  %v526 = vld [vmem:[%s1 + $0x7b4] sm:$0xf]
  %v527 = vld [vmem:[%s1 + $0x7b8] sm:$0xf]
  %v528 = vld [vmem:[%s1 + $0x7bc] sm:$0xf]
  %v529 = vld [vmem:[%s1 + $0x7c0] sm:$0xf]
  %v530 = vld [vmem:[%s1 + $0x7c4] sm:$0xf]
  %v531 = vld [vmem:[%s1 + $0x7c8] sm:$0xf]
  %v532 = vld [vmem:[%s1 + $0x7cc] sm:$0xf]
  %v533 = vld [vmem:[%s1 + $0x7d0] sm:$0xf]
  %v534 = vld [vmem:[%s1 + $0x7d4] sm:$0xf]
  %v535 = vld [vmem:[%s1 + $0x7d8] sm:$0xf]
  %v536 = vld [vmem:[%s1 + $0x7dc] sm:$0xf]
  %v537 = vld [vmem:[%s1 + $0x7e0] sm:$0xf]
  %v538 = vld [vmem:[%s1 + $0x7e4] sm:$0xf]
  %v539 = vld [vmem:[%s1 + $0x7e8] sm:$0xf]
  %v540 = vld [vmem:[%s1 + $0x7ec] sm:$0xf]
  %v541 = vld [vmem:[%s1 + $0x7f0] sm:$0xf]
  %v542 = vld [vmem:[%s1 + $0x7f4] sm:$0xf]
  %v543 = vld [vmem:[%s1 + $0x7f8] sm:$0xf]
  %v544 = vld [vmem:[%s1 + $0x7fc] sm:$0xf]
  %v545 = vld [vmem:[%s1 + $0x800] sm:$0xf]
  %v546 = vld [vmem:[%s1 + $0x804] sm:$0xf]
  %v547 = vld [vmem:[%s1 + $0x808] sm:$0xf]
  %v548 = vld [vmem:[%s1 + $0x80c] sm:$0xf]
  %v549 = vld [vmem:[%s1 + $0x810] sm:$0xf]
  %v550 = vld [vmem:[%s1 + $0x814] sm:$0xf]
  %v551 = vld [vmem:[%s1 + $0x818] sm:$0xf]
  %v552 = vld [vmem:[%s1 + $0x81c] sm:$0xf]
  %v553 = vld [vmem:[%s1 + $0x820] sm:$0xf]
  %v554 = vld [vmem:[%s1 + $0x824] sm:$0xf]
  %v555 = vld [vmem:[%s1 + $0x828] sm:$0xf]
  %v556 = vld [vmem:[%s1 + $0x82c] sm:$0xf]
  %v557 = vld [vmem:[%s1 + $0x830] sm:$0xf]
  %v558 = vld [vmem:[%s1 + $0x834] sm:$0xf]
  %v559 = vld [vmem:[%s1 + $0x838] sm:$0xf]
  %v560 = vld [vmem:[%s1 + $0x83c] sm:$0xf]
  %v561 = vld [vmem:[%s1 + $0x840] sm:$0xf]
  %v562 = vld [vmem:[%s1 + $0x844] sm:$0xf]
  %v563 = vld [vmem:[%s1 + $0x848] sm:$0xf]
  %v564 = vld [vmem:[%s1 + $0x84c] sm:$0xf]
  %v565 = vld [vmem:[%s1 + $0x850] sm:$0xf]
  %v566 = vld [vmem:[%s1 + $0x854] sm:$0xf]
  %v567 = vld [vmem:[%s1 + $0x858] sm:$0xf]
  %v568 = vld [vmem:[%s1 + $0x85c] sm:$0xf]
  %v569 = vld [vmem:[%s1 + $0x860] sm:$0xf]
  %v570 = vld [vmem:[%s1 + $0x864] sm:$0xf]
  %v571 = vld [vmem:[%s1 + $0x868] sm:$0xf]
  %v572 = vld [vmem:[%s1 + $0x86c] sm:$0xf]
  %v573 = vld [vmem:[%s1 + $0x870] sm:$0xf]
  %v574 = vld [vmem:[%s1 + $0x874] sm:$0xf]
  %v575 = vld [vmem:[%s1 + $0x878] sm:$0xf]
  %v576 = vld [vmem:[%s1 + $0x87c] sm:$0xf]
  %v577 = vld [vmem:[%s1 + $0x880] sm:$0xf]
  %v578 = vld [vmem:[%s1 + $0x884] sm:$0xf]
  %v579 = vld [vmem:[%s1 + $0x888] sm:$0xf]
  %v580 = vld [vmem:[%s1 + $0x88c] sm:$0xf]
  %v581 = vld [vmem:[%s1 + $0x890] sm:$0xf]
  %v582 = vld [vmem:[%s1 + $0x894] sm:$0xf]
  %v583 = vld [vmem:[%s1 + $0x898] sm:$0xf]
  %v584 = vld [vmem:[%s1 + $0x89c] sm:$0xf]
  %v585 = vld [vmem:[%s1 + $0x8a0] sm:$0xf]
  %v586 = vld [vmem:[%s1 + $0x8a4] sm:$0xf]
  %v587 = vld [vmem:[%s1 + $0x8a8] sm:$0xf]
  %v588 = vld [vmem:[%s1 + $0x8ac] sm:$0xf]
  %v589 = vld [vmem:[%s1 + $0x8b0] sm:$0xf]
  %v590 = vld [vmem:[%s1 + $0x8b4] sm:$0xf]
  %v591 = vld [vmem:[%s1 + $0x8b8] sm:$0xf]
  %v592 = vld [vmem:[%s1 + $0x8bc] sm:$0xf]
  %v593 = vld [vmem:[%s1 + $0x8c0] sm:$0xf]
  %v594 = vld [vmem:[%s1 + $0x8c4] sm:$0xf]
  %v595 = vld [vmem:[%s1 + $0x8c8] sm:$0xf]
  %v596 = vld [vmem:[%s1 + $0x8cc] sm:$0xf]
  %v597 = vld [vmem:[%s1 + $0x8d0] sm:$0xf]
  %v598 = vld [vmem:[%s1 + $0x8d4] sm:$0xf]
  %v599 = vld [vmem:[%s1 + $0x8d8] sm:$0xf]
  %v600 = vld [vmem:[%s1 + $0x8dc] sm:$0xf]
  %v601 = vld [vmem:[%s1 + $0x8e0] sm:$0xf]
  %v602 = vld [vmem:[%s1 + $0x8e4] sm:$0xf]
  %v603 = vld [vmem:[%s1 + $0x8e8] sm:$0xf]
  %v604 = vld [vmem:[%s1 + $0x8ec] sm:$0xf]
  %v605 = vld [vmem:[%s1 + $0x8f0] sm:$0xf]
  %v606 = vld [vmem:[%s1 + $0x8f4] sm:$0xf]
  %v607 = vld [vmem:[%s1 + $0x8f8] sm:$0xf]
  %v608 = vld [vmem:[%s1 + $0x8fc] sm:$0xf]
  %v609 = vld [vmem:[%s2] sm:$0x1]
  %v611 = vlaneseq
  %v612 = vshrl.u32 %v611, 7
  %v613 = vsub.s32 0, %v612
  %v614 = vrot.slane %v609, %v613
  %v634 = vunpack.c.l.b16 %v15
  %v635 = vunpack.c.h.b16 %v15
  %v636 = vunpack.c.l.b16 %v16
  %v637 = vunpack.c.h.b16 %v16
  %v638 = vunpack.c.l.b16 %v17
  %v639 = vunpack.c.h.b16 %v17
  %v640 = vunpack.c.l.b16 %v18
  %v641 = vunpack.c.h.b16 %v18
  %v642 = vunpack.c.l.b16 %v19
  %v643 = vunpack.c.h.b16 %v19
  %v644 = vunpack.c.l.b16 %v20
  %v645 = vunpack.c.h.b16 %v20
  %v646 = vunpack.c.l.b16 %v21
  %v647 = vunpack.c.h.b16 %v21
  %v648 = vunpack.c.l.b16 %v22
  %v649 = vunpack.c.h.b16 %v22
  %v650 = vunpack.c.l.b16 %v23
  %v651 = vunpack.c.h.b16 %v23
  %v652 = vunpack.c.l.b16 %v24
  %v653 = vunpack.c.h.b16 %v24
  %v654 = vunpack.c.l.b16 %v25
  %v655 = vunpack.c.h.b16 %v25
  %v656 = vunpack.c.l.b16 %v26
  %v657 = vunpack.c.h.b16 %v26
  %v658 = vunpack.c.l.b16 %v27
  %v659 = vunpack.c.h.b16 %v27
  %v660 = vunpack.c.l.b16 %v28
  %v661 = vunpack.c.h.b16 %v28
  %v662 = vunpack.c.l.b16 %v29
  %v663 = vunpack.c.h.b16 %v29
  %v664 = vunpack.c.l.b16 %v30
  %v665 = vunpack.c.h.b16 %v30
  %v666 = vunpack.c.l.b16 %v31
  %v667 = vunpack.c.h.b16 %v31
  %v668 = vunpack.c.l.b16 %v32
  %v669 = vunpack.c.h.b16 %v32
  %v670 = vpack.c.b16 %v634, %v634
  %v671 = vpack.c.b16 %v635, %v635
  %v672 = vpack.c.b16 %v636, %v636
  %v673 = vpack.c.b16 %v637, %v637
  %v674 = vpack.c.b16 %v638, %v638
  %v675 = vpack.c.b16 %v639, %v639
  %v676 = vpack.c.b16 %v640, %v640
  %v677 = vpack.c.b16 %v641, %v641
  %v678 = vpack.c.b16 %v642, %v642
  %v679 = vpack.c.b16 %v643, %v643
  %v680 = vpack.c.b16 %v644, %v644
  %v681 = vpack.c.b16 %v645, %v645
  %v682 = vpack.c.b16 %v646, %v646
  %v683 = vpack.c.b16 %v647, %v647
  %v684 = vpack.c.b16 %v648, %v648
  %v685 = vpack.c.b16 %v649, %v649
  %v686 = vpack.c.b16 %v650, %v650
  %v687 = vpack.c.b16 %v651, %v651
  %v688 = vpack.c.b16 %v652, %v652
  %v689 = vpack.c.b16 %v653, %v653
  %v690 = vpack.c.b16 %v654, %v654
  %v691 = vpack.c.b16 %v655, %v655
  %v692 = vpack.c.b16 %v656, %v656
  %v693 = vpack.c.b16 %v657, %v657
  %v694 = vpack.c.b16 %v658, %v658
  %v695 = vpack.c.b16 %v659, %v659
  %v696 = vpack.c.b16 %v660, %v660
  %v697 = vpack.c.b16 %v661, %v661
  %v698 = vpack.c.b16 %v662, %v662
  %v699 = vpack.c.b16 %v663, %v663
  %v700 = vpack.c.b16 %v664, %v664
  %v701 = vpack.c.b16 %v665, %v665
  %v702 = vpack.c.b16 %v666, %v666
  %v703 = vpack.c.b16 %v667, %v667
  %v704 = vpack.c.b16 %v668, %v668
  %v705 = vpack.c.b16 %v669, %v669
  %v1318 = vunpack.c.l.b16 %v33
  %v1319 = vunpack.c.l.b16 %v34
  %v1320 = vunpack.c.l.b16 %v35
  %v1321 = vunpack.c.l.b16 %v36
  %v1322 = vunpack.c.l.b16 %v37
  %v1323 = vunpack.c.l.b16 %v38
  %v1324 = vunpack.c.l.b16 %v39
  %v1325 = vunpack.c.l.b16 %v40
  %v1326 = vunpack.c.l.b16 %v41
  %v1327 = vunpack.c.l.b16 %v42
  %v1328 = vunpack.c.l.b16 %v43
  %v1329 = vunpack.c.l.b16 %v44
  %v1330 = vunpack.c.l.b16 %v45
  %v1331 = vunpack.c.l.b16 %v46
  %v1332 = vunpack.c.l.b16 %v47
  %v1333 = vunpack.c.l.b16 %v48
  %v1334 = vunpack.c.l.b16 %v49
  %v1335 = vunpack.c.l.b16 %v50
  %v1336 = vunpack.c.l.b16 %v51
  %v1337 = vunpack.c.l.b16 %v52
  %v1338 = vunpack.c.l.b16 %v53
  %v1339 = vunpack.c.l.b16 %v54
  %v1340 = vunpack.c.l.b16 %v55
  %v1341 = vunpack.c.l.b16 %v56
  %v1342 = vunpack.c.l.b16 %v57
  %v1343 = vunpack.c.l.b16 %v58
  %v1344 = vunpack.c.l.b16 %v59
  %v1345 = vunpack.c.l.b16 %v60
  %v1346 = vunpack.c.l.b16 %v61
  %v1347 = vunpack.c.l.b16 %v62
  %v1348 = vunpack.c.l.b16 %v63
  %v1349 = vunpack.c.l.b16 %v64
  %v1350 = vunpack.c.l.b16 %v65
  %v1351 = vunpack.c.l.b16 %v66
  %v1352 = vunpack.c.l.b16 %v67
  %v1353 = vunpack.c.l.b16 %v68
  %v1354 = vunpack.c.l.b16 %v69
  %v1355 = vunpack.c.l.b16 %v70
  %v1356 = vunpack.c.l.b16 %v71
  %v1357 = vunpack.c.l.b16 %v72
  %v1358 = vunpack.c.l.b16 %v73
  %v1359 = vunpack.c.l.b16 %v74
  %v1360 = vunpack.c.l.b16 %v75
  %v1361 = vunpack.c.l.b16 %v76
  %v1362 = vunpack.c.l.b16 %v77
  %v1363 = vunpack.c.l.b16 %v78
  %v1364 = vunpack.c.l.b16 %v79
  %v1365 = vunpack.c.l.b16 %v80
  %v1366 = vunpack.c.l.b16 %v81
  %v1367 = vunpack.c.l.b16 %v82
  %v1368 = vunpack.c.l.b16 %v83
  %v1369 = vunpack.c.l.b16 %v84
  %v1370 = vunpack.c.l.b16 %v85
  %v1371 = vunpack.c.l.b16 %v86
  %v1372 = vunpack.c.l.b16 %v87
  %v1373 = vunpack.c.l.b16 %v88
  %v1374 = vunpack.c.l.b16 %v89
  %v1375 = vunpack.c.l.b16 %v90
  %v1376 = vunpack.c.l.b16 %v91
  %v1377 = vunpack.c.l.b16 %v92
  %v1378 = vunpack.c.l.b16 %v93
  %v1379 = vunpack.c.l.b16 %v94
  %v1380 = vunpack.c.l.b16 %v95
  %v1381 = vunpack.c.l.b16 %v96
  %v1382 = vunpack.c.l.b16 %v97
  %v1383 = vunpack.c.l.b16 %v98
  %v1384 = vunpack.c.l.b16 %v99
  %v1385 = vunpack.c.l.b16 %v100
  %v1386 = vunpack.c.l.b16 %v101
  %v1387 = vunpack.c.l.b16 %v102
  %v1388 = vunpack.c.l.b16 %v103
  %v1389 = vunpack.c.l.b16 %v104
  %v1390 = vunpack.c.l.b16 %v105
  %v1391 = vunpack.c.l.b16 %v106
  %v1392 = vunpack.c.l.b16 %v107
  %v1393 = vunpack.c.l.b16 %v108
  %v1394 = vunpack.c.l.b16 %v109
  %v1395 = vunpack.c.l.b16 %v110
  %v1396 = vunpack.c.l.b16 %v111
  %v1397 = vunpack.c.l.b16 %v112
  %v1398 = vunpack.c.l.b16 %v113
  %v1399 = vunpack.c.l.b16 %v114
  %v1400 = vunpack.c.l.b16 %v115
  %v1401 = vunpack.c.l.b16 %v116
  %v1402 = vunpack.c.l.b16 %v117
  %v1403 = vunpack.c.l.b16 %v118
  %v1404 = vunpack.c.l.b16 %v119
  %v1405 = vunpack.c.l.b16 %v120
  %v1406 = vunpack.c.l.b16 %v121
  %v1407 = vunpack.c.l.b16 %v122
  %v1408 = vunpack.c.l.b16 %v123
  %v1409 = vunpack.c.l.b16 %v124
  %v1410 = vunpack.c.l.b16 %v125
  %v1411 = vunpack.c.l.b16 %v126
  %v1412 = vunpack.c.l.b16 %v127
  %v1413 = vunpack.c.l.b16 %v128
  %v1414 = vunpack.c.l.b16 %v129
  %v1415 = vunpack.c.l.b16 %v130
  %v1416 = vunpack.c.l.b16 %v131
  %v1417 = vunpack.c.l.b16 %v132
  %v1418 = vunpack.c.l.b16 %v133
  %v1419 = vunpack.c.l.b16 %v134
  %v1420 = vunpack.c.l.b16 %v135
  %v1421 = vunpack.c.l.b16 %v136
  %v1422 = vunpack.c.l.b16 %v137
  %v1423 = vunpack.c.l.b16 %v138
  %v1424 = vunpack.c.l.b16 %v139
  %v1425 = vunpack.c.l.b16 %v140
  %v1426 = vunpack.c.l.b16 %v141
  %v1427 = vunpack.c.l.b16 %v142
  %v1428 = vunpack.c.l.b16 %v143
  %v1429 = vunpack.c.l.b16 %v144
  %v1430 = vunpack.c.l.b16 %v145
  %v1431 = vunpack.c.l.b16 %v146
  %v1432 = vunpack.c.l.b16 %v147
  %v1433 = vunpack.c.l.b16 %v148
  %v1434 = vunpack.c.l.b16 %v149
  %v1435 = vunpack.c.l.b16 %v150
  %v1436 = vunpack.c.l.b16 %v151
  %v1437 = vunpack.c.l.b16 %v152
  %v1438 = vunpack.c.l.b16 %v153
  %v1439 = vunpack.c.l.b16 %v154
  %v1440 = vunpack.c.l.b16 %v155
  %v1441 = vunpack.c.l.b16 %v156
  %v1442 = vunpack.c.l.b16 %v157
  %v1443 = vunpack.c.l.b16 %v158
  %v1444 = vunpack.c.l.b16 %v159
  %v1445 = vunpack.c.l.b16 %v160
  %v1446 = vunpack.c.l.b16 %v161
  %v1447 = vunpack.c.l.b16 %v162
  %v1448 = vunpack.c.l.b16 %v163
  %v1449 = vunpack.c.l.b16 %v164
  %v1450 = vunpack.c.l.b16 %v165
  %v1451 = vunpack.c.l.b16 %v166
  %v1452 = vunpack.c.l.b16 %v167
  %v1453 = vunpack.c.l.b16 %v168
  %v1454 = vunpack.c.l.b16 %v169
  %v1455 = vunpack.c.l.b16 %v170
  %v1456 = vunpack.c.l.b16 %v171
  %v1457 = vunpack.c.l.b16 %v172
  %v1458 = vunpack.c.l.b16 %v173
  %v1459 = vunpack.c.l.b16 %v174
  %v1460 = vunpack.c.l.b16 %v175
  %v1461 = vunpack.c.l.b16 %v176
  %v1462 = vunpack.c.l.b16 %v177
  %v1463 = vunpack.c.l.b16 %v178
  %v1464 = vunpack.c.l.b16 %v179
  %v1465 = vunpack.c.l.b16 %v180
  %v1466 = vunpack.c.l.b16 %v181
  %v1467 = vunpack.c.l.b16 %v182
  %v1468 = vunpack.c.l.b16 %v183
  %v1469 = vunpack.c.l.b16 %v184
  %v1470 = vunpack.c.l.b16 %v185
  %v1471 = vunpack.c.l.b16 %v186
  %v1472 = vunpack.c.l.b16 %v187
  %v1473 = vunpack.c.l.b16 %v188
  %v1474 = vunpack.c.l.b16 %v189
  %v1475 = vunpack.c.l.b16 %v190
  %v1476 = vunpack.c.l.b16 %v191
  %v1477 = vunpack.c.l.b16 %v192
  %v1478 = vunpack.c.l.b16 %v193
  %v1479 = vunpack.c.l.b16 %v194
  %v1480 = vunpack.c.l.b16 %v195
  %v1481 = vunpack.c.l.b16 %v196
  %v1482 = vunpack.c.l.b16 %v197
  %v1483 = vunpack.c.l.b16 %v198
  %v1484 = vunpack.c.l.b16 %v199
  %v1485 = vunpack.c.l.b16 %v200
  %v1486 = vunpack.c.l.b16 %v201
  %v1487 = vunpack.c.l.b16 %v202
  %v1488 = vunpack.c.l.b16 %v203
  %v1489 = vunpack.c.l.b16 %v204
  %v1490 = vunpack.c.l.b16 %v205
  %v1491 = vunpack.c.l.b16 %v206
  %v1492 = vunpack.c.l.b16 %v207
  %v1493 = vunpack.c.l.b16 %v208
  %v1494 = vunpack.c.l.b16 %v209
  %v1495 = vunpack.c.l.b16 %v210
  %v1496 = vunpack.c.l.b16 %v211
  %v1497 = vunpack.c.l.b16 %v212
  %v1498 = vunpack.c.l.b16 %v213
  %v1499 = vunpack.c.l.b16 %v214
  %v1500 = vunpack.c.l.b16 %v215
  %v1501 = vunpack.c.l.b16 %v216
  %v1502 = vunpack.c.l.b16 %v217
  %v1503 = vunpack.c.l.b16 %v218
  %v1504 = vunpack.c.l.b16 %v219
  %v1505 = vunpack.c.l.b16 %v220
  %v1506 = vunpack.c.l.b16 %v221
  %v1507 = vunpack.c.l.b16 %v222
  %v1508 = vunpack.c.l.b16 %v223
  %v1509 = vunpack.c.l.b16 %v224
  %v1510 = vunpack.c.l.b16 %v225
  %v1511 = vunpack.c.l.b16 %v226
  %v1512 = vunpack.c.l.b16 %v227
  %v1513 = vunpack.c.l.b16 %v228
  %v1514 = vunpack.c.l.b16 %v229
  %v1515 = vunpack.c.l.b16 %v230
  %v1516 = vunpack.c.l.b16 %v231
  %v1517 = vunpack.c.l.b16 %v232
  %v1518 = vunpack.c.l.b16 %v233
  %v1519 = vunpack.c.l.b16 %v234
  %v1520 = vunpack.c.l.b16 %v235
  %v1521 = vunpack.c.l.b16 %v236
  %v1522 = vunpack.c.l.b16 %v237
  %v1523 = vunpack.c.l.b16 %v238
  %v1524 = vunpack.c.l.b16 %v239
  %v1525 = vunpack.c.l.b16 %v240
  %v1526 = vunpack.c.l.b16 %v241
  %v1527 = vunpack.c.l.b16 %v242
  %v1528 = vunpack.c.l.b16 %v243
  %v1529 = vunpack.c.l.b16 %v244
  %v1530 = vunpack.c.l.b16 %v245
  %v1531 = vunpack.c.l.b16 %v246
  %v1532 = vunpack.c.l.b16 %v247
  %v1533 = vunpack.c.l.b16 %v248
  %v1534 = vunpack.c.l.b16 %v249
  %v1535 = vunpack.c.l.b16 %v250
  %v1536 = vunpack.c.l.b16 %v251
  %v1537 = vunpack.c.l.b16 %v252
  %v1538 = vunpack.c.l.b16 %v253
  %v1539 = vunpack.c.l.b16 %v254
  %v1540 = vunpack.c.l.b16 %v255
  %v1541 = vunpack.c.l.b16 %v256
  %v1542 = vunpack.c.l.b16 %v257
  %v1543 = vunpack.c.l.b16 %v258
  %v1544 = vunpack.c.l.b16 %v259
  %v1545 = vunpack.c.l.b16 %v260
  %v1546 = vunpack.c.l.b16 %v261
  %v1547 = vunpack.c.l.b16 %v262
  %v1548 = vunpack.c.l.b16 %v263
  %v1549 = vunpack.c.l.b16 %v264
  %v1550 = vunpack.c.l.b16 %v265
  %v1551 = vunpack.c.l.b16 %v266
  %v1552 = vunpack.c.l.b16 %v267
  %v1553 = vunpack.c.l.b16 %v268
  %v1554 = vunpack.c.l.b16 %v269
  %v1555 = vunpack.c.l.b16 %v270
  %v1556 = vunpack.c.l.b16 %v271
  %v1557 = vunpack.c.l.b16 %v272
  %v1558 = vunpack.c.l.b16 %v273
  %v1559 = vunpack.c.l.b16 %v274
  %v1560 = vunpack.c.l.b16 %v275
  %v1561 = vunpack.c.l.b16 %v276
  %v1562 = vunpack.c.l.b16 %v277
  %v1563 = vunpack.c.l.b16 %v278
  %v1564 = vunpack.c.l.b16 %v279
  %v1565 = vunpack.c.l.b16 %v280
  %v1566 = vunpack.c.l.b16 %v281
  %v1567 = vunpack.c.l.b16 %v282
  %v1568 = vunpack.c.l.b16 %v283
  %v1569 = vunpack.c.l.b16 %v284
  %v1570 = vunpack.c.l.b16 %v285
  %v1571 = vunpack.c.l.b16 %v286
  %v1572 = vunpack.c.l.b16 %v287
  %v1573 = vunpack.c.l.b16 %v288
  %v1574 = vunpack.c.l.b16 %v289
  %v1575 = vunpack.c.l.b16 %v290
  %v1576 = vunpack.c.l.b16 %v291
  %v1577 = vunpack.c.l.b16 %v292
  %v1578 = vunpack.c.l.b16 %v293
  %v1579 = vunpack.c.l.b16 %v294
  %v1580 = vunpack.c.l.b16 %v295
  %v1581 = vunpack.c.l.b16 %v296
  %v1582 = vunpack.c.l.b16 %v297
  %v1583 = vunpack.c.l.b16 %v298
  %v1584 = vunpack.c.l.b16 %v299
  %v1585 = vunpack.c.l.b16 %v300
  %v1586 = vunpack.c.l.b16 %v301
  %v1587 = vunpack.c.l.b16 %v302
  %v1588 = vunpack.c.l.b16 %v303
  %v1589 = vunpack.c.l.b16 %v304
  %v1590 = vunpack.c.l.b16 %v305
  %v1591 = vunpack.c.l.b16 %v306
  %v1592 = vunpack.c.l.b16 %v307
  %v1593 = vunpack.c.l.b16 %v308
  %v1594 = vunpack.c.l.b16 %v309
  %v1595 = vunpack.c.l.b16 %v310
  %v1596 = vunpack.c.l.b16 %v311
  %v1597 = vunpack.c.l.b16 %v312
  %v1598 = vunpack.c.l.b16 %v313
  %v1599 = vunpack.c.l.b16 %v314
  %v1600 = vunpack.c.l.b16 %v315
  %v1601 = vunpack.c.l.b16 %v316
  %v1602 = vunpack.c.l.b16 %v317
  %v1603 = vunpack.c.l.b16 %v318
  %v1604 = vunpack.c.l.b16 %v319
  %v1605 = vunpack.c.l.b16 %v320
  %v1606 = vunpack.c.l.b16 %v321
  %v1607 = vunpack.c.l.b16 %v322
  %v1608 = vunpack.c.l.b16 %v323
  %v1609 = vunpack.c.l.b16 %v324
  %v1610 = vunpack.c.l.b16 %v325
  %v1611 = vunpack.c.l.b16 %v326
  %v1612 = vunpack.c.l.b16 %v327
  %v1613 = vunpack.c.l.b16 %v328
  %v1614 = vunpack.c.l.b16 %v329
  %v1615 = vunpack.c.l.b16 %v330
  %v1616 = vunpack.c.l.b16 %v331
  %v1617 = vunpack.c.l.b16 %v332
  %v1618 = vunpack.c.l.b16 %v333
  %v1619 = vunpack.c.l.b16 %v334
  %v1620 = vunpack.c.l.b16 %v335
  %v1621 = vunpack.c.l.b16 %v336
  %v1622 = vunpack.c.l.b16 %v337
  %v1623 = vunpack.c.l.b16 %v338
  %v1624 = vunpack.c.l.b16 %v339
  %v1625 = vunpack.c.l.b16 %v340
  %v1626 = vunpack.c.l.b16 %v341
  %v1627 = vunpack.c.l.b16 %v342
  %v1628 = vunpack.c.l.b16 %v343
  %v1629 = vunpack.c.l.b16 %v344
  %v1630 = vunpack.c.l.b16 %v345
  %v1631 = vunpack.c.l.b16 %v346
  %v1632 = vunpack.c.l.b16 %v347
  %v1633 = vunpack.c.l.b16 %v348
  %v1634 = vunpack.c.l.b16 %v349
  %v1635 = vunpack.c.l.b16 %v350
  %v1636 = vunpack.c.l.b16 %v351
  %v1637 = vunpack.c.l.b16 %v352
  %v1638 = vunpack.c.l.b16 %v353
  %v1639 = vunpack.c.l.b16 %v354
  %v1640 = vunpack.c.l.b16 %v355
  %v1641 = vunpack.c.l.b16 %v356
  %v1642 = vunpack.c.l.b16 %v357
  %v1643 = vunpack.c.l.b16 %v358
  %v1644 = vunpack.c.l.b16 %v359
  %v1645 = vunpack.c.l.b16 %v360
  %v1646 = vunpack.c.l.b16 %v361
  %v1647 = vunpack.c.l.b16 %v362
  %v1648 = vunpack.c.l.b16 %v363
  %v1649 = vunpack.c.l.b16 %v364
  %v1650 = vunpack.c.l.b16 %v365
  %v1651 = vunpack.c.l.b16 %v366
  %v1652 = vunpack.c.l.b16 %v367
  %v1653 = vunpack.c.l.b16 %v368
  %v1654 = vunpack.c.l.b16 %v369
  %v1655 = vunpack.c.l.b16 %v370
  %v1656 = vunpack.c.l.b16 %v371
  %v1657 = vunpack.c.l.b16 %v372
  %v1658 = vunpack.c.l.b16 %v373
  %v1659 = vunpack.c.l.b16 %v374
  %v1660 = vunpack.c.l.b16 %v375
  %v1661 = vunpack.c.l.b16 %v376
  %v1662 = vunpack.c.l.b16 %v377
  %v1663 = vunpack.c.l.b16 %v378
  %v1664 = vunpack.c.l.b16 %v379
  %v1665 = vunpack.c.l.b16 %v380
  %v1666 = vunpack.c.l.b16 %v381
  %v1667 = vunpack.c.l.b16 %v382
  %v1668 = vunpack.c.l.b16 %v383
  %v1669 = vunpack.c.l.b16 %v384
  %v1670 = vunpack.c.l.b16 %v385
  %v1671 = vunpack.c.l.b16 %v386
  %v1672 = vunpack.c.l.b16 %v387
  %v1673 = vunpack.c.l.b16 %v388
  %v1674 = vunpack.c.l.b16 %v389
  %v1675 = vunpack.c.l.b16 %v390
  %v1676 = vunpack.c.l.b16 %v391
  %v1677 = vunpack.c.l.b16 %v392
  %v1678 = vunpack.c.l.b16 %v393
  %v1679 = vunpack.c.l.b16 %v394
  %v1680 = vunpack.c.l.b16 %v395
  %v1681 = vunpack.c.l.b16 %v396
  %v1682 = vunpack.c.l.b16 %v397
  %v1683 = vunpack.c.l.b16 %v398
  %v1684 = vunpack.c.l.b16 %v399
  %v1685 = vunpack.c.l.b16 %v400
  %v1686 = vunpack.c.l.b16 %v401
  %v1687 = vunpack.c.l.b16 %v402
  %v1688 = vunpack.c.l.b16 %v403
  %v1689 = vunpack.c.l.b16 %v404
  %v1690 = vunpack.c.l.b16 %v405
  %v1691 = vunpack.c.l.b16 %v406
  %v1692 = vunpack.c.l.b16 %v407
  %v1693 = vunpack.c.l.b16 %v408
  %v1694 = vunpack.c.l.b16 %v409
  %v1695 = vunpack.c.l.b16 %v410
  %v1696 = vunpack.c.l.b16 %v411
  %v1697 = vunpack.c.l.b16 %v412
  %v1698 = vunpack.c.l.b16 %v413
  %v1699 = vunpack.c.l.b16 %v414
  %v1700 = vunpack.c.l.b16 %v415
  %v1701 = vunpack.c.l.b16 %v416
  %v1702 = vunpack.c.l.b16 %v417
  %v1703 = vunpack.c.l.b16 %v418
  %v1704 = vunpack.c.l.b16 %v419
  %v1705 = vunpack.c.l.b16 %v420
  %v1706 = vunpack.c.l.b16 %v421
  %v1707 = vunpack.c.l.b16 %v422
  %v1708 = vunpack.c.l.b16 %v423
  %v1709 = vunpack.c.l.b16 %v424
  %v1710 = vunpack.c.l.b16 %v425
  %v1711 = vunpack.c.l.b16 %v426
  %v1712 = vunpack.c.l.b16 %v427
  %v1713 = vunpack.c.l.b16 %v428
  %v1714 = vunpack.c.l.b16 %v429
  %v1715 = vunpack.c.l.b16 %v430
  %v1716 = vunpack.c.l.b16 %v431
  %v1717 = vunpack.c.l.b16 %v432
  %v1718 = vunpack.c.l.b16 %v433
  %v1719 = vunpack.c.l.b16 %v434
  %v1720 = vunpack.c.l.b16 %v435
  %v1721 = vunpack.c.l.b16 %v436
  %v1722 = vunpack.c.l.b16 %v437
  %v1723 = vunpack.c.l.b16 %v438
  %v1724 = vunpack.c.l.b16 %v439
  %v1725 = vunpack.c.l.b16 %v440
  %v1726 = vunpack.c.l.b16 %v441
  %v1727 = vunpack.c.l.b16 %v442
  %v1728 = vunpack.c.l.b16 %v443
  %v1729 = vunpack.c.l.b16 %v444
  %v1730 = vunpack.c.l.b16 %v445
  %v1731 = vunpack.c.l.b16 %v446
  %v1732 = vunpack.c.l.b16 %v447
  %v1733 = vunpack.c.l.b16 %v448
  %v1734 = vunpack.c.l.b16 %v449
  %v1735 = vunpack.c.l.b16 %v450
  %v1736 = vunpack.c.l.b16 %v451
  %v1737 = vunpack.c.l.b16 %v452
  %v1738 = vunpack.c.l.b16 %v453
  %v1739 = vunpack.c.l.b16 %v454
  %v1740 = vunpack.c.l.b16 %v455
  %v1741 = vunpack.c.l.b16 %v456
  %v1742 = vunpack.c.l.b16 %v457
  %v1743 = vunpack.c.l.b16 %v458
  %v1744 = vunpack.c.l.b16 %v459
  %v1745 = vunpack.c.l.b16 %v460
  %v1746 = vunpack.c.l.b16 %v461
  %v1747 = vunpack.c.l.b16 %v462
  %v1748 = vunpack.c.l.b16 %v463
  %v1749 = vunpack.c.l.b16 %v464
  %v1750 = vunpack.c.l.b16 %v465
  %v1751 = vunpack.c.l.b16 %v466
  %v1752 = vunpack.c.l.b16 %v467
  %v1753 = vunpack.c.l.b16 %v468
  %v1754 = vunpack.c.l.b16 %v469
  %v1755 = vunpack.c.l.b16 %v470
  %v1756 = vunpack.c.l.b16 %v471
  %v1757 = vunpack.c.l.b16 %v472
  %v1758 = vunpack.c.l.b16 %v473
  %v1759 = vunpack.c.l.b16 %v474
  %v1760 = vunpack.c.l.b16 %v475
  %v1761 = vunpack.c.l.b16 %v476
  %v1762 = vunpack.c.l.b16 %v477
  %v1763 = vunpack.c.l.b16 %v478
  %v1764 = vunpack.c.l.b16 %v479
  %v1765 = vunpack.c.l.b16 %v480
  %v1766 = vunpack.c.l.b16 %v481
  %v1767 = vunpack.c.l.b16 %v482
  %v1768 = vunpack.c.l.b16 %v483
  %v1769 = vunpack.c.l.b16 %v484
  %v1770 = vunpack.c.l.b16 %v485
  %v1771 = vunpack.c.l.b16 %v486
  %v1772 = vunpack.c.l.b16 %v487
  %v1773 = vunpack.c.l.b16 %v488
  %v1774 = vunpack.c.l.b16 %v489
  %v1775 = vunpack.c.l.b16 %v490
  %v1776 = vunpack.c.l.b16 %v491
  %v1777 = vunpack.c.l.b16 %v492
  %v1778 = vunpack.c.l.b16 %v493
  %v1779 = vunpack.c.l.b16 %v494
  %v1780 = vunpack.c.l.b16 %v495
  %v1781 = vunpack.c.l.b16 %v496
  %v1782 = vunpack.c.l.b16 %v497
  %v1783 = vunpack.c.l.b16 %v498
  %v1784 = vunpack.c.l.b16 %v499
  %v1785 = vunpack.c.l.b16 %v500
  %v1786 = vunpack.c.l.b16 %v501
  %v1787 = vunpack.c.l.b16 %v502
  %v1788 = vunpack.c.l.b16 %v503
  %v1789 = vunpack.c.l.b16 %v504
  %v1790 = vunpack.c.l.b16 %v505
  %v1791 = vunpack.c.l.b16 %v506
  %v1792 = vunpack.c.l.b16 %v507
  %v1793 = vunpack.c.l.b16 %v508
  %v1794 = vunpack.c.l.b16 %v509
  %v1795 = vunpack.c.l.b16 %v510
  %v1796 = vunpack.c.l.b16 %v511
  %v1797 = vunpack.c.l.b16 %v512
  %v1798 = vunpack.c.l.b16 %v513
  %v1799 = vunpack.c.l.b16 %v514
  %v1800 = vunpack.c.l.b16 %v515
  %v1801 = vunpack.c.l.b16 %v516
  %v1802 = vunpack.c.l.b16 %v517
  %v1803 = vunpack.c.l.b16 %v518
  %v1804 = vunpack.c.l.b16 %v519
  %v1805 = vunpack.c.l.b16 %v520
  %v1806 = vunpack.c.l.b16 %v521
  %v1807 = vunpack.c.l.b16 %v522
  %v1808 = vunpack.c.l.b16 %v523
  %v1809 = vunpack.c.l.b16 %v524
  %v1810 = vunpack.c.l.b16 %v525
  %v1811 = vunpack.c.l.b16 %v526
  %v1812 = vunpack.c.l.b16 %v527
  %v1813 = vunpack.c.l.b16 %v528
  %v1814 = vunpack.c.l.b16 %v529
  %v1815 = vunpack.c.l.b16 %v530
  %v1816 = vunpack.c.l.b16 %v531
  %v1817 = vunpack.c.l.b16 %v532
  %v1818 = vunpack.c.l.b16 %v533
  %v1819 = vunpack.c.l.b16 %v534
  %v1820 = vunpack.c.l.b16 %v535
  %v1821 = vunpack.c.l.b16 %v536
  %v1822 = vunpack.c.l.b16 %v537
  %v1823 = vunpack.c.l.b16 %v538
  %v1824 = vunpack.c.l.b16 %v539
  %v1825 = vunpack.c.l.b16 %v540
  %v1826 = vunpack.c.l.b16 %v541
  %v1827 = vunpack.c.l.b16 %v542
  %v1828 = vunpack.c.l.b16 %v543
  %v1829 = vunpack.c.l.b16 %v544
  %v1830 = vunpack.c.l.b16 %v545
  %v1831 = vunpack.c.l.b16 %v546
  %v1832 = vunpack.c.l.b16 %v547
  %v1833 = vunpack.c.l.b16 %v548
  %v1834 = vunpack.c.l.b16 %v549
  %v1835 = vunpack.c.l.b16 %v550
  %v1836 = vunpack.c.l.b16 %v551
  %v1837 = vunpack.c.l.b16 %v552
  %v1838 = vunpack.c.l.b16 %v553
  %v1839 = vunpack.c.l.b16 %v554
  %v1840 = vunpack.c.l.b16 %v555
  %v1841 = vunpack.c.l.b16 %v556
  %v1842 = vunpack.c.l.b16 %v557
  %v1843 = vunpack.c.l.b16 %v558
  %v1844 = vunpack.c.l.b16 %v559
  %v1845 = vunpack.c.l.b16 %v560
  %v1846 = vunpack.c.l.b16 %v561
  %v1847 = vunpack.c.l.b16 %v562
  %v1848 = vunpack.c.l.b16 %v563
  %v1849 = vunpack.c.l.b16 %v564
  %v1850 = vunpack.c.l.b16 %v565
  %v1851 = vunpack.c.l.b16 %v566
  %v1852 = vunpack.c.l.b16 %v567
  %v1853 = vunpack.c.l.b16 %v568
  %v1854 = vunpack.c.l.b16 %v569
  %v1855 = vunpack.c.l.b16 %v570
  %v1856 = vunpack.c.l.b16 %v571
  %v1857 = vunpack.c.l.b16 %v572
  %v1858 = vunpack.c.l.b16 %v573
  %v1859 = vunpack.c.l.b16 %v574
  %v1860 = vunpack.c.l.b16 %v575
  %v1861 = vunpack.c.l.b16 %v576
  %v1862 = vunpack.c.l.b16 %v577
  %v1863 = vunpack.c.l.b16 %v578
  %v1864 = vunpack.c.l.b16 %v579
  %v1865 = vunpack.c.l.b16 %v580
  %v1866 = vunpack.c.l.b16 %v581
  %v1867 = vunpack.c.l.b16 %v582
  %v1868 = vunpack.c.l.b16 %v583
  %v1869 = vunpack.c.l.b16 %v584
  %v1870 = vunpack.c.l.b16 %v585
  %v1871 = vunpack.c.l.b16 %v586
  %v1872 = vunpack.c.l.b16 %v587
  %v1873 = vunpack.c.l.b16 %v588
  %v1874 = vunpack.c.l.b16 %v589
  %v1875 = vunpack.c.l.b16 %v590
  %v1876 = vunpack.c.l.b16 %v591
  %v1877 = vunpack.c.l.b16 %v592
  %v1878 = vunpack.c.l.b16 %v593
  %v1879 = vunpack.c.l.b16 %v594
  %v1880 = vunpack.c.l.b16 %v595
  %v1881 = vunpack.c.l.b16 %v596
  %v1882 = vunpack.c.l.b16 %v597
  %v1883 = vunpack.c.l.b16 %v598
  %v1884 = vunpack.c.l.b16 %v599
  %v1885 = vunpack.c.l.b16 %v600
  %v1886 = vunpack.c.l.b16 %v601
  %v1887 = vunpack.c.l.b16 %v602
  %v1888 = vunpack.c.l.b16 %v603
  %v1889 = vunpack.c.l.b16 %v604
  %v1890 = vunpack.c.l.b16 %v605
  %v1891 = vunpack.c.l.b16 %v606
  %v1892 = vunpack.c.l.b16 %v607
  %v1893 = vunpack.c.l.b16 %v608
  %v1894 = vpack.c.b16 %v1319, %v1318
  %v1895 = vpack.c.b16 %v1321, %v1320
  %v1896 = vpack.c.b16 %v1323, %v1322
  %v1897 = vpack.c.b16 %v1325, %v1324
  %v1898 = vpack.c.b16 %v1327, %v1326
  %v1899 = vpack.c.b16 %v1329, %v1328
  %v1900 = vpack.c.b16 %v1331, %v1330
  %v1901 = vpack.c.b16 %v1333, %v1332
  %v1902 = vpack.c.b16 %v1335, %v1334
  %v1903 = vpack.c.b16 %v1337, %v1336
  %v1904 = vpack.c.b16 %v1339, %v1338
  %v1905 = vpack.c.b16 %v1341, %v1340
  %v1906 = vpack.c.b16 %v1343, %v1342
  %v1907 = vpack.c.b16 %v1345, %v1344
  %v1908 = vpack.c.b16 %v1347, %v1346
  %v1909 = vpack.c.b16 %v1349, %v1348
  %v1910 = vpack.c.b16 %v1351, %v1350
  %v1911 = vpack.c.b16 %v1353, %v1352
  %v1912 = vpack.c.b16 %v1355, %v1354
  %v1913 = vpack.c.b16 %v1357, %v1356
  %v1914 = vpack.c.b16 %v1359, %v1358
  %v1915 = vpack.c.b16 %v1361, %v1360
  %v1916 = vpack.c.b16 %v1363, %v1362
  %v1917 = vpack.c.b16 %v1365, %v1364
  %v1918 = vpack.c.b16 %v1367, %v1366
  %v1919 = vpack.c.b16 %v1369, %v1368
  %v1920 = vpack.c.b16 %v1371, %v1370
  %v1921 = vpack.c.b16 %v1373, %v1372
  %v1922 = vpack.c.b16 %v1375, %v1374
  %v1923 = vpack.c.b16 %v1377, %v1376
  %v1924 = vpack.c.b16 %v1379, %v1378
  %v1925 = vpack.c.b16 %v1381, %v1380
  %v1926 = vpack.c.b16 %v1383, %v1382
  %v1927 = vpack.c.b16 %v1385, %v1384
  %v1928 = vpack.c.b16 %v1387, %v1386
  %v1929 = vpack.c.b16 %v1389, %v1388
  %v1930 = vpack.c.b16 %v1391, %v1390
  %v1931 = vpack.c.b16 %v1393, %v1392
  %v1932 = vpack.c.b16 %v1395, %v1394
  %v1933 = vpack.c.b16 %v1397, %v1396
  %v1934 = vpack.c.b16 %v1399, %v1398
  %v1935 = vpack.c.b16 %v1401, %v1400
  %v1936 = vpack.c.b16 %v1403, %v1402
  %v1937 = vpack.c.b16 %v1405, %v1404
  %v1938 = vpack.c.b16 %v1407, %v1406
  %v1939 = vpack.c.b16 %v1409, %v1408
  %v1940 = vpack.c.b16 %v1411, %v1410
  %v1941 = vpack.c.b16 %v1413, %v1412
  %v1942 = vpack.c.b16 %v1415, %v1414
  %v1943 = vpack.c.b16 %v1417, %v1416
  %v1944 = vpack.c.b16 %v1419, %v1418
  %v1945 = vpack.c.b16 %v1421, %v1420
  %v1946 = vpack.c.b16 %v1423, %v1422
  %v1947 = vpack.c.b16 %v1425, %v1424
  %v1948 = vpack.c.b16 %v1427, %v1426
  %v1949 = vpack.c.b16 %v1429, %v1428
  %v1950 = vpack.c.b16 %v1431, %v1430
  %v1951 = vpack.c.b16 %v1433, %v1432
  %v1952 = vpack.c.b16 %v1435, %v1434
  %v1953 = vpack.c.b16 %v1437, %v1436
  %v1954 = vpack.c.b16 %v1439, %v1438
  %v1955 = vpack.c.b16 %v1441, %v1440
  %v1956 = vpack.c.b16 %v1443, %v1442
  %v1957 = vpack.c.b16 %v1445, %v1444
  %v1958 = vpack.c.b16 %v1447, %v1446
  %v1959 = vpack.c.b16 %v1449, %v1448
  %v1960 = vpack.c.b16 %v1451, %v1450
  %v1961 = vpack.c.b16 %v1453, %v1452
  %v1962 = vpack.c.b16 %v1455, %v1454
  %v1963 = vpack.c.b16 %v1457, %v1456
  %v1964 = vpack.c.b16 %v1459, %v1458
  %v1965 = vpack.c.b16 %v1461, %v1460
  %v1966 = vpack.c.b16 %v1463, %v1462
  %v1967 = vpack.c.b16 %v1465, %v1464
  %v1968 = vpack.c.b16 %v1467, %v1466
  %v1969 = vpack.c.b16 %v1469, %v1468
  %v1970 = vpack.c.b16 %v1471, %v1470
  %v1971 = vpack.c.b16 %v1473, %v1472
  %v1972 = vpack.c.b16 %v1475, %v1474
  %v1973 = vpack.c.b16 %v1477, %v1476
  %v1974 = vpack.c.b16 %v1479, %v1478
  %v1975 = vpack.c.b16 %v1481, %v1480
  %v1976 = vpack.c.b16 %v1483, %v1482
  %v1977 = vpack.c.b16 %v1485, %v1484
  %v1978 = vpack.c.b16 %v1487, %v1486
  %v1979 = vpack.c.b16 %v1489, %v1488
  %v1980 = vpack.c.b16 %v1491, %v1490
  %v1981 = vpack.c.b16 %v1493, %v1492
  %v1982 = vpack.c.b16 %v1495, %v1494
  %v1983 = vpack.c.b16 %v1497, %v1496
  %v1984 = vpack.c.b16 %v1499, %v1498
  %v1985 = vpack.c.b16 %v1501, %v1500
  %v1986 = vpack.c.b16 %v1503, %v1502
  %v1987 = vpack.c.b16 %v1505, %v1504
  %v1988 = vpack.c.b16 %v1507, %v1506
  %v1989 = vpack.c.b16 %v1509, %v1508
  %v1990 = vpack.c.b16 %v1511, %v1510
  %v1991 = vpack.c.b16 %v1513, %v1512
  %v1992 = vpack.c.b16 %v1515, %v1514
  %v1993 = vpack.c.b16 %v1517, %v1516
  %v1994 = vpack.c.b16 %v1519, %v1518
  %v1995 = vpack.c.b16 %v1521, %v1520
  %v1996 = vpack.c.b16 %v1523, %v1522
  %v1997 = vpack.c.b16 %v1525, %v1524
  %v1998 = vpack.c.b16 %v1527, %v1526
  %v1999 = vpack.c.b16 %v1529, %v1528
  %v2000 = vpack.c.b16 %v1531, %v1530
  %v2001 = vpack.c.b16 %v1533, %v1532
  %v2002 = vpack.c.b16 %v1535, %v1534
  %v2003 = vpack.c.b16 %v1537, %v1536
  %v2004 = vpack.c.b16 %v1539, %v1538
  %v2005 = vpack.c.b16 %v1541, %v1540
  %v2006 = vpack.c.b16 %v1543, %v1542
  %v2007 = vpack.c.b16 %v1545, %v1544
  %v2008 = vpack.c.b16 %v1547, %v1546
  %v2009 = vpack.c.b16 %v1549, %v1548
  %v2010 = vpack.c.b16 %v1551, %v1550
  %v2011 = vpack.c.b16 %v1553, %v1552
  %v2012 = vpack.c.b16 %v1555, %v1554
  %v2013 = vpack.c.b16 %v1557, %v1556
  %v2014 = vpack.c.b16 %v1559, %v1558
  %v2015 = vpack.c.b16 %v1561, %v1560
  %v2016 = vpack.c.b16 %v1563, %v1562
  %v2017 = vpack.c.b16 %v1565, %v1564
  %v2018 = vpack.c.b16 %v1567, %v1566
  %v2019 = vpack.c.b16 %v1569, %v1568
  %v2020 = vpack.c.b16 %v1571, %v1570
  %v2021 = vpack.c.b16 %v1573, %v1572
  %v2022 = vpack.c.b16 %v1575, %v1574
  %v2023 = vpack.c.b16 %v1577, %v1576
  %v2024 = vpack.c.b16 %v1579, %v1578
  %v2025 = vpack.c.b16 %v1581, %v1580
  %v2026 = vpack.c.b16 %v1583, %v1582
  %v2027 = vpack.c.b16 %v1585, %v1584
  %v2028 = vpack.c.b16 %v1587, %v1586
  %v2029 = vpack.c.b16 %v1589, %v1588
  %v2030 = vpack.c.b16 %v1591, %v1590
  %v2031 = vpack.c.b16 %v1593, %v1592
  %v2032 = vpack.c.b16 %v1595, %v1594
  %v2033 = vpack.c.b16 %v1597, %v1596
  %v2034 = vpack.c.b16 %v1599, %v1598
  %v2035 = vpack.c.b16 %v1601, %v1600
  %v2036 = vpack.c.b16 %v1603, %v1602
  %v2037 = vpack.c.b16 %v1605, %v1604
  %v2038 = vpack.c.b16 %v1607, %v1606
  %v2039 = vpack.c.b16 %v1609, %v1608
  %v2040 = vpack.c.b16 %v1611, %v1610
  %v2041 = vpack.c.b16 %v1613, %v1612
  %v2042 = vpack.c.b16 %v1615, %v1614
  %v2043 = vpack.c.b16 %v1617, %v1616
  %v2044 = vpack.c.b16 %v1619, %v1618
  %v2045 = vpack.c.b16 %v1621, %v1620
  %v2046 = vpack.c.b16 %v1623, %v1622
  %v2047 = vpack.c.b16 %v1625, %v1624
  %v2048 = vpack.c.b16 %v1627, %v1626
  %v2049 = vpack.c.b16 %v1629, %v1628
  %v2050 = vpack.c.b16 %v1631, %v1630
  %v2051 = vpack.c.b16 %v1633, %v1632
  %v2052 = vpack.c.b16 %v1635, %v1634
  %v2053 = vpack.c.b16 %v1637, %v1636
  %v2054 = vpack.c.b16 %v1639, %v1638
  %v2055 = vpack.c.b16 %v1641, %v1640
  %v2056 = vpack.c.b16 %v1643, %v1642
  %v2057 = vpack.c.b16 %v1645, %v1644
  %v2058 = vpack.c.b16 %v1647, %v1646
  %v2059 = vpack.c.b16 %v1649, %v1648
  %v2060 = vpack.c.b16 %v1651, %v1650
  %v2061 = vpack.c.b16 %v1653, %v1652
  %v2062 = vpack.c.b16 %v1655, %v1654
  %v2063 = vpack.c.b16 %v1657, %v1656
  %v2064 = vpack.c.b16 %v1659, %v1658
  %v2065 = vpack.c.b16 %v1661, %v1660
  %v2066 = vpack.c.b16 %v1663, %v1662
  %v2067 = vpack.c.b16 %v1665, %v1664
  %v2068 = vpack.c.b16 %v1667, %v1666
  %v2069 = vpack.c.b16 %v1669, %v1668
  %v2070 = vpack.c.b16 %v1671, %v1670
  %v2071 = vpack.c.b16 %v1673, %v1672
  %v2072 = vpack.c.b16 %v1675, %v1674
  %v2073 = vpack.c.b16 %v1677, %v1676
  %v2074 = vpack.c.b16 %v1679, %v1678
  %v2075 = vpack.c.b16 %v1681, %v1680
  %v2076 = vpack.c.b16 %v1683, %v1682
  %v2077 = vpack.c.b16 %v1685, %v1684
  %v2078 = vpack.c.b16 %v1687, %v1686
  %v2079 = vpack.c.b16 %v1689, %v1688
  %v2080 = vpack.c.b16 %v1691, %v1690
  %v2081 = vpack.c.b16 %v1693, %v1692
  %v2082 = vpack.c.b16 %v1695, %v1694
  %v2083 = vpack.c.b16 %v1697, %v1696
  %v2084 = vpack.c.b16 %v1699, %v1698
  %v2085 = vpack.c.b16 %v1701, %v1700
  %v2086 = vpack.c.b16 %v1703, %v1702
  %v2087 = vpack.c.b16 %v1705, %v1704
  %v2088 = vpack.c.b16 %v1707, %v1706
  %v2089 = vpack.c.b16 %v1709, %v1708
  %v2090 = vpack.c.b16 %v1711, %v1710
  %v2091 = vpack.c.b16 %v1713, %v1712
  %v2092 = vpack.c.b16 %v1715, %v1714
  %v2093 = vpack.c.b16 %v1717, %v1716
  %v2094 = vpack.c.b16 %v1719, %v1718
  %v2095 = vpack.c.b16 %v1721, %v1720
  %v2096 = vpack.c.b16 %v1723, %v1722
  %v2097 = vpack.c.b16 %v1725, %v1724
  %v2098 = vpack.c.b16 %v1727, %v1726
  %v2099 = vpack.c.b16 %v1729, %v1728
  %v2100 = vpack.c.b16 %v1731, %v1730
  %v2101 = vpack.c.b16 %v1733, %v1732
  %v2102 = vpack.c.b16 %v1735, %v1734
  %v2103 = vpack.c.b16 %v1737, %v1736
  %v2104 = vpack.c.b16 %v1739, %v1738
  %v2105 = vpack.c.b16 %v1741, %v1740
  %v2106 = vpack.c.b16 %v1743, %v1742
  %v2107 = vpack.c.b16 %v1745, %v1744
  %v2108 = vpack.c.b16 %v1747, %v1746
  %v2109 = vpack.c.b16 %v1749, %v1748
  %v2110 = vpack.c.b16 %v1751, %v1750
  %v2111 = vpack.c.b16 %v1753, %v1752
  %v2112 = vpack.c.b16 %v1755, %v1754
  %v2113 = vpack.c.b16 %v1757, %v1756
  %v2114 = vpack.c.b16 %v1759, %v1758
  %v2115 = vpack.c.b16 %v1761, %v1760
  %v2116 = vpack.c.b16 %v1763, %v1762
  %v2117 = vpack.c.b16 %v1765, %v1764
  %v2118 = vpack.c.b16 %v1767, %v1766
  %v2119 = vpack.c.b16 %v1769, %v1768
  %v2120 = vpack.c.b16 %v1771, %v1770
  %v2121 = vpack.c.b16 %v1773, %v1772
  %v2122 = vpack.c.b16 %v1775, %v1774
  %v2123 = vpack.c.b16 %v1777, %v1776
  %v2124 = vpack.c.b16 %v1779, %v1778
  %v2125 = vpack.c.b16 %v1781, %v1780
  %v2126 = vpack.c.b16 %v1783, %v1782
  %v2127 = vpack.c.b16 %v1785, %v1784
  %v2128 = vpack.c.b16 %v1787, %v1786
  %v2129 = vpack.c.b16 %v1789, %v1788
  %v2130 = vpack.c.b16 %v1791, %v1790
  %v2131 = vpack.c.b16 %v1793, %v1792
  %v2132 = vpack.c.b16 %v1795, %v1794
  %v2133 = vpack.c.b16 %v1797, %v1796
  %v2134 = vpack.c.b16 %v1799, %v1798
  %v2135 = vpack.c.b16 %v1801, %v1800
  %v2136 = vpack.c.b16 %v1803, %v1802
  %v2137 = vpack.c.b16 %v1805, %v1804
  %v2138 = vpack.c.b16 %v1807, %v1806
  %v2139 = vpack.c.b16 %v1809, %v1808
  %v2140 = vpack.c.b16 %v1811, %v1810
  %v2141 = vpack.c.b16 %v1813, %v1812
  %v2142 = vpack.c.b16 %v1815, %v1814
  %v2143 = vpack.c.b16 %v1817, %v1816
  %v2144 = vpack.c.b16 %v1819, %v1818
  %v2145 = vpack.c.b16 %v1821, %v1820
  %v2146 = vpack.c.b16 %v1823, %v1822
  %v2147 = vpack.c.b16 %v1825, %v1824
  %v2148 = vpack.c.b16 %v1827, %v1826
  %v2149 = vpack.c.b16 %v1829, %v1828
  %v2150 = vpack.c.b16 %v1831, %v1830
  %v2151 = vpack.c.b16 %v1833, %v1832
  %v2152 = vpack.c.b16 %v1835, %v1834
  %v2153 = vpack.c.b16 %v1837, %v1836
  %v2154 = vpack.c.b16 %v1839, %v1838
  %v2155 = vpack.c.b16 %v1841, %v1840
  %v2156 = vpack.c.b16 %v1843, %v1842
  %v2157 = vpack.c.b16 %v1845, %v1844
  %v2158 = vpack.c.b16 %v1847, %v1846
  %v2159 = vpack.c.b16 %v1849, %v1848
  %v2160 = vpack.c.b16 %v1851, %v1850
  %v2161 = vpack.c.b16 %v1853, %v1852
  %v2162 = vpack.c.b16 %v1855, %v1854
  %v2163 = vpack.c.b16 %v1857, %v1856
  %v2164 = vpack.c.b16 %v1859, %v1858
  %v2165 = vpack.c.b16 %v1861, %v1860
  %v2166 = vpack.c.b16 %v1863, %v1862
  %v2167 = vpack.c.b16 %v1865, %v1864
  %v2168 = vpack.c.b16 %v1867, %v1866
  %v2169 = vpack.c.b16 %v1869, %v1868
  %v2170 = vpack.c.b16 %v1871, %v1870
  %v2171 = vpack.c.b16 %v1873, %v1872
  %v2172 = vpack.c.b16 %v1875, %v1874
  %v2173 = vpack.c.b16 %v1877, %v1876
  %v2174 = vpack.c.b16 %v1879, %v1878
  %v2175 = vpack.c.b16 %v1881, %v1880
  %v2176 = vpack.c.b16 %v1883, %v1882
  %v2177 = vpack.c.b16 %v1885, %v1884
  %v2178 = vpack.c.b16 %v1887, %v1886
  %v2179 = vpack.c.b16 %v1889, %v1888
  %v2180 = vpack.c.b16 %v1891, %v1890
  %v2181 = vpack.c.b16 %v1893, %v1892
  %2470 = vmatprep.subr.bf16.mxu0 0
  %2471 = vmatpush1.bf16.msra.mxu0 %v1901
  %2472 = vmatprep.subr.bf16.mxu0 0
  %2473 = vmatpush1.bf16.msra.mxu0 %v1900
  %2474 = vmatprep.subr.bf16.mxu0 0
  %2475 = vmatpush1.bf16.msra.mxu0 %v1899
  %2476 = vmatprep.subr.bf16.mxu0 0
  %2477 = vmatpush1.bf16.msra.mxu0 %v1898
  %2478 = vmatprep.subr.bf16.mxu0 0
  %2479 = vmatpush1.bf16.msra.mxu0 %v1897
  %2480 = vmatprep.subr.bf16.mxu0 0
  %2481 = vmatpush1.bf16.msra.mxu0 %v1896
  %2482 = vmatprep.subr.bf16.mxu0 0
  %2483 = vmatpush1.bf16.msra.mxu0 %v1895
  %2484 = vmatprep.subr.bf16.mxu0 0
  %2485 = vmatpush1.bf16.msra.mxu0 %v1894
  %2486 = vmatprep.subr.bf16.mxu0 0
  %2487 = vmatpush2.bf16.msra.mxu0 %v1909
  %2488 = vmatprep.subr.bf16.mxu0 0
  %2489 = vmatpush2.bf16.msra.mxu0 %v1908
  %2490 = vmatprep.subr.bf16.mxu0 0
  %2491 = vmatpush2.bf16.msra.mxu0 %v1907
  %2492 = vmatprep.subr.bf16.mxu0 0
  %2493 = vmatpush2.bf16.msra.mxu0 %v1906
  %2494 = vmatprep.subr.bf16.mxu0 0
  %2495 = vmatpush2.bf16.msra.mxu0 %v1905
  %2496 = vmatprep.subr.bf16.mxu0 0
  %2497 = vmatpush2.bf16.msra.mxu0 %v1904
  %2498 = vmatprep.subr.bf16.mxu0 0
  %2499 = vmatpush2.bf16.msra.mxu0 %v1903
  %2500 = vmatprep.subr.bf16.mxu0 0
  %2501 = vmatpush2.bf16.msra.mxu0 %v1902
  %2502 = vmatprep.mubr.bf16.mxu0 %v671
  %2503 = vmatmul.mubr.bf16.gmra.mxu0 %v670
  %v2504 = vpop.f32.mrf.mxu0
  %v2505 = vadd.f32 %v614, %v2504
  %v2506 = vpop.f32.mrf.mxu0
  %v2507 = vpop.f32.mrf.mxu0
  %v2508 = vpop.f32.mrf.mxu0
  %2509 = vdwg.mxu0
  %2510 = vmatprep.subr.bf16.mxu0 0
  %2511 = vmatpush1.bf16.msra.mxu0 %v1917
  %2512 = vmatprep.subr.bf16.mxu0 0
  %2513 = vmatpush1.bf16.msra.mxu0 %v1916
  %2514 = vmatprep.subr.bf16.mxu0 0
  %2515 = vmatpush1.bf16.msra.mxu0 %v1915
  %2516 = vmatprep.subr.bf16.mxu0 0
  %2517 = vmatpush1.bf16.msra.mxu0 %v1914
  %2518 = vmatprep.subr.bf16.mxu0 0
  %2519 = vmatpush1.bf16.msra.mxu0 %v1913
  %2520 = vmatprep.subr.bf16.mxu0 0
  %2521 = vmatpush1.bf16.msra.mxu0 %v1912
  %2522 = vmatprep.subr.bf16.mxu0 0
  %2523 = vmatpush1.bf16.msra.mxu0 %v1911
  %2524 = vmatprep.subr.bf16.mxu0 0
  %2525 = vmatpush1.bf16.msra.mxu0 %v1910
  %2526 = vmatprep.subr.bf16.mxu0 0
  %2527 = vmatpush2.bf16.msra.mxu0 %v1925
  %2528 = vmatprep.subr.bf16.mxu0 0
  %2529 = vmatpush2.bf16.msra.mxu0 %v1924
  %2530 = vmatprep.subr.bf16.mxu0 0
  %2531 = vmatpush2.bf16.msra.mxu0 %v1923
  %2532 = vmatprep.subr.bf16.mxu0 0
  %2533 = vmatpush2.bf16.msra.mxu0 %v1922
  %2534 = vmatprep.subr.bf16.mxu0 0
  %2535 = vmatpush2.bf16.msra.mxu0 %v1921
  %2536 = vmatprep.subr.bf16.mxu0 0
  %2537 = vmatpush2.bf16.msra.mxu0 %v1920
  %2538 = vmatprep.subr.bf16.mxu0 0
  %2539 = vmatpush2.bf16.msra.mxu0 %v1919
  %2540 = vmatprep.subr.bf16.mxu0 0
  %2541 = vmatpush2.bf16.msra.mxu0 %v1918
  %2542 = vmatprep.mubr.bf16.mxu0 %v673
  %2543 = vmatmul.mubr.bf16.gmra.mxu0 %v672
  %v2544 = vpop.f32.mrf.mxu0
  %v2545 = vadd.f32 %v2505, %v2544
  %v2546 = vpop.f32.mrf.mxu0
  %v2547 = vpop.f32.mrf.mxu0
  %v2548 = vpop.f32.mrf.mxu0
  %2549 = vdwg.mxu0
  %2550 = vmatprep.subr.bf16.mxu0 0
  %2551 = vmatpush1.bf16.msra.mxu0 %v1933
  %2552 = vmatprep.subr.bf16.mxu0 0
  %2553 = vmatpush1.bf16.msra.mxu0 %v1932
  %2554 = vmatprep.subr.bf16.mxu0 0
  %2555 = vmatpush1.bf16.msra.mxu0 %v1931
  %2556 = vmatprep.subr.bf16.mxu0 0
  %2557 = vmatpush1.bf16.msra.mxu0 %v1930
  %2558 = vmatprep.subr.bf16.mxu0 0
  %2559 = vmatpush1.bf16.msra.mxu0 %v1929
  %2560 = vmatprep.subr.bf16.mxu0 0
  %2561 = vmatpush1.bf16.msra.mxu0 %v1928
  %2562 = vmatprep.subr.bf16.mxu0 0
  %2563 = vmatpush1.bf16.msra.mxu0 %v1927
  %2564 = vmatprep.subr.bf16.mxu0 0
  %2565 = vmatpush1.bf16.msra.mxu0 %v1926
  %2566 = vmatprep.subr.bf16.mxu0 0
  %2567 = vmatpush2.bf16.msra.mxu0 %v1941
  %2568 = vmatprep.subr.bf16.mxu0 0
  %2569 = vmatpush2.bf16.msra.mxu0 %v1940
  %2570 = vmatprep.subr.bf16.mxu0 0
  %2571 = vmatpush2.bf16.msra.mxu0 %v1939
  %2572 = vmatprep.subr.bf16.mxu0 0
  %2573 = vmatpush2.bf16.msra.mxu0 %v1938
  %2574 = vmatprep.subr.bf16.mxu0 0
  %2575 = vmatpush2.bf16.msra.mxu0 %v1937
  %2576 = vmatprep.subr.bf16.mxu0 0
  %2577 = vmatpush2.bf16.msra.mxu0 %v1936
  %2578 = vmatprep.subr.bf16.mxu0 0
  %2579 = vmatpush2.bf16.msra.mxu0 %v1935
  %2580 = vmatprep.subr.bf16.mxu0 0
  %2581 = vmatpush2.bf16.msra.mxu0 %v1934
  %2582 = vmatprep.mubr.bf16.mxu0 %v675
  %2583 = vmatmul.mubr.bf16.gmra.mxu0 %v674
  %v2584 = vpop.f32.mrf.mxu0
  %v2585 = vadd.f32 %v2545, %v2584
  %v2586 = vpop.f32.mrf.mxu0
  %v2587 = vpop.f32.mrf.mxu0
  %v2588 = vpop.f32.mrf.mxu0
  %2589 = vdwg.mxu0
  %2590 = vmatprep.subr.bf16.mxu0 0
  %2591 = vmatpush1.bf16.msra.mxu0 %v1949
  %2592 = vmatprep.subr.bf16.mxu0 0
  %2593 = vmatpush1.bf16.msra.mxu0 %v1948
  %2594 = vmatprep.subr.bf16.mxu0 0
  %2595 = vmatpush1.bf16.msra.mxu0 %v1947
  %2596 = vmatprep.subr.bf16.mxu0 0
  %2597 = vmatpush1.bf16.msra.mxu0 %v1946
  %2598 = vmatprep.subr.bf16.mxu0 0
  %2599 = vmatpush1.bf16.msra.mxu0 %v1945
  %2600 = vmatprep.subr.bf16.mxu0 0
  %2601 = vmatpush1.bf16.msra.mxu0 %v1944
  %2602 = vmatprep.subr.bf16.mxu0 0
  %2603 = vmatpush1.bf16.msra.mxu0 %v1943
  %2604 = vmatprep.subr.bf16.mxu0 0
  %2605 = vmatpush1.bf16.msra.mxu0 %v1942
  %2606 = vmatprep.subr.bf16.mxu0 0
  %2607 = vmatpush2.bf16.msra.mxu0 %v1957
  %2608 = vmatprep.subr.bf16.mxu0 0
  %2609 = vmatpush2.bf16.msra.mxu0 %v1956
  %2610 = vmatprep.subr.bf16.mxu0 0
  %2611 = vmatpush2.bf16.msra.mxu0 %v1955
  %2612 = vmatprep.subr.bf16.mxu0 0
  %2613 = vmatpush2.bf16.msra.mxu0 %v1954
  %2614 = vmatprep.subr.bf16.mxu0 0
  %2615 = vmatpush2.bf16.msra.mxu0 %v1953
  %2616 = vmatprep.subr.bf16.mxu0 0
  %2617 = vmatpush2.bf16.msra.mxu0 %v1952
  %2618 = vmatprep.subr.bf16.mxu0 0
  %2619 = vmatpush2.bf16.msra.mxu0 %v1951
  %2620 = vmatprep.subr.bf16.mxu0 0
  %2621 = vmatpush2.bf16.msra.mxu0 %v1950
  %2622 = vmatprep.mubr.bf16.mxu0 %v677
  %2623 = vmatmul.mubr.bf16.gmra.mxu0 %v676
  %v2624 = vpop.f32.mrf.mxu0
  %v2625 = vadd.f32 %v2585, %v2624
  %v2626 = vpop.f32.mrf.mxu0
  %v2627 = vpop.f32.mrf.mxu0
  %v2628 = vpop.f32.mrf.mxu0
  %2629 = vdwg.mxu0
  %2630 = vmatprep.subr.bf16.mxu0 0
  %2631 = vmatpush1.bf16.msra.mxu0 %v1965
  %2632 = vmatprep.subr.bf16.mxu0 0
  %2633 = vmatpush1.bf16.msra.mxu0 %v1964
  %2634 = vmatprep.subr.bf16.mxu0 0
  %2635 = vmatpush1.bf16.msra.mxu0 %v1963
  %2636 = vmatprep.subr.bf16.mxu0 0
  %2637 = vmatpush1.bf16.msra.mxu0 %v1962
  %2638 = vmatprep.subr.bf16.mxu0 0
  %2639 = vmatpush1.bf16.msra.mxu0 %v1961
  %2640 = vmatprep.subr.bf16.mxu0 0
  %2641 = vmatpush1.bf16.msra.mxu0 %v1960
  %2642 = vmatprep.subr.bf16.mxu0 0
  %2643 = vmatpush1.bf16.msra.mxu0 %v1959
  %2644 = vmatprep.subr.bf16.mxu0 0
  %2645 = vmatpush1.bf16.msra.mxu0 %v1958
  %2646 = vmatprep.subr.bf16.mxu0 0
  %2647 = vmatpush2.bf16.msra.mxu0 %v1973
  %2648 = vmatprep.subr.bf16.mxu0 0
  %2649 = vmatpush2.bf16.msra.mxu0 %v1972
  %2650 = vmatprep.subr.bf16.mxu0 0
  %2651 = vmatpush2.bf16.msra.mxu0 %v1971
  %2652 = vmatprep.subr.bf16.mxu0 0
  %2653 = vmatpush2.bf16.msra.mxu0 %v1970
  %2654 = vmatprep.subr.bf16.mxu0 0
  %2655 = vmatpush2.bf16.msra.mxu0 %v1969
  %2656 = vmatprep.subr.bf16.mxu0 0
  %2657 = vmatpush2.bf16.msra.mxu0 %v1968
  %2658 = vmatprep.subr.bf16.mxu0 0
  %2659 = vmatpush2.bf16.msra.mxu0 %v1967
  %2660 = vmatprep.subr.bf16.mxu0 0
  %2661 = vmatpush2.bf16.msra.mxu0 %v1966
  %2662 = vmatprep.mubr.bf16.mxu0 %v679
  %2663 = vmatmul.mubr.bf16.gmra.mxu0 %v678
  %v2664 = vpop.f32.mrf.mxu0
  %v2665 = vadd.f32 %v2625, %v2664
  %v2666 = vpop.f32.mrf.mxu0
  %v2667 = vpop.f32.mrf.mxu0
  %v2668 = vpop.f32.mrf.mxu0
  %2669 = vdwg.mxu0
  %2670 = vmatprep.subr.bf16.mxu0 0
  %2671 = vmatpush1.bf16.msra.mxu0 %v1981
  %2672 = vmatprep.subr.bf16.mxu0 0
  %2673 = vmatpush1.bf16.msra.mxu0 %v1980
  %2674 = vmatprep.subr.bf16.mxu0 0
  %2675 = vmatpush1.bf16.msra.mxu0 %v1979
  %2676 = vmatprep.subr.bf16.mxu0 0
  %2677 = vmatpush1.bf16.msra.mxu0 %v1978
  %2678 = vmatprep.subr.bf16.mxu0 0
  %2679 = vmatpush1.bf16.msra.mxu0 %v1977
  %2680 = vmatprep.subr.bf16.mxu0 0
  %2681 = vmatpush1.bf16.msra.mxu0 %v1976
  %2682 = vmatprep.subr.bf16.mxu0 0
  %2683 = vmatpush1.bf16.msra.mxu0 %v1975
  %2684 = vmatprep.subr.bf16.mxu0 0
  %2685 = vmatpush1.bf16.msra.mxu0 %v1974
  %2686 = vmatprep.subr.bf16.mxu0 0
  %2687 = vmatpush2.bf16.msra.mxu0 %v1989
  %2688 = vmatprep.subr.bf16.mxu0 0
  %2689 = vmatpush2.bf16.msra.mxu0 %v1988
  %2690 = vmatprep.subr.bf16.mxu0 0
  %2691 = vmatpush2.bf16.msra.mxu0 %v1987
  %2692 = vmatprep.subr.bf16.mxu0 0
  %2693 = vmatpush2.bf16.msra.mxu0 %v1986
  %2694 = vmatprep.subr.bf16.mxu0 0
  %2695 = vmatpush2.bf16.msra.mxu0 %v1985
  %2696 = vmatprep.subr.bf16.mxu0 0
  %2697 = vmatpush2.bf16.msra.mxu0 %v1984
  %2698 = vmatprep.subr.bf16.mxu0 0
  %2699 = vmatpush2.bf16.msra.mxu0 %v1983
  %2700 = vmatprep.subr.bf16.mxu0 0
  %2701 = vmatpush2.bf16.msra.mxu0 %v1982
  %2702 = vmatprep.mubr.bf16.mxu0 %v681
  %2703 = vmatmul.mubr.bf16.gmra.mxu0 %v680
  %v2704 = vpop.f32.mrf.mxu0
  %v2705 = vadd.f32 %v2665, %v2704
  %v2706 = vpop.f32.mrf.mxu0
  %v2707 = vpop.f32.mrf.mxu0
  %v2708 = vpop.f32.mrf.mxu0
  %2709 = vdwg.mxu0
  %2710 = vmatprep.subr.bf16.mxu0 0
  %2711 = vmatpush1.bf16.msra.mxu0 %v1997
  %2712 = vmatprep.subr.bf16.mxu0 0
  %2713 = vmatpush1.bf16.msra.mxu0 %v1996
  %2714 = vmatprep.subr.bf16.mxu0 0
  %2715 = vmatpush1.bf16.msra.mxu0 %v1995
  %2716 = vmatprep.subr.bf16.mxu0 0
  %2717 = vmatpush1.bf16.msra.mxu0 %v1994
  %2718 = vmatprep.subr.bf16.mxu0 0
  %2719 = vmatpush1.bf16.msra.mxu0 %v1993
  %2720 = vmatprep.subr.bf16.mxu0 0
  %2721 = vmatpush1.bf16.msra.mxu0 %v1992
  %2722 = vmatprep.subr.bf16.mxu0 0
  %2723 = vmatpush1.bf16.msra.mxu0 %v1991
  %2724 = vmatprep.subr.bf16.mxu0 0
  %2725 = vmatpush1.bf16.msra.mxu0 %v1990
  %2726 = vmatprep.subr.bf16.mxu0 0
  %2727 = vmatpush2.bf16.msra.mxu0 %v2005
  %2728 = vmatprep.subr.bf16.mxu0 0
  %2729 = vmatpush2.bf16.msra.mxu0 %v2004
  %2730 = vmatprep.subr.bf16.mxu0 0
  %2731 = vmatpush2.bf16.msra.mxu0 %v2003
  %2732 = vmatprep.subr.bf16.mxu0 0
  %2733 = vmatpush2.bf16.msra.mxu0 %v2002
  %2734 = vmatprep.subr.bf16.mxu0 0
  %2735 = vmatpush2.bf16.msra.mxu0 %v2001
  %2736 = vmatprep.subr.bf16.mxu0 0
  %2737 = vmatpush2.bf16.msra.mxu0 %v2000
  %2738 = vmatprep.subr.bf16.mxu0 0
  %2739 = vmatpush2.bf16.msra.mxu0 %v1999
  %2740 = vmatprep.subr.bf16.mxu0 0
  %2741 = vmatpush2.bf16.msra.mxu0 %v1998
  %2742 = vmatprep.mubr.bf16.mxu0 %v683
  %2743 = vmatmul.mubr.bf16.gmra.mxu0 %v682
  %v2744 = vpop.f32.mrf.mxu0
  %v2745 = vadd.f32 %v2705, %v2744
  %v2746 = vpop.f32.mrf.mxu0
  %v2747 = vpop.f32.mrf.mxu0
  %v2748 = vpop.f32.mrf.mxu0
  %2749 = vdwg.mxu0
  %2750 = vmatprep.subr.bf16.mxu0 0
  %2751 = vmatpush1.bf16.msra.mxu0 %v2013
  %2752 = vmatprep.subr.bf16.mxu0 0
  %2753 = vmatpush1.bf16.msra.mxu0 %v2012
  %2754 = vmatprep.subr.bf16.mxu0 0
  %2755 = vmatpush1.bf16.msra.mxu0 %v2011
  %2756 = vmatprep.subr.bf16.mxu0 0
  %2757 = vmatpush1.bf16.msra.mxu0 %v2010
  %2758 = vmatprep.subr.bf16.mxu0 0
  %2759 = vmatpush1.bf16.msra.mxu0 %v2009
  %2760 = vmatprep.subr.bf16.mxu0 0
  %2761 = vmatpush1.bf16.msra.mxu0 %v2008
  %2762 = vmatprep.subr.bf16.mxu0 0
  %2763 = vmatpush1.bf16.msra.mxu0 %v2007
  %2764 = vmatprep.subr.bf16.mxu0 0
  %2765 = vmatpush1.bf16.msra.mxu0 %v2006
  %2766 = vmatprep.subr.bf16.mxu0 0
  %2767 = vmatpush2.bf16.msra.mxu0 %v2021
  %2768 = vmatprep.subr.bf16.mxu0 0
  %2769 = vmatpush2.bf16.msra.mxu0 %v2020
  %2770 = vmatprep.subr.bf16.mxu0 0
  %2771 = vmatpush2.bf16.msra.mxu0 %v2019
  %2772 = vmatprep.subr.bf16.mxu0 0
  %2773 = vmatpush2.bf16.msra.mxu0 %v2018
  %2774 = vmatprep.subr.bf16.mxu0 0
  %2775 = vmatpush2.bf16.msra.mxu0 %v2017
  %2776 = vmatprep.subr.bf16.mxu0 0
  %2777 = vmatpush2.bf16.msra.mxu0 %v2016
  %2778 = vmatprep.subr.bf16.mxu0 0
  %2779 = vmatpush2.bf16.msra.mxu0 %v2015
  %2780 = vmatprep.subr.bf16.mxu0 0
  %2781 = vmatpush2.bf16.msra.mxu0 %v2014
  %2782 = vmatprep.mubr.bf16.mxu0 %v685
  %2783 = vmatmul.mubr.bf16.gmra.mxu0 %v684
  %v2784 = vpop.f32.mrf.mxu0
  %v2785 = vadd.f32 %v2745, %v2784
  %v2786 = vpop.f32.mrf.mxu0
  %v2787 = vpop.f32.mrf.mxu0
  %v2788 = vpop.f32.mrf.mxu0
  %2789 = vdwg.mxu0
  %2790 = vmatprep.subr.bf16.mxu0 0
  %2791 = vmatpush1.bf16.msra.mxu0 %v2029
  %2792 = vmatprep.subr.bf16.mxu0 0
  %2793 = vmatpush1.bf16.msra.mxu0 %v2028
  %2794 = vmatprep.subr.bf16.mxu0 0
  %2795 = vmatpush1.bf16.msra.mxu0 %v2027
  %2796 = vmatprep.subr.bf16.mxu0 0
  %2797 = vmatpush1.bf16.msra.mxu0 %v2026
  %2798 = vmatprep.subr.bf16.mxu0 0
  %2799 = vmatpush1.bf16.msra.mxu0 %v2025
  %2800 = vmatprep.subr.bf16.mxu0 0
  %2801 = vmatpush1.bf16.msra.mxu0 %v2024
  %2802 = vmatprep.subr.bf16.mxu0 0
  %2803 = vmatpush1.bf16.msra.mxu0 %v2023
  %2804 = vmatprep.subr.bf16.mxu0 0
  %2805 = vmatpush1.bf16.msra.mxu0 %v2022
  %2806 = vmatprep.subr.bf16.mxu0 0
  %2807 = vmatpush2.bf16.msra.mxu0 %v2037
  %2808 = vmatprep.subr.bf16.mxu0 0
  %2809 = vmatpush2.bf16.msra.mxu0 %v2036
  %2810 = vmatprep.subr.bf16.mxu0 0
  %2811 = vmatpush2.bf16.msra.mxu0 %v2035
  %2812 = vmatprep.subr.bf16.mxu0 0
  %2813 = vmatpush2.bf16.msra.mxu0 %v2034
  %2814 = vmatprep.subr.bf16.mxu0 0
  %2815 = vmatpush2.bf16.msra.mxu0 %v2033
  %2816 = vmatprep.subr.bf16.mxu0 0
  %2817 = vmatpush2.bf16.msra.mxu0 %v2032
  %2818 = vmatprep.subr.bf16.mxu0 0
  %2819 = vmatpush2.bf16.msra.mxu0 %v2031
  %2820 = vmatprep.subr.bf16.mxu0 0
  %2821 = vmatpush2.bf16.msra.mxu0 %v2030
  %2822 = vmatprep.mubr.bf16.mxu0 %v687
  %2823 = vmatmul.mubr.bf16.gmra.mxu0 %v686
  %v2824 = vpop.f32.mrf.mxu0
  %v2825 = vadd.f32 %v2785, %v2824
  %v2826 = vpop.f32.mrf.mxu0
  %v2827 = vpop.f32.mrf.mxu0
  %v2828 = vpop.f32.mrf.mxu0
  %2829 = vdwg.mxu0
  %2830 = vmatprep.subr.bf16.mxu0 0
  %2831 = vmatpush1.bf16.msra.mxu0 %v2045
  %2832 = vmatprep.subr.bf16.mxu0 0
  %2833 = vmatpush1.bf16.msra.mxu0 %v2044
  %2834 = vmatprep.subr.bf16.mxu0 0
  %2835 = vmatpush1.bf16.msra.mxu0 %v2043
  %2836 = vmatprep.subr.bf16.mxu0 0
  %2837 = vmatpush1.bf16.msra.mxu0 %v2042
  %2838 = vmatprep.subr.bf16.mxu0 0
  %2839 = vmatpush1.bf16.msra.mxu0 %v2041
  %2840 = vmatprep.subr.bf16.mxu0 0
  %2841 = vmatpush1.bf16.msra.mxu0 %v2040
  %2842 = vmatprep.subr.bf16.mxu0 0
  %2843 = vmatpush1.bf16.msra.mxu0 %v2039
  %2844 = vmatprep.subr.bf16.mxu0 0
  %2845 = vmatpush1.bf16.msra.mxu0 %v2038
  %2846 = vmatprep.subr.bf16.mxu0 0
  %2847 = vmatpush2.bf16.msra.mxu0 %v2053
  %2848 = vmatprep.subr.bf16.mxu0 0
  %2849 = vmatpush2.bf16.msra.mxu0 %v2052
  %2850 = vmatprep.subr.bf16.mxu0 0
  %2851 = vmatpush2.bf16.msra.mxu0 %v2051
  %2852 = vmatprep.subr.bf16.mxu0 0
  %2853 = vmatpush2.bf16.msra.mxu0 %v2050
  %2854 = vmatprep.subr.bf16.mxu0 0
  %2855 = vmatpush2.bf16.msra.mxu0 %v2049
  %2856 = vmatprep.subr.bf16.mxu0 0
  %2857 = vmatpush2.bf16.msra.mxu0 %v2048
  %2858 = vmatprep.subr.bf16.mxu0 0
  %2859 = vmatpush2.bf16.msra.mxu0 %v2047
  %2860 = vmatprep.subr.bf16.mxu0 0
  %2861 = vmatpush2.bf16.msra.mxu0 %v2046
  %2862 = vmatprep.mubr.bf16.mxu0 %v689
  %2863 = vmatmul.mubr.bf16.gmra.mxu0 %v688
  %v2864 = vpop.f32.mrf.mxu0
  %v2865 = vadd.f32 %v2825, %v2864
  %v2866 = vpop.f32.mrf.mxu0
  %v2867 = vpop.f32.mrf.mxu0
  %v2868 = vpop.f32.mrf.mxu0
  %2869 = vdwg.mxu0
  %2870 = vmatprep.subr.bf16.mxu0 0
  %2871 = vmatpush1.bf16.msra.mxu0 %v2061
  %2872 = vmatprep.subr.bf16.mxu0 0
  %2873 = vmatpush1.bf16.msra.mxu0 %v2060
  %2874 = vmatprep.subr.bf16.mxu0 0
  %2875 = vmatpush1.bf16.msra.mxu0 %v2059
  %2876 = vmatprep.subr.bf16.mxu0 0
  %2877 = vmatpush1.bf16.msra.mxu0 %v2058
  %2878 = vmatprep.subr.bf16.mxu0 0
  %2879 = vmatpush1.bf16.msra.mxu0 %v2057
  %2880 = vmatprep.subr.bf16.mxu0 0
  %2881 = vmatpush1.bf16.msra.mxu0 %v2056
  %2882 = vmatprep.subr.bf16.mxu0 0
  %2883 = vmatpush1.bf16.msra.mxu0 %v2055
  %2884 = vmatprep.subr.bf16.mxu0 0
  %2885 = vmatpush1.bf16.msra.mxu0 %v2054
  %2886 = vmatprep.subr.bf16.mxu0 0
  %2887 = vmatpush2.bf16.msra.mxu0 %v2069
  %2888 = vmatprep.subr.bf16.mxu0 0
  %2889 = vmatpush2.bf16.msra.mxu0 %v2068
  %2890 = vmatprep.subr.bf16.mxu0 0
  %2891 = vmatpush2.bf16.msra.mxu0 %v2067
  %2892 = vmatprep.subr.bf16.mxu0 0
  %2893 = vmatpush2.bf16.msra.mxu0 %v2066
  %2894 = vmatprep.subr.bf16.mxu0 0
  %2895 = vmatpush2.bf16.msra.mxu0 %v2065
  %2896 = vmatprep.subr.bf16.mxu0 0
  %2897 = vmatpush2.bf16.msra.mxu0 %v2064
  %2898 = vmatprep.subr.bf16.mxu0 0
  %2899 = vmatpush2.bf16.msra.mxu0 %v2063
  %2900 = vmatprep.subr.bf16.mxu0 0
  %2901 = vmatpush2.bf16.msra.mxu0 %v2062
  %2902 = vmatprep.mubr.bf16.mxu0 %v691
  %2903 = vmatmul.mubr.bf16.gmra.mxu0 %v690
  %v2904 = vpop.f32.mrf.mxu0
  %v2905 = vadd.f32 %v2865, %v2904
  %v2906 = vpop.f32.mrf.mxu0
  %v2907 = vpop.f32.mrf.mxu0
  %v2908 = vpop.f32.mrf.mxu0
  %2909 = vdwg.mxu0
  %2910 = vmatprep.subr.bf16.mxu0 0
  %2911 = vmatpush1.bf16.msra.mxu0 %v2077
  %2912 = vmatprep.subr.bf16.mxu0 0
  %2913 = vmatpush1.bf16.msra.mxu0 %v2076
  %2914 = vmatprep.subr.bf16.mxu0 0
  %2915 = vmatpush1.bf16.msra.mxu0 %v2075
  %2916 = vmatprep.subr.bf16.mxu0 0
  %2917 = vmatpush1.bf16.msra.mxu0 %v2074
  %2918 = vmatprep.subr.bf16.mxu0 0
  %2919 = vmatpush1.bf16.msra.mxu0 %v2073
  %2920 = vmatprep.subr.bf16.mxu0 0
  %2921 = vmatpush1.bf16.msra.mxu0 %v2072
  %2922 = vmatprep.subr.bf16.mxu0 0
  %2923 = vmatpush1.bf16.msra.mxu0 %v2071
  %2924 = vmatprep.subr.bf16.mxu0 0
  %2925 = vmatpush1.bf16.msra.mxu0 %v2070
  %2926 = vmatprep.subr.bf16.mxu0 0
  %2927 = vmatpush2.bf16.msra.mxu0 %v2085
  %2928 = vmatprep.subr.bf16.mxu0 0
  %2929 = vmatpush2.bf16.msra.mxu0 %v2084
  %2930 = vmatprep.subr.bf16.mxu0 0
  %2931 = vmatpush2.bf16.msra.mxu0 %v2083
  %2932 = vmatprep.subr.bf16.mxu0 0
  %2933 = vmatpush2.bf16.msra.mxu0 %v2082
  %2934 = vmatprep.subr.bf16.mxu0 0
  %2935 = vmatpush2.bf16.msra.mxu0 %v2081
  %2936 = vmatprep.subr.bf16.mxu0 0
  %2937 = vmatpush2.bf16.msra.mxu0 %v2080
  %2938 = vmatprep.subr.bf16.mxu0 0
  %2939 = vmatpush2.bf16.msra.mxu0 %v2079
  %2940 = vmatprep.subr.bf16.mxu0 0
  %2941 = vmatpush2.bf16.msra.mxu0 %v2078
  %2942 = vmatprep.mubr.bf16.mxu0 %v693
  %2943 = vmatmul.mubr.bf16.gmra.mxu0 %v692
  %v2944 = vpop.f32.mrf.mxu0
  %v2945 = vadd.f32 %v2905, %v2944
  %v2946 = vpop.f32.mrf.mxu0
  %v2947 = vpop.f32.mrf.mxu0
  %v2948 = vpop.f32.mrf.mxu0
  %2949 = vdwg.mxu0
  %2950 = vmatprep.subr.bf16.mxu0 0
  %2951 = vmatpush1.bf16.msra.mxu0 %v2093
  %2952 = vmatprep.subr.bf16.mxu0 0
  %2953 = vmatpush1.bf16.msra.mxu0 %v2092
  %2954 = vmatprep.subr.bf16.mxu0 0
  %2955 = vmatpush1.bf16.msra.mxu0 %v2091
  %2956 = vmatprep.subr.bf16.mxu0 0
  %2957 = vmatpush1.bf16.msra.mxu0 %v2090
  %2958 = vmatprep.subr.bf16.mxu0 0
  %2959 = vmatpush1.bf16.msra.mxu0 %v2089
  %2960 = vmatprep.subr.bf16.mxu0 0
  %2961 = vmatpush1.bf16.msra.mxu0 %v2088
  %2962 = vmatprep.subr.bf16.mxu0 0
  %2963 = vmatpush1.bf16.msra.mxu0 %v2087
  %2964 = vmatprep.subr.bf16.mxu0 0
  %2965 = vmatpush1.bf16.msra.mxu0 %v2086
  %2966 = vmatprep.subr.bf16.mxu0 0
  %2967 = vmatpush2.bf16.msra.mxu0 %v2101
  %2968 = vmatprep.subr.bf16.mxu0 0
  %2969 = vmatpush2.bf16.msra.mxu0 %v2100
  %2970 = vmatprep.subr.bf16.mxu0 0
  %2971 = vmatpush2.bf16.msra.mxu0 %v2099
  %2972 = vmatprep.subr.bf16.mxu0 0
  %2973 = vmatpush2.bf16.msra.mxu0 %v2098
  %2974 = vmatprep.subr.bf16.mxu0 0
  %2975 = vmatpush2.bf16.msra.mxu0 %v2097
  %2976 = vmatprep.subr.bf16.mxu0 0
  %2977 = vmatpush2.bf16.msra.mxu0 %v2096
  %2978 = vmatprep.subr.bf16.mxu0 0
  %2979 = vmatpush2.bf16.msra.mxu0 %v2095
  %2980 = vmatprep.subr.bf16.mxu0 0
  %2981 = vmatpush2.bf16.msra.mxu0 %v2094
  %2982 = vmatprep.mubr.bf16.mxu0 %v695
  %2983 = vmatmul.mubr.bf16.gmra.mxu0 %v694
  %v2984 = vpop.f32.mrf.mxu0
  %v2985 = vadd.f32 %v2945, %v2984
  %v2986 = vpop.f32.mrf.mxu0
  %v2987 = vpop.f32.mrf.mxu0
  %v2988 = vpop.f32.mrf.mxu0
  %2989 = vdwg.mxu0
  %2990 = vmatprep.subr.bf16.mxu0 0
  %2991 = vmatpush1.bf16.msra.mxu0 %v2109
  %2992 = vmatprep.subr.bf16.mxu0 0
  %2993 = vmatpush1.bf16.msra.mxu0 %v2108
  %2994 = vmatprep.subr.bf16.mxu0 0
  %2995 = vmatpush1.bf16.msra.mxu0 %v2107
  %2996 = vmatprep.subr.bf16.mxu0 0
  %2997 = vmatpush1.bf16.msra.mxu0 %v2106
  %2998 = vmatprep.subr.bf16.mxu0 0
  %2999 = vmatpush1.bf16.msra.mxu0 %v2105
  %3000 = vmatprep.subr.bf16.mxu0 0
  %3001 = vmatpush1.bf16.msra.mxu0 %v2104
  %3002 = vmatprep.subr.bf16.mxu0 0
  %3003 = vmatpush1.bf16.msra.mxu0 %v2103
  %3004 = vmatprep.subr.bf16.mxu0 0
  %3005 = vmatpush1.bf16.msra.mxu0 %v2102
  %3006 = vmatprep.subr.bf16.mxu0 0
  %3007 = vmatpush2.bf16.msra.mxu0 %v2117
  %3008 = vmatprep.subr.bf16.mxu0 0
  %3009 = vmatpush2.bf16.msra.mxu0 %v2116
  %3010 = vmatprep.subr.bf16.mxu0 0
  %3011 = vmatpush2.bf16.msra.mxu0 %v2115
  %3012 = vmatprep.subr.bf16.mxu0 0
  %3013 = vmatpush2.bf16.msra.mxu0 %v2114
  %3014 = vmatprep.subr.bf16.mxu0 0
  %3015 = vmatpush2.bf16.msra.mxu0 %v2113
  %3016 = vmatprep.subr.bf16.mxu0 0
  %3017 = vmatpush2.bf16.msra.mxu0 %v2112
  %3018 = vmatprep.subr.bf16.mxu0 0
  %3019 = vmatpush2.bf16.msra.mxu0 %v2111
  %3020 = vmatprep.subr.bf16.mxu0 0
  %3021 = vmatpush2.bf16.msra.mxu0 %v2110
  %3022 = vmatprep.mubr.bf16.mxu0 %v697
  %3023 = vmatmul.mubr.bf16.gmra.mxu0 %v696
  %v3024 = vpop.f32.mrf.mxu0
  %v3025 = vadd.f32 %v2985, %v3024
  %v3026 = vpop.f32.mrf.mxu0
  %v3027 = vpop.f32.mrf.mxu0
  %v3028 = vpop.f32.mrf.mxu0
  %3029 = vdwg.mxu0
  %3030 = vmatprep.subr.bf16.mxu0 0
  %3031 = vmatpush1.bf16.msra.mxu0 %v2125
  %3032 = vmatprep.subr.bf16.mxu0 0
  %3033 = vmatpush1.bf16.msra.mxu0 %v2124
  %3034 = vmatprep.subr.bf16.mxu0 0
  %3035 = vmatpush1.bf16.msra.mxu0 %v2123
  %3036 = vmatprep.subr.bf16.mxu0 0
  %3037 = vmatpush1.bf16.msra.mxu0 %v2122
  %3038 = vmatprep.subr.bf16.mxu0 0
  %3039 = vmatpush1.bf16.msra.mxu0 %v2121
  %3040 = vmatprep.subr.bf16.mxu0 0
  %3041 = vmatpush1.bf16.msra.mxu0 %v2120
  %3042 = vmatprep.subr.bf16.mxu0 0
  %3043 = vmatpush1.bf16.msra.mxu0 %v2119
  %3044 = vmatprep.subr.bf16.mxu0 0
  %3045 = vmatpush1.bf16.msra.mxu0 %v2118
  %3046 = vmatprep.subr.bf16.mxu0 0
  %3047 = vmatpush2.bf16.msra.mxu0 %v2133
  %3048 = vmatprep.subr.bf16.mxu0 0
  %3049 = vmatpush2.bf16.msra.mxu0 %v2132
  %3050 = vmatprep.subr.bf16.mxu0 0
  %3051 = vmatpush2.bf16.msra.mxu0 %v2131
  %3052 = vmatprep.subr.bf16.mxu0 0
  %3053 = vmatpush2.bf16.msra.mxu0 %v2130
  %3054 = vmatprep.subr.bf16.mxu0 0
  %3055 = vmatpush2.bf16.msra.mxu0 %v2129
  %3056 = vmatprep.subr.bf16.mxu0 0
  %3057 = vmatpush2.bf16.msra.mxu0 %v2128
  %3058 = vmatprep.subr.bf16.mxu0 0
  %3059 = vmatpush2.bf16.msra.mxu0 %v2127
  %3060 = vmatprep.subr.bf16.mxu0 0
  %3061 = vmatpush2.bf16.msra.mxu0 %v2126
  %3062 = vmatprep.mubr.bf16.mxu0 %v699
  %3063 = vmatmul.mubr.bf16.gmra.mxu0 %v698
  %v3064 = vpop.f32.mrf.mxu0
  %v3065 = vadd.f32 %v3025, %v3064
  %v3066 = vpop.f32.mrf.mxu0
  %v3067 = vpop.f32.mrf.mxu0
  %v3068 = vpop.f32.mrf.mxu0
  %3069 = vdwg.mxu0
  %3070 = vmatprep.subr.bf16.mxu0 0
  %3071 = vmatpush1.bf16.msra.mxu0 %v2141
  %3072 = vmatprep.subr.bf16.mxu0 0
  %3073 = vmatpush1.bf16.msra.mxu0 %v2140
  %3074 = vmatprep.subr.bf16.mxu0 0
  %3075 = vmatpush1.bf16.msra.mxu0 %v2139
  %3076 = vmatprep.subr.bf16.mxu0 0
  %3077 = vmatpush1.bf16.msra.mxu0 %v2138
  %3078 = vmatprep.subr.bf16.mxu0 0
  %3079 = vmatpush1.bf16.msra.mxu0 %v2137
  %3080 = vmatprep.subr.bf16.mxu0 0
  %3081 = vmatpush1.bf16.msra.mxu0 %v2136
  %3082 = vmatprep.subr.bf16.mxu0 0
  %3083 = vmatpush1.bf16.msra.mxu0 %v2135
  %3084 = vmatprep.subr.bf16.mxu0 0
  %3085 = vmatpush1.bf16.msra.mxu0 %v2134
  %3086 = vmatprep.subr.bf16.mxu0 0
  %3087 = vmatpush2.bf16.msra.mxu0 %v2149
  %3088 = vmatprep.subr.bf16.mxu0 0
  %3089 = vmatpush2.bf16.msra.mxu0 %v2148
  %3090 = vmatprep.subr.bf16.mxu0 0
  %3091 = vmatpush2.bf16.msra.mxu0 %v2147
  %3092 = vmatprep.subr.bf16.mxu0 0
  %3093 = vmatpush2.bf16.msra.mxu0 %v2146
  %3094 = vmatprep.subr.bf16.mxu0 0
  %3095 = vmatpush2.bf16.msra.mxu0 %v2145
  %3096 = vmatprep.subr.bf16.mxu0 0
  %3097 = vmatpush2.bf16.msra.mxu0 %v2144
  %3098 = vmatprep.subr.bf16.mxu0 0
  %3099 = vmatpush2.bf16.msra.mxu0 %v2143
  %3100 = vmatprep.subr.bf16.mxu0 0
  %3101 = vmatpush2.bf16.msra.mxu0 %v2142
  %3102 = vmatprep.mubr.bf16.mxu0 %v701
  %3103 = vmatmul.mubr.bf16.gmra.mxu0 %v700
  %v3104 = vpop.f32.mrf.mxu0
  %v3105 = vadd.f32 %v3065, %v3104
  %v3106 = vpop.f32.mrf.mxu0
  %v3107 = vpop.f32.mrf.mxu0
  %v3108 = vpop.f32.mrf.mxu0
  %3109 = vdwg.mxu0
  %3110 = vmatprep.subr.bf16.mxu0 0
  %3111 = vmatpush1.bf16.msra.mxu0 %v2157
  %3112 = vmatprep.subr.bf16.mxu0 0
  %3113 = vmatpush1.bf16.msra.mxu0 %v2156
  %3114 = vmatprep.subr.bf16.mxu0 0
  %3115 = vmatpush1.bf16.msra.mxu0 %v2155
  %3116 = vmatprep.subr.bf16.mxu0 0
  %3117 = vmatpush1.bf16.msra.mxu0 %v2154
  %3118 = vmatprep.subr.bf16.mxu0 0
  %3119 = vmatpush1.bf16.msra.mxu0 %v2153
  %3120 = vmatprep.subr.bf16.mxu0 0
  %3121 = vmatpush1.bf16.msra.mxu0 %v2152
  %3122 = vmatprep.subr.bf16.mxu0 0
  %3123 = vmatpush1.bf16.msra.mxu0 %v2151
  %3124 = vmatprep.subr.bf16.mxu0 0
  %3125 = vmatpush1.bf16.msra.mxu0 %v2150
  %3126 = vmatprep.subr.bf16.mxu0 0
  %3127 = vmatpush2.bf16.msra.mxu0 %v2165
  %3128 = vmatprep.subr.bf16.mxu0 0
  %3129 = vmatpush2.bf16.msra.mxu0 %v2164
  %3130 = vmatprep.subr.bf16.mxu0 0
  %3131 = vmatpush2.bf16.msra.mxu0 %v2163
  %3132 = vmatprep.subr.bf16.mxu0 0
  %3133 = vmatpush2.bf16.msra.mxu0 %v2162
  %3134 = vmatprep.subr.bf16.mxu0 0
  %3135 = vmatpush2.bf16.msra.mxu0 %v2161
  %3136 = vmatprep.subr.bf16.mxu0 0
  %3137 = vmatpush2.bf16.msra.mxu0 %v2160
  %3138 = vmatprep.subr.bf16.mxu0 0
  %3139 = vmatpush2.bf16.msra.mxu0 %v2159
  %3140 = vmatprep.subr.bf16.mxu0 0
  %3141 = vmatpush2.bf16.msra.mxu0 %v2158
  %3142 = vmatprep.mubr.bf16.mxu0 %v703
  %3143 = vmatmul.mubr.bf16.gmra.mxu0 %v702
  %v3144 = vpop.f32.mrf.mxu0
  %v3145 = vadd.f32 %v3105, %v3144
  %v3146 = vpop.f32.mrf.mxu0
  %v3147 = vpop.f32.mrf.mxu0
  %v3148 = vpop.f32.mrf.mxu0
  %3149 = vdwg.mxu0
  %3150 = vmatprep.subr.bf16.mxu0 0
  %3151 = vmatpush1.bf16.msra.mxu0 %v2173
  %3152 = vmatprep.subr.bf16.mxu0 0
  %3153 = vmatpush1.bf16.msra.mxu0 %v2172
  %3154 = vmatprep.subr.bf16.mxu0 0
  %3155 = vmatpush1.bf16.msra.mxu0 %v2171
  %3156 = vmatprep.subr.bf16.mxu0 0
  %3157 = vmatpush1.bf16.msra.mxu0 %v2170
  %3158 = vmatprep.subr.bf16.mxu0 0
  %3159 = vmatpush1.bf16.msra.mxu0 %v2169
  %3160 = vmatprep.subr.bf16.mxu0 0
  %3161 = vmatpush1.bf16.msra.mxu0 %v2168
  %3162 = vmatprep.subr.bf16.mxu0 0
  %3163 = vmatpush1.bf16.msra.mxu0 %v2167
  %3164 = vmatprep.subr.bf16.mxu0 0
  %3165 = vmatpush1.bf16.msra.mxu0 %v2166
  %3166 = vmatprep.subr.bf16.mxu0 0
  %3167 = vmatpush2.bf16.msra.mxu0 %v2181
  %3168 = vmatprep.subr.bf16.mxu0 0
  %3169 = vmatpush2.bf16.msra.mxu0 %v2180
  %3170 = vmatprep.subr.bf16.mxu0 0
  %3171 = vmatpush2.bf16.msra.mxu0 %v2179
  %3172 = vmatprep.subr.bf16.mxu0 0
  %3173 = vmatpush2.bf16.msra.mxu0 %v2178
  %3174 = vmatprep.subr.bf16.mxu0 0
  %3175 = vmatpush2.bf16.msra.mxu0 %v2177
  %3176 = vmatprep.subr.bf16.mxu0 0
  %3177 = vmatpush2.bf16.msra.mxu0 %v2176
  %3178 = vmatprep.subr.bf16.mxu0 0
  %3179 = vmatpush2.bf16.msra.mxu0 %v2175
  %3180 = vmatprep.subr.bf16.mxu0 0
  %3181 = vmatpush2.bf16.msra.mxu0 %v2174
  %3182 = vmatprep.mubr.bf16.mxu0 %v705
  %3183 = vmatmul.mubr.bf16.gmra.mxu0 %v704
  %v3184 = vpop.f32.mrf.mxu0
  %v3185 = vadd.f32 %v3145, %v3184
  %v3186 = vpop.f32.mrf.mxu0
  %v3187 = vpop.f32.mrf.mxu0
  %v3188 = vpop.f32.mrf.mxu0
  %3189 = vdwg.mxu0
  %3190 = vst [vmem:[%s3] sm:$0xff] %v3185
  // Predicated region
  $region14: #{discriminator_forward.15} parent=0 // pred_check
    _
  $region15: #{discriminator_forward.15} parent=0 // pred_check_branch
    %3192 = sbr.rel (0) target = $region17
  $region16: #{discriminator_forward.15} parent=0 // pred_region
    _
  $region17: #{discriminator_forward.15} parent=0 // pred_fallthru
    _
  // Predicated region
  $region18: #{discriminator_forward.15} parent=0 // pred_check
    _
  $region19: #{discriminator_forward.15} parent=0 // pred_check_branch
    %3194 = sbr.rel (0) target = $region21
  $region20: #{discriminator_forward.15} parent=0 // pred_region
    _
  $region21: #{discriminator_forward.15} parent=0 // pred_fallthru
    _

</llo_original>
